<compile_context>
chip_gen: v7x
topology: tpu7x:2x2x1
jax: 0.10.0
libtpu: 0.0.40
codegen_flags: <defaults>
</compile_context>

<pallas_src>
import functools
import math

import jax
import jax.numpy as jnp
from jax import lax
from jax.experimental import pallas as pl
from jax.experimental.pallas import tpu as pltpu


# ----------------------------------------------------------------------------
# Generation-aware scoped-VMEM budget
# ----------------------------------------------------------------------------

def _query_vmem_capacity_bytes():
    try:
        get_info = getattr(pltpu, "get_tpu_info", None)
        if get_info is not None:
            info = get_info()
            for name in ("vmem_capacity_bytes", "vmem_bytes", "vmem_size_bytes"):
                v = getattr(info, name, None)
                if v:
                    return int(v)
    except Exception:
        pass
    return 64 * 1024 * 1024  # conservative (v7x-sized) fallback


_VMEM_LIMIT = int(min(max(_query_vmem_capacity_bytes() * 3 // 4,
                          32 * 1024 * 1024),
                      96 * 1024 * 1024))


def _cparams(sem):
    return pltpu.CompilerParams(dimension_semantics=sem,
                                vmem_limit_bytes=_VMEM_LIMIT)


def _pick_tile(n, pref, granule):
    """Largest tile <= pref that is a multiple of `granule` and divides n,
    falling back to the full extent (always a legal BlockSpec block)."""
    if n <= pref:
        return n
    t = (pref // granule) * granule
    while t >= granule:
        if n % t == 0:
            return t
        t -= granule
    return n


def _split_rows(w, sizes):
    out, off = [], 0
    for s in sizes:
        out.append(w[off:off + s])
        off += s
    return out


# ----------------------------------------------------------------------------
# K-split Linear: o = sum_i xs[i] @ ws[i] + b  (bf16 MXU inputs, f32 accumulate)
# Avoids materializing jnp.concatenate of the xs pieces.
# ----------------------------------------------------------------------------

def _linear_kernel(*refs, n_x):
    xs = refs[:n_x]
    ws = refs[n_x:2 * n_x]
    b_ref = refs[2 * n_x]
    o_ref = refs[2 * n_x + 1]
    acc = jnp.dot(xs[0][...].astype(jnp.bfloat16), ws[0][...],
                  preferred_element_type=jnp.float32)
    for i in range(1, n_x):
        acc = acc + jnp.dot(xs[i][...].astype(jnp.bfloat16), ws[i][...],
                            preferred_element_type=jnp.float32)
    o_ref[...] = (acc + b_ref[...]).astype(o_ref.dtype)


def linear(xs, ws, b, *, out_dtype=jnp.float32, tm=512, tn=2048):
    xs = list(xs)
    ws = [w.astype(jnp.bfloat16) for w in ws]
    M = xs[0].shape[0]
    N = ws[0].shape[1]
    gran_m = 16 if any(x.dtype == jnp.bfloat16 for x in xs) else 8
    TM = _pick_tile(M, tm, gran_m)
    TN = _pick_tile(N, tn, 128)
    grid = (M // TM, N // TN)
    in_specs = ([pl.BlockSpec((TM, x.shape[1]), lambda i, j: (i, 0)) for x in xs]
                + [pl.BlockSpec((w.shape[0], TN), lambda i, j: (0, j)) for w in ws]
                + [pl.BlockSpec((1, TN), lambda i, j: (0, j))])
    kernel = functools.partial(_linear_kernel, n_x=len(xs))
    return pl.pallas_call(
        kernel,
        out_shape=jax.ShapeDtypeStruct((M, N), out_dtype),
        grid=grid,
        in_specs=in_specs,
        out_specs=pl.BlockSpec((TM, TN), lambda i, j: (i, j)),
        compiler_params=_cparams(("parallel", "parallel")),
    )(*xs, *ws, b)


# ----------------------------------------------------------------------------
# Fused image encoder: global average pool (channels on lanes) + Linear(+BN)
# ----------------------------------------------------------------------------

def _img_encode_kernel(x_ref, w_ref, b_ref, o_ref):
    # x: (tm, HW, C) -> pooled (tm, C): reduce over the sublane (HW) axis.
    pooled = jnp.mean(x_ref[...], axis=1)
    y = jnp.dot(pooled.astype(jnp.bfloat16), w_ref[...],
                preferred_element_type=jnp.float32)
    o_ref[...] = (y + b_ref[...]).astype(o_ref.dtype)


def image_encode(x_nhwc, w_bf16, b):
    # TODO(synk): at real backbone dims (HW=49, C=2048) add a channel grid axis
    # with an f32 accumulator instead of loading the full (TM, HW, C) block.
    N, HW, C = x_nhwc.shape
    D = w_bf16.shape[1]
    per_row = 2 * HW * C * x_nhwc.dtype.itemsize      # double-buffered input row
    tm_cap = max(8, (_VMEM_LIMIT // 4) // max(per_row, 1))
    TM = _pick_tile(N, int(min(tm_cap, 128)), 8)
    grid = (N // TM,)
    return pl.pallas_call(
        _img_encode_kernel,
        out_shape=jax.ShapeDtypeStruct((N, D), jnp.float32),
        grid=grid,
        in_specs=[pl.BlockSpec((TM, HW, C), lambda i: (i, 0, 0)),
                  pl.BlockSpec((C, D), lambda i: (0, 0)),
                  pl.BlockSpec((1, D), lambda i: (0, 0))],
        out_specs=pl.BlockSpec((TM, D), lambda i: (i, 0)),
        compiler_params=_cparams(("parallel",)),
    )(x_nhwc, w_bf16, b)


# ----------------------------------------------------------------------------
# Recurrent kernels (input projections are precomputed outside the recurrence)
# ----------------------------------------------------------------------------

def _lstm_cell(gates, c_prev, H):
    # PyTorch gate order: i, f, g, o.
    i_g = jax.nn.sigmoid(gates[:, 0 * H:1 * H])
    f_g = jax.nn.sigmoid(gates[:, 1 * H:2 * H])
    g_g = jnp.tanh(gates[:, 2 * H:3 * H])
    o_g = jax.nn.sigmoid(gates[:, 3 * H:4 * H])
    c_new = f_g * c_prev + i_g * g_g
    h_new = o_g * jnp.tanh(c_new)
    return h_new, c_new


def _bilstm_kernel(gf_ref, gb_ref, whh_f_ref, whh_b_ref, of_ref, ob_ref,
                   hf, cf, hb, cb, *, T, H):
    # One fused, fully unrolled pass: fwd direction at t = s, bwd at t = T-1-s.
    hf[...] = jnp.zeros_like(hf)
    cf[...] = jnp.zeros_like(cf)
    hb[...] = jnp.zeros_like(hb)
    cb[...] = jnp.zeros_like(cb)

    for s in range(T):
        g_f = gf_ref[s] + jnp.dot(hf[...].astype(jnp.bfloat16), whh_f_ref[...],
                                  preferred_element_type=jnp.float32)
        h_new, c_new = _lstm_cell(g_f, cf[...], H)
        hf[...] = h_new
        cf[...] = c_new
        of_ref[s] = h_new.astype(of_ref.dtype)

        tb = T - 1 - s
        g_b = gb_ref[tb] + jnp.dot(hb[...].astype(jnp.bfloat16), whh_b_ref[...],
                                   preferred_element_type=jnp.float32)
        h_nb, c_nb = _lstm_cell(g_b, cb[...], H)
        hb[...] = h_nb
        cb[...] = c_nb
        ob_ref[tb] = h_nb.astype(ob_ref.dtype)


def bilstm_layer(gates_f, gates_b, whh_f, whh_b):
    """gates_*: (T, B, 4H) = x @ W_ih + b precomputed. Returns (T,B,H) bf16 fwd/bwd."""
    T, B, G = gates_f.shape
    H = G // 4
    per_row = (2 * 2 * T * G * 4     # gf + gb blocks, double-buffered, f32
               + 2 * 2 * T * H * 2   # of + ob blocks, double-buffered, bf16
               + 4 * H * 4)          # h/c scratch
    tb_cap = max(16, (_VMEM_LIMIT * 6 // 10) // max(per_row, 1))
    TB = _pick_tile(B, int(min(tb_cap, 256)), 16)
    grid = (B // TB,)
    kernel = functools.partial(_bilstm_kernel, T=T, H=H)
    return pl.pallas_call(
        kernel,
        out_shape=(jax.ShapeDtypeStruct((T, B, H), jnp.bfloat16),
                   jax.ShapeDtypeStruct((T, B, H), jnp.bfloat16)),
        grid=grid,
        in_specs=[pl.BlockSpec((T, TB, G), lambda i: (0, i, 0)),
                  pl.BlockSpec((T, TB, G), lambda i: (0, i, 0)),
                  pl.BlockSpec((H, G), lambda i: (0, 0)),
                  pl.BlockSpec((H, G), lambda i: (0, 0))],
        out_specs=(pl.BlockSpec((T, TB, H), lambda i: (0, i, 0)),
                   pl.BlockSpec((T, TB, H), lambda i: (0, i, 0))),
        scratch_shapes=[pltpu.VMEM((TB, H), jnp.float32) for _ in range(4)],
        compiler_params=_cparams(("parallel",)),
    )(gates_f, gates_b,
      whh_f.astype(jnp.bfloat16), whh_b.astype(jnp.bfloat16))


def _dec_lstm_kernel(*refs, L, T, H):
    # refs = g0, ctxg, whh0, (wih_l, b_l, whh_l) for l=1..L-1, o_ref, h, c, [hseq]
    g0_ref, ctxg_ref, whh0_ref = refs[0], refs[1], refs[2]
    pos = 3
    extra = []
    for _ in range(1, L):
        extra.append((refs[pos], refs[pos + 1], refs[pos + 2]))
        pos += 3
    o_ref = refs[pos]
    pos += 1
    h_sc, c_sc = refs[pos], refs[pos + 1]
    pos += 2
    hseq_sc = refs[pos] if L > 1 else None

    def run_layer(get_gates, whh_ref, write):
        h_sc[...] = jnp.zeros_like(h_sc)
        c_sc[...] = jnp.zeros_like(c_sc)
        for t in range(T):                                  # fully unrolled
            gates = get_gates(t) + jnp.dot(h_sc[...].astype(jnp.bfloat16),
                                           whh_ref[...],
                                           preferred_element_type=jnp.float32)
            h_new, c_new = _lstm_cell(gates, c_sc[...], H)
            h_sc[...] = h_new
            c_sc[...] = c_new
            write(t, h_new)

    def write_out(t, h):
        o_ref[t] = h.astype(o_ref.dtype)

    if L > 1:
        def write_seq(t, h):
            hseq_sc[t] = h.astype(hseq_sc.dtype)

        # layer 0: precomputed word-emb gates + time-invariant context gates
        run_layer(lambda t: g0_ref[t] + ctxg_ref[...], whh0_ref, write_seq)
        for l in range(1, L):
            wih_ref, b_ref, whh_ref = extra[l - 1]

            def gates_l(t, wih_ref=wih_ref, b_ref=b_ref):
                # per-timestep input projection from the bf16 hidden-seq scratch
                return (jnp.dot(hseq_sc[t], wih_ref[...],
                                preferred_element_type=jnp.float32) + b_ref[...])

            write = write_out if l == L - 1 else write_seq
            run_layer(gates_l, whh_ref, write)
    else:
        run_layer(lambda t: g0_ref[t] + ctxg_ref[...], whh0_ref, write_out)


def decoder_lstm(g0, ctxg, whh0, extra_layers):
    """Fused multi-layer decoder LSTM.
    g0: (T, N, 4H) precomputed word-emb gates (+bias); ctxg: (N, 4H) context gates.
    extra_layers: list of (wih (H,4H), b (1,4H), whh (H,4H)) for layers >= 1."""
    T, N, G = g0.shape
    H = G // 4
    L = 1 + len(extra_layers)
    per_row = (2 * T * G * 4             # g0 block, double-buffered, f32
               + 2 * G * 4               # ctxg block, f32
               + 2 * T * H * 2           # output block, double-buffered, bf16
               + 2 * 2 * H * 4           # h/c scratch f32
               + (T * H * 2 if L > 1 else 0))   # bf16 hidden-seq scratch
    nb_cap = max(16, (_VMEM_LIMIT * 6 // 10) // max(per_row, 1))
    NB = _pick_tile(N, int(min(nb_cap, 256)), 16)
    grid = (N // NB,)

    inputs = [g0, ctxg, whh0.astype(jnp.bfloat16)]
    in_specs = [pl.BlockSpec((T, NB, G), lambda i: (0, i, 0)),
                pl.BlockSpec((NB, G), lambda i: (i, 0)),
                pl.BlockSpec((H, G), lambda i: (0, 0))]
    for (wih, b, whh) in extra_layers:
        inputs += [wih.astype(jnp.bfloat16), b, whh.astype(jnp.bfloat16)]
        in_specs += [pl.BlockSpec((H, G), lambda i: (0, 0)),
                     pl.BlockSpec((1, G), lambda i: (0, 0)),
                     pl.BlockSpec((H, G), lambda i: (0, 0))]

    scratch = [pltpu.VMEM((NB, H), jnp.float32),
               pltpu.VMEM((NB, H), jnp.float32)]
    if L > 1:
        scratch.append(pltpu.VMEM((T, NB, H), jnp.bfloat16))

    kernel = functools.partial(_dec_lstm_kernel, L=L, T=T, H=H)
    return pl.pallas_call(
        kernel,
        out_shape=jax.ShapeDtypeStruct((T, N, H), jnp.bfloat16),
        grid=grid,
        in_specs=in_specs,
        out_specs=pl.BlockSpec((T, NB, H), lambda i: (0, i, 0)),
        scratch_shapes=scratch,
        compiler_params=_cparams(("parallel",)),
    )(*inputs)


# ----------------------------------------------------------------------------
# Fused vocab head: tiled logits (bf16) + online log-sum-exp + per-row NLL
# ----------------------------------------------------------------------------

def _vocab_head_kernel(x_ref, w_ref, b_ref, lbl_ref, logits_ref, nll_ref,
                       m_sc, l_sc, g_sc, *, TN):
    j = pl.program_id(1)
    logits = (jnp.dot(x_ref[...].astype(jnp.bfloat16), w_ref[...],
                      preferred_element_type=jnp.float32) + b_ref[...])
    logits_ref[...] = logits.astype(logits_ref.dtype)

    @pl.when(j == 0)
    def _():
        m_sc[...] = jnp.full(m_sc.shape, -jnp.inf, m_sc.dtype)
        l_sc[...] = jnp.zeros_like(l_sc)
        g_sc[...] = jnp.zeros_like(g_sc)

    # gather the logit at the label position (one vocab tile will match)
    cols = j * TN + lax.broadcasted_iota(jnp.int32, logits.shape, 1)
    hit = cols == lbl_ref[...]
    g_sc[...] += jnp.sum(jnp.where(hit, logits, 0.0), axis=-1, keepdims=True)

    # online log-sum-exp across vocab tiles (kept f32)
    m_prev = m_sc[...]
    m_new = jnp.maximum(m_prev, jnp.max(logits, axis=-1, keepdims=True))
    l_sc[...] = (l_sc[...] * jnp.exp(m_prev - m_new)
                 + jnp.sum(jnp.exp(logits - m_new), axis=-1, keepdims=True))
    m_sc[...] = m_new

    @pl.when(j == pl.num_programs(1) - 1)
    def _():
        nll_ref[...] = m_sc[...] + jnp.log(l_sc[...]) - g_sc[...]


def vocab_head(x, w_bf16, b, labels):
    M, K = x.shape
    V = w_bf16.shape[1]
    gran_m = 16 if x.dtype == jnp.bfloat16 else 8
    TM = _pick_tile(M, 512, gran_m)
    TN = _pick_tile(V, 2048, 128)
    grid = (M // TM, V // TN)
    kernel = functools.partial(_vocab_head_kernel, TN=TN)
    return pl.pallas_call(
        kernel,
        out_shape=(jax.ShapeDtypeStruct((M, V), jnp.bfloat16),   # logits
                   jax.ShapeDtypeStruct((M, 1), jnp.float32)),   # per-row NLL
        grid=grid,
        in_specs=[pl.BlockSpec((TM, K), lambda i, j: (i, 0)),
                  pl.BlockSpec((K, TN), lambda i, j: (0, j)),
                  pl.BlockSpec((1, TN), lambda i, j: (0, j)),
                  pl.BlockSpec((TM, 1), lambda i, j: (i, 0))],
        out_specs=(pl.BlockSpec((TM, TN), lambda i, j: (i, j)),
                   pl.BlockSpec((TM, 1), lambda i, j: (i, 0))),
        scratch_shapes=[pltpu.VMEM((TM, 1), jnp.float32) for _ in range(3)],
        compiler_params=_cparams(("parallel", "arbitrary")),
        cost_estimate=pl.CostEstimate(
            flops=2 * M * K * V + 8 * M * V,
            transcendentals=M * V,
            bytes_accessed=2 * M * V + 2 * K * V
            + x.dtype.itemsize * M * K + 12 * M),
    )(x, w_bf16, b, labels)


# ----------------------------------------------------------------------------
# Parameter construction (deterministic, synthetic; same structure as before)
# ----------------------------------------------------------------------------

def _init_lstm(keys, din, h):
    s = 1.0 / math.sqrt(h)
    w_ih = jax.random.uniform(keys[0], (din, 4 * h), jnp.float32, -s, s)
    w_hh = jax.random.uniform(keys[1], (h, 4 * h), jnp.float32, -s, s)
    b = jax.random.uniform(keys[2], (1, 4 * h), jnp.float32, -s, s)  # b_ih + b_hh folded
    return (w_ih, w_hh, b)


def init_params(key, c_backbone, dim, vocab, num_lstm_layers):
    ks = list(jax.random.split(key, 64))
    it = iter(ks)
    p = {}

    s = 1.0 / math.sqrt(c_backbone)
    p['img_w'] = jax.random.uniform(next(it), (c_backbone, dim), jnp.float32, -s, s)
    p['img_b'] = jnp.zeros((1, dim), jnp.float32)
    p['img_gamma'] = jnp.ones((1, dim), jnp.float32)
    p['img_beta'] = jnp.zeros((1, dim), jnp.float32)
    p['img_mean'] = jnp.zeros((1, dim), jnp.float32)
    p['img_var'] = jnp.ones((1, dim), jnp.float32)

    ctx = []
    for l in range(num_lstm_layers):
        din = dim if l == 0 else 2 * dim
        fwd = _init_lstm([next(it), next(it), next(it)], din, dim)
        bwd = _init_lstm([next(it), next(it), next(it)], din, dim)
        ctx.append((fwd, bwd))
    p['ctx_lstm'] = ctx

    s = 1.0 / math.sqrt(3 * dim)
    p['gl_w'] = jax.random.uniform(next(it), (3 * dim, dim), jnp.float32, -s, s)
    p['gl_b'] = jnp.zeros((1, dim), jnp.float32)
    p['gl_gamma'] = jnp.ones((1, dim), jnp.float32)
    p['gl_beta'] = jnp.zeros((1, dim), jnp.float32)
    p['gl_mean'] = jnp.zeros((1, dim), jnp.float32)
    p['gl_var'] = jnp.ones((1, dim), jnp.float32)

    p['embed'] = jax.random.normal(next(it), (vocab, dim), jnp.float32) * 0.02
    dec = []
    for l in range(num_lstm_layers):
        din = 2 * dim if l == 0 else dim
        dec.append(_init_lstm([next(it), next(it), next(it)], din, dim))
    p['dec_lstm'] = dec
    s = 1.0 / math.sqrt(dim)
    p['out_w'] = jax.random.uniform(next(it), (dim, vocab), jnp.float32, -s, s)
    p['out_b'] = jnp.zeros((1, vocab), jnp.float32)
    return p


def _fold_bn(w, b, gamma, beta, mean, var, eps=1e-5):
    """Fold eval-mode BatchNorm1d into the preceding Linear (same eps as torch)."""
    scale = gamma * lax.rsqrt(var + eps)         # (1, dout)
    w_f = (w * scale).astype(jnp.bfloat16)
    b_f = ((b - mean) * scale + beta).astype(jnp.float32)
    return w_f, b_f


# ----------------------------------------------------------------------------
# GLACNet forward
# ----------------------------------------------------------------------------

def glacnet_forward(p, states, states_mask, label_ids, label_mask):
    B, S, C, IH, IW = states.shape
    dim = p['img_w'].shape[1]

    # ---- ImageEncoder -------------------------------------------------------
    # TODO(synk): frozen ResNet-152 backbone substituted by global-average-pool
    # over spatial positions; the Linear + (folded) BatchNorm head is kept.
    img_w, img_b = _fold_bn(p['img_w'], p['img_b'], p['img_gamma'], p['img_beta'],
                            p['img_mean'], p['img_var'])
    x_nhwc = jnp.transpose(states, (0, 1, 3, 4, 2)).reshape(B * S, IH * IW, C)
    feats = image_encode(x_nhwc, img_w, img_b)                    # (B*S, dim)
    features = feats.reshape(B, S, dim) * states_mask[..., None]
    # TODO(synk): pack_padded_sequence not reproduced; padded frames are zeroed.

    # ---- GLocalContext: bi-LSTM (hoisted input proj, K-split, no concats) ---
    feats_tm = jnp.transpose(features, (1, 0, 2))                 # (S, B, dim)
    feats_flat = feats_tm.reshape(S * B, dim)
    pieces = [feats_flat]                                         # K-split layer input
    for (pf, pb) in p['ctx_lstm']:
        wih_f, whh_f, b_f = pf
        wih_b, whh_b, b_b = pb
        sizes = [x.shape[1] for x in pieces]
        gf = linear(pieces, _split_rows(wih_f, sizes), b_f).reshape(S, B, 4 * dim)
        gb = linear(pieces, _split_rows(wih_b, sizes), b_b).reshape(S, B, 4 * dim)
        of, ob = bilstm_layer(gf, gb, whh_f, whh_b)               # (S,B,dim) bf16 each
        pieces = [of.reshape(S * B, dim), ob.reshape(S * B, dim)]
        # TODO(synk): inter-layer LSTM dropout skipped (eval-mode semantics).

    gl_w, gl_b = _fold_bn(p['gl_w'], p['gl_b'], p['gl_gamma'], p['gl_beta'],
                          p['gl_mean'], p['gl_var'])
    gl_x = pieces + [feats_flat]                                  # [fwd, bwd, feats]
    gl_w_pieces = _split_rows(gl_w, [x.shape[1] for x in gl_x])
    context_flat = linear(gl_x, gl_w_pieces, gl_b)                # (S*B, dim) f32
    context = jnp.transpose(context_flat.reshape(S, B, dim), (1, 0, 2))

    end_context = context[:, 1:, :]                               # (B, S-1, dim)

    # ---- ContextLSTMText decoder (teacher forcing, fused layer stack) -------
    # TODO(synk): input/target alignment follows the reference decoder as-is
    # (label_ids are both the teacher-forced inputs and the loss targets).
    Bm, Sm1, T = label_ids.shape
    N = Bm * Sm1
    V = p['embed'].shape[0]

    ids_tm = label_ids.reshape(N, T).T                            # (T, N) tiny int transpose
    emb_tm = p['embed'][ids_tm]                                   # (T, N, dim); embed_dropout: eval
    wih0, whh0, b0 = p['dec_lstm'][0]
    g0 = linear([emb_tm.reshape(T * N, dim)], [wih0[:dim]], b0).reshape(T, N, 4 * dim)
    zero_b = jnp.zeros((1, 4 * dim), jnp.float32)
    ctxg = linear([end_context.reshape(N, dim)], [wih0[dim:]], zero_b)  # (N, 4H)
    extra_layers = [(wih, b, whh) for (wih, whh, b) in p['dec_lstm'][1:]]
    dec_out = decoder_lstm(g0, ctxg, whh0, extra_layers)          # (T, N, dim) bf16
    # TODO(synk): decoder output stays time-major; the bf16 (N,T) relayout below
    # is half the old f32 round trip (fusing it into the kernel store needs a
    # mid-dim dynamic store that is fragile to lower).
    dec_bm = jnp.transpose(dec_out, (1, 0, 2)).reshape(N * T, dim)

    labels_rows = label_ids.reshape(N * T, 1).astype(jnp.int32)
    # TODO(synk): labels outside [0, V) (ignore-index) rely on label_mask == 0.
    logits_flat, nll_rows = vocab_head(dec_bm, p['out_w'].astype(jnp.bfloat16),
                                       p['out_b'], labels_rows)
    logits = logits_flat.reshape(Bm, Sm1, T, V)

    nll = nll_rows[:, 0].reshape(Bm, Sm1, T)
    loss = jnp.sum(nll * label_mask) / jnp.maximum(jnp.sum(label_mask), 1.0)

    return {'features': features, 'context': context, 'logits': logits, 'loss': loss}


# ----------------------------------------------------------------------------
# Demo
# ----------------------------------------------------------------------------

if __name__ == "__main__":
    B, S, C, HW = 2, 5, 4, 16          # 2 stories, 5 images each, tiny "images"
    DIM, T, VOCAB, NL = 32, 8, 64, 2   # hidden dim, tokens/sentence, vocab, lstm layers

    key = jax.random.PRNGKey(0)
    k_states, k_ids, k_params = jax.random.split(key, 3)

    states = jax.random.normal(k_states, (B, S, C, HW, HW), jnp.float32)  # (B,S,C,H,W)
    states_mask = jnp.ones((B, S), jnp.float32)
    label_ids = jax.random.randint(k_ids, (B, S - 1, T), 0, VOCAB)
    label_mask = jnp.ones((B, S - 1, T), jnp.float32)

    params = init_params(k_params, C, DIM, VOCAB, NL)

    fwd = jax.jit(glacnet_forward)
    out = jax.block_until_ready(fwd(params, states, states_mask, label_ids, label_mask))

    assert out['features'].shape == (B, S, DIM)
    assert out['context'].shape == (B, S, DIM)
    assert out['logits'].shape == (B, S - 1, T, VOCAB)
    assert bool(jnp.isfinite(out['loss']))
    print("KERNEL_OK")
</pallas_src>

<mosaic_0001>
module attributes {stable_mosaic.version = 11 : i64} {
  func.func @_img_encode_kernel(%arg0: i32, %arg1: memref<10x256x4xf32, #tpu.memory_space<vmem>>, %arg2: memref<4x32xbf16, #tpu.memory_space<vmem>>, %arg3: memref<1x32xf32, #tpu.memory_space<vmem>>, %arg4: memref<10x32xf32, #tpu.memory_space<vmem>>) attributes {dimension_semantics = [#tpu.dimension_semantics<parallel>], iteration_bounds = array<i64: 1>, scalar_prefetch = 0 : i64, scratch_operands = 0 : i64, tpu.core_type = #tpu.core_type<tc>, window_params = [{transform_indices = @transform_0, window_bounds = array<i64: 10, 256, 4>}, {pipeline_mode = #tpu.pipeline_mode<synchronous>, transform_indices = @transform_1, window_bounds = array<i64: 4, 32>}, {pipeline_mode = #tpu.pipeline_mode<synchronous>, transform_indices = @transform_2, window_bounds = array<i64: 1, 32>}, {transform_indices = @transform_3, window_bounds = array<i64: 10, 32>}]} {
    %c0 = arith.constant 0 : index
    %c0_0 = arith.constant 0 : index
    %c0_1 = arith.constant 0 : index
    %0 = vector.load %arg1[%c0, %c0_0, %c0_1] : memref<10x256x4xf32, #tpu.memory_space<vmem>>, vector<10x256x4xf32>
    %cst = arith.constant dense<0.000000e+00> : vector<10x4xf32>
    %1 = vector.multi_reduction <add>, %0, %cst [1] : vector<10x256x4xf32> to vector<10x4xf32>
    %cst_2 = arith.constant 2.560000e+02 : f32
    %2 = vector.broadcast %cst_2 : f32 to vector<10x4xf32>
    %3 = arith.divf %1, %2 : vector<10x4xf32>
    %4 = arith.truncf %3 : vector<10x4xf32> to vector<10x4xbf16>
    %c0_3 = arith.constant 0 : index
    %c0_4 = arith.constant 0 : index
    %5 = vector.load %arg2[%c0_3, %c0_4] : memref<4x32xbf16, #tpu.memory_space<vmem>>, vector<4x32xbf16>
    %cst_5 = arith.constant dense<0.000000e+00> : vector<10x32xf32>
    %6 = tpu.matmul %4, %5, %cst_5 {dimension_numbers = #tpu.dot_dimension_numbers<[1], [0], [0], [1], [0, 0, 1, 1], [], []>} : vector<10x4xbf16>, vector<4x32xbf16>, vector<10x32xf32> -> vector<10x32xf32>
    %c0_6 = arith.constant 0 : index
    %c0_7 = arith.constant 0 : index
    %7 = vector.load %arg3[%c0_6, %c0_7] : memref<1x32xf32, #tpu.memory_space<vmem>>, vector<1x32xf32>
    %8 = vector.broadcast %7 : vector<1x32xf32> to vector<10x32xf32>
    %9 = arith.addf %6, %8 : vector<10x32xf32>
    %c0_8 = arith.constant 0 : index
    %c0_9 = arith.constant 0 : index
    %10 = vector.load %arg4[%c0_8, %c0_9] : memref<10x32xf32, #tpu.memory_space<vmem>>, vector<10x32xf32>
    tpu.vector_store %arg4[%c0_8, %c0_9], %9 {strides = array<i32>} : memref<10x32xf32, #tpu.memory_space<vmem>>, vector<10x32xf32>,
    return
  }
  func.func @transform_0(%arg0: i32) -> (i32, i32, i32) {
    %c0_i32 = arith.constant 0 : i32
    %c0_i32_0 = arith.constant 0 : i32
    %c0_i32_1 = arith.constant 0 : i32
    return %arg0, %c0_i32, %c0_i32_0 : i32, i32, i32
  }
  func.func @transform_1(%arg0: i32) -> (i32, i32) {
    %c0_i32 = arith.constant 0 : i32
    %c0_i32_0 = arith.constant 0 : i32
    %c0_i32_1 = arith.constant 0 : i32
    return %c0_i32, %c0_i32_0 : i32, i32
  }
  func.func @transform_2(%arg0: i32) -> (i32, i32) {
    %c0_i32 = arith.constant 0 : i32
    %c0_i32_0 = arith.constant 0 : i32
    %c0_i32_1 = arith.constant 0 : i32
    return %c0_i32, %c0_i32_0 : i32, i32
  }
  func.func @transform_3(%arg0: i32) -> (i32, i32) {
    %c0_i32 = arith.constant 0 : i32
    %c0_i32_0 = arith.constant 0 : i32
    return %arg0, %c0_i32 : i32, i32
  }
}

module attributes {stable_mosaic.version = 11 : i64} {
  func.func @_linear_kernel(%arg0: i32, %arg1: i32, %arg2: memref<10x32xf32, #tpu.memory_space<vmem>>, %arg3: memref<32x128xbf16, #tpu.memory_space<vmem>>, %arg4: memref<1x128xf32, #tpu.memory_space<vmem>>, %arg5: memref<10x128xf32, #tpu.memory_space<vmem>>) attributes {dimension_semantics = [#tpu.dimension_semantics<parallel>, #tpu.dimension_semantics<parallel>], iteration_bounds = array<i64: 1, 1>, scalar_prefetch = 0 : i64, scratch_operands = 0 : i64, tpu.core_type = #tpu.core_type<tc>, window_params = [{transform_indices = @transform_0, window_bounds = array<i64: 10, 32>}, {transform_indices = @transform_1, window_bounds = array<i64: 32, 128>}, {transform_indices = @transform_2, window_bounds = array<i64: 1, 128>}, {transform_indices = @transform_3, window_bounds = array<i64: 10, 128>}]} {
    %c0 = arith.constant 0 : index
    %c0_0 = arith.constant 0 : index
    %0 = vector.load %arg2[%c0, %c0_0] : memref<10x32xf32, #tpu.memory_space<vmem>>, vector<10x32xf32>
    %1 = arith.truncf %0 : vector<10x32xf32> to vector<10x32xbf16>
    %c0_1 = arith.constant 0 : index
    %c0_2 = arith.constant 0 : index
    %2 = vector.load %arg3[%c0_1, %c0_2] : memref<32x128xbf16, #tpu.memory_space<vmem>>, vector<32x128xbf16>
    %cst = arith.constant dense<0.000000e+00> : vector<10x128xf32>
    %3 = tpu.matmul %1, %2, %cst {dimension_numbers = #tpu.dot_dimension_numbers<[1], [0], [0], [1], [0, 0, 1, 1], [], []>} : vector<10x32xbf16>, vector<32x128xbf16>, vector<10x128xf32> -> vector<10x128xf32>
    %c0_3 = arith.constant 0 : index
    %c0_4 = arith.constant 0 : index
    %4 = vector.load %arg4[%c0_3, %c0_4] : memref<1x128xf32, #tpu.memory_space<vmem>>, vector<1x128xf32>
    %5 = vector.broadcast %4 : vector<1x128xf32> to vector<10x128xf32>
    %6 = arith.addf %3, %5 : vector<10x128xf32>
    %c0_5 = arith.constant 0 : index
    %c0_6 = arith.constant 0 : index
    %7 = vector.load %arg5[%c0_5, %c0_6] : memref<10x128xf32, #tpu.memory_space<vmem>>, vector<10x128xf32>
    tpu.vector_store %arg5[%c0_5, %c0_6], %6 {strides = array<i32>} : memref<10x128xf32, #tpu.memory_space<vmem>>, vector<10x128xf32>,
    return
  }
  func.func @transform_0(%arg0: i32, %arg1: i32) -> (i32, i32) {
    %c0_i32 = arith.constant 0 : i32
    %c0_i32_0 = arith.constant 0 : i32
    return %arg0, %c0_i32 : i32, i32
  }
  func.func @transform_1(%arg0: i32, %arg1: i32) -> (i32, i32) {
    %c0_i32 = arith.constant 0 : i32
    %c0_i32_0 = arith.constant 0 : i32
    return %c0_i32, %arg1 : i32, i32
  }
  func.func @transform_2(%arg0: i32, %arg1: i32) -> (i32, i32) {
    %c0_i32 = arith.constant 0 : i32
    %c0_i32_0 = arith.constant 0 : i32
    return %c0_i32, %arg1 : i32, i32
  }
  func.func @transform_3(%arg0: i32, %arg1: i32) -> (i32, i32) {
    %c0_i32 = arith.constant 0 : i32
    return %arg0, %arg1 : i32, i32
  }
}

module attributes {stable_mosaic.version = 11 : i64} {
  func.func @_bilstm_kernel(%arg0: i32, %arg1: memref<5x2x128xf32, #tpu.memory_space<vmem>>, %arg2: memref<5x2x128xf32, #tpu.memory_space<vmem>>, %arg3: memref<32x128xbf16, #tpu.memory_space<vmem>>, %arg4: memref<32x128xbf16, #tpu.memory_space<vmem>>, %arg5: memref<5x2x32xbf16, #tpu.memory_space<vmem>>, %arg6: memref<5x2x32xbf16, #tpu.memory_space<vmem>>, %arg7: memref<2x32xf32, #tpu.memory_space<vmem>>, %arg8: memref<2x32xf32, #tpu.memory_space<vmem>>, %arg9: memref<2x32xf32, #tpu.memory_space<vmem>>, %arg10: memref<2x32xf32, #tpu.memory_space<vmem>>) attributes {dimension_semantics = [#tpu.dimension_semantics<parallel>], iteration_bounds = array<i64: 1>, scalar_prefetch = 0 : i64, scratch_operands = 4 : i64, tpu.core_type = #tpu.core_type<tc>, window_params = [{transform_indices = @transform_0, window_bounds = array<i64: 5, 2, 128>}, {transform_indices = @transform_1, window_bounds = array<i64: 5, 2, 128>}, {pipeline_mode = #tpu.pipeline_mode<synchronous>, transform_indices = @transform_2, window_bounds = array<i64: 32, 128>}, {pipeline_mode = #tpu.pipeline_mode<synchronous>, transform_indices = @transform_3, window_bounds = array<i64: 32, 128>}, {transform_indices = @transform_4, window_bounds = array<i64: 5, 2, 32>}, {transform_indices = @transform_5, window_bounds = array<i64: 5, 2, 32>}]} {
    %cst = arith.constant 0.000000e+00 : f32
    %0 = vector.broadcast %cst : f32 to vector<2x32xf32>
    %c0 = arith.constant 0 : index
    %c0_0 = arith.constant 0 : index
    %1 = vector.load %arg7[%c0, %c0_0] : memref<2x32xf32, #tpu.memory_space<vmem>>, vector<2x32xf32>
    tpu.vector_store %arg7[%c0, %c0_0], %0 {strides = array<i32>} : memref<2x32xf32, #tpu.memory_space<vmem>>, vector<2x32xf32>,
    %cst_1 = arith.constant 0.000000e+00 : f32
    %2 = vector.broadcast %cst_1 : f32 to vector<2x32xf32>
    %c0_2 = arith.constant 0 : index
    %c0_3 = arith.constant 0 : index
    %3 = vector.load %arg8[%c0_2, %c0_3] : memref<2x32xf32, #tpu.memory_space<vmem>>, vector<2x32xf32>
    tpu.vector_store %arg8[%c0_2, %c0_3], %2 {strides = array<i32>} : memref<2x32xf32, #tpu.memory_space<vmem>>, vector<2x32xf32>,
    %cst_4 = arith.constant 0.000000e+00 : f32
    %4 = vector.broadcast %cst_4 : f32 to vector<2x32xf32>
    %c0_5 = arith.constant 0 : index
    %c0_6 = arith.constant 0 : index
    %5 = vector.load %arg9[%c0_5, %c0_6] : memref<2x32xf32, #tpu.memory_space<vmem>>, vector<2x32xf32>
    tpu.vector_store %arg9[%c0_5, %c0_6], %4 {strides = array<i32>} : memref<2x32xf32, #tpu.memory_space<vmem>>, vector<2x32xf32>,
    %cst_7 = arith.constant 0.000000e+00 : f32
    %6 = vector.broadcast %cst_7 : f32 to vector<2x32xf32>
    %c0_8 = arith.constant 0 : index
    %c0_9 = arith.constant 0 : index
    %7 = vector.load %arg10[%c0_8, %c0_9] : memref<2x32xf32, #tpu.memory_space<vmem>>, vector<2x32xf32>
    tpu.vector_store %arg10[%c0_8, %c0_9], %6 {strides = array<i32>} : memref<2x32xf32, #tpu.memory_space<vmem>>, vector<2x32xf32>,
    %c0_10 = arith.constant 0 : index
    %c0_11 = arith.constant 0 : index
    %c0_12 = arith.constant 0 : index
    %8 = vector.load %arg1[%c0_10, %c0_11, %c0_12] : memref<5x2x128xf32, #tpu.memory_space<vmem>>, vector<1x2x128xf32>
    %9 = vector.shape_cast %8 : vector<1x2x128xf32> to vector<2x128xf32>
    %c0_13 = arith.constant 0 : index
    %c0_14 = arith.constant 0 : index
    %10 = vector.load %arg7[%c0_13, %c0_14] : memref<2x32xf32, #tpu.memory_space<vmem>>, vector<2x32xf32>
    %11 = arith.truncf %10 : vector<2x32xf32> to vector<2x32xbf16>
    %c0_15 = arith.constant 0 : index
    %c0_16 = arith.constant 0 : index
    %12 = vector.load %arg3[%c0_15, %c0_16] : memref<32x128xbf16, #tpu.memory_space<vmem>>, vector<32x128xbf16>
    %cst_17 = arith.constant dense<0.000000e+00> : vector<2x128xf32>
    %13 = tpu.matmul %11, %12, %cst_17 {dimension_numbers = #tpu.dot_dimension_numbers<[1], [0], [0], [1], [0, 0, 1, 1], [], []>} : vector<2x32xbf16>, vector<32x128xbf16>, vector<2x128xf32> -> vector<2x128xf32>
    %14 = arith.addf %9, %13 : vector<2x128xf32>
    %c0_18 = arith.constant 0 : index
    %c0_19 = arith.constant 0 : index
    %15 = vector.load %arg8[%c0_18, %c0_19] : memref<2x32xf32, #tpu.memory_space<vmem>>, vector<2x32xf32>
    %16 = vector.extract_strided_slice %14 {offsets = [0, 0], sizes = [2, 32], strides = [1, 1]} : vector<2x128xf32> to vector<2x32xf32>
    %17 = arith.negf %16 : vector<2x32xf32>
    %18 = math.exp %17 : vector<2x32xf32>
    %cst_20 = arith.constant 1.000000e+00 : f32
    %19 = vector.broadcast %cst_20 : f32 to vector<2x32xf32>
    %20 = arith.addf %19, %18 : vector<2x32xf32>
    %21 = arith.divf %19, %20 : vector<2x32xf32>
    %22 = vector.extract_strided_slice %14 {offsets = [0, 32], sizes = [2, 32], strides = [1, 1]} : vector<2x128xf32> to vector<2x32xf32>
    %23 = arith.negf %22 : vector<2x32xf32>
    %24 = math.exp %23 : vector<2x32xf32>
    %cst_21 = arith.constant 1.000000e+00 : f32
    %25 = vector.broadcast %cst_21 : f32 to vector<2x32xf32>
    %26 = arith.addf %25, %24 : vector<2x32xf32>
    %27 = arith.divf %25, %26 : vector<2x32xf32>
    %28 = vector.extract_strided_slice %14 {offsets = [0, 64], sizes = [2, 32], strides = [1, 1]} : vector<2x128xf32> to vector<2x32xf32>
    %29 = math.tanh %28 : vector<2x32xf32>
    %30 = vector.extract_strided_slice %14 {offsets = [0, 96], sizes = [2, 32], strides = [1, 1]} : vector<2x128xf32> to vector<2x32xf32>
    %31 = arith.negf %30 : vector<2x32xf32>
    %32 = math.exp %31 : vector<2x32xf32>
    %cst_22 = arith.constant 1.000000e+00 : f32
    %33 = vector.broadcast %cst_22 : f32 to vector<2x32xf32>
    %34 = arith.addf %33, %32 : vector<2x32xf32>
    %35 = arith.divf %33, %34 : vector<2x32xf32>
    %36 = arith.mulf %27, %15 : vector<2x32xf32>
    %37 = arith.mulf %21, %29 : vector<2x32xf32>
    %38 = arith.addf %36, %37 : vector<2x32xf32>
    %39 = math.tanh %38 : vector<2x32xf32>
    %40 = arith.mulf %35, %39 : vector<2x32xf32>
    %c0_23 = arith.constant 0 : index
    %c0_24 = arith.constant 0 : index
    %41 = vector.load %arg7[%c0_23, %c0_24] : memref<2x32xf32, #tpu.memory_space<vmem>>, vector<2x32xf32>
    tpu.vector_store %arg7[%c0_23, %c0_24], %40 {strides = array<i32>} : memref<2x32xf32, #tpu.memory_space<vmem>>, vector<2x32xf32>,
    %c0_25 = arith.constant 0 : index
    %c0_26 = arith.constant 0 : index
    %42 = vector.load %arg8[%c0_25, %c0_26] : memref<2x32xf32, #tpu.memory_space<vmem>>, vector<2x32xf32>
    tpu.vector_store %arg8[%c0_25, %c0_26], %38 {strides = array<i32>} : memref<2x32xf32, #tpu.memory_space<vmem>>, vector<2x32xf32>,
    %43 = arith.truncf %40 : vector<2x32xf32> to vector<2x32xbf16>
    %c0_27 = arith.constant 0 : index
    %c0_28 = arith.constant 0 : index
    %c0_29 = arith.constant 0 : index
    %44 = vector.load %arg5[%c0_27, %c0_28, %c0_29] : memref<5x2x32xbf16, #tpu.memory_space<vmem>>, vector<1x2x32xbf16>
    %45 = vector.shape_cast %44 : vector<1x2x32xbf16> to vector<2x32xbf16>
    %46 = vector.shape_cast %43 : vector<2x32xbf16> to vector<1x2x32xbf16>
    tpu.vector_store %arg5[%c0_27, %c0_28, %c0_29], %46 {strides = array<i32>} : memref<5x2x32xbf16, #tpu.memory_space<vmem>>, vector<1x2x32xbf16>,
    %c4 = arith.constant 4 : index
    %c0_30 = arith.constant 0 : index
    %c0_31 = arith.constant 0 : index
    %47 = vector.load %arg2[%c4, %c0_30, %c0_31] : memref<5x2x128xf32, #tpu.memory_space<vmem>>, vector<1x2x128xf32>
    %48 = vector.shape_cast %47 : vector<1x2x128xf32> to vector<2x128xf32>
    %c0_32 = arith.constant 0 : index
    %c0_33 = arith.constant 0 : index
    %49 = vector.load %arg9[%c0_32, %c0_33] : memref<2x32xf32, #tpu.memory_space<vmem>>, vector<2x32xf32>
    %50 = arith.truncf %49 : vector<2x32xf32> to vector<2x32xbf16>
    %c0_34 = arith.constant 0 : index
    %c0_35 = arith.constant 0 : index
    %51 = vector.load %arg4[%c0_34, %c0_35] : memref<32x128xbf16, #tpu.memory_space<vmem>>, vector<32x128xbf16>
    %cst_36 = arith.constant dense<0.000000e+00> : vector<2x128xf32>
    %52 = tpu.matmul %50, %51, %cst_36 {dimension_numbers = #tpu.dot_dimension_numbers<[1], [0], [0], [1], [0, 0, 1, 1], [], []>} : vector<2x32xbf16>, vector<32x128xbf16>, vector<2x128xf32> -> vector<2x128xf32>
    %53 = arith.addf %48, %52 : vector<2x128xf32>
    %c0_37 = arith.constant 0 : index
    %c0_38 = arith.constant 0 : index
    %54 = vector.load %arg10[%c0_37, %c0_38] : memref<2x32xf32, #tpu.memory_space<vmem>>, vector<2x32xf32>
    %55 = vector.extract_strided_slice %53 {offsets = [0, 0], sizes = [2, 32], strides = [1, 1]} : vector<2x128xf32> to vector<2x32xf32>
    %56 = arith.negf %55 : vector<2x32xf32>
    %57 = math.exp %56 : vector<2x32xf32>
    %cst_39 = arith.constant 1.000000e+00 : f32
    %58 = vector.broadcast %cst_39 : f32 to vector<2x32xf32>
    %59 = arith.addf %58, %57 : vector<2x32xf32>
    %60 = arith.divf %58, %59 : vector<2x32xf32>
    %61 = vector.extract_strided_slice %53 {offsets = [0, 32], sizes = [2, 32], strides = [1, 1]} : vector<2x128xf32> to vector<2x32xf32>
    %62 = arith.negf %61 : vector<2x32xf32>
    %63 = math.exp %62 : vector<2x32xf32>
    %cst_40 = arith.constant 1.000000e+00 : f32
    %64 = vector.broadcast %cst_40 : f32 to vector<2x32xf32>
    %65 = arith.addf %64, %63 : vector<2x32xf32>
    %66 = arith.divf %64, %65 : vector<2x32xf32>
    %67 = vector.extract_strided_slice %53 {offsets = [0, 64], sizes = [2, 32], strides = [1, 1]} : vector<2x128xf32> to vector<2x32xf32>
    %68 = math.tanh %67 : vector<2x32xf32>
    %69 = vector.extract_strided_slice %53 {offsets = [0, 96], sizes = [2, 32], strides = [1, 1]} : vector<2x128xf32> to vector<2x32xf32>
    %70 = arith.negf %69 : vector<2x32xf32>
    %71 = math.exp %70 : vector<2x32xf32>
    %cst_41 = arith.constant 1.000000e+00 : f32
    %72 = vector.broadcast %cst_41 : f32 to vector<2x32xf32>
    %73 = arith.addf %72, %71 : vector<2x32xf32>
    %74 = arith.divf %72, %73 : vector<2x32xf32>
    %75 = arith.mulf %66, %54 : vector<2x32xf32>
    %76 = arith.mulf %60, %68 : vector<2x32xf32>
    %77 = arith.addf %75, %76 : vector<2x32xf32>
    %78 = math.tanh %77 : vector<2x32xf32>
    %79 = arith.mulf %74, %78 : vector<2x32xf32>
    %c0_42 = arith.constant 0 : index
    %c0_43 = arith.constant 0 : index
    %80 = vector.load %arg9[%c0_42, %c0_43] : memref<2x32xf32, #tpu.memory_space<vmem>>, vector<2x32xf32>
    tpu.vector_store %arg9[%c0_42, %c0_43], %79 {strides = array<i32>} : memref<2x32xf32, #tpu.memory_space<vmem>>, vector<2x32xf32>,
    %c0_44 = arith.constant 0 : index
    %c0_45 = arith.constant 0 : index
    %81 = vector.load %arg10[%c0_44, %c0_45] : memref<2x32xf32, #tpu.memory_space<vmem>>, vector<2x32xf32>
    tpu.vector_store %arg10[%c0_44, %c0_45], %77 {strides = array<i32>} : memref<2x32xf32, #tpu.memory_space<vmem>>, vector<2x32xf32>,
    %82 = arith.truncf %79 : vector<2x32xf32> to vector<2x32xbf16>
    %c4_46 = arith.constant 4 : index
    %c0_47 = arith.constant 0 : index
    %c0_48 = arith.constant 0 : index
    %83 = vector.load %arg6[%c4_46, %c0_47, %c0_48] : memref<5x2x32xbf16, #tpu.memory_space<vmem>>, vector<1x2x32xbf16>
    %84 = vector.shape_cast %83 : vector<1x2x32xbf16> to vector<2x32xbf16>
    %85 = vector.shape_cast %82 : vector<2x32xbf16> to vector<1x2x32xbf16>
    tpu.vector_store %arg6[%c4_46, %c0_47, %c0_48], %85 {strides = array<i32>} : memref<5x2x32xbf16, #tpu.memory_space<vmem>>, vector<1x2x32xbf16>,
    %c1 = arith.constant 1 : index
    %c0_49 = arith.constant 0 : index
    %c0_50 = arith.constant 0 : index
    %86 = vector.load %arg1[%c1, %c0_49, %c0_50] : memref<5x2x128xf32, #tpu.memory_space<vmem>>, vector<1x2x128xf32>
    %87 = vector.shape_cast %86 : vector<1x2x128xf32> to vector<2x128xf32>
    %c0_51 = arith.constant 0 : index
    %c0_52 = arith.constant 0 : index
    %88 = vector.load %arg7[%c0_51, %c0_52] : memref<2x32xf32, #tpu.memory_space<vmem>>, vector<2x32xf32>
    %89 = arith.truncf %88 : vector<2x32xf32> to vector<2x32xbf16>
    %c0_53 = arith.constant 0 : index
    %c0_54 = arith.constant 0 : index
    %90 = vector.load %arg3[%c0_53, %c0_54] : memref<32x128xbf16, #tpu.memory_space<vmem>>, vector<32x128xbf16>
    %cst_55 = arith.constant dense<0.000000e+00> : vector<2x128xf32>
    %91 = tpu.matmul %89, %90, %cst_55 {dimension_numbers = #tpu.dot_dimension_numbers<[1], [0], [0], [1], [0, 0, 1, 1], [], []>} : vector<2x32xbf16>, vector<32x128xbf16>, vector<2x128xf32> -> vector<2x128xf32>
    %92 = arith.addf %87, %91 : vector<2x128xf32>
    %c0_56 = arith.constant 0 : index
    %c0_57 = arith.constant 0 : index
    %93 = vector.load %arg8[%c0_56, %c0_57] : memref<2x32xf32, #tpu.memory_space<vmem>>, vector<2x32xf32>
    %94 = vector.extract_strided_slice %92 {offsets = [0, 0], sizes = [2, 32], strides = [1, 1]} : vector<2x128xf32> to vector<2x32xf32>
    %95 = arith.negf %94 : vector<2x32xf32>
    %96 = math.exp %95 : vector<2x32xf32>
    %cst_58 = arith.constant 1.000000e+00 : f32
    %97 = vector.broadcast %cst_58 : f32 to vector<2x32xf32>
    %98 = arith.addf %97, %96 : vector<2x32xf32>
    %99 = arith.divf %97, %98 : vector<2x32xf32>
    %100 = vector.extract_strided_slice %92 {offsets = [0, 32], sizes = [2, 32], strides = [1, 1]} : vector<2x128xf32> to vector<2x32xf32>
    %101 = arith.negf %100 : vector<2x32xf32>
    %102 = math.exp %101 : vector<2x32xf32>
    %cst_59 = arith.constant 1.000000e+00 : f32
    %103 = vector.broadcast %cst_59 : f32 to vector<2x32xf32>
    %104 = arith.addf %103, %102 : vector<2x32xf32>
    %105 = arith.divf %103, %104 : vector<2x32xf32>
    %106 = vector.extract_strided_slice %92 {offsets = [0, 64], sizes = [2, 32], strides = [1, 1]} : vector<2x128xf32> to vector<2x32xf32>
    %107 = math.tanh %106 : vector<2x32xf32>
    %108 = vector.extract_strided_slice %92 {offsets = [0, 96], sizes = [2, 32], strides = [1, 1]} : vector<2x128xf32> to vector<2x32xf32>
    %109 = arith.negf %108 : vector<2x32xf32>
    %110 = math.exp %109 : vector<2x32xf32>
    %cst_60 = arith.constant 1.000000e+00 : f32
    %111 = vector.broadcast %cst_60 : f32 to vector<2x32xf32>
    %112 = arith.addf %111, %110 : vector<2x32xf32>
    %113 = arith.divf %111, %112 : vector<2x32xf32>
    %114 = arith.mulf %105, %93 : vector<2x32xf32>
    %115 = arith.mulf %99, %107 : vector<2x32xf32>
    %116 = arith.addf %114, %115 : vector<2x32xf32>
    %117 = math.tanh %116 : vector<2x32xf32>
    %118 = arith.mulf %113, %117 : vector<2x32xf32>
    %c0_61 = arith.constant 0 : index
    %c0_62 = arith.constant 0 : index
    %119 = vector.load %arg7[%c0_61, %c0_62] : memref<2x32xf32, #tpu.memory_space<vmem>>, vector<2x32xf32>
    tpu.vector_store %arg7[%c0_61, %c0_62], %118 {strides = array<i32>} : memref<2x32xf32, #tpu.memory_space<vmem>>, vector<2x32xf32>,
    %c0_63 = arith.constant 0 : index
    %c0_64 = arith.constant 0 : index
    %120 = vector.load %arg8[%c0_63, %c0_64] : memref<2x32xf32, #tpu.memory_space<vmem>>, vector<2x32xf32>
    tpu.vector_store %arg8[%c0_63, %c0_64], %116 {strides = array<i32>} : memref<2x32xf32, #tpu.memory_space<vmem>>, vector<2x32xf32>,
    %121 = arith.truncf %118 : vector<2x32xf32> to vector<2x32xbf16>
    %c1_65 = arith.constant 1 : index
    %c0_66 = arith.constant 0 : index
    %c0_67 = arith.constant 0 : index
    %122 = vector.load %arg5[%c1_65, %c0_66, %c0_67] : memref<5x2x32xbf16, #tpu.memory_space<vmem>>, vector<1x2x32xbf16>
    %123 = vector.shape_cast %122 : vector<1x2x32xbf16> to vector<2x32xbf16>
    %124 = vector.shape_cast %121 : vector<2x32xbf16> to vector<1x2x32xbf16>
    tpu.vector_store %arg5[%c1_65, %c0_66, %c0_67], %124 {strides = array<i32>} : memref<5x2x32xbf16, #tpu.memory_space<vmem>>, vector<1x2x32xbf16>,
    %c3 = arith.constant 3 : index
    %c0_68 = arith.constant 0 : index
    %c0_69 = arith.constant 0 : index
    %125 = vector.load %arg2[%c3, %c0_68, %c0_69] : memref<5x2x128xf32, #tpu.memory_space<vmem>>, vector<1x2x128xf32>
    %126 = vector.shape_cast %125 : vector<1x2x128xf32> to vector<2x128xf32>
    %c0_70 = arith.constant 0 : index
    %c0_71 = arith.constant 0 : index
    %127 = vector.load %arg9[%c0_70, %c0_71] : memref<2x32xf32, #tpu.memory_space<vmem>>, vector<2x32xf32>
    %128 = arith.truncf %127 : vector<2x32xf32> to vector<2x32xbf16>
    %c0_72 = arith.constant 0 : index
    %c0_73 = arith.constant 0 : index
    %129 = vector.load %arg4[%c0_72, %c0_73] : memref<32x128xbf16, #tpu.memory_space<vmem>>, vector<32x128xbf16>
    %cst_74 = arith.constant dense<0.000000e+00> : vector<2x128xf32>
    %130 = tpu.matmul %128, %129, %cst_74 {dimension_numbers = #tpu.dot_dimension_numbers<[1], [0], [0], [1], [0, 0, 1, 1], [], []>} : vector<2x32xbf16>, vector<32x128xbf16>, vector<2x128xf32> -> vector<2x128xf32>
    %131 = arith.addf %126, %130 : vector<2x128xf32>
    %c0_75 = arith.constant 0 : index
    %c0_76 = arith.constant 0 : index
    %132 = vector.load %arg10[%c0_75, %c0_76] : memref<2x32xf32, #tpu.memory_space<vmem>>, vector<2x32xf32>
    %133 = vector.extract_strided_slice %131 {offsets = [0, 0], sizes = [2, 32], strides = [1, 1]} : vector<2x128xf32> to vector<2x32xf32>
    %134 = arith.negf %133 : vector<2x32xf32>
    %135 = math.exp %134 : vector<2x32xf32>
    %cst_77 = arith.constant 1.000000e+00 : f32
    %136 = vector.broadcast %cst_77 : f32 to vector<2x32xf32>
    %137 = arith.addf %136, %135 : vector<2x32xf32>
    %138 = arith.divf %136, %137 : vector<2x32xf32>
    %139 = vector.extract_strided_slice %131 {offsets = [0, 32], sizes = [2, 32], strides = [1, 1]} : vector<2x128xf32> to vector<2x32xf32>
    %140 = arith.negf %139 : vector<2x32xf32>
    %141 = math.exp %140 : vector<2x32xf32>
    %cst_78 = arith.constant 1.000000e+00 : f32
    %142 = vector.broadcast %cst_78 : f32 to vector<2x32xf32>
    %143 = arith.addf %142, %141 : vector<2x32xf32>
    %144 = arith.divf %142, %143 : vector<2x32xf32>
    %145 = vector.extract_strided_slice %131 {offsets = [0, 64], sizes = [2, 32], strides = [1, 1]} : vector<2x128xf32> to vector<2x32xf32>
    %146 = math.tanh %145 : vector<2x32xf32>
    %147 = vector.extract_strided_slice %131 {offsets = [0, 96], sizes = [2, 32], strides = [1, 1]} : vector<2x128xf32> to vector<2x32xf32>
    %148 = arith.negf %147 : vector<2x32xf32>
    %149 = math.exp %148 : vector<2x32xf32>
    %cst_79 = arith.constant 1.000000e+00 : f32
    %150 = vector.broadcast %cst_79 : f32 to vector<2x32xf32>
    %151 = arith.addf %150, %149 : vector<2x32xf32>
    %152 = arith.divf %150, %151 : vector<2x32xf32>
    %153 = arith.mulf %144, %132 : vector<2x32xf32>
    %154 = arith.mulf %138, %146 : vector<2x32xf32>
    %155 = arith.addf %153, %154 : vector<2x32xf32>
    %156 = math.tanh %155 : vector<2x32xf32>
    %157 = arith.mulf %152, %156 : vector<2x32xf32>
    %c0_80 = arith.constant 0 : index
    %c0_81 = arith.constant 0 : index
    %158 = vector.load %arg9[%c0_80, %c0_81] : memref<2x32xf32, #tpu.memory_space<vmem>>, vector<2x32xf32>
    tpu.vector_store %arg9[%c0_80, %c0_81], %157 {strides = array<i32>} : memref<2x32xf32, #tpu.memory_space<vmem>>, vector<2x32xf32>,
    %c0_82 = arith.constant 0 : index
    %c0_83 = arith.constant 0 : index
    %159 = vector.load %arg10[%c0_82, %c0_83] : memref<2x32xf32, #tpu.memory_space<vmem>>, vector<2x32xf32>
    tpu.vector_store %arg10[%c0_82, %c0_83], %155 {strides = array<i32>} : memref<2x32xf32, #tpu.memory_space<vmem>>, vector<2x32xf32>,
    %160 = arith.truncf %157 : vector<2x32xf32> to vector<2x32xbf16>
    %c3_84 = arith.constant 3 : index
    %c0_85 = arith.constant 0 : index
    %c0_86 = arith.constant 0 : index
    %161 = vector.load %arg6[%c3_84, %c0_85, %c0_86] : memref<5x2x32xbf16, #tpu.memory_space<vmem>>, vector<1x2x32xbf16>
    %162 = vector.shape_cast %161 : vector<1x2x32xbf16> to vector<2x32xbf16>
    %163 = vector.shape_cast %160 : vector<2x32xbf16> to vector<1x2x32xbf16>
    tpu.vector_store %arg6[%c3_84, %c0_85, %c0_86], %163 {strides = array<i32>} : memref<5x2x32xbf16, #tpu.memory_space<vmem>>, vector<1x2x32xbf16>,
    %c2 = arith.constant 2 : index
    %c0_87 = arith.constant 0 : index
    %c0_88 = arith.constant 0 : index
    %164 = vector.load %arg1[%c2, %c0_87, %c0_88] : memref<5x2x128xf32, #tpu.memory_space<vmem>>, vector<1x2x128xf32>
    %165 = vector.shape_cast %164 : vector<1x2x128xf32> to vector<2x128xf32>
    %c0_89 = arith.constant 0 : index
    %c0_90 = arith.constant 0 : index
    %166 = vector.load %arg7[%c0_89, %c0_90] : memref<2x32xf32, #tpu.memory_space<vmem>>, vector<2x32xf32>
    %167 = arith.truncf %166 : vector<2x32xf32> to vector<2x32xbf16>
    %c0_91 = arith.constant 0 : index
    %c0_92 = arith.constant 0 : index
    %168 = vector.load %arg3[%c0_91, %c0_92] : memref<32x128xbf16, #tpu.memory_space<vmem>>, vector<32x128xbf16>
    %cst_93 = arith.constant dense<0.000000e+00> : vector<2x128xf32>
    %169 = tpu.matmul %167, %168, %cst_93 {dimension_numbers = #tpu.dot_dimension_numbers<[1], [0], [0], [1], [0, 0, 1, 1], [], []>} : vector<2x32xbf16>, vector<32x128xbf16>, vector<2x128xf32> -> vector<2x128xf32>
    %170 = arith.addf %165, %169 : vector<2x128xf32>
    %c0_94 = arith.constant 0 : index
    %c0_95 = arith.constant 0 : index
    %171 = vector.load %arg8[%c0_94, %c0_95] : memref<2x32xf32, #tpu.memory_space<vmem>>, vector<2x32xf32>
    %172 = vector.extract_strided_slice %170 {offsets = [0, 0], sizes = [2, 32], strides = [1, 1]} : vector<2x128xf32> to vector<2x32xf32>
    %173 = arith.negf %172 : vector<2x32xf32>
    %174 = math.exp %173 : vector<2x32xf32>
    %cst_96 = arith.constant 1.000000e+00 : f32
    %175 = vector.broadcast %cst_96 : f32 to vector<2x32xf32>
    %176 = arith.addf %175, %174 : vector<2x32xf32>
    %177 = arith.divf %175, %176 : vector<2x32xf32>
    %178 = vector.extract_strided_slice %170 {offsets = [0, 32], sizes = [2, 32], strides = [1, 1]} : vector<2x128xf32> to vector<2x32xf32>
    %179 = arith.negf %178 : vector<2x32xf32>
    %180 = math.exp %179 : vector<2x32xf32>
    %cst_97 = arith.constant 1.000000e+00 : f32
    %181 = vector.broadcast %cst_97 : f32 to vector<2x32xf32>
    %182 = arith.addf %181, %180 : vector<2x32xf32>
    %183 = arith.divf %181, %182 : vector<2x32xf32>
    %184 = vector.extract_strided_slice %170 {offsets = [0, 64], sizes = [2, 32], strides = [1, 1]} : vector<2x128xf32> to vector<2x32xf32>
    %185 = math.tanh %184 : vector<2x32xf32>
    %186 = vector.extract_strided_slice %170 {offsets = [0, 96], sizes = [2, 32], strides = [1, 1]} : vector<2x128xf32> to vector<2x32xf32>
    %187 = arith.negf %186 : vector<2x32xf32>
    %188 = math.exp %187 : vector<2x32xf32>
    %cst_98 = arith.constant 1.000000e+00 : f32
    %189 = vector.broadcast %cst_98 : f32 to vector<2x32xf32>
    %190 = arith.addf %189, %188 : vector<2x32xf32>
    %191 = arith.divf %189, %190 : vector<2x32xf32>
    %192 = arith.mulf %183, %171 : vector<2x32xf32>
    %193 = arith.mulf %177, %185 : vector<2x32xf32>
    %194 = arith.addf %192, %193 : vector<2x32xf32>
    %195 = math.tanh %194 : vector<2x32xf32>
    %196 = arith.mulf %191, %195 : vector<2x32xf32>
    %c0_99 = arith.constant 0 : index
    %c0_100 = arith.constant 0 : index
    %197 = vector.load %arg7[%c0_99, %c0_100] : memref<2x32xf32, #tpu.memory_space<vmem>>, vector<2x32xf32>
    tpu.vector_store %arg7[%c0_99, %c0_100], %196 {strides = array<i32>} : memref<2x32xf32, #tpu.memory_space<vmem>>, vector<2x32xf32>,
    %c0_101 = arith.constant 0 : index
    %c0_102 = arith.constant 0 : index
    %198 = vector.load %arg8[%c0_101, %c0_102] : memref<2x32xf32, #tpu.memory_space<vmem>>, vector<2x32xf32>
    tpu.vector_store %arg8[%c0_101, %c0_102], %194 {strides = array<i32>} : memref<2x32xf32, #tpu.memory_space<vmem>>, vector<2x32xf32>,
    %199 = arith.truncf %196 : vector<2x32xf32> to vector<2x32xbf16>
    %c2_103 = arith.constant 2 : index
    %c0_104 = arith.constant 0 : index
    %c0_105 = arith.constant 0 : index
    %200 = vector.load %arg5[%c2_103, %c0_104, %c0_105] : memref<5x2x32xbf16, #tpu.memory_space<vmem>>, vector<1x2x32xbf16>
    %201 = vector.shape_cast %200 : vector<1x2x32xbf16> to vector<2x32xbf16>
    %202 = vector.shape_cast %199 : vector<2x32xbf16> to vector<1x2x32xbf16>
    tpu.vector_store %arg5[%c2_103, %c0_104, %c0_105], %202 {strides = array<i32>} : memref<5x2x32xbf16, #tpu.memory_space<vmem>>, vector<1x2x32xbf16>,
    %c2_106 = arith.constant 2 : index
    %c0_107 = arith.constant 0 : index
    %c0_108 = arith.constant 0 : index
    %203 = vector.load %arg2[%c2_106, %c0_107, %c0_108] : memref<5x2x128xf32, #tpu.memory_space<vmem>>, vector<1x2x128xf32>
    %204 = vector.shape_cast %203 : vector<1x2x128xf32> to vector<2x128xf32>
    %c0_109 = arith.constant 0 : index
    %c0_110 = arith.constant 0 : index
    %205 = vector.load %arg9[%c0_109, %c0_110] : memref<2x32xf32, #tpu.memory_space<vmem>>, vector<2x32xf32>
    %206 = arith.truncf %205 : vector<2x32xf32> to vector<2x32xbf16>
    %c0_111 = arith.constant 0 : index
    %c0_112 = arith.constant 0 : index
    %207 = vector.load %arg4[%c0_111, %c0_112] : memref<32x128xbf16, #tpu.memory_space<vmem>>, vector<32x128xbf16>
    %cst_113 = arith.constant dense<0.000000e+00> : vector<2x128xf32>
    %208 = tpu.matmul %206, %207, %cst_113 {dimension_numbers = #tpu.dot_dimension_numbers<[1], [0], [0], [1], [0, 0, 1, 1], [], []>} : vector<2x32xbf16>, vector<32x128xbf16>, vector<2x128xf32> -> vector<2x128xf32>
    %209 = arith.addf %204, %208 : vector<2x128xf32>
    %c0_114 = arith.constant 0 : index
    %c0_115 = arith.constant 0 : index
    %210 = vector.load %arg10[%c0_114, %c0_115] : memref<2x32xf32, #tpu.memory_space<vmem>>, vector<2x32xf32>
    %211 = vector.extract_strided_slice %209 {offsets = [0, 0], sizes = [2, 32], strides = [1, 1]} : vector<2x128xf32> to vector<2x32xf32>
    %212 = arith.negf %211 : vector<2x32xf32>
    %213 = math.exp %212 : vector<2x32xf32>
    %cst_116 = arith.constant 1.000000e+00 : f32
    %214 = vector.broadcast %cst_116 : f32 to vector<2x32xf32>
    %215 = arith.addf %214, %213 : vector<2x32xf32>
    %216 = arith.divf %214, %215 : vector<2x32xf32>
    %217 = vector.extract_strided_slice %209 {offsets = [0, 32], sizes = [2, 32], strides = [1, 1]} : vector<2x128xf32> to vector<2x32xf32>
    %218 = arith.negf %217 : vector<2x32xf32>
    %219 = math.exp %218 : vector<2x32xf32>
    %cst_117 = arith.constant 1.000000e+00 : f32
    %220 = vector.broadcast %cst_117 : f32 to vector<2x32xf32>
    %221 = arith.addf %220, %219 : vector<2x32xf32>
    %222 = arith.divf %220, %221 : vector<2x32xf32>
    %223 = vector.extract_strided_slice %209 {offsets = [0, 64], sizes = [2, 32], strides = [1, 1]} : vector<2x128xf32> to vector<2x32xf32>
    %224 = math.tanh %223 : vector<2x32xf32>
    %225 = vector.extract_strided_slice %209 {offsets = [0, 96], sizes = [2, 32], strides = [1, 1]} : vector<2x128xf32> to vector<2x32xf32>
    %226 = arith.negf %225 : vector<2x32xf32>
    %227 = math.exp %226 : vector<2x32xf32>
    %cst_118 = arith.constant 1.000000e+00 : f32
    %228 = vector.broadcast %cst_118 : f32 to vector<2x32xf32>
    %229 = arith.addf %228, %227 : vector<2x32xf32>
    %230 = arith.divf %228, %229 : vector<2x32xf32>
    %231 = arith.mulf %222, %210 : vector<2x32xf32>
    %232 = arith.mulf %216, %224 : vector<2x32xf32>
    %233 = arith.addf %231, %232 : vector<2x32xf32>
    %234 = math.tanh %233 : vector<2x32xf32>
    %235 = arith.mulf %230, %234 : vector<2x32xf32>
    %c0_119 = arith.constant 0 : index
    %c0_120 = arith.constant 0 : index
    %236 = vector.load %arg9[%c0_119, %c0_120] : memref<2x32xf32, #tpu.memory_space<vmem>>, vector<2x32xf32>
    tpu.vector_store %arg9[%c0_119, %c0_120], %235 {strides = array<i32>} : memref<2x32xf32, #tpu.memory_space<vmem>>, vector<2x32xf32>,
    %c0_121 = arith.constant 0 : index
    %c0_122 = arith.constant 0 : index
    %237 = vector.load %arg10[%c0_121, %c0_122] : memref<2x32xf32, #tpu.memory_space<vmem>>, vector<2x32xf32>
    tpu.vector_store %arg10[%c0_121, %c0_122], %233 {strides = array<i32>} : memref<2x32xf32, #tpu.memory_space<vmem>>, vector<2x32xf32>,
    %238 = arith.truncf %235 : vector<2x32xf32> to vector<2x32xbf16>
    %c2_123 = arith.constant 2 : index
    %c0_124 = arith.constant 0 : index
    %c0_125 = arith.constant 0 : index
    %239 = vector.load %arg6[%c2_123, %c0_124, %c0_125] : memref<5x2x32xbf16, #tpu.memory_space<vmem>>, vector<1x2x32xbf16>
    %240 = vector.shape_cast %239 : vector<1x2x32xbf16> to vector<2x32xbf16>
    %241 = vector.shape_cast %238 : vector<2x32xbf16> to vector<1x2x32xbf16>
    tpu.vector_store %arg6[%c2_123, %c0_124, %c0_125], %241 {strides = array<i32>} : memref<5x2x32xbf16, #tpu.memory_space<vmem>>, vector<1x2x32xbf16>,
    %c3_126 = arith.constant 3 : index
    %c0_127 = arith.constant 0 : index
    %c0_128 = arith.constant 0 : index
    %242 = vector.load %arg1[%c3_126, %c0_127, %c0_128] : memref<5x2x128xf32, #tpu.memory_space<vmem>>, vector<1x2x128xf32>
    %243 = vector.shape_cast %242 : vector<1x2x128xf32> to vector<2x128xf32>
    %c0_129 = arith.constant 0 : index
    %c0_130 = arith.constant 0 : index
    %244 = vector.load %arg7[%c0_129, %c0_130] : memref<2x32xf32, #tpu.memory_space<vmem>>, vector<2x32xf32>
    %245 = arith.truncf %244 : vector<2x32xf32> to vector<2x32xbf16>
    %c0_131 = arith.constant 0 : index
    %c0_132 = arith.constant 0 : index
    %246 = vector.load %arg3[%c0_131, %c0_132] : memref<32x128xbf16, #tpu.memory_space<vmem>>, vector<32x128xbf16>
    %cst_133 = arith.constant dense<0.000000e+00> : vector<2x128xf32>
    %247 = tpu.matmul %245, %246, %cst_133 {dimension_numbers = #tpu.dot_dimension_numbers<[1], [0], [0], [1], [0, 0, 1, 1], [], []>} : vector<2x32xbf16>, vector<32x128xbf16>, vector<2x128xf32> -> vector<2x128xf32>
    %248 = arith.addf %243, %247 : vector<2x128xf32>
    %c0_134 = arith.constant 0 : index
    %c0_135 = arith.constant 0 : index
    %249 = vector.load %arg8[%c0_134, %c0_135] : memref<2x32xf32, #tpu.memory_space<vmem>>, vector<2x32xf32>
    %250 = vector.extract_strided_slice %248 {offsets = [0, 0], sizes = [2, 32], strides = [1, 1]} : vector<2x128xf32> to vector<2x32xf32>
    %251 = arith.negf %250 : vector<2x32xf32>
    %252 = math.exp %251 : vector<2x32xf32>
    %cst_136 = arith.constant 1.000000e+00 : f32
    %253 = vector.broadcast %cst_136 : f32 to vector<2x32xf32>
    %254 = arith.addf %253, %252 : vector<2x32xf32>
    %255 = arith.divf %253, %254 : vector<2x32xf32>
    %256 = vector.extract_strided_slice %248 {offsets = [0, 32], sizes = [2, 32], strides = [1, 1]} : vector<2x128xf32> to vector<2x32xf32>
    %257 = arith.negf %256 : vector<2x32xf32>
    %258 = math.exp %257 : vector<2x32xf32>
    %cst_137 = arith.constant 1.000000e+00 : f32
    %259 = vector.broadcast %cst_137 : f32 to vector<2x32xf32>
    %260 = arith.addf %259, %258 : vector<2x32xf32>
    %261 = arith.divf %259, %260 : vector<2x32xf32>
    %262 = vector.extract_strided_slice %248 {offsets = [0, 64], sizes = [2, 32], strides = [1, 1]} : vector<2x128xf32> to vector<2x32xf32>
    %263 = math.tanh %262 : vector<2x32xf32>
    %264 = vector.extract_strided_slice %248 {offsets = [0, 96], sizes = [2, 32], strides = [1, 1]} : vector<2x128xf32> to vector<2x32xf32>
    %265 = arith.negf %264 : vector<2x32xf32>
    %266 = math.exp %265 : vector<2x32xf32>
    %cst_138 = arith.constant 1.000000e+00 : f32
    %267 = vector.broadcast %cst_138 : f32 to vector<2x32xf32>
    %268 = arith.addf %267, %266 : vector<2x32xf32>
    %269 = arith.divf %267, %268 : vector<2x32xf32>
    %270 = arith.mulf %261, %249 : vector<2x32xf32>
    %271 = arith.mulf %255, %263 : vector<2x32xf32>
    %272 = arith.addf %270, %271 : vector<2x32xf32>
    %273 = math.tanh %272 : vector<2x32xf32>
    %274 = arith.mulf %269, %273 : vector<2x32xf32>
    %c0_139 = arith.constant 0 : index
    %c0_140 = arith.constant 0 : index
    %275 = vector.load %arg7[%c0_139, %c0_140] : memref<2x32xf32, #tpu.memory_space<vmem>>, vector<2x32xf32>
    tpu.vector_store %arg7[%c0_139, %c0_140], %274 {strides = array<i32>} : memref<2x32xf32, #tpu.memory_space<vmem>>, vector<2x32xf32>,
    %c0_141 = arith.constant 0 : index
    %c0_142 = arith.constant 0 : index
    %276 = vector.load %arg8[%c0_141, %c0_142] : memref<2x32xf32, #tpu.memory_space<vmem>>, vector<2x32xf32>
    tpu.vector_store %arg8[%c0_141, %c0_142], %272 {strides = array<i32>} : memref<2x32xf32, #tpu.memory_space<vmem>>, vector<2x32xf32>,
    %277 = arith.truncf %274 : vector<2x32xf32> to vector<2x32xbf16>
    %c3_143 = arith.constant 3 : index
    %c0_144 = arith.constant 0 : index
    %c0_145 = arith.constant 0 : index
    %278 = vector.load %arg5[%c3_143, %c0_144, %c0_145] : memref<5x2x32xbf16, #tpu.memory_space<vmem>>, vector<1x2x32xbf16>
    %279 = vector.shape_cast %278 : vector<1x2x32xbf16> to vector<2x32xbf16>
    %280 = vector.shape_cast %277 : vector<2x32xbf16> to vector<1x2x32xbf16>
    tpu.vector_store %arg5[%c3_143, %c0_144, %c0_145], %280 {strides = array<i32>} : memref<5x2x32xbf16, #tpu.memory_space<vmem>>, vector<1x2x32xbf16>,
    %c1_146 = arith.constant 1 : index
    %c0_147 = arith.constant 0 : index
    %c0_148 = arith.constant 0 : index
    %281 = vector.load %arg2[%c1_146, %c0_147, %c0_148] : memref<5x2x128xf32, #tpu.memory_space<vmem>>, vector<1x2x128xf32>
    %282 = vector.shape_cast %281 : vector<1x2x128xf32> to vector<2x128xf32>
    %c0_149 = arith.constant 0 : index
    %c0_150 = arith.constant 0 : index
    %283 = vector.load %arg9[%c0_149, %c0_150] : memref<2x32xf32, #tpu.memory_space<vmem>>, vector<2x32xf32>
    %284 = arith.truncf %283 : vector<2x32xf32> to vector<2x32xbf16>
    %c0_151 = arith.constant 0 : index
    %c0_152 = arith.constant 0 : index
    %285 = vector.load %arg4[%c0_151, %c0_152] : memref<32x128xbf16, #tpu.memory_space<vmem>>, vector<32x128xbf16>
    %cst_153 = arith.constant dense<0.000000e+00> : vector<2x128xf32>
    %286 = tpu.matmul %284, %285, %cst_153 {dimension_numbers = #tpu.dot_dimension_numbers<[1], [0], [0], [1], [0, 0, 1, 1], [], []>} : vector<2x32xbf16>, vector<32x128xbf16>, vector<2x128xf32> -> vector<2x128xf32>
    %287 = arith.addf %282, %286 : vector<2x128xf32>
    %c0_154 = arith.constant 0 : index
    %c0_155 = arith.constant 0 : index
    %288 = vector.load %arg10[%c0_154, %c0_155] : memref<2x32xf32, #tpu.memory_space<vmem>>, vector<2x32xf32>
    %289 = vector.extract_strided_slice %287 {offsets = [0, 0], sizes = [2, 32], strides = [1, 1]} : vector<2x128xf32> to vector<2x32xf32>
    %290 = arith.negf %289 : vector<2x32xf32>
    %291 = math.exp %290 : vector<2x32xf32>
    %cst_156 = arith.constant 1.000000e+00 : f32
    %292 = vector.broadcast %cst_156 : f32 to vector<2x32xf32>
    %293 = arith.addf %292, %291 : vector<2x32xf32>
    %294 = arith.divf %292, %293 : vector<2x32xf32>
    %295 = vector.extract_strided_slice %287 {offsets = [0, 32], sizes = [2, 32], strides = [1, 1]} : vector<2x128xf32> to vector<2x32xf32>
    %296 = arith.negf %295 : vector<2x32xf32>
    %297 = math.exp %296 : vector<2x32xf32>
    %cst_157 = arith.constant 1.000000e+00 : f32
    %298 = vector.broadcast %cst_157 : f32 to vector<2x32xf32>
    %299 = arith.addf %298, %297 : vector<2x32xf32>
    %300 = arith.divf %298, %299 : vector<2x32xf32>
    %301 = vector.extract_strided_slice %287 {offsets = [0, 64], sizes = [2, 32], strides = [1, 1]} : vector<2x128xf32> to vector<2x32xf32>
    %302 = math.tanh %301 : vector<2x32xf32>
    %303 = vector.extract_strided_slice %287 {offsets = [0, 96], sizes = [2, 32], strides = [1, 1]} : vector<2x128xf32> to vector<2x32xf32>
    %304 = arith.negf %303 : vector<2x32xf32>
    %305 = math.exp %304 : vector<2x32xf32>
    %cst_158 = arith.constant 1.000000e+00 : f32
    %306 = vector.broadcast %cst_158 : f32 to vector<2x32xf32>
    %307 = arith.addf %306, %305 : vector<2x32xf32>
    %308 = arith.divf %306, %307 : vector<2x32xf32>
    %309 = arith.mulf %300, %288 : vector<2x32xf32>
    %310 = arith.mulf %294, %302 : vector<2x32xf32>
    %311 = arith.addf %309, %310 : vector<2x32xf32>
    %312 = math.tanh %311 : vector<2x32xf32>
    %313 = arith.mulf %308, %312 : vector<2x32xf32>
    %c0_159 = arith.constant 0 : index
    %c0_160 = arith.constant 0 : index
    %314 = vector.load %arg9[%c0_159, %c0_160] : memref<2x32xf32, #tpu.memory_space<vmem>>, vector<2x32xf32>
    tpu.vector_store %arg9[%c0_159, %c0_160], %313 {strides = array<i32>} : memref<2x32xf32, #tpu.memory_space<vmem>>, vector<2x32xf32>,
    %c0_161 = arith.constant 0 : index
    %c0_162 = arith.constant 0 : index
    %315 = vector.load %arg10[%c0_161, %c0_162] : memref<2x32xf32, #tpu.memory_space<vmem>>, vector<2x32xf32>
    tpu.vector_store %arg10[%c0_161, %c0_162], %311 {strides = array<i32>} : memref<2x32xf32, #tpu.memory_space<vmem>>, vector<2x32xf32>,
    %316 = arith.truncf %313 : vector<2x32xf32> to vector<2x32xbf16>
    %c1_163 = arith.constant 1 : index
    %c0_164 = arith.constant 0 : index
    %c0_165 = arith.constant 0 : index
    %317 = vector.load %arg6[%c1_163, %c0_164, %c0_165] : memref<5x2x32xbf16, #tpu.memory_space<vmem>>, vector<1x2x32xbf16>
    %318 = vector.shape_cast %317 : vector<1x2x32xbf16> to vector<2x32xbf16>
    %319 = vector.shape_cast %316 : vector<2x32xbf16> to vector<1x2x32xbf16>
    tpu.vector_store %arg6[%c1_163, %c0_164, %c0_165], %319 {strides = array<i32>} : memref<5x2x32xbf16, #tpu.memory_space<vmem>>, vector<1x2x32xbf16>,
    %c4_166 = arith.constant 4 : index
    %c0_167 = arith.constant 0 : index
    %c0_168 = arith.constant 0 : index
    %320 = vector.load %arg1[%c4_166, %c0_167, %c0_168] : memref<5x2x128xf32, #tpu.memory_space<vmem>>, vector<1x2x128xf32>
    %321 = vector.shape_cast %320 : vector<1x2x128xf32> to vector<2x128xf32>
    %c0_169 = arith.constant 0 : index
    %c0_170 = arith.constant 0 : index
    %322 = vector.load %arg7[%c0_169, %c0_170] : memref<2x32xf32, #tpu.memory_space<vmem>>, vector<2x32xf32>
    %323 = arith.truncf %322 : vector<2x32xf32> to vector<2x32xbf16>
    %c0_171 = arith.constant 0 : index
    %c0_172 = arith.constant 0 : index
    %324 = vector.load %arg3[%c0_171, %c0_172] : memref<32x128xbf16, #tpu.memory_space<vmem>>, vector<32x128xbf16>
    %cst_173 = arith.constant dense<0.000000e+00> : vector<2x128xf32>
    %325 = tpu.matmul %323, %324, %cst_173 {dimension_numbers = #tpu.dot_dimension_numbers<[1], [0], [0], [1], [0, 0, 1, 1], [], []>} : vector<2x32xbf16>, vector<32x128xbf16>, vector<2x128xf32> -> vector<2x128xf32>
    %326 = arith.addf %321, %325 : vector<2x128xf32>
    %c0_174 = arith.constant 0 : index
    %c0_175 = arith.constant 0 : index
    %327 = vector.load %arg8[%c0_174, %c0_175] : memref<2x32xf32, #tpu.memory_space<vmem>>, vector<2x32xf32>
    %328 = vector.extract_strided_slice %326 {offsets = [0, 0], sizes = [2, 32], strides = [1, 1]} : vector<2x128xf32> to vector<2x32xf32>
    %329 = arith.negf %328 : vector<2x32xf32>
    %330 = math.exp %329 : vector<2x32xf32>
    %cst_176 = arith.constant 1.000000e+00 : f32
    %331 = vector.broadcast %cst_176 : f32 to vector<2x32xf32>
    %332 = arith.addf %331, %330 : vector<2x32xf32>
    %333 = arith.divf %331, %332 : vector<2x32xf32>
    %334 = vector.extract_strided_slice %326 {offsets = [0, 32], sizes = [2, 32], strides = [1, 1]} : vector<2x128xf32> to vector<2x32xf32>
    %335 = arith.negf %334 : vector<2x32xf32>
    %336 = math.exp %335 : vector<2x32xf32>
    %cst_177 = arith.constant 1.000000e+00 : f32
    %337 = vector.broadcast %cst_177 : f32 to vector<2x32xf32>
    %338 = arith.addf %337, %336 : vector<2x32xf32>
    %339 = arith.divf %337, %338 : vector<2x32xf32>
    %340 = vector.extract_strided_slice %326 {offsets = [0, 64], sizes = [2, 32], strides = [1, 1]} : vector<2x128xf32> to vector<2x32xf32>
    %341 = math.tanh %340 : vector<2x32xf32>
    %342 = vector.extract_strided_slice %326 {offsets = [0, 96], sizes = [2, 32], strides = [1, 1]} : vector<2x128xf32> to vector<2x32xf32>
    %343 = arith.negf %342 : vector<2x32xf32>
    %344 = math.exp %343 : vector<2x32xf32>
    %cst_178 = arith.constant 1.000000e+00 : f32
    %345 = vector.broadcast %cst_178 : f32 to vector<2x32xf32>
    %346 = arith.addf %345, %344 : vector<2x32xf32>
    %347 = arith.divf %345, %346 : vector<2x32xf32>
    %348 = arith.mulf %339, %327 : vector<2x32xf32>
    %349 = arith.mulf %333, %341 : vector<2x32xf32>
    %350 = arith.addf %348, %349 : vector<2x32xf32>
    %351 = math.tanh %350 : vector<2x32xf32>
    %352 = arith.mulf %347, %351 : vector<2x32xf32>
    %c0_179 = arith.constant 0 : index
    %c0_180 = arith.constant 0 : index
    %353 = vector.load %arg7[%c0_179, %c0_180] : memref<2x32xf32, #tpu.memory_space<vmem>>, vector<2x32xf32>
    tpu.vector_store %arg7[%c0_179, %c0_180], %352 {strides = array<i32>} : memref<2x32xf32, #tpu.memory_space<vmem>>, vector<2x32xf32>,
    %c0_181 = arith.constant 0 : index
    %c0_182 = arith.constant 0 : index
    %354 = vector.load %arg8[%c0_181, %c0_182] : memref<2x32xf32, #tpu.memory_space<vmem>>, vector<2x32xf32>
    tpu.vector_store %arg8[%c0_181, %c0_182], %350 {strides = array<i32>} : memref<2x32xf32, #tpu.memory_space<vmem>>, vector<2x32xf32>,
    %355 = arith.truncf %352 : vector<2x32xf32> to vector<2x32xbf16>
    %c4_183 = arith.constant 4 : index
    %c0_184 = arith.constant 0 : index
    %c0_185 = arith.constant 0 : index
    %356 = vector.load %arg5[%c4_183, %c0_184, %c0_185] : memref<5x2x32xbf16, #tpu.memory_space<vmem>>, vector<1x2x32xbf16>
    %357 = vector.shape_cast %356 : vector<1x2x32xbf16> to vector<2x32xbf16>
    %358 = vector.shape_cast %355 : vector<2x32xbf16> to vector<1x2x32xbf16>
    tpu.vector_store %arg5[%c4_183, %c0_184, %c0_185], %358 {strides = array<i32>} : memref<5x2x32xbf16, #tpu.memory_space<vmem>>, vector<1x2x32xbf16>,
    %c0_186 = arith.constant 0 : index
    %c0_187 = arith.constant 0 : index
    %c0_188 = arith.constant 0 : index
    %359 = vector.load %arg2[%c0_186, %c0_187, %c0_188] : memref<5x2x128xf32, #tpu.memory_space<vmem>>, vector<1x2x128xf32>
    %360 = vector.shape_cast %359 : vector<1x2x128xf32> to vector<2x128xf32>
    %c0_189 = arith.constant 0 : index
    %c0_190 = arith.constant 0 : index
    %361 = vector.load %arg9[%c0_189, %c0_190] : memref<2x32xf32, #tpu.memory_space<vmem>>, vector<2x32xf32>
    %362 = arith.truncf %361 : vector<2x32xf32> to vector<2x32xbf16>
    %c0_191 = arith.constant 0 : index
    %c0_192 = arith.constant 0 : index
    %363 = vector.load %arg4[%c0_191, %c0_192] : memref<32x128xbf16, #tpu.memory_space<vmem>>, vector<32x128xbf16>
    %cst_193 = arith.constant dense<0.000000e+00> : vector<2x128xf32>
    %364 = tpu.matmul %362, %363, %cst_193 {dimension_numbers = #tpu.dot_dimension_numbers<[1], [0], [0], [1], [0, 0, 1, 1], [], []>} : vector<2x32xbf16>, vector<32x128xbf16>, vector<2x128xf32> -> vector<2x128xf32>
    %365 = arith.addf %360, %364 : vector<2x128xf32>
    %c0_194 = arith.constant 0 : index
    %c0_195 = arith.constant 0 : index
    %366 = vector.load %arg10[%c0_194, %c0_195] : memref<2x32xf32, #tpu.memory_space<vmem>>, vector<2x32xf32>
    %367 = vector.extract_strided_slice %365 {offsets = [0, 0], sizes = [2, 32], strides = [1, 1]} : vector<2x128xf32> to vector<2x32xf32>
    %368 = arith.negf %367 : vector<2x32xf32>
    %369 = math.exp %368 : vector<2x32xf32>
    %cst_196 = arith.constant 1.000000e+00 : f32
    %370 = vector.broadcast %cst_196 : f32 to vector<2x32xf32>
    %371 = arith.addf %370, %369 : vector<2x32xf32>
    %372 = arith.divf %370, %371 : vector<2x32xf32>
    %373 = vector.extract_strided_slice %365 {offsets = [0, 32], sizes = [2, 32], strides = [1, 1]} : vector<2x128xf32> to vector<2x32xf32>
    %374 = arith.negf %373 : vector<2x32xf32>
    %375 = math.exp %374 : vector<2x32xf32>
    %cst_197 = arith.constant 1.000000e+00 : f32
    %376 = vector.broadcast %cst_197 : f32 to vector<2x32xf32>
    %377 = arith.addf %376, %375 : vector<2x32xf32>
    %378 = arith.divf %376, %377 : vector<2x32xf32>
    %379 = vector.extract_strided_slice %365 {offsets = [0, 64], sizes = [2, 32], strides = [1, 1]} : vector<2x128xf32> to vector<2x32xf32>
    %380 = math.tanh %379 : vector<2x32xf32>
    %381 = vector.extract_strided_slice %365 {offsets = [0, 96], sizes = [2, 32], strides = [1, 1]} : vector<2x128xf32> to vector<2x32xf32>
    %382 = arith.negf %381 : vector<2x32xf32>
    %383 = math.exp %382 : vector<2x32xf32>
    %cst_198 = arith.constant 1.000000e+00 : f32
    %384 = vector.broadcast %cst_198 : f32 to vector<2x32xf32>
    %385 = arith.addf %384, %383 : vector<2x32xf32>
    %386 = arith.divf %384, %385 : vector<2x32xf32>
    %387 = arith.mulf %378, %366 : vector<2x32xf32>
    %388 = arith.mulf %372, %380 : vector<2x32xf32>
    %389 = arith.addf %387, %388 : vector<2x32xf32>
    %390 = math.tanh %389 : vector<2x32xf32>
    %391 = arith.mulf %386, %390 : vector<2x32xf32>
    %c0_199 = arith.constant 0 : index
    %c0_200 = arith.constant 0 : index
    %392 = vector.load %arg9[%c0_199, %c0_200] : memref<2x32xf32, #tpu.memory_space<vmem>>, vector<2x32xf32>
    tpu.vector_store %arg9[%c0_199, %c0_200], %391 {strides = array<i32>} : memref<2x32xf32, #tpu.memory_space<vmem>>, vector<2x32xf32>,
    %c0_201 = arith.constant 0 : index
    %c0_202 = arith.constant 0 : index
    %393 = vector.load %arg10[%c0_201, %c0_202] : memref<2x32xf32, #tpu.memory_space<vmem>>, vector<2x32xf32>
    tpu.vector_store %arg10[%c0_201, %c0_202], %389 {strides = array<i32>} : memref<2x32xf32, #tpu.memory_space<vmem>>, vector<2x32xf32>,
    %394 = arith.truncf %391 : vector<2x32xf32> to vector<2x32xbf16>
    %c0_203 = arith.constant 0 : index
    %c0_204 = arith.constant 0 : index
    %c0_205 = arith.constant 0 : index
    %395 = vector.load %arg6[%c0_203, %c0_204, %c0_205] : memref<5x2x32xbf16, #tpu.memory_space<vmem>>, vector<1x2x32xbf16>
    %396 = vector.shape_cast %395 : vector<1x2x32xbf16> to vector<2x32xbf16>
    %397 = vector.shape_cast %394 : vector<2x32xbf16> to vector<1x2x32xbf16>
    tpu.vector_store %arg6[%c0_203, %c0_204, %c0_205], %397 {strides = array<i32>} : memref<5x2x32xbf16, #tpu.memory_space<vmem>>, vector<1x2x32xbf16>,
    return
  }
  func.func @transform_0(%arg0: i32) -> (i32, i32, i32) {
    %c0_i32 = arith.constant 0 : i32
    %c0_i32_0 = arith.constant 0 : i32
    %c0_i32_1 = arith.constant 0 : i32
    return %c0_i32, %arg0, %c0_i32_0 : i32, i32, i32
  }
  func.func @transform_1(%arg0: i32) -> (i32, i32, i32) {
    %c0_i32 = arith.constant 0 : i32
    %c0_i32_0 = arith.constant 0 : i32
    %c0_i32_1 = arith.constant 0 : i32
    return %c0_i32, %arg0, %c0_i32_0 : i32, i32, i32
  }
  func.func @transform_2(%arg0: i32) -> (i32, i32) {
    %c0_i32 = arith.constant 0 : i32
    %c0_i32_0 = arith.constant 0 : i32
    %c0_i32_1 = arith.constant 0 : i32
    return %c0_i32, %c0_i32_0 : i32, i32
  }
  func.func @transform_3(%arg0: i32) -> (i32, i32) {
    %c0_i32 = arith.constant 0 : i32
    %c0_i32_0 = arith.constant 0 : i32
    %c0_i32_1 = arith.constant 0 : i32
    return %c0_i32, %c0_i32_0 : i32, i32
  }
  func.func @transform_4(%arg0: i32) -> (i32, i32, i32) {
    %c0_i32 = arith.constant 0 : i32
    %c0_i32_0 = arith.constant 0 : i32
    %c0_i32_1 = arith.constant 0 : i32
    return %c0_i32, %arg0, %c0_i32_0 : i32, i32, i32
  }
  func.func @transform_5(%arg0: i32) -> (i32, i32, i32) {
    %c0_i32 = arith.constant 0 : i32
    %c0_i32_0 = arith.constant 0 : i32
    %c0_i32_1 = arith.constant 0 : i32
    return %c0_i32, %arg0, %c0_i32_0 : i32, i32, i32
  }
}

module attributes {stable_mosaic.version = 11 : i64} {
  func.func @_linear_kernel(%arg0: i32, %arg1: i32, %arg2: memref<10x32xbf16, #tpu.memory_space<vmem>>, %arg3: memref<10x32xbf16, #tpu.memory_space<vmem>>, %arg4: memref<32x128xbf16, #tpu.memory_space<vmem>>, %arg5: memref<32x128xbf16, #tpu.memory_space<vmem>>, %arg6: memref<1x128xf32, #tpu.memory_space<vmem>>, %arg7: memref<10x128xf32, #tpu.memory_space<vmem>>) attributes {dimension_semantics = [#tpu.dimension_semantics<parallel>, #tpu.dimension_semantics<parallel>], iteration_bounds = array<i64: 1, 1>, scalar_prefetch = 0 : i64, scratch_operands = 0 : i64, tpu.core_type = #tpu.core_type<tc>, window_params = [{transform_indices = @transform_0, window_bounds = array<i64: 10, 32>}, {transform_indices = @transform_1, window_bounds = array<i64: 10, 32>}, {transform_indices = @transform_2, window_bounds = array<i64: 32, 128>}, {transform_indices = @transform_3, window_bounds = array<i64: 32, 128>}, {transform_indices = @transform_4, window_bounds = array<i64: 1, 128>}, {transform_indices = @transform_5, window_bounds = array<i64: 10, 128>}]} {
    %c0 = arith.constant 0 : index
    %c0_0 = arith.constant 0 : index
    %0 = vector.load %arg2[%c0, %c0_0] : memref<10x32xbf16, #tpu.memory_space<vmem>>, vector<10x32xbf16>
    %c0_1 = arith.constant 0 : index
    %c0_2 = arith.constant 0 : index
    %1 = vector.load %arg4[%c0_1, %c0_2] : memref<32x128xbf16, #tpu.memory_space<vmem>>, vector<32x128xbf16>
    %cst = arith.constant dense<0.000000e+00> : vector<10x128xf32>
    %2 = tpu.matmul %0, %1, %cst {dimension_numbers = #tpu.dot_dimension_numbers<[1], [0], [0], [1], [0, 0, 1, 1], [], []>} : vector<10x32xbf16>, vector<32x128xbf16>, vector<10x128xf32> -> vector<10x128xf32>
    %c0_3 = arith.constant 0 : index
    %c0_4 = arith.constant 0 : index
    %3 = vector.load %arg3[%c0_3, %c0_4] : memref<10x32xbf16, #tpu.memory_space<vmem>>, vector<10x32xbf16>
    %c0_5 = arith.constant 0 : index
    %c0_6 = arith.constant 0 : index
    %4 = vector.load %arg5[%c0_5, %c0_6] : memref<32x128xbf16, #tpu.memory_space<vmem>>, vector<32x128xbf16>
    %cst_7 = arith.constant dense<0.000000e+00> : vector<10x128xf32>
    %5 = tpu.matmul %3, %4, %cst_7 {dimension_numbers = #tpu.dot_dimension_numbers<[1], [0], [0], [1], [0, 0, 1, 1], [], []>} : vector<10x32xbf16>, vector<32x128xbf16>, vector<10x128xf32> -> vector<10x128xf32>
    %6 = arith.addf %2, %5 : vector<10x128xf32>
    %c0_8 = arith.constant 0 : index
    %c0_9 = arith.constant 0 : index
    %7 = vector.load %arg6[%c0_8, %c0_9] : memref<1x128xf32, #tpu.memory_space<vmem>>, vector<1x128xf32>
    %8 = vector.broadcast %7 : vector<1x128xf32> to vector<10x128xf32>
    %9 = arith.addf %6, %8 : vector<10x128xf32>
    %c0_10 = arith.constant 0 : index
    %c0_11 = arith.constant 0 : index
    %10 = vector.load %arg7[%c0_10, %c0_11] : memref<10x128xf32, #tpu.memory_space<vmem>>, vector<10x128xf32>
    tpu.vector_store %arg7[%c0_10, %c0_11], %9 {strides = array<i32>} : memref<10x128xf32, #tpu.memory_space<vmem>>, vector<10x128xf32>,
    return
  }
  func.func @transform_0(%arg0: i32, %arg1: i32) -> (i32, i32) {
    %c0_i32 = arith.constant 0 : i32
    %c0_i32_0 = arith.constant 0 : i32
    return %arg0, %c0_i32 : i32, i32
  }
  func.func @transform_1(%arg0: i32, %arg1: i32) -> (i32, i32) {
    %c0_i32 = arith.constant 0 : i32
    %c0_i32_0 = arith.constant 0 : i32
    return %arg0, %c0_i32 : i32, i32
  }
  func.func @transform_2(%arg0: i32, %arg1: i32) -> (i32, i32) {
    %c0_i32 = arith.constant 0 : i32
    %c0_i32_0 = arith.constant 0 : i32
    return %c0_i32, %arg1 : i32, i32
  }
  func.func @transform_3(%arg0: i32, %arg1: i32) -> (i32, i32) {
    %c0_i32 = arith.constant 0 : i32
    %c0_i32_0 = arith.constant 0 : i32
    return %c0_i32, %arg1 : i32, i32
  }
  func.func @transform_4(%arg0: i32, %arg1: i32) -> (i32, i32) {
    %c0_i32 = arith.constant 0 : i32
    %c0_i32_0 = arith.constant 0 : i32
    return %c0_i32, %arg1 : i32, i32
  }
  func.func @transform_5(%arg0: i32, %arg1: i32) -> (i32, i32) {
    %c0_i32 = arith.constant 0 : i32
    return %arg0, %arg1 : i32, i32
  }
}

module attributes {stable_mosaic.version = 11 : i64} {
  func.func @_linear_kernel(%arg0: i32, %arg1: i32, %arg2: memref<8x32xf32, #tpu.memory_space<vmem>>, %arg3: memref<32x128xbf16, #tpu.memory_space<vmem>>, %arg4: memref<1x128xf32, #tpu.memory_space<vmem>>, %arg5: memref<8x128xf32, #tpu.memory_space<vmem>>) attributes {dimension_semantics = [#tpu.dimension_semantics<parallel>, #tpu.dimension_semantics<parallel>], iteration_bounds = array<i64: 1, 1>, scalar_prefetch = 0 : i64, scratch_operands = 0 : i64, tpu.core_type = #tpu.core_type<tc>, window_params = [{transform_indices = @transform_0, window_bounds = array<i64: 8, 32>}, {transform_indices = @transform_1, window_bounds = array<i64: 32, 128>}, {transform_indices = @transform_2, window_bounds = array<i64: 1, 128>}, {transform_indices = @transform_3, window_bounds = array<i64: 8, 128>}]} {
    %c0 = arith.constant 0 : index
    %c0_0 = arith.constant 0 : index
    %0 = vector.load %arg2[%c0, %c0_0] : memref<8x32xf32, #tpu.memory_space<vmem>>, vector<8x32xf32>
    %1 = arith.truncf %0 : vector<8x32xf32> to vector<8x32xbf16>
    %c0_1 = arith.constant 0 : index
    %c0_2 = arith.constant 0 : index
    %2 = vector.load %arg3[%c0_1, %c0_2] : memref<32x128xbf16, #tpu.memory_space<vmem>>, vector<32x128xbf16>
    %cst = arith.constant dense<0.000000e+00> : vector<8x128xf32>
    %3 = tpu.matmul %1, %2, %cst {dimension_numbers = #tpu.dot_dimension_numbers<[1], [0], [0], [1], [0, 0, 1, 1], [], []>} : vector<8x32xbf16>, vector<32x128xbf16>, vector<8x128xf32> -> vector<8x128xf32>
    %c0_3 = arith.constant 0 : index
    %c0_4 = arith.constant 0 : index
    %4 = vector.load %arg4[%c0_3, %c0_4] : memref<1x128xf32, #tpu.memory_space<vmem>>, vector<1x128xf32>
    %5 = vector.broadcast %4 : vector<1x128xf32> to vector<8x128xf32>
    %6 = arith.addf %3, %5 : vector<8x128xf32>
    %c0_5 = arith.constant 0 : index
    %c0_6 = arith.constant 0 : index
    %7 = vector.load %arg5[%c0_5, %c0_6] : memref<8x128xf32, #tpu.memory_space<vmem>>, vector<8x128xf32>
    tpu.vector_store %arg5[%c0_5, %c0_6], %6 {strides = array<i32>} : memref<8x128xf32, #tpu.memory_space<vmem>>, vector<8x128xf32>,
    return
  }
  func.func @transform_0(%arg0: i32, %arg1: i32) -> (i32, i32) {
    %c0_i32 = arith.constant 0 : i32
    %c0_i32_0 = arith.constant 0 : i32
    return %arg0, %c0_i32 : i32, i32
  }
  func.func @transform_1(%arg0: i32, %arg1: i32) -> (i32, i32) {
    %c0_i32 = arith.constant 0 : i32
    %c0_i32_0 = arith.constant 0 : i32
    return %c0_i32, %arg1 : i32, i32
  }
  func.func @transform_2(%arg0: i32, %arg1: i32) -> (i32, i32) {
    %c0_i32 = arith.constant 0 : i32
    %c0_i32_0 = arith.constant 0 : i32
    return %c0_i32, %arg1 : i32, i32
  }
  func.func @transform_3(%arg0: i32, %arg1: i32) -> (i32, i32) {
    %c0_i32 = arith.constant 0 : i32
    return %arg0, %arg1 : i32, i32
  }
}

module attributes {stable_mosaic.version = 11 : i64} {
  func.func @_linear_kernel(%arg0: i32, %arg1: i32, %arg2: memref<10x32xbf16, #tpu.memory_space<vmem>>, %arg3: memref<10x32xbf16, #tpu.memory_space<vmem>>, %arg4: memref<10x32xf32, #tpu.memory_space<vmem>>, %arg5: memref<32x32xbf16, #tpu.memory_space<vmem>>, %arg6: memref<32x32xbf16, #tpu.memory_space<vmem>>, %arg7: memref<32x32xbf16, #tpu.memory_space<vmem>>, %arg8: memref<1x32xf32, #tpu.memory_space<vmem>>, %arg9: memref<10x32xf32, #tpu.memory_space<vmem>>) attributes {dimension_semantics = [#tpu.dimension_semantics<parallel>, #tpu.dimension_semantics<parallel>], iteration_bounds = array<i64: 1, 1>, scalar_prefetch = 0 : i64, scratch_operands = 0 : i64, tpu.core_type = #tpu.core_type<tc>, window_params = [{transform_indices = @transform_0, window_bounds = array<i64: 10, 32>}, {transform_indices = @transform_1, window_bounds = array<i64: 10, 32>}, {transform_indices = @transform_2, window_bounds = array<i64: 10, 32>}, {transform_indices = @transform_3, window_bounds = array<i64: 32, 32>}, {transform_indices = @transform_4, window_bounds = array<i64: 32, 32>}, {transform_indices = @transform_5, window_bounds = array<i64: 32, 32>}, {transform_indices = @transform_6, window_bounds = array<i64: 1, 32>}, {transform_indices = @transform_7, window_bounds = array<i64: 10, 32>}]} {
    %c0 = arith.constant 0 : index
    %c0_0 = arith.constant 0 : index
    %0 = vector.load %arg2[%c0, %c0_0] : memref<10x32xbf16, #tpu.memory_space<vmem>>, vector<10x32xbf16>
    %c0_1 = arith.constant 0 : index
    %c0_2 = arith.constant 0 : index
    %1 = vector.load %arg5[%c0_1, %c0_2] : memref<32x32xbf16, #tpu.memory_space<vmem>>, vector<32x32xbf16>
    %cst = arith.constant dense<0.000000e+00> : vector<10x32xf32>
    %2 = tpu.matmul %0, %1, %cst {dimension_numbers = #tpu.dot_dimension_numbers<[1], [0], [0], [1], [0, 0, 1, 1], [], []>} : vector<10x32xbf16>, vector<32x32xbf16>, vector<10x32xf32> -> vector<10x32xf32>
    %c0_3 = arith.constant 0 : index
    %c0_4 = arith.constant 0 : index
    %3 = vector.load %arg3[%c0_3, %c0_4] : memref<10x32xbf16, #tpu.memory_space<vmem>>, vector<10x32xbf16>
    %c0_5 = arith.constant 0 : index
    %c0_6 = arith.constant 0 : index
    %4 = vector.load %arg6[%c0_5, %c0_6] : memref<32x32xbf16, #tpu.memory_space<vmem>>, vector<32x32xbf16>
    %cst_7 = arith.constant dense<0.000000e+00> : vector<10x32xf32>
    %5 = tpu.matmul %3, %4, %cst_7 {dimension_numbers = #tpu.dot_dimension_numbers<[1], [0], [0], [1], [0, 0, 1, 1], [], []>} : vector<10x32xbf16>, vector<32x32xbf16>, vector<10x32xf32> -> vector<10x32xf32>
    %6 = arith.addf %2, %5 : vector<10x32xf32>
    %c0_8 = arith.constant 0 : index
    %c0_9 = arith.constant 0 : index
    %7 = vector.load %arg4[%c0_8, %c0_9] : memref<10x32xf32, #tpu.memory_space<vmem>>, vector<10x32xf32>
    %8 = arith.truncf %7 : vector<10x32xf32> to vector<10x32xbf16>
    %c0_10 = arith.constant 0 : index
    %c0_11 = arith.constant 0 : index
    %9 = vector.load %arg7[%c0_10, %c0_11] : memref<32x32xbf16, #tpu.memory_space<vmem>>, vector<32x32xbf16>
    %cst_12 = arith.constant dense<0.000000e+00> : vector<10x32xf32>
    %10 = tpu.matmul %8, %9, %cst_12 {dimension_numbers = #tpu.dot_dimension_numbers<[1], [0], [0], [1], [0, 0, 1, 1], [], []>} : vector<10x32xbf16>, vector<32x32xbf16>, vector<10x32xf32> -> vector<10x32xf32>
    %11 = arith.addf %6, %10 : vector<10x32xf32>
    %c0_13 = arith.constant 0 : index
    %c0_14 = arith.constant 0 : index
    %12 = vector.load %arg8[%c0_13, %c0_14] : memref<1x32xf32, #tpu.memory_space<vmem>>, vector<1x32xf32>
    %13 = vector.broadcast %12 : vector<1x32xf32> to vector<10x32xf32>
    %14 = arith.addf %11, %13 : vector<10x32xf32>
    %c0_15 = arith.constant 0 : index
    %c0_16 = arith.constant 0 : index
    %15 = vector.load %arg9[%c0_15, %c0_16] : memref<10x32xf32, #tpu.memory_space<vmem>>, vector<10x32xf32>
    tpu.vector_store %arg9[%c0_15, %c0_16], %14 {strides = array<i32>} : memref<10x32xf32, #tpu.memory_space<vmem>>, vector<10x32xf32>,
    return
  }
  func.func @transform_0(%arg0: i32, %arg1: i32) -> (i32, i32) {
    %c0_i32 = arith.constant 0 : i32
    %c0_i32_0 = arith.constant 0 : i32
    return %arg0, %c0_i32 : i32, i32
  }
  func.func @transform_1(%arg0: i32, %arg1: i32) -> (i32, i32) {
    %c0_i32 = arith.constant 0 : i32
    %c0_i32_0 = arith.constant 0 : i32
    return %arg0, %c0_i32 : i32, i32
  }
  func.func @transform_2(%arg0: i32, %arg1: i32) -> (i32, i32) {
    %c0_i32 = arith.constant 0 : i32
    %c0_i32_0 = arith.constant 0 : i32
    return %arg0, %c0_i32 : i32, i32
  }
  func.func @transform_3(%arg0: i32, %arg1: i32) -> (i32, i32) {
    %c0_i32 = arith.constant 0 : i32
    %c0_i32_0 = arith.constant 0 : i32
    return %c0_i32, %arg1 : i32, i32
  }
  func.func @transform_4(%arg0: i32, %arg1: i32) -> (i32, i32) {
    %c0_i32 = arith.constant 0 : i32
    %c0_i32_0 = arith.constant 0 : i32
    return %c0_i32, %arg1 : i32, i32
  }
  func.func @transform_5(%arg0: i32, %arg1: i32) -> (i32, i32) {
    %c0_i32 = arith.constant 0 : i32
    %c0_i32_0 = arith.constant 0 : i32
    return %c0_i32, %arg1 : i32, i32
  }
  func.func @transform_6(%arg0: i32, %arg1: i32) -> (i32, i32) {
    %c0_i32 = arith.constant 0 : i32
    %c0_i32_0 = arith.constant 0 : i32
    return %c0_i32, %arg1 : i32, i32
  }
  func.func @transform_7(%arg0: i32, %arg1: i32) -> (i32, i32) {
    %c0_i32 = arith.constant 0 : i32
    return %arg0, %arg1 : i32, i32
  }
}

module attributes {stable_mosaic.version = 11 : i64} {
  func.func @_linear_kernel(%arg0: i32, %arg1: i32, %arg2: memref<64x32xf32, #tpu.memory_space<vmem>>, %arg3: memref<32x128xbf16, #tpu.memory_space<vmem>>, %arg4: memref<1x128xf32, #tpu.memory_space<vmem>>, %arg5: memref<64x128xf32, #tpu.memory_space<vmem>>) attributes {dimension_semantics = [#tpu.dimension_semantics<parallel>, #tpu.dimension_semantics<parallel>], iteration_bounds = array<i64: 1, 1>, scalar_prefetch = 0 : i64, scratch_operands = 0 : i64, tpu.core_type = #tpu.core_type<tc>, window_params = [{transform_indices = @transform_0, window_bounds = array<i64: 64, 32>}, {transform_indices = @transform_1, window_bounds = array<i64: 32, 128>}, {transform_indices = @transform_2, window_bounds = array<i64: 1, 128>}, {transform_indices = @transform_3, window_bounds = array<i64: 64, 128>}]} {
    %c0 = arith.constant 0 : index
    %c0_0 = arith.constant 0 : index
    %0 = vector.load %arg2[%c0, %c0_0] : memref<64x32xf32, #tpu.memory_space<vmem>>, vector<64x32xf32>
    %1 = arith.truncf %0 : vector<64x32xf32> to vector<64x32xbf16>
    %c0_1 = arith.constant 0 : index
    %c0_2 = arith.constant 0 : index
    %2 = vector.load %arg3[%c0_1, %c0_2] : memref<32x128xbf16, #tpu.memory_space<vmem>>, vector<32x128xbf16>
    %cst = arith.constant dense<0.000000e+00> : vector<64x128xf32>
    %3 = tpu.matmul %1, %2, %cst {dimension_numbers = #tpu.dot_dimension_numbers<[1], [0], [0], [1], [0, 0, 1, 1], [], []>} : vector<64x32xbf16>, vector<32x128xbf16>, vector<64x128xf32> -> vector<64x128xf32>
    %c0_3 = arith.constant 0 : index
    %c0_4 = arith.constant 0 : index
    %4 = vector.load %arg4[%c0_3, %c0_4] : memref<1x128xf32, #tpu.memory_space<vmem>>, vector<1x128xf32>
    %5 = vector.broadcast %4 : vector<1x128xf32> to vector<64x128xf32>
    %6 = arith.addf %3, %5 : vector<64x128xf32>
    %c0_5 = arith.constant 0 : index
    %c0_6 = arith.constant 0 : index
    %7 = vector.load %arg5[%c0_5, %c0_6] : memref<64x128xf32, #tpu.memory_space<vmem>>, vector<64x128xf32>
    tpu.vector_store %arg5[%c0_5, %c0_6], %6 {strides = array<i32>} : memref<64x128xf32, #tpu.memory_space<vmem>>, vector<64x128xf32>,
    return
  }
  func.func @transform_0(%arg0: i32, %arg1: i32) -> (i32, i32) {
    %c0_i32 = arith.constant 0 : i32
    %c0_i32_0 = arith.constant 0 : i32
    return %arg0, %c0_i32 : i32, i32
  }
  func.func @transform_1(%arg0: i32, %arg1: i32) -> (i32, i32) {
    %c0_i32 = arith.constant 0 : i32
    %c0_i32_0 = arith.constant 0 : i32
    return %c0_i32, %arg1 : i32, i32
  }
  func.func @transform_2(%arg0: i32, %arg1: i32) -> (i32, i32) {
    %c0_i32 = arith.constant 0 : i32
    %c0_i32_0 = arith.constant 0 : i32
    return %c0_i32, %arg1 : i32, i32
  }
  func.func @transform_3(%arg0: i32, %arg1: i32) -> (i32, i32) {
    %c0_i32 = arith.constant 0 : i32
    return %arg0, %arg1 : i32, i32
  }
}

module attributes {stable_mosaic.version = 11 : i64} {
  func.func @_dec_lstm_kernel(%arg0: i32, %arg1: memref<8x8x128xf32, #tpu.memory_space<vmem>>, %arg2: memref<8x128xf32, #tpu.memory_space<vmem>>, %arg3: memref<32x128xbf16, #tpu.memory_space<vmem>>, %arg4: memref<32x128xbf16, #tpu.memory_space<vmem>>, %arg5: memref<1x128xf32, #tpu.memory_space<vmem>>, %arg6: memref<32x128xbf16, #tpu.memory_space<vmem>>, %arg7: memref<8x8x32xbf16, #tpu.memory_space<vmem>>, %arg8: memref<8x32xf32, #tpu.memory_space<vmem>>, %arg9: memref<8x32xf32, #tpu.memory_space<vmem>>, %arg10: memref<8x8x32xbf16, #tpu.memory_space<vmem>>) attributes {dimension_semantics = [#tpu.dimension_semantics<parallel>], iteration_bounds = array<i64: 1>, scalar_prefetch = 0 : i64, scratch_operands = 3 : i64, tpu.core_type = #tpu.core_type<tc>, window_params = [{transform_indices = @transform_0, window_bounds = array<i64: 8, 8, 128>}, {transform_indices = @transform_1, window_bounds = array<i64: 8, 128>}, {pipeline_mode = #tpu.pipeline_mode<synchronous>, transform_indices = @transform_2, window_bounds = array<i64: 32, 128>}, {pipeline_mode = #tpu.pipeline_mode<synchronous>, transform_indices = @transform_3, window_bounds = array<i64: 32, 128>}, {pipeline_mode = #tpu.pipeline_mode<synchronous>, transform_indices = @transform_4, window_bounds = array<i64: 1, 128>}, {pipeline_mode = #tpu.pipeline_mode<synchronous>, transform_indices = @transform_5, window_bounds = array<i64: 32, 128>}, {transform_indices = @transform_6, window_bounds = array<i64: 8, 8, 32>}]} {
    %cst = arith.constant 0.000000e+00 : f32
    %0 = vector.broadcast %cst : f32 to vector<8x32xf32>
    %c0 = arith.constant 0 : index
    %c0_0 = arith.constant 0 : index
    %1 = vector.load %arg8[%c0, %c0_0] : memref<8x32xf32, #tpu.memory_space<vmem>>, vector<8x32xf32>
    tpu.vector_store %arg8[%c0, %c0_0], %0 {strides = array<i32>} : memref<8x32xf32, #tpu.memory_space<vmem>>, vector<8x32xf32>,
    %cst_1 = arith.constant 0.000000e+00 : f32
    %2 = vector.broadcast %cst_1 : f32 to vector<8x32xf32>
    %c0_2 = arith.constant 0 : index
    %c0_3 = arith.constant 0 : index
    %3 = vector.load %arg9[%c0_2, %c0_3] : memref<8x32xf32, #tpu.memory_space<vmem>>, vector<8x32xf32>
    tpu.vector_store %arg9[%c0_2, %c0_3], %2 {strides = array<i32>} : memref<8x32xf32, #tpu.memory_space<vmem>>, vector<8x32xf32>,
    %c0_4 = arith.constant 0 : index
    %c0_5 = arith.constant 0 : index
    %c0_6 = arith.constant 0 : index
    %4 = vector.load %arg1[%c0_4, %c0_5, %c0_6] : memref<8x8x128xf32, #tpu.memory_space<vmem>>, vector<1x8x128xf32>
    %5 = vector.shape_cast %4 : vector<1x8x128xf32> to vector<8x128xf32>
    %c0_7 = arith.constant 0 : index
    %c0_8 = arith.constant 0 : index
    %6 = vector.load %arg2[%c0_7, %c0_8] : memref<8x128xf32, #tpu.memory_space<vmem>>, vector<8x128xf32>
    %7 = arith.addf %5, %6 : vector<8x128xf32>
    %c0_9 = arith.constant 0 : index
    %c0_10 = arith.constant 0 : index
    %8 = vector.load %arg8[%c0_9, %c0_10] : memref<8x32xf32, #tpu.memory_space<vmem>>, vector<8x32xf32>
    %9 = arith.truncf %8 : vector<8x32xf32> to vector<8x32xbf16>
    %c0_11 = arith.constant 0 : index
    %c0_12 = arith.constant 0 : index
    %10 = vector.load %arg3[%c0_11, %c0_12] : memref<32x128xbf16, #tpu.memory_space<vmem>>, vector<32x128xbf16>
    %cst_13 = arith.constant dense<0.000000e+00> : vector<8x128xf32>
    %11 = tpu.matmul %9, %10, %cst_13 {dimension_numbers = #tpu.dot_dimension_numbers<[1], [0], [0], [1], [0, 0, 1, 1], [], []>} : vector<8x32xbf16>, vector<32x128xbf16>, vector<8x128xf32> -> vector<8x128xf32>
    %12 = arith.addf %7, %11 : vector<8x128xf32>
    %c0_14 = arith.constant 0 : index
    %c0_15 = arith.constant 0 : index
    %13 = vector.load %arg9[%c0_14, %c0_15] : memref<8x32xf32, #tpu.memory_space<vmem>>, vector<8x32xf32>
    %14 = vector.extract_strided_slice %12 {offsets = [0, 0], sizes = [8, 32], strides = [1, 1]} : vector<8x128xf32> to vector<8x32xf32>
    %15 = arith.negf %14 : vector<8x32xf32>
    %16 = math.exp %15 : vector<8x32xf32>
    %cst_16 = arith.constant 1.000000e+00 : f32
    %17 = vector.broadcast %cst_16 : f32 to vector<8x32xf32>
    %18 = arith.addf %17, %16 : vector<8x32xf32>
    %19 = arith.divf %17, %18 : vector<8x32xf32>
    %20 = vector.extract_strided_slice %12 {offsets = [0, 32], sizes = [8, 32], strides = [1, 1]} : vector<8x128xf32> to vector<8x32xf32>
    %21 = arith.negf %20 : vector<8x32xf32>
    %22 = math.exp %21 : vector<8x32xf32>
    %cst_17 = arith.constant 1.000000e+00 : f32
    %23 = vector.broadcast %cst_17 : f32 to vector<8x32xf32>
    %24 = arith.addf %23, %22 : vector<8x32xf32>
    %25 = arith.divf %23, %24 : vector<8x32xf32>
    %26 = vector.extract_strided_slice %12 {offsets = [0, 64], sizes = [8, 32], strides = [1, 1]} : vector<8x128xf32> to vector<8x32xf32>
    %27 = math.tanh %26 : vector<8x32xf32>
    %28 = vector.extract_strided_slice %12 {offsets = [0, 96], sizes = [8, 32], strides = [1, 1]} : vector<8x128xf32> to vector<8x32xf32>
    %29 = arith.negf %28 : vector<8x32xf32>
    %30 = math.exp %29 : vector<8x32xf32>
    %cst_18 = arith.constant 1.000000e+00 : f32
    %31 = vector.broadcast %cst_18 : f32 to vector<8x32xf32>
    %32 = arith.addf %31, %30 : vector<8x32xf32>
    %33 = arith.divf %31, %32 : vector<8x32xf32>
    %34 = arith.mulf %25, %13 : vector<8x32xf32>
    %35 = arith.mulf %19, %27 : vector<8x32xf32>
    %36 = arith.addf %34, %35 : vector<8x32xf32>
    %37 = math.tanh %36 : vector<8x32xf32>
    %38 = arith.mulf %33, %37 : vector<8x32xf32>
    %c0_19 = arith.constant 0 : index
    %c0_20 = arith.constant 0 : index
    %39 = vector.load %arg8[%c0_19, %c0_20] : memref<8x32xf32, #tpu.memory_space<vmem>>, vector<8x32xf32>
    tpu.vector_store %arg8[%c0_19, %c0_20], %38 {strides = array<i32>} : memref<8x32xf32, #tpu.memory_space<vmem>>, vector<8x32xf32>,
    %c0_21 = arith.constant 0 : index
    %c0_22 = arith.constant 0 : index
    %40 = vector.load %arg9[%c0_21, %c0_22] : memref<8x32xf32, #tpu.memory_space<vmem>>, vector<8x32xf32>
    tpu.vector_store %arg9[%c0_21, %c0_22], %36 {strides = array<i32>} : memref<8x32xf32, #tpu.memory_space<vmem>>, vector<8x32xf32>,
    %41 = arith.truncf %38 : vector<8x32xf32> to vector<8x32xbf16>
    %c0_23 = arith.constant 0 : index
    %c0_24 = arith.constant 0 : index
    %c0_25 = arith.constant 0 : index
    %42 = vector.load %arg10[%c0_23, %c0_24, %c0_25] : memref<8x8x32xbf16, #tpu.memory_space<vmem>>, vector<1x8x32xbf16>
    %43 = vector.shape_cast %42 : vector<1x8x32xbf16> to vector<8x32xbf16>
    %44 = vector.shape_cast %41 : vector<8x32xbf16> to vector<1x8x32xbf16>
    tpu.vector_store %arg10[%c0_23, %c0_24, %c0_25], %44 {strides = array<i32>} : memref<8x8x32xbf16, #tpu.memory_space<vmem>>, vector<1x8x32xbf16>,
    %c1 = arith.constant 1 : index
    %c0_26 = arith.constant 0 : index
    %c0_27 = arith.constant 0 : index
    %45 = vector.load %arg1[%c1, %c0_26, %c0_27] : memref<8x8x128xf32, #tpu.memory_space<vmem>>, vector<1x8x128xf32>
    %46 = vector.shape_cast %45 : vector<1x8x128xf32> to vector<8x128xf32>
    %c0_28 = arith.constant 0 : index
    %c0_29 = arith.constant 0 : index
    %47 = vector.load %arg2[%c0_28, %c0_29] : memref<8x128xf32, #tpu.memory_space<vmem>>, vector<8x128xf32>
    %48 = arith.addf %46, %47 : vector<8x128xf32>
    %c0_30 = arith.constant 0 : index
    %c0_31 = arith.constant 0 : index
    %49 = vector.load %arg8[%c0_30, %c0_31] : memref<8x32xf32, #tpu.memory_space<vmem>>, vector<8x32xf32>
    %50 = arith.truncf %49 : vector<8x32xf32> to vector<8x32xbf16>
    %c0_32 = arith.constant 0 : index
    %c0_33 = arith.constant 0 : index
    %51 = vector.load %arg3[%c0_32, %c0_33] : memref<32x128xbf16, #tpu.memory_space<vmem>>, vector<32x128xbf16>
    %cst_34 = arith.constant dense<0.000000e+00> : vector<8x128xf32>
    %52 = tpu.matmul %50, %51, %cst_34 {dimension_numbers = #tpu.dot_dimension_numbers<[1], [0], [0], [1], [0, 0, 1, 1], [], []>} : vector<8x32xbf16>, vector<32x128xbf16>, vector<8x128xf32> -> vector<8x128xf32>
    %53 = arith.addf %48, %52 : vector<8x128xf32>
    %c0_35 = arith.constant 0 : index
    %c0_36 = arith.constant 0 : index
    %54 = vector.load %arg9[%c0_35, %c0_36] : memref<8x32xf32, #tpu.memory_space<vmem>>, vector<8x32xf32>
    %55 = vector.extract_strided_slice %53 {offsets = [0, 0], sizes = [8, 32], strides = [1, 1]} : vector<8x128xf32> to vector<8x32xf32>
    %56 = arith.negf %55 : vector<8x32xf32>
    %57 = math.exp %56 : vector<8x32xf32>
    %cst_37 = arith.constant 1.000000e+00 : f32
    %58 = vector.broadcast %cst_37 : f32 to vector<8x32xf32>
    %59 = arith.addf %58, %57 : vector<8x32xf32>
    %60 = arith.divf %58, %59 : vector<8x32xf32>
    %61 = vector.extract_strided_slice %53 {offsets = [0, 32], sizes = [8, 32], strides = [1, 1]} : vector<8x128xf32> to vector<8x32xf32>
    %62 = arith.negf %61 : vector<8x32xf32>
    %63 = math.exp %62 : vector<8x32xf32>
    %cst_38 = arith.constant 1.000000e+00 : f32
    %64 = vector.broadcast %cst_38 : f32 to vector<8x32xf32>
    %65 = arith.addf %64, %63 : vector<8x32xf32>
    %66 = arith.divf %64, %65 : vector<8x32xf32>
    %67 = vector.extract_strided_slice %53 {offsets = [0, 64], sizes = [8, 32], strides = [1, 1]} : vector<8x128xf32> to vector<8x32xf32>
    %68 = math.tanh %67 : vector<8x32xf32>
    %69 = vector.extract_strided_slice %53 {offsets = [0, 96], sizes = [8, 32], strides = [1, 1]} : vector<8x128xf32> to vector<8x32xf32>
    %70 = arith.negf %69 : vector<8x32xf32>
    %71 = math.exp %70 : vector<8x32xf32>
    %cst_39 = arith.constant 1.000000e+00 : f32
    %72 = vector.broadcast %cst_39 : f32 to vector<8x32xf32>
    %73 = arith.addf %72, %71 : vector<8x32xf32>
    %74 = arith.divf %72, %73 : vector<8x32xf32>
    %75 = arith.mulf %66, %54 : vector<8x32xf32>
    %76 = arith.mulf %60, %68 : vector<8x32xf32>
    %77 = arith.addf %75, %76 : vector<8x32xf32>
    %78 = math.tanh %77 : vector<8x32xf32>
    %79 = arith.mulf %74, %78 : vector<8x32xf32>
    %c0_40 = arith.constant 0 : index
    %c0_41 = arith.constant 0 : index
    %80 = vector.load %arg8[%c0_40, %c0_41] : memref<8x32xf32, #tpu.memory_space<vmem>>, vector<8x32xf32>
    tpu.vector_store %arg8[%c0_40, %c0_41], %79 {strides = array<i32>} : memref<8x32xf32, #tpu.memory_space<vmem>>, vector<8x32xf32>,
    %c0_42 = arith.constant 0 : index
    %c0_43 = arith.constant 0 : index
    %81 = vector.load %arg9[%c0_42, %c0_43] : memref<8x32xf32, #tpu.memory_space<vmem>>, vector<8x32xf32>
    tpu.vector_store %arg9[%c0_42, %c0_43], %77 {strides = array<i32>} : memref<8x32xf32, #tpu.memory_space<vmem>>, vector<8x32xf32>,
    %82 = arith.truncf %79 : vector<8x32xf32> to vector<8x32xbf16>
    %c1_44 = arith.constant 1 : index
    %c0_45 = arith.constant 0 : index
    %c0_46 = arith.constant 0 : index
    %83 = vector.load %arg10[%c1_44, %c0_45, %c0_46] : memref<8x8x32xbf16, #tpu.memory_space<vmem>>, vector<1x8x32xbf16>
    %84 = vector.shape_cast %83 : vector<1x8x32xbf16> to vector<8x32xbf16>
    %85 = vector.shape_cast %82 : vector<8x32xbf16> to vector<1x8x32xbf16>
    tpu.vector_store %arg10[%c1_44, %c0_45, %c0_46], %85 {strides = array<i32>} : memref<8x8x32xbf16, #tpu.memory_space<vmem>>, vector<1x8x32xbf16>,
    %c2 = arith.constant 2 : index
    %c0_47 = arith.constant 0 : index
    %c0_48 = arith.constant 0 : index
    %86 = vector.load %arg1[%c2, %c0_47, %c0_48] : memref<8x8x128xf32, #tpu.memory_space<vmem>>, vector<1x8x128xf32>
    %87 = vector.shape_cast %86 : vector<1x8x128xf32> to vector<8x128xf32>
    %c0_49 = arith.constant 0 : index
    %c0_50 = arith.constant 0 : index
    %88 = vector.load %arg2[%c0_49, %c0_50] : memref<8x128xf32, #tpu.memory_space<vmem>>, vector<8x128xf32>
    %89 = arith.addf %87, %88 : vector<8x128xf32>
    %c0_51 = arith.constant 0 : index
    %c0_52 = arith.constant 0 : index
    %90 = vector.load %arg8[%c0_51, %c0_52] : memref<8x32xf32, #tpu.memory_space<vmem>>, vector<8x32xf32>
    %91 = arith.truncf %90 : vector<8x32xf32> to vector<8x32xbf16>
    %c0_53 = arith.constant 0 : index
    %c0_54 = arith.constant 0 : index
    %92 = vector.load %arg3[%c0_53, %c0_54] : memref<32x128xbf16, #tpu.memory_space<vmem>>, vector<32x128xbf16>
    %cst_55 = arith.constant dense<0.000000e+00> : vector<8x128xf32>
    %93 = tpu.matmul %91, %92, %cst_55 {dimension_numbers = #tpu.dot_dimension_numbers<[1], [0], [0], [1], [0, 0, 1, 1], [], []>} : vector<8x32xbf16>, vector<32x128xbf16>, vector<8x128xf32> -> vector<8x128xf32>
    %94 = arith.addf %89, %93 : vector<8x128xf32>
    %c0_56 = arith.constant 0 : index
    %c0_57 = arith.constant 0 : index
    %95 = vector.load %arg9[%c0_56, %c0_57] : memref<8x32xf32, #tpu.memory_space<vmem>>, vector<8x32xf32>
    %96 = vector.extract_strided_slice %94 {offsets = [0, 0], sizes = [8, 32], strides = [1, 1]} : vector<8x128xf32> to vector<8x32xf32>
    %97 = arith.negf %96 : vector<8x32xf32>
    %98 = math.exp %97 : vector<8x32xf32>
    %cst_58 = arith.constant 1.000000e+00 : f32
    %99 = vector.broadcast %cst_58 : f32 to vector<8x32xf32>
    %100 = arith.addf %99, %98 : vector<8x32xf32>
    %101 = arith.divf %99, %100 : vector<8x32xf32>
    %102 = vector.extract_strided_slice %94 {offsets = [0, 32], sizes = [8, 32], strides = [1, 1]} : vector<8x128xf32> to vector<8x32xf32>
    %103 = arith.negf %102 : vector<8x32xf32>
    %104 = math.exp %103 : vector<8x32xf32>
    %cst_59 = arith.constant 1.000000e+00 : f32
    %105 = vector.broadcast %cst_59 : f32 to vector<8x32xf32>
    %106 = arith.addf %105, %104 : vector<8x32xf32>
    %107 = arith.divf %105, %106 : vector<8x32xf32>
    %108 = vector.extract_strided_slice %94 {offsets = [0, 64], sizes = [8, 32], strides = [1, 1]} : vector<8x128xf32> to vector<8x32xf32>
    %109 = math.tanh %108 : vector<8x32xf32>
    %110 = vector.extract_strided_slice %94 {offsets = [0, 96], sizes = [8, 32], strides = [1, 1]} : vector<8x128xf32> to vector<8x32xf32>
    %111 = arith.negf %110 : vector<8x32xf32>
    %112 = math.exp %111 : vector<8x32xf32>
    %cst_60 = arith.constant 1.000000e+00 : f32
    %113 = vector.broadcast %cst_60 : f32 to vector<8x32xf32>
    %114 = arith.addf %113, %112 : vector<8x32xf32>
    %115 = arith.divf %113, %114 : vector<8x32xf32>
    %116 = arith.mulf %107, %95 : vector<8x32xf32>
    %117 = arith.mulf %101, %109 : vector<8x32xf32>
    %118 = arith.addf %116, %117 : vector<8x32xf32>
    %119 = math.tanh %118 : vector<8x32xf32>
    %120 = arith.mulf %115, %119 : vector<8x32xf32>
    %c0_61 = arith.constant 0 : index
    %c0_62 = arith.constant 0 : index
    %121 = vector.load %arg8[%c0_61, %c0_62] : memref<8x32xf32, #tpu.memory_space<vmem>>, vector<8x32xf32>
    tpu.vector_store %arg8[%c0_61, %c0_62], %120 {strides = array<i32>} : memref<8x32xf32, #tpu.memory_space<vmem>>, vector<8x32xf32>,
    %c0_63 = arith.constant 0 : index
    %c0_64 = arith.constant 0 : index
    %122 = vector.load %arg9[%c0_63, %c0_64] : memref<8x32xf32, #tpu.memory_space<vmem>>, vector<8x32xf32>
    tpu.vector_store %arg9[%c0_63, %c0_64], %118 {strides = array<i32>} : memref<8x32xf32, #tpu.memory_space<vmem>>, vector<8x32xf32>,
    %123 = arith.truncf %120 : vector<8x32xf32> to vector<8x32xbf16>
    %c2_65 = arith.constant 2 : index
    %c0_66 = arith.constant 0 : index
    %c0_67 = arith.constant 0 : index
    %124 = vector.load %arg10[%c2_65, %c0_66, %c0_67] : memref<8x8x32xbf16, #tpu.memory_space<vmem>>, vector<1x8x32xbf16>
    %125 = vector.shape_cast %124 : vector<1x8x32xbf16> to vector<8x32xbf16>
    %126 = vector.shape_cast %123 : vector<8x32xbf16> to vector<1x8x32xbf16>
    tpu.vector_store %arg10[%c2_65, %c0_66, %c0_67], %126 {strides = array<i32>} : memref<8x8x32xbf16, #tpu.memory_space<vmem>>, vector<1x8x32xbf16>,
    %c3 = arith.constant 3 : index
    %c0_68 = arith.constant 0 : index
    %c0_69 = arith.constant 0 : index
    %127 = vector.load %arg1[%c3, %c0_68, %c0_69] : memref<8x8x128xf32, #tpu.memory_space<vmem>>, vector<1x8x128xf32>
    %128 = vector.shape_cast %127 : vector<1x8x128xf32> to vector<8x128xf32>
    %c0_70 = arith.constant 0 : index
    %c0_71 = arith.constant 0 : index
    %129 = vector.load %arg2[%c0_70, %c0_71] : memref<8x128xf32, #tpu.memory_space<vmem>>, vector<8x128xf32>
    %130 = arith.addf %128, %129 : vector<8x128xf32>
    %c0_72 = arith.constant 0 : index
    %c0_73 = arith.constant 0 : index
    %131 = vector.load %arg8[%c0_72, %c0_73] : memref<8x32xf32, #tpu.memory_space<vmem>>, vector<8x32xf32>
    %132 = arith.truncf %131 : vector<8x32xf32> to vector<8x32xbf16>
    %c0_74 = arith.constant 0 : index
    %c0_75 = arith.constant 0 : index
    %133 = vector.load %arg3[%c0_74, %c0_75] : memref<32x128xbf16, #tpu.memory_space<vmem>>, vector<32x128xbf16>
    %cst_76 = arith.constant dense<0.000000e+00> : vector<8x128xf32>
    %134 = tpu.matmul %132, %133, %cst_76 {dimension_numbers = #tpu.dot_dimension_numbers<[1], [0], [0], [1], [0, 0, 1, 1], [], []>} : vector<8x32xbf16>, vector<32x128xbf16>, vector<8x128xf32> -> vector<8x128xf32>
    %135 = arith.addf %130, %134 : vector<8x128xf32>
    %c0_77 = arith.constant 0 : index
    %c0_78 = arith.constant 0 : index
    %136 = vector.load %arg9[%c0_77, %c0_78] : memref<8x32xf32, #tpu.memory_space<vmem>>, vector<8x32xf32>
    %137 = vector.extract_strided_slice %135 {offsets = [0, 0], sizes = [8, 32], strides = [1, 1]} : vector<8x128xf32> to vector<8x32xf32>
    %138 = arith.negf %137 : vector<8x32xf32>
    %139 = math.exp %138 : vector<8x32xf32>
    %cst_79 = arith.constant 1.000000e+00 : f32
    %140 = vector.broadcast %cst_79 : f32 to vector<8x32xf32>
    %141 = arith.addf %140, %139 : vector<8x32xf32>
    %142 = arith.divf %140, %141 : vector<8x32xf32>
    %143 = vector.extract_strided_slice %135 {offsets = [0, 32], sizes = [8, 32], strides = [1, 1]} : vector<8x128xf32> to vector<8x32xf32>
    %144 = arith.negf %143 : vector<8x32xf32>
    %145 = math.exp %144 : vector<8x32xf32>
    %cst_80 = arith.constant 1.000000e+00 : f32
    %146 = vector.broadcast %cst_80 : f32 to vector<8x32xf32>
    %147 = arith.addf %146, %145 : vector<8x32xf32>
    %148 = arith.divf %146, %147 : vector<8x32xf32>
    %149 = vector.extract_strided_slice %135 {offsets = [0, 64], sizes = [8, 32], strides = [1, 1]} : vector<8x128xf32> to vector<8x32xf32>
    %150 = math.tanh %149 : vector<8x32xf32>
    %151 = vector.extract_strided_slice %135 {offsets = [0, 96], sizes = [8, 32], strides = [1, 1]} : vector<8x128xf32> to vector<8x32xf32>
    %152 = arith.negf %151 : vector<8x32xf32>
    %153 = math.exp %152 : vector<8x32xf32>
    %cst_81 = arith.constant 1.000000e+00 : f32
    %154 = vector.broadcast %cst_81 : f32 to vector<8x32xf32>
    %155 = arith.addf %154, %153 : vector<8x32xf32>
    %156 = arith.divf %154, %155 : vector<8x32xf32>
    %157 = arith.mulf %148, %136 : vector<8x32xf32>
    %158 = arith.mulf %142, %150 : vector<8x32xf32>
    %159 = arith.addf %157, %158 : vector<8x32xf32>
    %160 = math.tanh %159 : vector<8x32xf32>
    %161 = arith.mulf %156, %160 : vector<8x32xf32>
    %c0_82 = arith.constant 0 : index
    %c0_83 = arith.constant 0 : index
    %162 = vector.load %arg8[%c0_82, %c0_83] : memref<8x32xf32, #tpu.memory_space<vmem>>, vector<8x32xf32>
    tpu.vector_store %arg8[%c0_82, %c0_83], %161 {strides = array<i32>} : memref<8x32xf32, #tpu.memory_space<vmem>>, vector<8x32xf32>,
    %c0_84 = arith.constant 0 : index
    %c0_85 = arith.constant 0 : index
    %163 = vector.load %arg9[%c0_84, %c0_85] : memref<8x32xf32, #tpu.memory_space<vmem>>, vector<8x32xf32>
    tpu.vector_store %arg9[%c0_84, %c0_85], %159 {strides = array<i32>} : memref<8x32xf32, #tpu.memory_space<vmem>>, vector<8x32xf32>,
    %164 = arith.truncf %161 : vector<8x32xf32> to vector<8x32xbf16>
    %c3_86 = arith.constant 3 : index
    %c0_87 = arith.constant 0 : index
    %c0_88 = arith.constant 0 : index
    %165 = vector.load %arg10[%c3_86, %c0_87, %c0_88] : memref<8x8x32xbf16, #tpu.memory_space<vmem>>, vector<1x8x32xbf16>
    %166 = vector.shape_cast %165 : vector<1x8x32xbf16> to vector<8x32xbf16>
    %167 = vector.shape_cast %164 : vector<8x32xbf16> to vector<1x8x32xbf16>
    tpu.vector_store %arg10[%c3_86, %c0_87, %c0_88], %167 {strides = array<i32>} : memref<8x8x32xbf16, #tpu.memory_space<vmem>>, vector<1x8x32xbf16>,
    %c4 = arith.constant 4 : index
    %c0_89 = arith.constant 0 : index
    %c0_90 = arith.constant 0 : index
    %168 = vector.load %arg1[%c4, %c0_89, %c0_90] : memref<8x8x128xf32, #tpu.memory_space<vmem>>, vector<1x8x128xf32>
    %169 = vector.shape_cast %168 : vector<1x8x128xf32> to vector<8x128xf32>
    %c0_91 = arith.constant 0 : index
    %c0_92 = arith.constant 0 : index
    %170 = vector.load %arg2[%c0_91, %c0_92] : memref<8x128xf32, #tpu.memory_space<vmem>>, vector<8x128xf32>
    %171 = arith.addf %169, %170 : vector<8x128xf32>
    %c0_93 = arith.constant 0 : index
    %c0_94 = arith.constant 0 : index
    %172 = vector.load %arg8[%c0_93, %c0_94] : memref<8x32xf32, #tpu.memory_space<vmem>>, vector<8x32xf32>
    %173 = arith.truncf %172 : vector<8x32xf32> to vector<8x32xbf16>
    %c0_95 = arith.constant 0 : index
    %c0_96 = arith.constant 0 : index
    %174 = vector.load %arg3[%c0_95, %c0_96] : memref<32x128xbf16, #tpu.memory_space<vmem>>, vector<32x128xbf16>
    %cst_97 = arith.constant dense<0.000000e+00> : vector<8x128xf32>
    %175 = tpu.matmul %173, %174, %cst_97 {dimension_numbers = #tpu.dot_dimension_numbers<[1], [0], [0], [1], [0, 0, 1, 1], [], []>} : vector<8x32xbf16>, vector<32x128xbf16>, vector<8x128xf32> -> vector<8x128xf32>
    %176 = arith.addf %171, %175 : vector<8x128xf32>
    %c0_98 = arith.constant 0 : index
    %c0_99 = arith.constant 0 : index
    %177 = vector.load %arg9[%c0_98, %c0_99] : memref<8x32xf32, #tpu.memory_space<vmem>>, vector<8x32xf32>
    %178 = vector.extract_strided_slice %176 {offsets = [0, 0], sizes = [8, 32], strides = [1, 1]} : vector<8x128xf32> to vector<8x32xf32>
    %179 = arith.negf %178 : vector<8x32xf32>
    %180 = math.exp %179 : vector<8x32xf32>
    %cst_100 = arith.constant 1.000000e+00 : f32
    %181 = vector.broadcast %cst_100 : f32 to vector<8x32xf32>
    %182 = arith.addf %181, %180 : vector<8x32xf32>
    %183 = arith.divf %181, %182 : vector<8x32xf32>
    %184 = vector.extract_strided_slice %176 {offsets = [0, 32], sizes = [8, 32], strides = [1, 1]} : vector<8x128xf32> to vector<8x32xf32>
    %185 = arith.negf %184 : vector<8x32xf32>
    %186 = math.exp %185 : vector<8x32xf32>
    %cst_101 = arith.constant 1.000000e+00 : f32
    %187 = vector.broadcast %cst_101 : f32 to vector<8x32xf32>
    %188 = arith.addf %187, %186 : vector<8x32xf32>
    %189 = arith.divf %187, %188 : vector<8x32xf32>
    %190 = vector.extract_strided_slice %176 {offsets = [0, 64], sizes = [8, 32], strides = [1, 1]} : vector<8x128xf32> to vector<8x32xf32>
    %191 = math.tanh %190 : vector<8x32xf32>
    %192 = vector.extract_strided_slice %176 {offsets = [0, 96], sizes = [8, 32], strides = [1, 1]} : vector<8x128xf32> to vector<8x32xf32>
    %193 = arith.negf %192 : vector<8x32xf32>
    %194 = math.exp %193 : vector<8x32xf32>
    %cst_102 = arith.constant 1.000000e+00 : f32
    %195 = vector.broadcast %cst_102 : f32 to vector<8x32xf32>
    %196 = arith.addf %195, %194 : vector<8x32xf32>
    %197 = arith.divf %195, %196 : vector<8x32xf32>
    %198 = arith.mulf %189, %177 : vector<8x32xf32>
    %199 = arith.mulf %183, %191 : vector<8x32xf32>
    %200 = arith.addf %198, %199 : vector<8x32xf32>
    %201 = math.tanh %200 : vector<8x32xf32>
    %202 = arith.mulf %197, %201 : vector<8x32xf32>
    %c0_103 = arith.constant 0 : index
    %c0_104 = arith.constant 0 : index
    %203 = vector.load %arg8[%c0_103, %c0_104] : memref<8x32xf32, #tpu.memory_space<vmem>>, vector<8x32xf32>
    tpu.vector_store %arg8[%c0_103, %c0_104], %202 {strides = array<i32>} : memref<8x32xf32, #tpu.memory_space<vmem>>, vector<8x32xf32>,
    %c0_105 = arith.constant 0 : index
    %c0_106 = arith.constant 0 : index
    %204 = vector.load %arg9[%c0_105, %c0_106] : memref<8x32xf32, #tpu.memory_space<vmem>>, vector<8x32xf32>
    tpu.vector_store %arg9[%c0_105, %c0_106], %200 {strides = array<i32>} : memref<8x32xf32, #tpu.memory_space<vmem>>, vector<8x32xf32>,
    %205 = arith.truncf %202 : vector<8x32xf32> to vector<8x32xbf16>
    %c4_107 = arith.constant 4 : index
    %c0_108 = arith.constant 0 : index
    %c0_109 = arith.constant 0 : index
    %206 = vector.load %arg10[%c4_107, %c0_108, %c0_109] : memref<8x8x32xbf16, #tpu.memory_space<vmem>>, vector<1x8x32xbf16>
    %207 = vector.shape_cast %206 : vector<1x8x32xbf16> to vector<8x32xbf16>
    %208 = vector.shape_cast %205 : vector<8x32xbf16> to vector<1x8x32xbf16>
    tpu.vector_store %arg10[%c4_107, %c0_108, %c0_109], %208 {strides = array<i32>} : memref<8x8x32xbf16, #tpu.memory_space<vmem>>, vector<1x8x32xbf16>,
    %c5 = arith.constant 5 : index
    %c0_110 = arith.constant 0 : index
    %c0_111 = arith.constant 0 : index
    %209 = vector.load %arg1[%c5, %c0_110, %c0_111] : memref<8x8x128xf32, #tpu.memory_space<vmem>>, vector<1x8x128xf32>
    %210 = vector.shape_cast %209 : vector<1x8x128xf32> to vector<8x128xf32>
    %c0_112 = arith.constant 0 : index
    %c0_113 = arith.constant 0 : index
    %211 = vector.load %arg2[%c0_112, %c0_113] : memref<8x128xf32, #tpu.memory_space<vmem>>, vector<8x128xf32>
    %212 = arith.addf %210, %211 : vector<8x128xf32>
    %c0_114 = arith.constant 0 : index
    %c0_115 = arith.constant 0 : index
    %213 = vector.load %arg8[%c0_114, %c0_115] : memref<8x32xf32, #tpu.memory_space<vmem>>, vector<8x32xf32>
    %214 = arith.truncf %213 : vector<8x32xf32> to vector<8x32xbf16>
    %c0_116 = arith.constant 0 : index
    %c0_117 = arith.constant 0 : index
    %215 = vector.load %arg3[%c0_116, %c0_117] : memref<32x128xbf16, #tpu.memory_space<vmem>>, vector<32x128xbf16>
    %cst_118 = arith.constant dense<0.000000e+00> : vector<8x128xf32>
    %216 = tpu.matmul %214, %215, %cst_118 {dimension_numbers = #tpu.dot_dimension_numbers<[1], [0], [0], [1], [0, 0, 1, 1], [], []>} : vector<8x32xbf16>, vector<32x128xbf16>, vector<8x128xf32> -> vector<8x128xf32>
    %217 = arith.addf %212, %216 : vector<8x128xf32>
    %c0_119 = arith.constant 0 : index
    %c0_120 = arith.constant 0 : index
    %218 = vector.load %arg9[%c0_119, %c0_120] : memref<8x32xf32, #tpu.memory_space<vmem>>, vector<8x32xf32>
    %219 = vector.extract_strided_slice %217 {offsets = [0, 0], sizes = [8, 32], strides = [1, 1]} : vector<8x128xf32> to vector<8x32xf32>
    %220 = arith.negf %219 : vector<8x32xf32>
    %221 = math.exp %220 : vector<8x32xf32>
    %cst_121 = arith.constant 1.000000e+00 : f32
    %222 = vector.broadcast %cst_121 : f32 to vector<8x32xf32>
    %223 = arith.addf %222, %221 : vector<8x32xf32>
    %224 = arith.divf %222, %223 : vector<8x32xf32>
    %225 = vector.extract_strided_slice %217 {offsets = [0, 32], sizes = [8, 32], strides = [1, 1]} : vector<8x128xf32> to vector<8x32xf32>
    %226 = arith.negf %225 : vector<8x32xf32>
    %227 = math.exp %226 : vector<8x32xf32>
    %cst_122 = arith.constant 1.000000e+00 : f32
    %228 = vector.broadcast %cst_122 : f32 to vector<8x32xf32>
    %229 = arith.addf %228, %227 : vector<8x32xf32>
    %230 = arith.divf %228, %229 : vector<8x32xf32>
    %231 = vector.extract_strided_slice %217 {offsets = [0, 64], sizes = [8, 32], strides = [1, 1]} : vector<8x128xf32> to vector<8x32xf32>
    %232 = math.tanh %231 : vector<8x32xf32>
    %233 = vector.extract_strided_slice %217 {offsets = [0, 96], sizes = [8, 32], strides = [1, 1]} : vector<8x128xf32> to vector<8x32xf32>
    %234 = arith.negf %233 : vector<8x32xf32>
    %235 = math.exp %234 : vector<8x32xf32>
    %cst_123 = arith.constant 1.000000e+00 : f32
    %236 = vector.broadcast %cst_123 : f32 to vector<8x32xf32>
    %237 = arith.addf %236, %235 : vector<8x32xf32>
    %238 = arith.divf %236, %237 : vector<8x32xf32>
    %239 = arith.mulf %230, %218 : vector<8x32xf32>
    %240 = arith.mulf %224, %232 : vector<8x32xf32>
    %241 = arith.addf %239, %240 : vector<8x32xf32>
    %242 = math.tanh %241 : vector<8x32xf32>
    %243 = arith.mulf %238, %242 : vector<8x32xf32>
    %c0_124 = arith.constant 0 : index
    %c0_125 = arith.constant 0 : index
    %244 = vector.load %arg8[%c0_124, %c0_125] : memref<8x32xf32, #tpu.memory_space<vmem>>, vector<8x32xf32>
    tpu.vector_store %arg8[%c0_124, %c0_125], %243 {strides = array<i32>} : memref<8x32xf32, #tpu.memory_space<vmem>>, vector<8x32xf32>,
    %c0_126 = arith.constant 0 : index
    %c0_127 = arith.constant 0 : index
    %245 = vector.load %arg9[%c0_126, %c0_127] : memref<8x32xf32, #tpu.memory_space<vmem>>, vector<8x32xf32>
    tpu.vector_store %arg9[%c0_126, %c0_127], %241 {strides = array<i32>} : memref<8x32xf32, #tpu.memory_space<vmem>>, vector<8x32xf32>,
    %246 = arith.truncf %243 : vector<8x32xf32> to vector<8x32xbf16>
    %c5_128 = arith.constant 5 : index
    %c0_129 = arith.constant 0 : index
    %c0_130 = arith.constant 0 : index
    %247 = vector.load %arg10[%c5_128, %c0_129, %c0_130] : memref<8x8x32xbf16, #tpu.memory_space<vmem>>, vector<1x8x32xbf16>
    %248 = vector.shape_cast %247 : vector<1x8x32xbf16> to vector<8x32xbf16>
    %249 = vector.shape_cast %246 : vector<8x32xbf16> to vector<1x8x32xbf16>
    tpu.vector_store %arg10[%c5_128, %c0_129, %c0_130], %249 {strides = array<i32>} : memref<8x8x32xbf16, #tpu.memory_space<vmem>>, vector<1x8x32xbf16>,
    %c6 = arith.constant 6 : index
    %c0_131 = arith.constant 0 : index
    %c0_132 = arith.constant 0 : index
    %250 = vector.load %arg1[%c6, %c0_131, %c0_132] : memref<8x8x128xf32, #tpu.memory_space<vmem>>, vector<1x8x128xf32>
    %251 = vector.shape_cast %250 : vector<1x8x128xf32> to vector<8x128xf32>
    %c0_133 = arith.constant 0 : index
    %c0_134 = arith.constant 0 : index
    %252 = vector.load %arg2[%c0_133, %c0_134] : memref<8x128xf32, #tpu.memory_space<vmem>>, vector<8x128xf32>
    %253 = arith.addf %251, %252 : vector<8x128xf32>
    %c0_135 = arith.constant 0 : index
    %c0_136 = arith.constant 0 : index
    %254 = vector.load %arg8[%c0_135, %c0_136] : memref<8x32xf32, #tpu.memory_space<vmem>>, vector<8x32xf32>
    %255 = arith.truncf %254 : vector<8x32xf32> to vector<8x32xbf16>
    %c0_137 = arith.constant 0 : index
    %c0_138 = arith.constant 0 : index
    %256 = vector.load %arg3[%c0_137, %c0_138] : memref<32x128xbf16, #tpu.memory_space<vmem>>, vector<32x128xbf16>
    %cst_139 = arith.constant dense<0.000000e+00> : vector<8x128xf32>
    %257 = tpu.matmul %255, %256, %cst_139 {dimension_numbers = #tpu.dot_dimension_numbers<[1], [0], [0], [1], [0, 0, 1, 1], [], []>} : vector<8x32xbf16>, vector<32x128xbf16>, vector<8x128xf32> -> vector<8x128xf32>
    %258 = arith.addf %253, %257 : vector<8x128xf32>
    %c0_140 = arith.constant 0 : index
    %c0_141 = arith.constant 0 : index
    %259 = vector.load %arg9[%c0_140, %c0_141] : memref<8x32xf32, #tpu.memory_space<vmem>>, vector<8x32xf32>
    %260 = vector.extract_strided_slice %258 {offsets = [0, 0], sizes = [8, 32], strides = [1, 1]} : vector<8x128xf32> to vector<8x32xf32>
    %261 = arith.negf %260 : vector<8x32xf32>
    %262 = math.exp %261 : vector<8x32xf32>
    %cst_142 = arith.constant 1.000000e+00 : f32
    %263 = vector.broadcast %cst_142 : f32 to vector<8x32xf32>
    %264 = arith.addf %263, %262 : vector<8x32xf32>
    %265 = arith.divf %263, %264 : vector<8x32xf32>
    %266 = vector.extract_strided_slice %258 {offsets = [0, 32], sizes = [8, 32], strides = [1, 1]} : vector<8x128xf32> to vector<8x32xf32>
    %267 = arith.negf %266 : vector<8x32xf32>
    %268 = math.exp %267 : vector<8x32xf32>
    %cst_143 = arith.constant 1.000000e+00 : f32
    %269 = vector.broadcast %cst_143 : f32 to vector<8x32xf32>
    %270 = arith.addf %269, %268 : vector<8x32xf32>
    %271 = arith.divf %269, %270 : vector<8x32xf32>
    %272 = vector.extract_strided_slice %258 {offsets = [0, 64], sizes = [8, 32], strides = [1, 1]} : vector<8x128xf32> to vector<8x32xf32>
    %273 = math.tanh %272 : vector<8x32xf32>
    %274 = vector.extract_strided_slice %258 {offsets = [0, 96], sizes = [8, 32], strides = [1, 1]} : vector<8x128xf32> to vector<8x32xf32>
    %275 = arith.negf %274 : vector<8x32xf32>
    %276 = math.exp %275 : vector<8x32xf32>
    %cst_144 = arith.constant 1.000000e+00 : f32
    %277 = vector.broadcast %cst_144 : f32 to vector<8x32xf32>
    %278 = arith.addf %277, %276 : vector<8x32xf32>
    %279 = arith.divf %277, %278 : vector<8x32xf32>
    %280 = arith.mulf %271, %259 : vector<8x32xf32>
    %281 = arith.mulf %265, %273 : vector<8x32xf32>
    %282 = arith.addf %280, %281 : vector<8x32xf32>
    %283 = math.tanh %282 : vector<8x32xf32>
    %284 = arith.mulf %279, %283 : vector<8x32xf32>
    %c0_145 = arith.constant 0 : index
    %c0_146 = arith.constant 0 : index
    %285 = vector.load %arg8[%c0_145, %c0_146] : memref<8x32xf32, #tpu.memory_space<vmem>>, vector<8x32xf32>
    tpu.vector_store %arg8[%c0_145, %c0_146], %284 {strides = array<i32>} : memref<8x32xf32, #tpu.memory_space<vmem>>, vector<8x32xf32>,
    %c0_147 = arith.constant 0 : index
    %c0_148 = arith.constant 0 : index
    %286 = vector.load %arg9[%c0_147, %c0_148] : memref<8x32xf32, #tpu.memory_space<vmem>>, vector<8x32xf32>
    tpu.vector_store %arg9[%c0_147, %c0_148], %282 {strides = array<i32>} : memref<8x32xf32, #tpu.memory_space<vmem>>, vector<8x32xf32>,
    %287 = arith.truncf %284 : vector<8x32xf32> to vector<8x32xbf16>
    %c6_149 = arith.constant 6 : index
    %c0_150 = arith.constant 0 : index
    %c0_151 = arith.constant 0 : index
    %288 = vector.load %arg10[%c6_149, %c0_150, %c0_151] : memref<8x8x32xbf16, #tpu.memory_space<vmem>>, vector<1x8x32xbf16>
    %289 = vector.shape_cast %288 : vector<1x8x32xbf16> to vector<8x32xbf16>
    %290 = vector.shape_cast %287 : vector<8x32xbf16> to vector<1x8x32xbf16>
    tpu.vector_store %arg10[%c6_149, %c0_150, %c0_151], %290 {strides = array<i32>} : memref<8x8x32xbf16, #tpu.memory_space<vmem>>, vector<1x8x32xbf16>,
    %c7 = arith.constant 7 : index
    %c0_152 = arith.constant 0 : index
    %c0_153 = arith.constant 0 : index
    %291 = vector.load %arg1[%c7, %c0_152, %c0_153] : memref<8x8x128xf32, #tpu.memory_space<vmem>>, vector<1x8x128xf32>
    %292 = vector.shape_cast %291 : vector<1x8x128xf32> to vector<8x128xf32>
    %c0_154 = arith.constant 0 : index
    %c0_155 = arith.constant 0 : index
    %293 = vector.load %arg2[%c0_154, %c0_155] : memref<8x128xf32, #tpu.memory_space<vmem>>, vector<8x128xf32>
    %294 = arith.addf %292, %293 : vector<8x128xf32>
    %c0_156 = arith.constant 0 : index
    %c0_157 = arith.constant 0 : index
    %295 = vector.load %arg8[%c0_156, %c0_157] : memref<8x32xf32, #tpu.memory_space<vmem>>, vector<8x32xf32>
    %296 = arith.truncf %295 : vector<8x32xf32> to vector<8x32xbf16>
    %c0_158 = arith.constant 0 : index
    %c0_159 = arith.constant 0 : index
    %297 = vector.load %arg3[%c0_158, %c0_159] : memref<32x128xbf16, #tpu.memory_space<vmem>>, vector<32x128xbf16>
    %cst_160 = arith.constant dense<0.000000e+00> : vector<8x128xf32>
    %298 = tpu.matmul %296, %297, %cst_160 {dimension_numbers = #tpu.dot_dimension_numbers<[1], [0], [0], [1], [0, 0, 1, 1], [], []>} : vector<8x32xbf16>, vector<32x128xbf16>, vector<8x128xf32> -> vector<8x128xf32>
    %299 = arith.addf %294, %298 : vector<8x128xf32>
    %c0_161 = arith.constant 0 : index
    %c0_162 = arith.constant 0 : index
    %300 = vector.load %arg9[%c0_161, %c0_162] : memref<8x32xf32, #tpu.memory_space<vmem>>, vector<8x32xf32>
    %301 = vector.extract_strided_slice %299 {offsets = [0, 0], sizes = [8, 32], strides = [1, 1]} : vector<8x128xf32> to vector<8x32xf32>
    %302 = arith.negf %301 : vector<8x32xf32>
    %303 = math.exp %302 : vector<8x32xf32>
    %cst_163 = arith.constant 1.000000e+00 : f32
    %304 = vector.broadcast %cst_163 : f32 to vector<8x32xf32>
    %305 = arith.addf %304, %303 : vector<8x32xf32>
    %306 = arith.divf %304, %305 : vector<8x32xf32>
    %307 = vector.extract_strided_slice %299 {offsets = [0, 32], sizes = [8, 32], strides = [1, 1]} : vector<8x128xf32> to vector<8x32xf32>
    %308 = arith.negf %307 : vector<8x32xf32>
    %309 = math.exp %308 : vector<8x32xf32>
    %cst_164 = arith.constant 1.000000e+00 : f32
    %310 = vector.broadcast %cst_164 : f32 to vector<8x32xf32>
    %311 = arith.addf %310, %309 : vector<8x32xf32>
    %312 = arith.divf %310, %311 : vector<8x32xf32>
    %313 = vector.extract_strided_slice %299 {offsets = [0, 64], sizes = [8, 32], strides = [1, 1]} : vector<8x128xf32> to vector<8x32xf32>
    %314 = math.tanh %313 : vector<8x32xf32>
    %315 = vector.extract_strided_slice %299 {offsets = [0, 96], sizes = [8, 32], strides = [1, 1]} : vector<8x128xf32> to vector<8x32xf32>
    %316 = arith.negf %315 : vector<8x32xf32>
    %317 = math.exp %316 : vector<8x32xf32>
    %cst_165 = arith.constant 1.000000e+00 : f32
    %318 = vector.broadcast %cst_165 : f32 to vector<8x32xf32>
    %319 = arith.addf %318, %317 : vector<8x32xf32>
    %320 = arith.divf %318, %319 : vector<8x32xf32>
    %321 = arith.mulf %312, %300 : vector<8x32xf32>
    %322 = arith.mulf %306, %314 : vector<8x32xf32>
    %323 = arith.addf %321, %322 : vector<8x32xf32>
    %324 = math.tanh %323 : vector<8x32xf32>
    %325 = arith.mulf %320, %324 : vector<8x32xf32>
    %c0_166 = arith.constant 0 : index
    %c0_167 = arith.constant 0 : index
    %326 = vector.load %arg8[%c0_166, %c0_167] : memref<8x32xf32, #tpu.memory_space<vmem>>, vector<8x32xf32>
    tpu.vector_store %arg8[%c0_166, %c0_167], %325 {strides = array<i32>} : memref<8x32xf32, #tpu.memory_space<vmem>>, vector<8x32xf32>,
    %c0_168 = arith.constant 0 : index
    %c0_169 = arith.constant 0 : index
    %327 = vector.load %arg9[%c0_168, %c0_169] : memref<8x32xf32, #tpu.memory_space<vmem>>, vector<8x32xf32>
    tpu.vector_store %arg9[%c0_168, %c0_169], %323 {strides = array<i32>} : memref<8x32xf32, #tpu.memory_space<vmem>>, vector<8x32xf32>,
    %328 = arith.truncf %325 : vector<8x32xf32> to vector<8x32xbf16>
    %c7_170 = arith.constant 7 : index
    %c0_171 = arith.constant 0 : index
    %c0_172 = arith.constant 0 : index
    %329 = vector.load %arg10[%c7_170, %c0_171, %c0_172] : memref<8x8x32xbf16, #tpu.memory_space<vmem>>, vector<1x8x32xbf16>
    %330 = vector.shape_cast %329 : vector<1x8x32xbf16> to vector<8x32xbf16>
    %331 = vector.shape_cast %328 : vector<8x32xbf16> to vector<1x8x32xbf16>
    tpu.vector_store %arg10[%c7_170, %c0_171, %c0_172], %331 {strides = array<i32>} : memref<8x8x32xbf16, #tpu.memory_space<vmem>>, vector<1x8x32xbf16>,
    %cst_173 = arith.constant 0.000000e+00 : f32
    %332 = vector.broadcast %cst_173 : f32 to vector<8x32xf32>
    %c0_174 = arith.constant 0 : index
    %c0_175 = arith.constant 0 : index
    %333 = vector.load %arg8[%c0_174, %c0_175] : memref<8x32xf32, #tpu.memory_space<vmem>>, vector<8x32xf32>
    tpu.vector_store %arg8[%c0_174, %c0_175], %332 {strides = array<i32>} : memref<8x32xf32, #tpu.memory_space<vmem>>, vector<8x32xf32>,
    %cst_176 = arith.constant 0.000000e+00 : f32
    %334 = vector.broadcast %cst_176 : f32 to vector<8x32xf32>
    %c0_177 = arith.constant 0 : index
    %c0_178 = arith.constant 0 : index
    %335 = vector.load %arg9[%c0_177, %c0_178] : memref<8x32xf32, #tpu.memory_space<vmem>>, vector<8x32xf32>
    tpu.vector_store %arg9[%c0_177, %c0_178], %334 {strides = array<i32>} : memref<8x32xf32, #tpu.memory_space<vmem>>, vector<8x32xf32>,
    %c0_179 = arith.constant 0 : index
    %c0_180 = arith.constant 0 : index
    %c0_181 = arith.constant 0 : index
    %336 = vector.load %arg10[%c0_179, %c0_180, %c0_181] : memref<8x8x32xbf16, #tpu.memory_space<vmem>>, vector<1x8x32xbf16>
    %337 = vector.shape_cast %336 : vector<1x8x32xbf16> to vector<8x32xbf16>
    %c0_182 = arith.constant 0 : index
    %c0_183 = arith.constant 0 : index
    %338 = vector.load %arg4[%c0_182, %c0_183] : memref<32x128xbf16, #tpu.memory_space<vmem>>, vector<32x128xbf16>
    %cst_184 = arith.constant dense<0.000000e+00> : vector<8x128xf32>
    %339 = tpu.matmul %337, %338, %cst_184 {dimension_numbers = #tpu.dot_dimension_numbers<[1], [0], [0], [1], [0, 0, 1, 1], [], []>} : vector<8x32xbf16>, vector<32x128xbf16>, vector<8x128xf32> -> vector<8x128xf32>
    %c0_185 = arith.constant 0 : index
    %c0_186 = arith.constant 0 : index
    %340 = vector.load %arg5[%c0_185, %c0_186] : memref<1x128xf32, #tpu.memory_space<vmem>>, vector<1x128xf32>
    %341 = vector.broadcast %340 : vector<1x128xf32> to vector<8x128xf32>
    %342 = arith.addf %339, %341 : vector<8x128xf32>
    %c0_187 = arith.constant 0 : index
    %c0_188 = arith.constant 0 : index
    %343 = vector.load %arg8[%c0_187, %c0_188] : memref<8x32xf32, #tpu.memory_space<vmem>>, vector<8x32xf32>
    %344 = arith.truncf %343 : vector<8x32xf32> to vector<8x32xbf16>
    %c0_189 = arith.constant 0 : index
    %c0_190 = arith.constant 0 : index
    %345 = vector.load %arg6[%c0_189, %c0_190] : memref<32x128xbf16, #tpu.memory_space<vmem>>, vector<32x128xbf16>
    %cst_191 = arith.constant dense<0.000000e+00> : vector<8x128xf32>
    %346 = tpu.matmul %344, %345, %cst_191 {dimension_numbers = #tpu.dot_dimension_numbers<[1], [0], [0], [1], [0, 0, 1, 1], [], []>} : vector<8x32xbf16>, vector<32x128xbf16>, vector<8x128xf32> -> vector<8x128xf32>
    %347 = arith.addf %342, %346 : vector<8x128xf32>
    %c0_192 = arith.constant 0 : index
    %c0_193 = arith.constant 0 : index
    %348 = vector.load %arg9[%c0_192, %c0_193] : memref<8x32xf32, #tpu.memory_space<vmem>>, vector<8x32xf32>
    %349 = vector.extract_strided_slice %347 {offsets = [0, 0], sizes = [8, 32], strides = [1, 1]} : vector<8x128xf32> to vector<8x32xf32>
    %350 = arith.negf %349 : vector<8x32xf32>
    %351 = math.exp %350 : vector<8x32xf32>
    %cst_194 = arith.constant 1.000000e+00 : f32
    %352 = vector.broadcast %cst_194 : f32 to vector<8x32xf32>
    %353 = arith.addf %352, %351 : vector<8x32xf32>
    %354 = arith.divf %352, %353 : vector<8x32xf32>
    %355 = vector.extract_strided_slice %347 {offsets = [0, 32], sizes = [8, 32], strides = [1, 1]} : vector<8x128xf32> to vector<8x32xf32>
    %356 = arith.negf %355 : vector<8x32xf32>
    %357 = math.exp %356 : vector<8x32xf32>
    %cst_195 = arith.constant 1.000000e+00 : f32
    %358 = vector.broadcast %cst_195 : f32 to vector<8x32xf32>
    %359 = arith.addf %358, %357 : vector<8x32xf32>
    %360 = arith.divf %358, %359 : vector<8x32xf32>
    %361 = vector.extract_strided_slice %347 {offsets = [0, 64], sizes = [8, 32], strides = [1, 1]} : vector<8x128xf32> to vector<8x32xf32>
    %362 = math.tanh %361 : vector<8x32xf32>
    %363 = vector.extract_strided_slice %347 {offsets = [0, 96], sizes = [8, 32], strides = [1, 1]} : vector<8x128xf32> to vector<8x32xf32>
    %364 = arith.negf %363 : vector<8x32xf32>
    %365 = math.exp %364 : vector<8x32xf32>
    %cst_196 = arith.constant 1.000000e+00 : f32
    %366 = vector.broadcast %cst_196 : f32 to vector<8x32xf32>
    %367 = arith.addf %366, %365 : vector<8x32xf32>
    %368 = arith.divf %366, %367 : vector<8x32xf32>
    %369 = arith.mulf %360, %348 : vector<8x32xf32>
    %370 = arith.mulf %354, %362 : vector<8x32xf32>
    %371 = arith.addf %369, %370 : vector<8x32xf32>
    %372 = math.tanh %371 : vector<8x32xf32>
    %373 = arith.mulf %368, %372 : vector<8x32xf32>
    %c0_197 = arith.constant 0 : index
    %c0_198 = arith.constant 0 : index
    %374 = vector.load %arg8[%c0_197, %c0_198] : memref<8x32xf32, #tpu.memory_space<vmem>>, vector<8x32xf32>
    tpu.vector_store %arg8[%c0_197, %c0_198], %373 {strides = array<i32>} : memref<8x32xf32, #tpu.memory_space<vmem>>, vector<8x32xf32>,
    %c0_199 = arith.constant 0 : index
    %c0_200 = arith.constant 0 : index
    %375 = vector.load %arg9[%c0_199, %c0_200] : memref<8x32xf32, #tpu.memory_space<vmem>>, vector<8x32xf32>
    tpu.vector_store %arg9[%c0_199, %c0_200], %371 {strides = array<i32>} : memref<8x32xf32, #tpu.memory_space<vmem>>, vector<8x32xf32>,
    %376 = arith.truncf %373 : vector<8x32xf32> to vector<8x32xbf16>
    %c0_201 = arith.constant 0 : index
    %c0_202 = arith.constant 0 : index
    %c0_203 = arith.constant 0 : index
    %377 = vector.load %arg7[%c0_201, %c0_202, %c0_203] : memref<8x8x32xbf16, #tpu.memory_space<vmem>>, vector<1x8x32xbf16>
    %378 = vector.shape_cast %377 : vector<1x8x32xbf16> to vector<8x32xbf16>
    %379 = vector.shape_cast %376 : vector<8x32xbf16> to vector<1x8x32xbf16>
    tpu.vector_store %arg7[%c0_201, %c0_202, %c0_203], %379 {strides = array<i32>} : memref<8x8x32xbf16, #tpu.memory_space<vmem>>, vector<1x8x32xbf16>,
    %c1_204 = arith.constant 1 : index
    %c0_205 = arith.constant 0 : index
    %c0_206 = arith.constant 0 : index
    %380 = vector.load %arg10[%c1_204, %c0_205, %c0_206] : memref<8x8x32xbf16, #tpu.memory_space<vmem>>, vector<1x8x32xbf16>
    %381 = vector.shape_cast %380 : vector<1x8x32xbf16> to vector<8x32xbf16>
    %c0_207 = arith.constant 0 : index
    %c0_208 = arith.constant 0 : index
    %382 = vector.load %arg4[%c0_207, %c0_208] : memref<32x128xbf16, #tpu.memory_space<vmem>>, vector<32x128xbf16>
    %cst_209 = arith.constant dense<0.000000e+00> : vector<8x128xf32>
    %383 = tpu.matmul %381, %382, %cst_209 {dimension_numbers = #tpu.dot_dimension_numbers<[1], [0], [0], [1], [0, 0, 1, 1], [], []>} : vector<8x32xbf16>, vector<32x128xbf16>, vector<8x128xf32> -> vector<8x128xf32>
    %c0_210 = arith.constant 0 : index
    %c0_211 = arith.constant 0 : index
    %384 = vector.load %arg5[%c0_210, %c0_211] : memref<1x128xf32, #tpu.memory_space<vmem>>, vector<1x128xf32>
    %385 = vector.broadcast %384 : vector<1x128xf32> to vector<8x128xf32>
    %386 = arith.addf %383, %385 : vector<8x128xf32>
    %c0_212 = arith.constant 0 : index
    %c0_213 = arith.constant 0 : index
    %387 = vector.load %arg8[%c0_212, %c0_213] : memref<8x32xf32, #tpu.memory_space<vmem>>, vector<8x32xf32>
    %388 = arith.truncf %387 : vector<8x32xf32> to vector<8x32xbf16>
    %c0_214 = arith.constant 0 : index
    %c0_215 = arith.constant 0 : index
    %389 = vector.load %arg6[%c0_214, %c0_215] : memref<32x128xbf16, #tpu.memory_space<vmem>>, vector<32x128xbf16>
    %cst_216 = arith.constant dense<0.000000e+00> : vector<8x128xf32>
    %390 = tpu.matmul %388, %389, %cst_216 {dimension_numbers = #tpu.dot_dimension_numbers<[1], [0], [0], [1], [0, 0, 1, 1], [], []>} : vector<8x32xbf16>, vector<32x128xbf16>, vector<8x128xf32> -> vector<8x128xf32>
    %391 = arith.addf %386, %390 : vector<8x128xf32>
    %c0_217 = arith.constant 0 : index
    %c0_218 = arith.constant 0 : index
    %392 = vector.load %arg9[%c0_217, %c0_218] : memref<8x32xf32, #tpu.memory_space<vmem>>, vector<8x32xf32>
    %393 = vector.extract_strided_slice %391 {offsets = [0, 0], sizes = [8, 32], strides = [1, 1]} : vector<8x128xf32> to vector<8x32xf32>
    %394 = arith.negf %393 : vector<8x32xf32>
    %395 = math.exp %394 : vector<8x32xf32>
    %cst_219 = arith.constant 1.000000e+00 : f32
    %396 = vector.broadcast %cst_219 : f32 to vector<8x32xf32>
    %397 = arith.addf %396, %395 : vector<8x32xf32>
    %398 = arith.divf %396, %397 : vector<8x32xf32>
    %399 = vector.extract_strided_slice %391 {offsets = [0, 32], sizes = [8, 32], strides = [1, 1]} : vector<8x128xf32> to vector<8x32xf32>
    %400 = arith.negf %399 : vector<8x32xf32>
    %401 = math.exp %400 : vector<8x32xf32>
    %cst_220 = arith.constant 1.000000e+00 : f32
    %402 = vector.broadcast %cst_220 : f32 to vector<8x32xf32>
    %403 = arith.addf %402, %401 : vector<8x32xf32>
    %404 = arith.divf %402, %403 : vector<8x32xf32>
    %405 = vector.extract_strided_slice %391 {offsets = [0, 64], sizes = [8, 32], strides = [1, 1]} : vector<8x128xf32> to vector<8x32xf32>
    %406 = math.tanh %405 : vector<8x32xf32>
    %407 = vector.extract_strided_slice %391 {offsets = [0, 96], sizes = [8, 32], strides = [1, 1]} : vector<8x128xf32> to vector<8x32xf32>
    %408 = arith.negf %407 : vector<8x32xf32>
    %409 = math.exp %408 : vector<8x32xf32>
    %cst_221 = arith.constant 1.000000e+00 : f32
    %410 = vector.broadcast %cst_221 : f32 to vector<8x32xf32>
    %411 = arith.addf %410, %409 : vector<8x32xf32>
    %412 = arith.divf %410, %411 : vector<8x32xf32>
    %413 = arith.mulf %404, %392 : vector<8x32xf32>
    %414 = arith.mulf %398, %406 : vector<8x32xf32>
    %415 = arith.addf %413, %414 : vector<8x32xf32>
    %416 = math.tanh %415 : vector<8x32xf32>
    %417 = arith.mulf %412, %416 : vector<8x32xf32>
    %c0_222 = arith.constant 0 : index
    %c0_223 = arith.constant 0 : index
    %418 = vector.load %arg8[%c0_222, %c0_223] : memref<8x32xf32, #tpu.memory_space<vmem>>, vector<8x32xf32>
    tpu.vector_store %arg8[%c0_222, %c0_223], %417 {strides = array<i32>} : memref<8x32xf32, #tpu.memory_space<vmem>>, vector<8x32xf32>,
    %c0_224 = arith.constant 0 : index
    %c0_225 = arith.constant 0 : index
    %419 = vector.load %arg9[%c0_224, %c0_225] : memref<8x32xf32, #tpu.memory_space<vmem>>, vector<8x32xf32>
    tpu.vector_store %arg9[%c0_224, %c0_225], %415 {strides = array<i32>} : memref<8x32xf32, #tpu.memory_space<vmem>>, vector<8x32xf32>,
    %420 = arith.truncf %417 : vector<8x32xf32> to vector<8x32xbf16>
    %c1_226 = arith.constant 1 : index
    %c0_227 = arith.constant 0 : index
    %c0_228 = arith.constant 0 : index
    %421 = vector.load %arg7[%c1_226, %c0_227, %c0_228] : memref<8x8x32xbf16, #tpu.memory_space<vmem>>, vector<1x8x32xbf16>
    %422 = vector.shape_cast %421 : vector<1x8x32xbf16> to vector<8x32xbf16>
    %423 = vector.shape_cast %420 : vector<8x32xbf16> to vector<1x8x32xbf16>
    tpu.vector_store %arg7[%c1_226, %c0_227, %c0_228], %423 {strides = array<i32>} : memref<8x8x32xbf16, #tpu.memory_space<vmem>>, vector<1x8x32xbf16>,
    %c2_229 = arith.constant 2 : index
    %c0_230 = arith.constant 0 : index
    %c0_231 = arith.constant 0 : index
    %424 = vector.load %arg10[%c2_229, %c0_230, %c0_231] : memref<8x8x32xbf16, #tpu.memory_space<vmem>>, vector<1x8x32xbf16>
    %425 = vector.shape_cast %424 : vector<1x8x32xbf16> to vector<8x32xbf16>
    %c0_232 = arith.constant 0 : index
    %c0_233 = arith.constant 0 : index
    %426 = vector.load %arg4[%c0_232, %c0_233] : memref<32x128xbf16, #tpu.memory_space<vmem>>, vector<32x128xbf16>
    %cst_234 = arith.constant dense<0.000000e+00> : vector<8x128xf32>
    %427 = tpu.matmul %425, %426, %cst_234 {dimension_numbers = #tpu.dot_dimension_numbers<[1], [0], [0], [1], [0, 0, 1, 1], [], []>} : vector<8x32xbf16>, vector<32x128xbf16>, vector<8x128xf32> -> vector<8x128xf32>
    %c0_235 = arith.constant 0 : index
    %c0_236 = arith.constant 0 : index
    %428 = vector.load %arg5[%c0_235, %c0_236] : memref<1x128xf32, #tpu.memory_space<vmem>>, vector<1x128xf32>
    %429 = vector.broadcast %428 : vector<1x128xf32> to vector<8x128xf32>
    %430 = arith.addf %427, %429 : vector<8x128xf32>
    %c0_237 = arith.constant 0 : index
    %c0_238 = arith.constant 0 : index
    %431 = vector.load %arg8[%c0_237, %c0_238] : memref<8x32xf32, #tpu.memory_space<vmem>>, vector<8x32xf32>
    %432 = arith.truncf %431 : vector<8x32xf32> to vector<8x32xbf16>
    %c0_239 = arith.constant 0 : index
    %c0_240 = arith.constant 0 : index
    %433 = vector.load %arg6[%c0_239, %c0_240] : memref<32x128xbf16, #tpu.memory_space<vmem>>, vector<32x128xbf16>
    %cst_241 = arith.constant dense<0.000000e+00> : vector<8x128xf32>
    %434 = tpu.matmul %432, %433, %cst_241 {dimension_numbers = #tpu.dot_dimension_numbers<[1], [0], [0], [1], [0, 0, 1, 1], [], []>} : vector<8x32xbf16>, vector<32x128xbf16>, vector<8x128xf32> -> vector<8x128xf32>
    %435 = arith.addf %430, %434 : vector<8x128xf32>
    %c0_242 = arith.constant 0 : index
    %c0_243 = arith.constant 0 : index
    %436 = vector.load %arg9[%c0_242, %c0_243] : memref<8x32xf32, #tpu.memory_space<vmem>>, vector<8x32xf32>
    %437 = vector.extract_strided_slice %435 {offsets = [0, 0], sizes = [8, 32], strides = [1, 1]} : vector<8x128xf32> to vector<8x32xf32>
    %438 = arith.negf %437 : vector<8x32xf32>
    %439 = math.exp %438 : vector<8x32xf32>
    %cst_244 = arith.constant 1.000000e+00 : f32
    %440 = vector.broadcast %cst_244 : f32 to vector<8x32xf32>
    %441 = arith.addf %440, %439 : vector<8x32xf32>
    %442 = arith.divf %440, %441 : vector<8x32xf32>
    %443 = vector.extract_strided_slice %435 {offsets = [0, 32], sizes = [8, 32], strides = [1, 1]} : vector<8x128xf32> to vector<8x32xf32>
    %444 = arith.negf %443 : vector<8x32xf32>
    %445 = math.exp %444 : vector<8x32xf32>
    %cst_245 = arith.constant 1.000000e+00 : f32
    %446 = vector.broadcast %cst_245 : f32 to vector<8x32xf32>
    %447 = arith.addf %446, %445 : vector<8x32xf32>
    %448 = arith.divf %446, %447 : vector<8x32xf32>
    %449 = vector.extract_strided_slice %435 {offsets = [0, 64], sizes = [8, 32], strides = [1, 1]} : vector<8x128xf32> to vector<8x32xf32>
    %450 = math.tanh %449 : vector<8x32xf32>
    %451 = vector.extract_strided_slice %435 {offsets = [0, 96], sizes = [8, 32], strides = [1, 1]} : vector<8x128xf32> to vector<8x32xf32>
    %452 = arith.negf %451 : vector<8x32xf32>
    %453 = math.exp %452 : vector<8x32xf32>
    %cst_246 = arith.constant 1.000000e+00 : f32
    %454 = vector.broadcast %cst_246 : f32 to vector<8x32xf32>
    %455 = arith.addf %454, %453 : vector<8x32xf32>
    %456 = arith.divf %454, %455 : vector<8x32xf32>
    %457 = arith.mulf %448, %436 : vector<8x32xf32>
    %458 = arith.mulf %442, %450 : vector<8x32xf32>
    %459 = arith.addf %457, %458 : vector<8x32xf32>
    %460 = math.tanh %459 : vector<8x32xf32>
    %461 = arith.mulf %456, %460 : vector<8x32xf32>
    %c0_247 = arith.constant 0 : index
    %c0_248 = arith.constant 0 : index
    %462 = vector.load %arg8[%c0_247, %c0_248] : memref<8x32xf32, #tpu.memory_space<vmem>>, vector<8x32xf32>
    tpu.vector_store %arg8[%c0_247, %c0_248], %461 {strides = array<i32>} : memref<8x32xf32, #tpu.memory_space<vmem>>, vector<8x32xf32>,
    %c0_249 = arith.constant 0 : index
    %c0_250 = arith.constant 0 : index
    %463 = vector.load %arg9[%c0_249, %c0_250] : memref<8x32xf32, #tpu.memory_space<vmem>>, vector<8x32xf32>
    tpu.vector_store %arg9[%c0_249, %c0_250], %459 {strides = array<i32>} : memref<8x32xf32, #tpu.memory_space<vmem>>, vector<8x32xf32>,
    %464 = arith.truncf %461 : vector<8x32xf32> to vector<8x32xbf16>
    %c2_251 = arith.constant 2 : index
    %c0_252 = arith.constant 0 : index
    %c0_253 = arith.constant 0 : index
    %465 = vector.load %arg7[%c2_251, %c0_252, %c0_253] : memref<8x8x32xbf16, #tpu.memory_space<vmem>>, vector<1x8x32xbf16>
    %466 = vector.shape_cast %465 : vector<1x8x32xbf16> to vector<8x32xbf16>
    %467 = vector.shape_cast %464 : vector<8x32xbf16> to vector<1x8x32xbf16>
    tpu.vector_store %arg7[%c2_251, %c0_252, %c0_253], %467 {strides = array<i32>} : memref<8x8x32xbf16, #tpu.memory_space<vmem>>, vector<1x8x32xbf16>,
    %c3_254 = arith.constant 3 : index
    %c0_255 = arith.constant 0 : index
    %c0_256 = arith.constant 0 : index
    %468 = vector.load %arg10[%c3_254, %c0_255, %c0_256] : memref<8x8x32xbf16, #tpu.memory_space<vmem>>, vector<1x8x32xbf16>
    %469 = vector.shape_cast %468 : vector<1x8x32xbf16> to vector<8x32xbf16>
    %c0_257 = arith.constant 0 : index
    %c0_258 = arith.constant 0 : index
    %470 = vector.load %arg4[%c0_257, %c0_258] : memref<32x128xbf16, #tpu.memory_space<vmem>>, vector<32x128xbf16>
    %cst_259 = arith.constant dense<0.000000e+00> : vector<8x128xf32>
    %471 = tpu.matmul %469, %470, %cst_259 {dimension_numbers = #tpu.dot_dimension_numbers<[1], [0], [0], [1], [0, 0, 1, 1], [], []>} : vector<8x32xbf16>, vector<32x128xbf16>, vector<8x128xf32> -> vector<8x128xf32>
    %c0_260 = arith.constant 0 : index
    %c0_261 = arith.constant 0 : index
    %472 = vector.load %arg5[%c0_260, %c0_261] : memref<1x128xf32, #tpu.memory_space<vmem>>, vector<1x128xf32>
    %473 = vector.broadcast %472 : vector<1x128xf32> to vector<8x128xf32>
    %474 = arith.addf %471, %473 : vector<8x128xf32>
    %c0_262 = arith.constant 0 : index
    %c0_263 = arith.constant 0 : index
    %475 = vector.load %arg8[%c0_262, %c0_263] : memref<8x32xf32, #tpu.memory_space<vmem>>, vector<8x32xf32>
    %476 = arith.truncf %475 : vector<8x32xf32> to vector<8x32xbf16>
    %c0_264 = arith.constant 0 : index
    %c0_265 = arith.constant 0 : index
    %477 = vector.load %arg6[%c0_264, %c0_265] : memref<32x128xbf16, #tpu.memory_space<vmem>>, vector<32x128xbf16>
    %cst_266 = arith.constant dense<0.000000e+00> : vector<8x128xf32>
    %478 = tpu.matmul %476, %477, %cst_266 {dimension_numbers = #tpu.dot_dimension_numbers<[1], [0], [0], [1], [0, 0, 1, 1], [], []>} : vector<8x32xbf16>, vector<32x128xbf16>, vector<8x128xf32> -> vector<8x128xf32>
    %479 = arith.addf %474, %478 : vector<8x128xf32>
    %c0_267 = arith.constant 0 : index
    %c0_268 = arith.constant 0 : index
    %480 = vector.load %arg9[%c0_267, %c0_268] : memref<8x32xf32, #tpu.memory_space<vmem>>, vector<8x32xf32>
    %481 = vector.extract_strided_slice %479 {offsets = [0, 0], sizes = [8, 32], strides = [1, 1]} : vector<8x128xf32> to vector<8x32xf32>
    %482 = arith.negf %481 : vector<8x32xf32>
    %483 = math.exp %482 : vector<8x32xf32>
    %cst_269 = arith.constant 1.000000e+00 : f32
    %484 = vector.broadcast %cst_269 : f32 to vector<8x32xf32>
    %485 = arith.addf %484, %483 : vector<8x32xf32>
    %486 = arith.divf %484, %485 : vector<8x32xf32>
    %487 = vector.extract_strided_slice %479 {offsets = [0, 32], sizes = [8, 32], strides = [1, 1]} : vector<8x128xf32> to vector<8x32xf32>
    %488 = arith.negf %487 : vector<8x32xf32>
    %489 = math.exp %488 : vector<8x32xf32>
    %cst_270 = arith.constant 1.000000e+00 : f32
    %490 = vector.broadcast %cst_270 : f32 to vector<8x32xf32>
    %491 = arith.addf %490, %489 : vector<8x32xf32>
    %492 = arith.divf %490, %491 : vector<8x32xf32>
    %493 = vector.extract_strided_slice %479 {offsets = [0, 64], sizes = [8, 32], strides = [1, 1]} : vector<8x128xf32> to vector<8x32xf32>
    %494 = math.tanh %493 : vector<8x32xf32>
    %495 = vector.extract_strided_slice %479 {offsets = [0, 96], sizes = [8, 32], strides = [1, 1]} : vector<8x128xf32> to vector<8x32xf32>
    %496 = arith.negf %495 : vector<8x32xf32>
    %497 = math.exp %496 : vector<8x32xf32>
    %cst_271 = arith.constant 1.000000e+00 : f32
    %498 = vector.broadcast %cst_271 : f32 to vector<8x32xf32>
    %499 = arith.addf %498, %497 : vector<8x32xf32>
    %500 = arith.divf %498, %499 : vector<8x32xf32>
    %501 = arith.mulf %492, %480 : vector<8x32xf32>
    %502 = arith.mulf %486, %494 : vector<8x32xf32>
    %503 = arith.addf %501, %502 : vector<8x32xf32>
    %504 = math.tanh %503 : vector<8x32xf32>
    %505 = arith.mulf %500, %504 : vector<8x32xf32>
    %c0_272 = arith.constant 0 : index
    %c0_273 = arith.constant 0 : index
    %506 = vector.load %arg8[%c0_272, %c0_273] : memref<8x32xf32, #tpu.memory_space<vmem>>, vector<8x32xf32>
    tpu.vector_store %arg8[%c0_272, %c0_273], %505 {strides = array<i32>} : memref<8x32xf32, #tpu.memory_space<vmem>>, vector<8x32xf32>,
    %c0_274 = arith.constant 0 : index
    %c0_275 = arith.constant 0 : index
    %507 = vector.load %arg9[%c0_274, %c0_275] : memref<8x32xf32, #tpu.memory_space<vmem>>, vector<8x32xf32>
    tpu.vector_store %arg9[%c0_274, %c0_275], %503 {strides = array<i32>} : memref<8x32xf32, #tpu.memory_space<vmem>>, vector<8x32xf32>,
    %508 = arith.truncf %505 : vector<8x32xf32> to vector<8x32xbf16>
    %c3_276 = arith.constant 3 : index
    %c0_277 = arith.constant 0 : index
    %c0_278 = arith.constant 0 : index
    %509 = vector.load %arg7[%c3_276, %c0_277, %c0_278] : memref<8x8x32xbf16, #tpu.memory_space<vmem>>, vector<1x8x32xbf16>
    %510 = vector.shape_cast %509 : vector<1x8x32xbf16> to vector<8x32xbf16>
    %511 = vector.shape_cast %508 : vector<8x32xbf16> to vector<1x8x32xbf16>
    tpu.vector_store %arg7[%c3_276, %c0_277, %c0_278], %511 {strides = array<i32>} : memref<8x8x32xbf16, #tpu.memory_space<vmem>>, vector<1x8x32xbf16>,
    %c4_279 = arith.constant 4 : index
    %c0_280 = arith.constant 0 : index
    %c0_281 = arith.constant 0 : index
    %512 = vector.load %arg10[%c4_279, %c0_280, %c0_281] : memref<8x8x32xbf16, #tpu.memory_space<vmem>>, vector<1x8x32xbf16>
    %513 = vector.shape_cast %512 : vector<1x8x32xbf16> to vector<8x32xbf16>
    %c0_282 = arith.constant 0 : index
    %c0_283 = arith.constant 0 : index
    %514 = vector.load %arg4[%c0_282, %c0_283] : memref<32x128xbf16, #tpu.memory_space<vmem>>, vector<32x128xbf16>
    %cst_284 = arith.constant dense<0.000000e+00> : vector<8x128xf32>
    %515 = tpu.matmul %513, %514, %cst_284 {dimension_numbers = #tpu.dot_dimension_numbers<[1], [0], [0], [1], [0, 0, 1, 1], [], []>} : vector<8x32xbf16>, vector<32x128xbf16>, vector<8x128xf32> -> vector<8x128xf32>
    %c0_285 = arith.constant 0 : index
    %c0_286 = arith.constant 0 : index
    %516 = vector.load %arg5[%c0_285, %c0_286] : memref<1x128xf32, #tpu.memory_space<vmem>>, vector<1x128xf32>
    %517 = vector.broadcast %516 : vector<1x128xf32> to vector<8x128xf32>
    %518 = arith.addf %515, %517 : vector<8x128xf32>
    %c0_287 = arith.constant 0 : index
    %c0_288 = arith.constant 0 : index
    %519 = vector.load %arg8[%c0_287, %c0_288] : memref<8x32xf32, #tpu.memory_space<vmem>>, vector<8x32xf32>
    %520 = arith.truncf %519 : vector<8x32xf32> to vector<8x32xbf16>
    %c0_289 = arith.constant 0 : index
    %c0_290 = arith.constant 0 : index
    %521 = vector.load %arg6[%c0_289, %c0_290] : memref<32x128xbf16, #tpu.memory_space<vmem>>, vector<32x128xbf16>
    %cst_291 = arith.constant dense<0.000000e+00> : vector<8x128xf32>
    %522 = tpu.matmul %520, %521, %cst_291 {dimension_numbers = #tpu.dot_dimension_numbers<[1], [0], [0], [1], [0, 0, 1, 1], [], []>} : vector<8x32xbf16>, vector<32x128xbf16>, vector<8x128xf32> -> vector<8x128xf32>
    %523 = arith.addf %518, %522 : vector<8x128xf32>
    %c0_292 = arith.constant 0 : index
    %c0_293 = arith.constant 0 : index
    %524 = vector.load %arg9[%c0_292, %c0_293] : memref<8x32xf32, #tpu.memory_space<vmem>>, vector<8x32xf32>
    %525 = vector.extract_strided_slice %523 {offsets = [0, 0], sizes = [8, 32], strides = [1, 1]} : vector<8x128xf32> to vector<8x32xf32>
    %526 = arith.negf %525 : vector<8x32xf32>
    %527 = math.exp %526 : vector<8x32xf32>
    %cst_294 = arith.constant 1.000000e+00 : f32
    %528 = vector.broadcast %cst_294 : f32 to vector<8x32xf32>
    %529 = arith.addf %528, %527 : vector<8x32xf32>
    %530 = arith.divf %528, %529 : vector<8x32xf32>
    %531 = vector.extract_strided_slice %523 {offsets = [0, 32], sizes = [8, 32], strides = [1, 1]} : vector<8x128xf32> to vector<8x32xf32>
    %532 = arith.negf %531 : vector<8x32xf32>
    %533 = math.exp %532 : vector<8x32xf32>
    %cst_295 = arith.constant 1.000000e+00 : f32
    %534 = vector.broadcast %cst_295 : f32 to vector<8x32xf32>
    %535 = arith.addf %534, %533 : vector<8x32xf32>
    %536 = arith.divf %534, %535 : vector<8x32xf32>
    %537 = vector.extract_strided_slice %523 {offsets = [0, 64], sizes = [8, 32], strides = [1, 1]} : vector<8x128xf32> to vector<8x32xf32>
    %538 = math.tanh %537 : vector<8x32xf32>
    %539 = vector.extract_strided_slice %523 {offsets = [0, 96], sizes = [8, 32], strides = [1, 1]} : vector<8x128xf32> to vector<8x32xf32>
    %540 = arith.negf %539 : vector<8x32xf32>
    %541 = math.exp %540 : vector<8x32xf32>
    %cst_296 = arith.constant 1.000000e+00 : f32
    %542 = vector.broadcast %cst_296 : f32 to vector<8x32xf32>
    %543 = arith.addf %542, %541 : vector<8x32xf32>
    %544 = arith.divf %542, %543 : vector<8x32xf32>
    %545 = arith.mulf %536, %524 : vector<8x32xf32>
    %546 = arith.mulf %530, %538 : vector<8x32xf32>
    %547 = arith.addf %545, %546 : vector<8x32xf32>
    %548 = math.tanh %547 : vector<8x32xf32>
    %549 = arith.mulf %544, %548 : vector<8x32xf32>
    %c0_297 = arith.constant 0 : index
    %c0_298 = arith.constant 0 : index
    %550 = vector.load %arg8[%c0_297, %c0_298] : memref<8x32xf32, #tpu.memory_space<vmem>>, vector<8x32xf32>
    tpu.vector_store %arg8[%c0_297, %c0_298], %549 {strides = array<i32>} : memref<8x32xf32, #tpu.memory_space<vmem>>, vector<8x32xf32>,
    %c0_299 = arith.constant 0 : index
    %c0_300 = arith.constant 0 : index
    %551 = vector.load %arg9[%c0_299, %c0_300] : memref<8x32xf32, #tpu.memory_space<vmem>>, vector<8x32xf32>
    tpu.vector_store %arg9[%c0_299, %c0_300], %547 {strides = array<i32>} : memref<8x32xf32, #tpu.memory_space<vmem>>, vector<8x32xf32>,
    %552 = arith.truncf %549 : vector<8x32xf32> to vector<8x32xbf16>
    %c4_301 = arith.constant 4 : index
    %c0_302 = arith.constant 0 : index
    %c0_303 = arith.constant 0 : index
    %553 = vector.load %arg7[%c4_301, %c0_302, %c0_303] : memref<8x8x32xbf16, #tpu.memory_space<vmem>>, vector<1x8x32xbf16>
    %554 = vector.shape_cast %553 : vector<1x8x32xbf16> to vector<8x32xbf16>
    %555 = vector.shape_cast %552 : vector<8x32xbf16> to vector<1x8x32xbf16>
    tpu.vector_store %arg7[%c4_301, %c0_302, %c0_303], %555 {strides = array<i32>} : memref<8x8x32xbf16, #tpu.memory_space<vmem>>, vector<1x8x32xbf16>,
    %c5_304 = arith.constant 5 : index
    %c0_305 = arith.constant 0 : index
    %c0_306 = arith.constant 0 : index
    %556 = vector.load %arg10[%c5_304, %c0_305, %c0_306] : memref<8x8x32xbf16, #tpu.memory_space<vmem>>, vector<1x8x32xbf16>
    %557 = vector.shape_cast %556 : vector<1x8x32xbf16> to vector<8x32xbf16>
    %c0_307 = arith.constant 0 : index
    %c0_308 = arith.constant 0 : index
    %558 = vector.load %arg4[%c0_307, %c0_308] : memref<32x128xbf16, #tpu.memory_space<vmem>>, vector<32x128xbf16>
    %cst_309 = arith.constant dense<0.000000e+00> : vector<8x128xf32>
    %559 = tpu.matmul %557, %558, %cst_309 {dimension_numbers = #tpu.dot_dimension_numbers<[1], [0], [0], [1], [0, 0, 1, 1], [], []>} : vector<8x32xbf16>, vector<32x128xbf16>, vector<8x128xf32> -> vector<8x128xf32>
    %c0_310 = arith.constant 0 : index
    %c0_311 = arith.constant 0 : index
    %560 = vector.load %arg5[%c0_310, %c0_311] : memref<1x128xf32, #tpu.memory_space<vmem>>, vector<1x128xf32>
    %561 = vector.broadcast %560 : vector<1x128xf32> to vector<8x128xf32>
    %562 = arith.addf %559, %561 : vector<8x128xf32>
    %c0_312 = arith.constant 0 : index
    %c0_313 = arith.constant 0 : index
    %563 = vector.load %arg8[%c0_312, %c0_313] : memref<8x32xf32, #tpu.memory_space<vmem>>, vector<8x32xf32>
    %564 = arith.truncf %563 : vector<8x32xf32> to vector<8x32xbf16>
    %c0_314 = arith.constant 0 : index
    %c0_315 = arith.constant 0 : index
    %565 = vector.load %arg6[%c0_314, %c0_315] : memref<32x128xbf16, #tpu.memory_space<vmem>>, vector<32x128xbf16>
    %cst_316 = arith.constant dense<0.000000e+00> : vector<8x128xf32>
    %566 = tpu.matmul %564, %565, %cst_316 {dimension_numbers = #tpu.dot_dimension_numbers<[1], [0], [0], [1], [0, 0, 1, 1], [], []>} : vector<8x32xbf16>, vector<32x128xbf16>, vector<8x128xf32> -> vector<8x128xf32>
    %567 = arith.addf %562, %566 : vector<8x128xf32>
    %c0_317 = arith.constant 0 : index
    %c0_318 = arith.constant 0 : index
    %568 = vector.load %arg9[%c0_317, %c0_318] : memref<8x32xf32, #tpu.memory_space<vmem>>, vector<8x32xf32>
    %569 = vector.extract_strided_slice %567 {offsets = [0, 0], sizes = [8, 32], strides = [1, 1]} : vector<8x128xf32> to vector<8x32xf32>
    %570 = arith.negf %569 : vector<8x32xf32>
    %571 = math.exp %570 : vector<8x32xf32>
    %cst_319 = arith.constant 1.000000e+00 : f32
    %572 = vector.broadcast %cst_319 : f32 to vector<8x32xf32>
    %573 = arith.addf %572, %571 : vector<8x32xf32>
    %574 = arith.divf %572, %573 : vector<8x32xf32>
    %575 = vector.extract_strided_slice %567 {offsets = [0, 32], sizes = [8, 32], strides = [1, 1]} : vector<8x128xf32> to vector<8x32xf32>
    %576 = arith.negf %575 : vector<8x32xf32>
    %577 = math.exp %576 : vector<8x32xf32>
    %cst_320 = arith.constant 1.000000e+00 : f32
    %578 = vector.broadcast %cst_320 : f32 to vector<8x32xf32>
    %579 = arith.addf %578, %577 : vector<8x32xf32>
    %580 = arith.divf %578, %579 : vector<8x32xf32>
    %581 = vector.extract_strided_slice %567 {offsets = [0, 64], sizes = [8, 32], strides = [1, 1]} : vector<8x128xf32> to vector<8x32xf32>
    %582 = math.tanh %581 : vector<8x32xf32>
    %583 = vector.extract_strided_slice %567 {offsets = [0, 96], sizes = [8, 32], strides = [1, 1]} : vector<8x128xf32> to vector<8x32xf32>
    %584 = arith.negf %583 : vector<8x32xf32>
    %585 = math.exp %584 : vector<8x32xf32>
    %cst_321 = arith.constant 1.000000e+00 : f32
    %586 = vector.broadcast %cst_321 : f32 to vector<8x32xf32>
    %587 = arith.addf %586, %585 : vector<8x32xf32>
    %588 = arith.divf %586, %587 : vector<8x32xf32>
    %589 = arith.mulf %580, %568 : vector<8x32xf32>
    %590 = arith.mulf %574, %582 : vector<8x32xf32>
    %591 = arith.addf %589, %590 : vector<8x32xf32>
    %592 = math.tanh %591 : vector<8x32xf32>
    %593 = arith.mulf %588, %592 : vector<8x32xf32>
    %c0_322 = arith.constant 0 : index
    %c0_323 = arith.constant 0 : index
    %594 = vector.load %arg8[%c0_322, %c0_323] : memref<8x32xf32, #tpu.memory_space<vmem>>, vector<8x32xf32>
    tpu.vector_store %arg8[%c0_322, %c0_323], %593 {strides = array<i32>} : memref<8x32xf32, #tpu.memory_space<vmem>>, vector<8x32xf32>,
    %c0_324 = arith.constant 0 : index
    %c0_325 = arith.constant 0 : index
    %595 = vector.load %arg9[%c0_324, %c0_325] : memref<8x32xf32, #tpu.memory_space<vmem>>, vector<8x32xf32>
    tpu.vector_store %arg9[%c0_324, %c0_325], %591 {strides = array<i32>} : memref<8x32xf32, #tpu.memory_space<vmem>>, vector<8x32xf32>,
    %596 = arith.truncf %593 : vector<8x32xf32> to vector<8x32xbf16>
    %c5_326 = arith.constant 5 : index
    %c0_327 = arith.constant 0 : index
    %c0_328 = arith.constant 0 : index
    %597 = vector.load %arg7[%c5_326, %c0_327, %c0_328] : memref<8x8x32xbf16, #tpu.memory_space<vmem>>, vector<1x8x32xbf16>
    %598 = vector.shape_cast %597 : vector<1x8x32xbf16> to vector<8x32xbf16>
    %599 = vector.shape_cast %596 : vector<8x32xbf16> to vector<1x8x32xbf16>
    tpu.vector_store %arg7[%c5_326, %c0_327, %c0_328], %599 {strides = array<i32>} : memref<8x8x32xbf16, #tpu.memory_space<vmem>>, vector<1x8x32xbf16>,
    %c6_329 = arith.constant 6 : index
    %c0_330 = arith.constant 0 : index
    %c0_331 = arith.constant 0 : index
    %600 = vector.load %arg10[%c6_329, %c0_330, %c0_331] : memref<8x8x32xbf16, #tpu.memory_space<vmem>>, vector<1x8x32xbf16>
    %601 = vector.shape_cast %600 : vector<1x8x32xbf16> to vector<8x32xbf16>
    %c0_332 = arith.constant 0 : index
    %c0_333 = arith.constant 0 : index
    %602 = vector.load %arg4[%c0_332, %c0_333] : memref<32x128xbf16, #tpu.memory_space<vmem>>, vector<32x128xbf16>
    %cst_334 = arith.constant dense<0.000000e+00> : vector<8x128xf32>
    %603 = tpu.matmul %601, %602, %cst_334 {dimension_numbers = #tpu.dot_dimension_numbers<[1], [0], [0], [1], [0, 0, 1, 1], [], []>} : vector<8x32xbf16>, vector<32x128xbf16>, vector<8x128xf32> -> vector<8x128xf32>
    %c0_335 = arith.constant 0 : index
    %c0_336 = arith.constant 0 : index
    %604 = vector.load %arg5[%c0_335, %c0_336] : memref<1x128xf32, #tpu.memory_space<vmem>>, vector<1x128xf32>
    %605 = vector.broadcast %604 : vector<1x128xf32> to vector<8x128xf32>
    %606 = arith.addf %603, %605 : vector<8x128xf32>
    %c0_337 = arith.constant 0 : index
    %c0_338 = arith.constant 0 : index
    %607 = vector.load %arg8[%c0_337, %c0_338] : memref<8x32xf32, #tpu.memory_space<vmem>>, vector<8x32xf32>
    %608 = arith.truncf %607 : vector<8x32xf32> to vector<8x32xbf16>
    %c0_339 = arith.constant 0 : index
    %c0_340 = arith.constant 0 : index
    %609 = vector.load %arg6[%c0_339, %c0_340] : memref<32x128xbf16, #tpu.memory_space<vmem>>, vector<32x128xbf16>
    %cst_341 = arith.constant dense<0.000000e+00> : vector<8x128xf32>
    %610 = tpu.matmul %608, %609, %cst_341 {dimension_numbers = #tpu.dot_dimension_numbers<[1], [0], [0], [1], [0, 0, 1, 1], [], []>} : vector<8x32xbf16>, vector<32x128xbf16>, vector<8x128xf32> -> vector<8x128xf32>
    %611 = arith.addf %606, %610 : vector<8x128xf32>
    %c0_342 = arith.constant 0 : index
    %c0_343 = arith.constant 0 : index
    %612 = vector.load %arg9[%c0_342, %c0_343] : memref<8x32xf32, #tpu.memory_space<vmem>>, vector<8x32xf32>
    %613 = vector.extract_strided_slice %611 {offsets = [0, 0], sizes = [8, 32], strides = [1, 1]} : vector<8x128xf32> to vector<8x32xf32>
    %614 = arith.negf %613 : vector<8x32xf32>
    %615 = math.exp %614 : vector<8x32xf32>
    %cst_344 = arith.constant 1.000000e+00 : f32
    %616 = vector.broadcast %cst_344 : f32 to vector<8x32xf32>
    %617 = arith.addf %616, %615 : vector<8x32xf32>
    %618 = arith.divf %616, %617 : vector<8x32xf32>
    %619 = vector.extract_strided_slice %611 {offsets = [0, 32], sizes = [8, 32], strides = [1, 1]} : vector<8x128xf32> to vector<8x32xf32>
    %620 = arith.negf %619 : vector<8x32xf32>
    %621 = math.exp %620 : vector<8x32xf32>
    %cst_345 = arith.constant 1.000000e+00 : f32
    %622 = vector.broadcast %cst_345 : f32 to vector<8x32xf32>
    %623 = arith.addf %622, %621 : vector<8x32xf32>
    %624 = arith.divf %622, %623 : vector<8x32xf32>
    %625 = vector.extract_strided_slice %611 {offsets = [0, 64], sizes = [8, 32], strides = [1, 1]} : vector<8x128xf32> to vector<8x32xf32>
    %626 = math.tanh %625 : vector<8x32xf32>
    %627 = vector.extract_strided_slice %611 {offsets = [0, 96], sizes = [8, 32], strides = [1, 1]} : vector<8x128xf32> to vector<8x32xf32>
    %628 = arith.negf %627 : vector<8x32xf32>
    %629 = math.exp %628 : vector<8x32xf32>
    %cst_346 = arith.constant 1.000000e+00 : f32
    %630 = vector.broadcast %cst_346 : f32 to vector<8x32xf32>
    %631 = arith.addf %630, %629 : vector<8x32xf32>
    %632 = arith.divf %630, %631 : vector<8x32xf32>
    %633 = arith.mulf %624, %612 : vector<8x32xf32>
    %634 = arith.mulf %618, %626 : vector<8x32xf32>
    %635 = arith.addf %633, %634 : vector<8x32xf32>
    %636 = math.tanh %635 : vector<8x32xf32>
    %637 = arith.mulf %632, %636 : vector<8x32xf32>
    %c0_347 = arith.constant 0 : index
    %c0_348 = arith.constant 0 : index
    %638 = vector.load %arg8[%c0_347, %c0_348] : memref<8x32xf32, #tpu.memory_space<vmem>>, vector<8x32xf32>
    tpu.vector_store %arg8[%c0_347, %c0_348], %637 {strides = array<i32>} : memref<8x32xf32, #tpu.memory_space<vmem>>, vector<8x32xf32>,
    %c0_349 = arith.constant 0 : index
    %c0_350 = arith.constant 0 : index
    %639 = vector.load %arg9[%c0_349, %c0_350] : memref<8x32xf32, #tpu.memory_space<vmem>>, vector<8x32xf32>
    tpu.vector_store %arg9[%c0_349, %c0_350], %635 {strides = array<i32>} : memref<8x32xf32, #tpu.memory_space<vmem>>, vector<8x32xf32>,
    %640 = arith.truncf %637 : vector<8x32xf32> to vector<8x32xbf16>
    %c6_351 = arith.constant 6 : index
    %c0_352 = arith.constant 0 : index
    %c0_353 = arith.constant 0 : index
    %641 = vector.load %arg7[%c6_351, %c0_352, %c0_353] : memref<8x8x32xbf16, #tpu.memory_space<vmem>>, vector<1x8x32xbf16>
    %642 = vector.shape_cast %641 : vector<1x8x32xbf16> to vector<8x32xbf16>
    %643 = vector.shape_cast %640 : vector<8x32xbf16> to vector<1x8x32xbf16>
    tpu.vector_store %arg7[%c6_351, %c0_352, %c0_353], %643 {strides = array<i32>} : memref<8x8x32xbf16, #tpu.memory_space<vmem>>, vector<1x8x32xbf16>,
    %c7_354 = arith.constant 7 : index
    %c0_355 = arith.constant 0 : index
    %c0_356 = arith.constant 0 : index
    %644 = vector.load %arg10[%c7_354, %c0_355, %c0_356] : memref<8x8x32xbf16, #tpu.memory_space<vmem>>, vector<1x8x32xbf16>
    %645 = vector.shape_cast %644 : vector<1x8x32xbf16> to vector<8x32xbf16>
    %c0_357 = arith.constant 0 : index
    %c0_358 = arith.constant 0 : index
    %646 = vector.load %arg4[%c0_357, %c0_358] : memref<32x128xbf16, #tpu.memory_space<vmem>>, vector<32x128xbf16>
    %cst_359 = arith.constant dense<0.000000e+00> : vector<8x128xf32>
    %647 = tpu.matmul %645, %646, %cst_359 {dimension_numbers = #tpu.dot_dimension_numbers<[1], [0], [0], [1], [0, 0, 1, 1], [], []>} : vector<8x32xbf16>, vector<32x128xbf16>, vector<8x128xf32> -> vector<8x128xf32>
    %c0_360 = arith.constant 0 : index
    %c0_361 = arith.constant 0 : index
    %648 = vector.load %arg5[%c0_360, %c0_361] : memref<1x128xf32, #tpu.memory_space<vmem>>, vector<1x128xf32>
    %649 = vector.broadcast %648 : vector<1x128xf32> to vector<8x128xf32>
    %650 = arith.addf %647, %649 : vector<8x128xf32>
    %c0_362 = arith.constant 0 : index
    %c0_363 = arith.constant 0 : index
    %651 = vector.load %arg8[%c0_362, %c0_363] : memref<8x32xf32, #tpu.memory_space<vmem>>, vector<8x32xf32>
    %652 = arith.truncf %651 : vector<8x32xf32> to vector<8x32xbf16>
    %c0_364 = arith.constant 0 : index
    %c0_365 = arith.constant 0 : index
    %653 = vector.load %arg6[%c0_364, %c0_365] : memref<32x128xbf16, #tpu.memory_space<vmem>>, vector<32x128xbf16>
    %cst_366 = arith.constant dense<0.000000e+00> : vector<8x128xf32>
    %654 = tpu.matmul %652, %653, %cst_366 {dimension_numbers = #tpu.dot_dimension_numbers<[1], [0], [0], [1], [0, 0, 1, 1], [], []>} : vector<8x32xbf16>, vector<32x128xbf16>, vector<8x128xf32> -> vector<8x128xf32>
    %655 = arith.addf %650, %654 : vector<8x128xf32>
    %c0_367 = arith.constant 0 : index
    %c0_368 = arith.constant 0 : index
    %656 = vector.load %arg9[%c0_367, %c0_368] : memref<8x32xf32, #tpu.memory_space<vmem>>, vector<8x32xf32>
    %657 = vector.extract_strided_slice %655 {offsets = [0, 0], sizes = [8, 32], strides = [1, 1]} : vector<8x128xf32> to vector<8x32xf32>
    %658 = arith.negf %657 : vector<8x32xf32>
    %659 = math.exp %658 : vector<8x32xf32>
    %cst_369 = arith.constant 1.000000e+00 : f32
    %660 = vector.broadcast %cst_369 : f32 to vector<8x32xf32>
    %661 = arith.addf %660, %659 : vector<8x32xf32>
    %662 = arith.divf %660, %661 : vector<8x32xf32>
    %663 = vector.extract_strided_slice %655 {offsets = [0, 32], sizes = [8, 32], strides = [1, 1]} : vector<8x128xf32> to vector<8x32xf32>
    %664 = arith.negf %663 : vector<8x32xf32>
    %665 = math.exp %664 : vector<8x32xf32>
    %cst_370 = arith.constant 1.000000e+00 : f32
    %666 = vector.broadcast %cst_370 : f32 to vector<8x32xf32>
    %667 = arith.addf %666, %665 : vector<8x32xf32>
    %668 = arith.divf %666, %667 : vector<8x32xf32>
    %669 = vector.extract_strided_slice %655 {offsets = [0, 64], sizes = [8, 32], strides = [1, 1]} : vector<8x128xf32> to vector<8x32xf32>
    %670 = math.tanh %669 : vector<8x32xf32>
    %671 = vector.extract_strided_slice %655 {offsets = [0, 96], sizes = [8, 32], strides = [1, 1]} : vector<8x128xf32> to vector<8x32xf32>
    %672 = arith.negf %671 : vector<8x32xf32>
    %673 = math.exp %672 : vector<8x32xf32>
    %cst_371 = arith.constant 1.000000e+00 : f32
    %674 = vector.broadcast %cst_371 : f32 to vector<8x32xf32>
    %675 = arith.addf %674, %673 : vector<8x32xf32>
    %676 = arith.divf %674, %675 : vector<8x32xf32>
    %677 = arith.mulf %668, %656 : vector<8x32xf32>
    %678 = arith.mulf %662, %670 : vector<8x32xf32>
    %679 = arith.addf %677, %678 : vector<8x32xf32>
    %680 = math.tanh %679 : vector<8x32xf32>
    %681 = arith.mulf %676, %680 : vector<8x32xf32>
    %c0_372 = arith.constant 0 : index
    %c0_373 = arith.constant 0 : index
    %682 = vector.load %arg8[%c0_372, %c0_373] : memref<8x32xf32, #tpu.memory_space<vmem>>, vector<8x32xf32>
    tpu.vector_store %arg8[%c0_372, %c0_373], %681 {strides = array<i32>} : memref<8x32xf32, #tpu.memory_space<vmem>>, vector<8x32xf32>,
    %c0_374 = arith.constant 0 : index
    %c0_375 = arith.constant 0 : index
    %683 = vector.load %arg9[%c0_374, %c0_375] : memref<8x32xf32, #tpu.memory_space<vmem>>, vector<8x32xf32>
    tpu.vector_store %arg9[%c0_374, %c0_375], %679 {strides = array<i32>} : memref<8x32xf32, #tpu.memory_space<vmem>>, vector<8x32xf32>,
    %684 = arith.truncf %681 : vector<8x32xf32> to vector<8x32xbf16>
    %c7_376 = arith.constant 7 : index
    %c0_377 = arith.constant 0 : index
    %c0_378 = arith.constant 0 : index
    %685 = vector.load %arg7[%c7_376, %c0_377, %c0_378] : memref<8x8x32xbf16, #tpu.memory_space<vmem>>, vector<1x8x32xbf16>
    %686 = vector.shape_cast %685 : vector<1x8x32xbf16> to vector<8x32xbf16>
    %687 = vector.shape_cast %684 : vector<8x32xbf16> to vector<1x8x32xbf16>
    tpu.vector_store %arg7[%c7_376, %c0_377, %c0_378], %687 {strides = array<i32>} : memref<8x8x32xbf16, #tpu.memory_space<vmem>>, vector<1x8x32xbf16>,
    return
  }
  func.func @transform_0(%arg0: i32) -> (i32, i32, i32) {
    %c0_i32 = arith.constant 0 : i32
    %c0_i32_0 = arith.constant 0 : i32
    %c0_i32_1 = arith.constant 0 : i32
    return %c0_i32, %arg0, %c0_i32_0 : i32, i32, i32
  }
  func.func @transform_1(%arg0: i32) -> (i32, i32) {
    %c0_i32 = arith.constant 0 : i32
    %c0_i32_0 = arith.constant 0 : i32
    return %arg0, %c0_i32 : i32, i32
  }
  func.func @transform_2(%arg0: i32) -> (i32, i32) {
    %c0_i32 = arith.constant 0 : i32
    %c0_i32_0 = arith.constant 0 : i32
    %c0_i32_1 = arith.constant 0 : i32
    return %c0_i32, %c0_i32_0 : i32, i32
  }
  func.func @transform_3(%arg0: i32) -> (i32, i32) {
    %c0_i32 = arith.constant 0 : i32
    %c0_i32_0 = arith.constant 0 : i32
    %c0_i32_1 = arith.constant 0 : i32
    return %c0_i32, %c0_i32_0 : i32, i32
  }
  func.func @transform_4(%arg0: i32) -> (i32, i32) {
    %c0_i32 = arith.constant 0 : i32
    %c0_i32_0 = arith.constant 0 : i32
    %c0_i32_1 = arith.constant 0 : i32
    return %c0_i32, %c0_i32_0 : i32, i32
  }
  func.func @transform_5(%arg0: i32) -> (i32, i32) {
    %c0_i32 = arith.constant 0 : i32
    %c0_i32_0 = arith.constant 0 : i32
    %c0_i32_1 = arith.constant 0 : i32
    return %c0_i32, %c0_i32_0 : i32, i32
  }
  func.func @transform_6(%arg0: i32) -> (i32, i32, i32) {
    %c0_i32 = arith.constant 0 : i32
    %c0_i32_0 = arith.constant 0 : i32
    %c0_i32_1 = arith.constant 0 : i32
    return %c0_i32, %arg0, %c0_i32_0 : i32, i32, i32
  }
}

module attributes {stable_mosaic.version = 11 : i64} {
  func.func @_vocab_head_kernel(%arg0: i32, %arg1: i32, %arg2: memref<64x32xbf16, #tpu.memory_space<vmem>>, %arg3: memref<32x64xbf16, #tpu.memory_space<vmem>>, %arg4: memref<1x64xf32, #tpu.memory_space<vmem>>, %arg5: memref<64x1xi32, #tpu.memory_space<vmem>>, %arg6: memref<64x64xbf16, #tpu.memory_space<vmem>>, %arg7: memref<64x1xf32, #tpu.memory_space<vmem>>, %arg8: memref<64x1xf32, #tpu.memory_space<vmem>>, %arg9: memref<64x1xf32, #tpu.memory_space<vmem>>, %arg10: memref<64x1xf32, #tpu.memory_space<vmem>>) attributes {dimension_semantics = [#tpu.dimension_semantics<parallel>, #tpu.dimension_semantics<arbitrary>], iteration_bounds = array<i64: 1, 1>, scalar_prefetch = 0 : i64, scratch_operands = 3 : i64, tpu.core_type = #tpu.core_type<tc>, window_params = [{transform_indices = @transform_0, window_bounds = array<i64: 64, 32>}, {transform_indices = @transform_1, window_bounds = array<i64: 32, 64>}, {transform_indices = @transform_2, window_bounds = array<i64: 1, 64>}, {transform_indices = @transform_3, window_bounds = array<i64: 64, 1>}, {transform_indices = @transform_4, window_bounds = array<i64: 64, 64>}, {transform_indices = @transform_5, window_bounds = array<i64: 64, 1>}]} {
    %c0 = arith.constant 0 : index
    %c0_0 = arith.constant 0 : index
    %0 = vector.load %arg2[%c0, %c0_0] : memref<64x32xbf16, #tpu.memory_space<vmem>>, vector<64x32xbf16>
    %c0_1 = arith.constant 0 : index
    %c0_2 = arith.constant 0 : index
    %1 = vector.load %arg3[%c0_1, %c0_2] : memref<32x64xbf16, #tpu.memory_space<vmem>>, vector<32x64xbf16>
    %cst = arith.constant dense<0.000000e+00> : vector<64x64xf32>
    %2 = tpu.matmul %0, %1, %cst {dimension_numbers = #tpu.dot_dimension_numbers<[1], [0], [0], [1], [0, 0, 1, 1], [], []>} : vector<64x32xbf16>, vector<32x64xbf16>, vector<64x64xf32> -> vector<64x64xf32>
    %c0_3 = arith.constant 0 : index
    %c0_4 = arith.constant 0 : index
    %3 = vector.load %arg4[%c0_3, %c0_4] : memref<1x64xf32, #tpu.memory_space<vmem>>, vector<1x64xf32>
    %4 = vector.broadcast %3 : vector<1x64xf32> to vector<64x64xf32>
    %5 = arith.addf %2, %4 : vector<64x64xf32>
    %6 = arith.truncf %5 : vector<64x64xf32> to vector<64x64xbf16>
    %c0_5 = arith.constant 0 : index
    %c0_6 = arith.constant 0 : index
    %7 = vector.load %arg6[%c0_5, %c0_6] : memref<64x64xbf16, #tpu.memory_space<vmem>>, vector<64x64xbf16>
    tpu.vector_store %arg6[%c0_5, %c0_6], %6 {strides = array<i32>} : memref<64x64xbf16, #tpu.memory_space<vmem>>, vector<64x64xbf16>,
    %c0_i32 = arith.constant 0 : i32
    %8 = arith.cmpi eq, %arg1, %c0_i32 : i32
    %9 = arith.extui %8 : i1 to i32
    %c0_i32_7 = arith.constant 0 : i32
    %10 = arith.cmpi ne, %9, %c0_i32_7 : i32
    scf.if %10 {
      %cst_28 = arith.constant 0xFF800000 : f32
      %44 = vector.broadcast %cst_28 : f32 to vector<64x1xf32>
      %c0_29 = arith.constant 0 : index
      %c0_30 = arith.constant 0 : index
      %45 = vector.load %arg8[%c0_29, %c0_30] : memref<64x1xf32, #tpu.memory_space<vmem>>, vector<64x1xf32>
      tpu.vector_store %arg8[%c0_29, %c0_30], %44 {strides = array<i32>} : memref<64x1xf32, #tpu.memory_space<vmem>>, vector<64x1xf32>,
      %cst_31 = arith.constant 0.000000e+00 : f32
      %46 = vector.broadcast %cst_31 : f32 to vector<64x1xf32>
      %c0_32 = arith.constant 0 : index
      %c0_33 = arith.constant 0 : index
      %47 = vector.load %arg9[%c0_32, %c0_33] : memref<64x1xf32, #tpu.memory_space<vmem>>, vector<64x1xf32>
      tpu.vector_store %arg9[%c0_32, %c0_33], %46 {strides = array<i32>} : memref<64x1xf32, #tpu.memory_space<vmem>>, vector<64x1xf32>,
      %cst_34 = arith.constant 0.000000e+00 : f32
      %48 = vector.broadcast %cst_34 : f32 to vector<64x1xf32>
      %c0_35 = arith.constant 0 : index
      %c0_36 = arith.constant 0 : index
      %49 = vector.load %arg10[%c0_35, %c0_36] : memref<64x1xf32, #tpu.memory_space<vmem>>, vector<64x1xf32>
      tpu.vector_store %arg10[%c0_35, %c0_36], %48 {strides = array<i32>} : memref<64x1xf32, #tpu.memory_space<vmem>>, vector<64x1xf32>,
    } else {
    }
    %c64_i32 = arith.constant 64 : i32
    %11 = arith.muli %arg1, %c64_i32 : i32
    %12 = tpu.iota {dimensions = array<i32: 1>} : vector<64x64xi32>
    %13 = vector.broadcast %11 : i32 to vector<64x64xi32>
    %14 = arith.addi %13, %12 : vector<64x64xi32>
    %c0_8 = arith.constant 0 : index
    %c0_9 = arith.constant 0 : index
    %15 = vector.load %arg5[%c0_8, %c0_9] : memref<64x1xi32, #tpu.memory_space<vmem>>, vector<64x1xi32>
    %16 = vector.broadcast %15 : vector<64x1xi32> to vector<64x64xi32>
    %17 = arith.cmpi eq, %14, %16 : vector<64x64xi32>
    %c0_10 = arith.constant 0 : index
    %c0_11 = arith.constant 0 : index
    %18 = vector.load %arg10[%c0_10, %c0_11] : memref<64x1xf32, #tpu.memory_space<vmem>>, vector<64x1xf32>
    %cst_12 = arith.constant 0.000000e+00 : f32
    %19 = vector.broadcast %cst_12 : f32 to vector<64x64xf32>
    %20 = arith.select %17, %5, %19 : vector<64x64xi1>, vector<64x64xf32>
    %cst_13 = arith.constant dense<0.000000e+00> : vector<64xf32>
    %21 = vector.multi_reduction <add>, %20, %cst_13 [1] : vector<64x64xf32> to vector<64xf32>
    %22 = vector.shape_cast %21 : vector<64xf32> to vector<64x1xf32>
    %23 = arith.addf %18, %22 : vector<64x1xf32>
    %c0_14 = arith.constant 0 : index
    %c0_15 = arith.constant 0 : index
    %24 = vector.load %arg10[%c0_14, %c0_15] : memref<64x1xf32, #tpu.memory_space<vmem>>, vector<64x1xf32>
    tpu.vector_store %arg10[%c0_14, %c0_15], %23 {strides = array<i32>} : memref<64x1xf32, #tpu.memory_space<vmem>>, vector<64x1xf32>,
    %c0_16 = arith.constant 0 : index
    %c0_17 = arith.constant 0 : index
    %25 = vector.load %arg8[%c0_16, %c0_17] : memref<64x1xf32, #tpu.memory_space<vmem>>, vector<64x1xf32>
    %cst_18 = arith.constant dense<0xFF800000> : vector<64xf32>
    %26 = vector.multi_reduction <maximumf>, %5, %cst_18 [1] : vector<64x64xf32> to vector<64xf32>
    %27 = vector.shape_cast %26 : vector<64xf32> to vector<64x1xf32>
    %28 = arith.maximumf %25, %27 : vector<64x1xf32>
    %c0_19 = arith.constant 0 : index
    %c0_20 = arith.constant 0 : index
    %29 = vector.load %arg9[%c0_19, %c0_20] : memref<64x1xf32, #tpu.memory_space<vmem>>, vector<64x1xf32>
    %30 = arith.subf %25, %28 : vector<64x1xf32>
    %31 = math.exp %30 : vector<64x1xf32>
    %32 = arith.mulf %29, %31 : vector<64x1xf32>
    %33 = vector.broadcast %28 : vector<64x1xf32> to vector<64x64xf32>
    %34 = arith.subf %5, %33 : vector<64x64xf32>
    %35 = math.exp %34 : vector<64x64xf32>
    %cst_21 = arith.constant dense<0.000000e+00> : vector<64xf32>
    %36 = vector.multi_reduction <add>, %35, %cst_21 [1] : vector<64x64xf32> to vector<64xf32>
    %37 = vector.shape_cast %36 : vector<64xf32> to vector<64x1xf32>
    %38 = arith.addf %32, %37 : vector<64x1xf32>
    %c0_22 = arith.constant 0 : index
    %c0_23 = arith.constant 0 : index
    %39 = vector.load %arg9[%c0_22, %c0_23] : memref<64x1xf32, #tpu.memory_space<vmem>>, vector<64x1xf32>
    tpu.vector_store %arg9[%c0_22, %c0_23], %38 {strides = array<i32>} : memref<64x1xf32, #tpu.memory_space<vmem>>, vector<64x1xf32>,
    %c0_24 = arith.constant 0 : index
    %c0_25 = arith.constant 0 : index
    %40 = vector.load %arg8[%c0_24, %c0_25] : memref<64x1xf32, #tpu.memory_space<vmem>>, vector<64x1xf32>
    tpu.vector_store %arg8[%c0_24, %c0_25], %28 {strides = array<i32>} : memref<64x1xf32, #tpu.memory_space<vmem>>, vector<64x1xf32>,
    %c0_i32_26 = arith.constant 0 : i32
    %41 = arith.cmpi eq, %arg1, %c0_i32_26 : i32
    %42 = arith.extui %41 : i1 to i32
    %c0_i32_27 = arith.constant 0 : i32
    %43 = arith.cmpi ne, %42, %c0_i32_27 : i32
    scf.if %43 {
      %c0_28 = arith.constant 0 : index
      %c0_29 = arith.constant 0 : index
      %44 = vector.load %arg8[%c0_28, %c0_29] : memref<64x1xf32, #tpu.memory_space<vmem>>, vector<64x1xf32>
      %c0_30 = arith.constant 0 : index
      %c0_31 = arith.constant 0 : index
      %45 = vector.load %arg9[%c0_30, %c0_31] : memref<64x1xf32, #tpu.memory_space<vmem>>, vector<64x1xf32>
      %46 = math.log %45 : vector<64x1xf32>
      %47 = arith.addf %44, %46 : vector<64x1xf32>
      %c0_32 = arith.constant 0 : index
      %c0_33 = arith.constant 0 : index
      %48 = vector.load %arg10[%c0_32, %c0_33] : memref<64x1xf32, #tpu.memory_space<vmem>>, vector<64x1xf32>
      %49 = arith.subf %47, %48 : vector<64x1xf32>
      %c0_34 = arith.constant 0 : index
      %c0_35 = arith.constant 0 : index
      %50 = vector.load %arg7[%c0_34, %c0_35] : memref<64x1xf32, #tpu.memory_space<vmem>>, vector<64x1xf32>
      tpu.vector_store %arg7[%c0_34, %c0_35], %49 {strides = array<i32>} : memref<64x1xf32, #tpu.memory_space<vmem>>, vector<64x1xf32>,
    } else {
    }
    return
  }
  func.func @transform_0(%arg0: i32, %arg1: i32) -> (i32, i32) {
    %c0_i32 = arith.constant 0 : i32
    %c0_i32_0 = arith.constant 0 : i32
    return %arg0, %c0_i32 : i32, i32
  }
  func.func @transform_1(%arg0: i32, %arg1: i32) -> (i32, i32) {
    %c0_i32 = arith.constant 0 : i32
    %c0_i32_0 = arith.constant 0 : i32
    return %c0_i32, %arg1 : i32, i32
  }
  func.func @transform_2(%arg0: i32, %arg1: i32) -> (i32, i32) {
    %c0_i32 = arith.constant 0 : i32
    %c0_i32_0 = arith.constant 0 : i32
    return %c0_i32, %arg1 : i32, i32
  }
  func.func @transform_3(%arg0: i32, %arg1: i32) -> (i32, i32) {
    %c0_i32 = arith.constant 0 : i32
    %c0_i32_0 = arith.constant 0 : i32
    return %arg0, %c0_i32 : i32, i32
  }
  func.func @transform_4(%arg0: i32, %arg1: i32) -> (i32, i32) {
    %c0_i32 = arith.constant 0 : i32
    return %arg0, %arg1 : i32, i32
  }
  func.func @transform_5(%arg0: i32, %arg1: i32) -> (i32, i32) {
    %c0_i32 = arith.constant 0 : i32
    %c0_i32_0 = arith.constant 0 : i32
    return %arg0, %c0_i32 : i32, i32
  }
}

</mosaic_0001>

<llo_original>
// kernel: glacnet_forward.13
$region0: #{glacnet_forward.13}
  #allocation0 [shape = 'u32[]', space=smem, size = 0x4, offset = 0x4, fixed_abs, tag = 'smem constant byte address 0x4 - core index']
  #allocation1 [shape = 'u32[144,128]{1,0:T(1,128)}', space=vmem, size = 0x12000, scoped, tag = 'internal scratch']
  %s0 = inlined_call_operand.vmem [shape: f32[10,32], index: 0, kind: input, shape index: {}]
  %s1 = inlined_call_operand.vmem [shape: bf16[32,128], index: 1, kind: input, shape index: {}]
  %s2 = inlined_call_operand.vmem [shape: f32[1,128], index: 2, kind: input, shape index: {}]
  %s3 = inlined_call_operand.vmem [shape: f32[10,128], index: 3, kind: output, shape index: {}]
  %s4 = sld [smem:[#allocation0]]
  $region22: #{glacnet_forward.13} parent=0
    _
  %s6 = ssub.s32 1, %s4
  %s7 = scalar_select 0, %s6, %s4
  // Predicated region
  $region2: #{glacnet_forward.13} parent=0 // pred_check
    _
  $region3: #{glacnet_forward.13} parent=0 // pred_check_branch
    %9 = sbr.rel (0) target = $region5
  $region4: #{glacnet_forward.13} parent=0 // pred_region
    _
  $region5: #{glacnet_forward.13} parent=0 // pred_fallthru
    _
  // Predicated region
  $region6: #{glacnet_forward.13} parent=0 // pred_check
    _
  $region7: #{glacnet_forward.13} parent=0 // pred_check_branch
    %11 = sbr.rel (0) target = $region9
  $region8: #{glacnet_forward.13} parent=0 // pred_region
    _
  $region9: #{glacnet_forward.13} parent=0 // pred_fallthru
    _
  // Predicated region
  $region10: #{glacnet_forward.13} parent=0 // pred_check
    _
  $region11: #{glacnet_forward.13} parent=0 // pred_check_branch
    %13 = sbr.rel (0) target = $region13
  $region12: #{glacnet_forward.13} parent=0 // pred_region
    _
  $region13: #{glacnet_forward.13} parent=0 // pred_fallthru
    _
  %v15 = vld [vmem:[%s0] sm:$0xff]
  %v16 = vld [vmem:[%s0 + $0x8] sm:$0x3]
  %v17 = vpack.c.bf16 %v16, %v15
  %v18 = vld [vmem:[%s1] sm:$0xf]
  %v19 = vld [vmem:[%s1 + $0x4] sm:$0xf]
  %v20 = vld [vmem:[%s1 + $0x8] sm:$0xf]
  %v21 = vld [vmem:[%s1 + $0xc] sm:$0xf]
  %v22 = vld [vmem:[%s2] sm:$0x1]
  %v24 = vlaneseq
  %v25 = vshrl.u32 %v24, 7
  %v26 = vsub.s32 0, %v25
  %v27 = vrot.slane %v22, %v26
  %v33 = vunpack.c.l.b16 %v18
  %v34 = vunpack.c.l.b16 %v19
  %v35 = vunpack.c.l.b16 %v20
  %v36 = vunpack.c.l.b16 %v21
  %v37 = vpack.c.b16 %v34, %v33
  %v38 = vpack.c.b16 %v36, %v35
  %vm41 = vcmask 261120
  %v43 = vsel %vm41, %v17, 0
  %45 = vmatprep.subr.bf16.mxu0 0
  %46 = vmatpush1.bf16.msra.mxu0 %v37
  %47 = vmatprep.subr.bf16.mxu0 0
  %48 = vmatpush1.bf16.msra.mxu0 %v38
  %49 = vmatprep.subr.bf16.mxu0 0
  %50 = vmatpush1.bf16.msra.mxu0 0
  %51 = vmatprep.subr.bf16.mxu0 0
  %52 = vmatpush1.bf16.msra.mxu0 0
  %53 = vmatprep.subr.bf16.mxu0 0
  %54 = vmatpush1.bf16.msra.mxu0 0
  %55 = vmatprep.subr.bf16.mxu0 0
  %56 = vmatpush1.bf16.msra.mxu0 0
  %57 = vmatprep.subr.bf16.mxu0 0
  %58 = vmatpush1.bf16.msra.mxu0 0
  %59 = vmatprep.subr.bf16.mxu0 0
  %60 = vmatpush1.bf16.msra.mxu0 0
  %61 = vmatprep.subr.bf16.mxu0 0
  %62 = vmatpush1.bf16.msra.mxu0 0
  %63 = vmatprep.subr.bf16.mxu0 0
  %64 = vmatpush1.bf16.msra.mxu0 0
  %65 = vmatprep.subr.bf16.mxu0 0
  %66 = vmatpush1.bf16.msra.mxu0 0
  %67 = vmatprep.subr.bf16.mxu0 0
  %68 = vmatpush1.bf16.msra.mxu0 0
  %69 = vmatprep.subr.bf16.mxu0 0
  %70 = vmatpush1.bf16.msra.mxu0 0
  %71 = vmatprep.subr.bf16.mxu0 0
  %72 = vmatpush1.bf16.msra.mxu0 0
  %73 = vmatprep.subr.bf16.mxu0 0
  %74 = vmatpush1.bf16.msra.mxu0 0
  %75 = vmatprep.subr.bf16.mxu0 0
  %76 = vmatpush1.bf16.msra.mxu0 0
  %77 = vmatprep.mubr.bf16.mxu0 0
  %78 = vmatmul.mubr.bf16.gmra.mrb[0].mxu0 %v43
  %v79 = vpop.f32.mrb[0].mxu0
  %v80 = vadd.f32 %v27, %v79
  %v81 = vpop.f32.mrb[0].mxu0
  %v82 = vpop.f32.mrb[0].mxu0
  %v83 = vadd.f32 %v27, %v82
  %v84 = vpop.f32.mrb[0].mxu0
  %85 = vdwg.mxu0
  %86 = vst [vmem:[%s3] sm:$0xff] %v80
  %87 = vst [vmem:[%s3 + $0x8] sm:$0x3] %v83
  // Predicated region
  $region14: #{glacnet_forward.13} parent=0 // pred_check
    _
  $region15: #{glacnet_forward.13} parent=0 // pred_check_branch
    %89 = sbr.rel (0) target = $region17
  $region16: #{glacnet_forward.13} parent=0 // pred_region
    _
  $region17: #{glacnet_forward.13} parent=0 // pred_fallthru
    _
  // Predicated region
  $region18: #{glacnet_forward.13} parent=0 // pred_check
    _
  $region19: #{glacnet_forward.13} parent=0 // pred_check_branch
    %91 = sbr.rel (0) target = $region21
  $region20: #{glacnet_forward.13} parent=0 // pred_region
    _
  $region21: #{glacnet_forward.13} parent=0 // pred_fallthru
    _

// kernel: glacnet_forward.12
$region0: #{glacnet_forward.12}
  #allocation0 [shape = 'u32[]', space=smem, size = 0x4, offset = 0x4, fixed_abs, tag = 'smem constant byte address 0x4 - core index']
  #allocation1 [shape = 'u32[144,128]{1,0:T(1,128)}', space=vmem, size = 0x12000, scoped, tag = 'internal scratch']
  %s0 = inlined_call_operand.vmem [shape: f32[10,256,4], index: 0, kind: input, shape index: {}]
  %s1 = inlined_call_operand.vmem [shape: bf16[4,32], index: 1, kind: input, shape index: {}]
  %s2 = inlined_call_operand.vmem [shape: f32[1,32], index: 2, kind: input, shape index: {}]
  %s3 = inlined_call_operand.vmem [shape: f32[10,32], index: 3, kind: output, shape index: {}]
  %s4 = sld [smem:[#allocation0]]
  $region22: #{glacnet_forward.12} parent=0
    _
  %s6 = ssub.s32 1, %s4
  %s7 = scalar_select 0, %s6, %s4
  // Predicated region
  $region2: #{glacnet_forward.12} parent=0 // pred_check
    _
  $region3: #{glacnet_forward.12} parent=0 // pred_check_branch
    %9 = sbr.rel (0) target = $region5
  $region4: #{glacnet_forward.12} parent=0 // pred_region
    _
  $region5: #{glacnet_forward.12} parent=0 // pred_fallthru
    _
  // Predicated region
  $region6: #{glacnet_forward.12} parent=0 // pred_check
    _
  $region7: #{glacnet_forward.12} parent=0 // pred_check_branch
    %11 = sbr.rel (0) target = $region9
  $region8: #{glacnet_forward.12} parent=0 // pred_region
    _
  $region9: #{glacnet_forward.12} parent=0 // pred_fallthru
    _
  // Predicated region
  $region10: #{glacnet_forward.12} parent=0 // pred_check
    _
  $region11: #{glacnet_forward.12} parent=0 // pred_check_branch
    %13 = sbr.rel (0) target = $region13
  $region12: #{glacnet_forward.12} parent=0 // pred_region
    _
  $region13: #{glacnet_forward.12} parent=0 // pred_fallthru
    _
  %v15 = vld [vmem:[%s0] sm:$0xff]
  %v16 = vld [vmem:[%s0 + $0x8] sm:$0xff]
  %v17 = vld [vmem:[%s0 + $0x10] sm:$0xff]
  %v18 = vld [vmem:[%s0 + $0x18] sm:$0xff]
  %v19 = vld [vmem:[%s0 + $0x20] sm:$0xff]
  %v20 = vld [vmem:[%s0 + $0x28] sm:$0xff]
  %v21 = vld [vmem:[%s0 + $0x30] sm:$0xff]
  %v22 = vld [vmem:[%s0 + $0x38] sm:$0xff]
  %v23 = vld [vmem:[%s0 + $0x40] sm:$0xff]
  %v24 = vld [vmem:[%s0 + $0x48] sm:$0xff]
  %v25 = vld [vmem:[%s0 + $0x50] sm:$0xff]
  %v26 = vld [vmem:[%s0 + $0x58] sm:$0xff]
  %v27 = vld [vmem:[%s0 + $0x60] sm:$0xff]
  %v28 = vld [vmem:[%s0 + $0x68] sm:$0xff]
  %v29 = vld [vmem:[%s0 + $0x70] sm:$0xff]
  %v30 = vld [vmem:[%s0 + $0x78] sm:$0xff]
  %v31 = vld [vmem:[%s0 + $0x80] sm:$0xff]
  %v32 = vld [vmem:[%s0 + $0x88] sm:$0xff]
  %v33 = vld [vmem:[%s0 + $0x90] sm:$0xff]
  %v34 = vld [vmem:[%s0 + $0x98] sm:$0xff]
  %v35 = vld [vmem:[%s0 + $0xa0] sm:$0xff]
  %v36 = vld [vmem:[%s0 + $0xa8] sm:$0xff]
  %v37 = vld [vmem:[%s0 + $0xb0] sm:$0xff]
  %v38 = vld [vmem:[%s0 + $0xb8] sm:$0xff]
  %v39 = vld [vmem:[%s0 + $0xc0] sm:$0xff]
  %v40 = vld [vmem:[%s0 + $0xc8] sm:$0xff]
  %v41 = vld [vmem:[%s0 + $0xd0] sm:$0xff]
  %v42 = vld [vmem:[%s0 + $0xd8] sm:$0xff]
  %v43 = vld [vmem:[%s0 + $0xe0] sm:$0xff]
  %v44 = vld [vmem:[%s0 + $0xe8] sm:$0xff]
  %v45 = vld [vmem:[%s0 + $0xf0] sm:$0xff]
  %v46 = vld [vmem:[%s0 + $0xf8] sm:$0xff]
  %v47 = vld [vmem:[%s0 + $0x100] sm:$0xff]
  %v48 = vld [vmem:[%s0 + $0x108] sm:$0xff]
  %v49 = vld [vmem:[%s0 + $0x110] sm:$0xff]
  %v50 = vld [vmem:[%s0 + $0x118] sm:$0xff]
  %v51 = vld [vmem:[%s0 + $0x120] sm:$0xff]
  %v52 = vld [vmem:[%s0 + $0x128] sm:$0xff]
  %v53 = vld [vmem:[%s0 + $0x130] sm:$0xff]
  %v54 = vld [vmem:[%s0 + $0x138] sm:$0xff]
  %v55 = vld [vmem:[%s0 + $0x140] sm:$0xff]
  %v56 = vld [vmem:[%s0 + $0x148] sm:$0xff]
  %v57 = vld [vmem:[%s0 + $0x150] sm:$0xff]
  %v58 = vld [vmem:[%s0 + $0x158] sm:$0xff]
  %v59 = vld [vmem:[%s0 + $0x160] sm:$0xff]
  %v60 = vld [vmem:[%s0 + $0x168] sm:$0xff]
  %v61 = vld [vmem:[%s0 + $0x170] sm:$0xff]
  %v62 = vld [vmem:[%s0 + $0x178] sm:$0xff]
  %v63 = vld [vmem:[%s0 + $0x180] sm:$0xff]
  %v64 = vld [vmem:[%s0 + $0x188] sm:$0xff]
  %v65 = vld [vmem:[%s0 + $0x190] sm:$0xff]
  %v66 = vld [vmem:[%s0 + $0x198] sm:$0xff]
  %v67 = vld [vmem:[%s0 + $0x1a0] sm:$0xff]
  %v68 = vld [vmem:[%s0 + $0x1a8] sm:$0xff]
  %v69 = vld [vmem:[%s0 + $0x1b0] sm:$0xff]
  %v70 = vld [vmem:[%s0 + $0x1b8] sm:$0xff]
  %v71 = vld [vmem:[%s0 + $0x1c0] sm:$0xff]
  %v72 = vld [vmem:[%s0 + $0x1c8] sm:$0xff]
  %v73 = vld [vmem:[%s0 + $0x1d0] sm:$0xff]
  %v74 = vld [vmem:[%s0 + $0x1d8] sm:$0xff]
  %v75 = vld [vmem:[%s0 + $0x1e0] sm:$0xff]
  %v76 = vld [vmem:[%s0 + $0x1e8] sm:$0xff]
  %v77 = vld [vmem:[%s0 + $0x1f0] sm:$0xff]
  %v78 = vld [vmem:[%s0 + $0x1f8] sm:$0xff]
  %v79 = vld [vmem:[%s0 + $0x200] sm:$0xff]
  %v80 = vld [vmem:[%s0 + $0x208] sm:$0xff]
  %v81 = vld [vmem:[%s0 + $0x210] sm:$0xff]
  %v82 = vld [vmem:[%s0 + $0x218] sm:$0xff]
  %v83 = vld [vmem:[%s0 + $0x220] sm:$0xff]
  %v84 = vld [vmem:[%s0 + $0x228] sm:$0xff]
  %v85 = vld [vmem:[%s0 + $0x230] sm:$0xff]
  %v86 = vld [vmem:[%s0 + $0x238] sm:$0xff]
  %v87 = vld [vmem:[%s0 + $0x240] sm:$0xff]
  %v88 = vld [vmem:[%s0 + $0x248] sm:$0xff]
  %v89 = vld [vmem:[%s0 + $0x250] sm:$0xff]
  %v90 = vld [vmem:[%s0 + $0x258] sm:$0xff]
  %v91 = vld [vmem:[%s0 + $0x260] sm:$0xff]
  %v92 = vld [vmem:[%s0 + $0x268] sm:$0xff]
  %v93 = vld [vmem:[%s0 + $0x270] sm:$0xff]
  %v94 = vld [vmem:[%s0 + $0x278] sm:$0xff]
  %v95 = vld [vmem:[%s0 + $0x280] sm:$0xff]
  %v96 = vld [vmem:[%s0 + $0x288] sm:$0xff]
  %v97 = vld [vmem:[%s0 + $0x290] sm:$0xff]
  %v98 = vld [vmem:[%s0 + $0x298] sm:$0xff]
  %v99 = vld [vmem:[%s0 + $0x2a0] sm:$0xff]
  %v100 = vld [vmem:[%s0 + $0x2a8] sm:$0xff]
  %v101 = vld [vmem:[%s0 + $0x2b0] sm:$0xff]
  %v102 = vld [vmem:[%s0 + $0x2b8] sm:$0xff]
  %v103 = vld [vmem:[%s0 + $0x2c0] sm:$0xff]
  %v104 = vld [vmem:[%s0 + $0x2c8] sm:$0xff]
  %v105 = vld [vmem:[%s0 + $0x2d0] sm:$0xff]
  %v106 = vld [vmem:[%s0 + $0x2d8] sm:$0xff]
  %v107 = vld [vmem:[%s0 + $0x2e0] sm:$0xff]
  %v108 = vld [vmem:[%s0 + $0x2e8] sm:$0xff]
  %v109 = vld [vmem:[%s0 + $0x2f0] sm:$0xff]
  %v110 = vld [vmem:[%s0 + $0x2f8] sm:$0xff]
  %v111 = vld [vmem:[%s0 + $0x300] sm:$0xff]
  %v112 = vld [vmem:[%s0 + $0x308] sm:$0xff]
  %v113 = vld [vmem:[%s0 + $0x310] sm:$0xff]
  %v114 = vld [vmem:[%s0 + $0x318] sm:$0xff]
  %v115 = vld [vmem:[%s0 + $0x320] sm:$0xff]
  %v116 = vld [vmem:[%s0 + $0x328] sm:$0xff]
  %v117 = vld [vmem:[%s0 + $0x330] sm:$0xff]
  %v118 = vld [vmem:[%s0 + $0x338] sm:$0xff]
  %v119 = vld [vmem:[%s0 + $0x340] sm:$0xff]
  %v120 = vld [vmem:[%s0 + $0x348] sm:$0xff]
  %v121 = vld [vmem:[%s0 + $0x350] sm:$0xff]
  %v122 = vld [vmem:[%s0 + $0x358] sm:$0xff]
  %v123 = vld [vmem:[%s0 + $0x360] sm:$0xff]
  %v124 = vld [vmem:[%s0 + $0x368] sm:$0xff]
  %v125 = vld [vmem:[%s0 + $0x370] sm:$0xff]
  %v126 = vld [vmem:[%s0 + $0x378] sm:$0xff]
  %v127 = vld [vmem:[%s0 + $0x380] sm:$0xff]
  %v128 = vld [vmem:[%s0 + $0x388] sm:$0xff]
  %v129 = vld [vmem:[%s0 + $0x390] sm:$0xff]
  %v130 = vld [vmem:[%s0 + $0x398] sm:$0xff]
  %v131 = vld [vmem:[%s0 + $0x3a0] sm:$0xff]
  %v132 = vld [vmem:[%s0 + $0x3a8] sm:$0xff]
  %v133 = vld [vmem:[%s0 + $0x3b0] sm:$0xff]
  %v134 = vld [vmem:[%s0 + $0x3b8] sm:$0xff]
  %v135 = vld [vmem:[%s0 + $0x3c0] sm:$0xff]
  %v136 = vld [vmem:[%s0 + $0x3c8] sm:$0xff]
  %v137 = vld [vmem:[%s0 + $0x3d0] sm:$0xff]
  %v138 = vld [vmem:[%s0 + $0x3d8] sm:$0xff]
  %v139 = vld [vmem:[%s0 + $0x3e0] sm:$0xff]
  %v140 = vld [vmem:[%s0 + $0x3e8] sm:$0xff]
  %v141 = vld [vmem:[%s0 + $0x3f0] sm:$0xff]
  %v142 = vld [vmem:[%s0 + $0x3f8] sm:$0xff]
  %v143 = vld [vmem:[%s0 + $0x400] sm:$0xff]
  %v144 = vld [vmem:[%s0 + $0x408] sm:$0xff]
  %v145 = vld [vmem:[%s0 + $0x410] sm:$0xff]
  %v146 = vld [vmem:[%s0 + $0x418] sm:$0xff]
  %v147 = vld [vmem:[%s0 + $0x420] sm:$0xff]
  %v148 = vld [vmem:[%s0 + $0x428] sm:$0xff]
  %v149 = vld [vmem:[%s0 + $0x430] sm:$0xff]
  %v150 = vld [vmem:[%s0 + $0x438] sm:$0xff]
  %v151 = vld [vmem:[%s0 + $0x440] sm:$0xff]
  %v152 = vld [vmem:[%s0 + $0x448] sm:$0xff]
  %v153 = vld [vmem:[%s0 + $0x450] sm:$0xff]
  %v154 = vld [vmem:[%s0 + $0x458] sm:$0xff]
  %v155 = vld [vmem:[%s0 + $0x460] sm:$0xff]
  %v156 = vld [vmem:[%s0 + $0x468] sm:$0xff]
  %v157 = vld [vmem:[%s0 + $0x470] sm:$0xff]
  %v158 = vld [vmem:[%s0 + $0x478] sm:$0xff]
  %v159 = vld [vmem:[%s0 + $0x480] sm:$0xff]
  %v160 = vld [vmem:[%s0 + $0x488] sm:$0xff]
  %v161 = vld [vmem:[%s0 + $0x490] sm:$0xff]
  %v162 = vld [vmem:[%s0 + $0x498] sm:$0xff]
  %v163 = vld [vmem:[%s0 + $0x4a0] sm:$0xff]
  %v164 = vld [vmem:[%s0 + $0x4a8] sm:$0xff]
  %v165 = vld [vmem:[%s0 + $0x4b0] sm:$0xff]
  %v166 = vld [vmem:[%s0 + $0x4b8] sm:$0xff]
  %v167 = vld [vmem:[%s0 + $0x4c0] sm:$0xff]
  %v168 = vld [vmem:[%s0 + $0x4c8] sm:$0xff]
  %v169 = vld [vmem:[%s0 + $0x4d0] sm:$0xff]
  %v170 = vld [vmem:[%s0 + $0x4d8] sm:$0xff]
  %v171 = vld [vmem:[%s0 + $0x4e0] sm:$0xff]
  %v172 = vld [vmem:[%s0 + $0x4e8] sm:$0xff]
  %v173 = vld [vmem:[%s0 + $0x4f0] sm:$0xff]
  %v174 = vld [vmem:[%s0 + $0x4f8] sm:$0xff]
  %v175 = vld [vmem:[%s0 + $0x500] sm:$0xff]
  %v176 = vld [vmem:[%s0 + $0x508] sm:$0xff]
  %v177 = vld [vmem:[%s0 + $0x510] sm:$0xff]
  %v178 = vld [vmem:[%s0 + $0x518] sm:$0xff]
  %v179 = vld [vmem:[%s0 + $0x520] sm:$0xff]
  %v180 = vld [vmem:[%s0 + $0x528] sm:$0xff]
  %v181 = vld [vmem:[%s0 + $0x530] sm:$0xff]
  %v182 = vld [vmem:[%s0 + $0x538] sm:$0xff]
  %v183 = vld [vmem:[%s0 + $0x540] sm:$0xff]
  %v184 = vld [vmem:[%s0 + $0x548] sm:$0xff]
  %v185 = vld [vmem:[%s0 + $0x550] sm:$0xff]
  %v186 = vld [vmem:[%s0 + $0x558] sm:$0xff]
  %v187 = vld [vmem:[%s0 + $0x560] sm:$0xff]
  %v188 = vld [vmem:[%s0 + $0x568] sm:$0xff]
  %v189 = vld [vmem:[%s0 + $0x570] sm:$0xff]
  %v190 = vld [vmem:[%s0 + $0x578] sm:$0xff]
  %v191 = vld [vmem:[%s0 + $0x580] sm:$0xff]
  %v192 = vld [vmem:[%s0 + $0x588] sm:$0xff]
  %v193 = vld [vmem:[%s0 + $0x590] sm:$0xff]
  %v194 = vld [vmem:[%s0 + $0x598] sm:$0xff]
  %v195 = vld [vmem:[%s0 + $0x5a0] sm:$0xff]
  %v196 = vld [vmem:[%s0 + $0x5a8] sm:$0xff]
  %v197 = vld [vmem:[%s0 + $0x5b0] sm:$0xff]
  %v198 = vld [vmem:[%s0 + $0x5b8] sm:$0xff]
  %v199 = vld [vmem:[%s0 + $0x5c0] sm:$0xff]
  %v200 = vld [vmem:[%s0 + $0x5c8] sm:$0xff]
  %v201 = vld [vmem:[%s0 + $0x5d0] sm:$0xff]
  %v202 = vld [vmem:[%s0 + $0x5d8] sm:$0xff]
  %v203 = vld [vmem:[%s0 + $0x5e0] sm:$0xff]
  %v204 = vld [vmem:[%s0 + $0x5e8] sm:$0xff]
  %v205 = vld [vmem:[%s0 + $0x5f0] sm:$0xff]
  %v206 = vld [vmem:[%s0 + $0x5f8] sm:$0xff]
  %v207 = vld [vmem:[%s0 + $0x600] sm:$0xff]
  %v208 = vld [vmem:[%s0 + $0x608] sm:$0xff]
  %v209 = vld [vmem:[%s0 + $0x610] sm:$0xff]
  %v210 = vld [vmem:[%s0 + $0x618] sm:$0xff]
  %v211 = vld [vmem:[%s0 + $0x620] sm:$0xff]
  %v212 = vld [vmem:[%s0 + $0x628] sm:$0xff]
  %v213 = vld [vmem:[%s0 + $0x630] sm:$0xff]
  %v214 = vld [vmem:[%s0 + $0x638] sm:$0xff]
  %v215 = vld [vmem:[%s0 + $0x640] sm:$0xff]
  %v216 = vld [vmem:[%s0 + $0x648] sm:$0xff]
  %v217 = vld [vmem:[%s0 + $0x650] sm:$0xff]
  %v218 = vld [vmem:[%s0 + $0x658] sm:$0xff]
  %v219 = vld [vmem:[%s0 + $0x660] sm:$0xff]
  %v220 = vld [vmem:[%s0 + $0x668] sm:$0xff]
  %v221 = vld [vmem:[%s0 + $0x670] sm:$0xff]
  %v222 = vld [vmem:[%s0 + $0x678] sm:$0xff]
  %v223 = vld [vmem:[%s0 + $0x680] sm:$0xff]
  %v224 = vld [vmem:[%s0 + $0x688] sm:$0xff]
  %v225 = vld [vmem:[%s0 + $0x690] sm:$0xff]
  %v226 = vld [vmem:[%s0 + $0x698] sm:$0xff]
  %v227 = vld [vmem:[%s0 + $0x6a0] sm:$0xff]
  %v228 = vld [vmem:[%s0 + $0x6a8] sm:$0xff]
  %v229 = vld [vmem:[%s0 + $0x6b0] sm:$0xff]
  %v230 = vld [vmem:[%s0 + $0x6b8] sm:$0xff]
  %v231 = vld [vmem:[%s0 + $0x6c0] sm:$0xff]
  %v232 = vld [vmem:[%s0 + $0x6c8] sm:$0xff]
  %v233 = vld [vmem:[%s0 + $0x6d0] sm:$0xff]
  %v234 = vld [vmem:[%s0 + $0x6d8] sm:$0xff]
  %v235 = vld [vmem:[%s0 + $0x6e0] sm:$0xff]
  %v236 = vld [vmem:[%s0 + $0x6e8] sm:$0xff]
  %v237 = vld [vmem:[%s0 + $0x6f0] sm:$0xff]
  %v238 = vld [vmem:[%s0 + $0x6f8] sm:$0xff]
  %v239 = vld [vmem:[%s0 + $0x700] sm:$0xff]
  %v240 = vld [vmem:[%s0 + $0x708] sm:$0xff]
  %v241 = vld [vmem:[%s0 + $0x710] sm:$0xff]
  %v242 = vld [vmem:[%s0 + $0x718] sm:$0xff]
  %v243 = vld [vmem:[%s0 + $0x720] sm:$0xff]
  %v244 = vld [vmem:[%s0 + $0x728] sm:$0xff]
  %v245 = vld [vmem:[%s0 + $0x730] sm:$0xff]
  %v246 = vld [vmem:[%s0 + $0x738] sm:$0xff]
  %v247 = vld [vmem:[%s0 + $0x740] sm:$0xff]
  %v248 = vld [vmem:[%s0 + $0x748] sm:$0xff]
  %v249 = vld [vmem:[%s0 + $0x750] sm:$0xff]
  %v250 = vld [vmem:[%s0 + $0x758] sm:$0xff]
  %v251 = vld [vmem:[%s0 + $0x760] sm:$0xff]
  %v252 = vld [vmem:[%s0 + $0x768] sm:$0xff]
  %v253 = vld [vmem:[%s0 + $0x770] sm:$0xff]
  %v254 = vld [vmem:[%s0 + $0x778] sm:$0xff]
  %v255 = vld [vmem:[%s0 + $0x780] sm:$0xff]
  %v256 = vld [vmem:[%s0 + $0x788] sm:$0xff]
  %v257 = vld [vmem:[%s0 + $0x790] sm:$0xff]
  %v258 = vld [vmem:[%s0 + $0x798] sm:$0xff]
  %v259 = vld [vmem:[%s0 + $0x7a0] sm:$0xff]
  %v260 = vld [vmem:[%s0 + $0x7a8] sm:$0xff]
  %v261 = vld [vmem:[%s0 + $0x7b0] sm:$0xff]
  %v262 = vld [vmem:[%s0 + $0x7b8] sm:$0xff]
  %v263 = vld [vmem:[%s0 + $0x7c0] sm:$0xff]
  %v264 = vld [vmem:[%s0 + $0x7c8] sm:$0xff]
  %v265 = vld [vmem:[%s0 + $0x7d0] sm:$0xff]
  %v266 = vld [vmem:[%s0 + $0x7d8] sm:$0xff]
  %v267 = vld [vmem:[%s0 + $0x7e0] sm:$0xff]
  %v268 = vld [vmem:[%s0 + $0x7e8] sm:$0xff]
  %v269 = vld [vmem:[%s0 + $0x7f0] sm:$0xff]
  %v270 = vld [vmem:[%s0 + $0x7f8] sm:$0xff]
  %v271 = vld [vmem:[%s0 + $0x800] sm:$0xff]
  %v272 = vld [vmem:[%s0 + $0x808] sm:$0xff]
  %v273 = vld [vmem:[%s0 + $0x810] sm:$0xff]
  %v274 = vld [vmem:[%s0 + $0x818] sm:$0xff]
  %v275 = vld [vmem:[%s0 + $0x820] sm:$0xff]
  %v276 = vld [vmem:[%s0 + $0x828] sm:$0xff]
  %v277 = vld [vmem:[%s0 + $0x830] sm:$0xff]
  %v278 = vld [vmem:[%s0 + $0x838] sm:$0xff]
  %v279 = vld [vmem:[%s0 + $0x840] sm:$0xff]
  %v280 = vld [vmem:[%s0 + $0x848] sm:$0xff]
  %v281 = vld [vmem:[%s0 + $0x850] sm:$0xff]
  %v282 = vld [vmem:[%s0 + $0x858] sm:$0xff]
  %v283 = vld [vmem:[%s0 + $0x860] sm:$0xff]
  %v284 = vld [vmem:[%s0 + $0x868] sm:$0xff]
  %v285 = vld [vmem:[%s0 + $0x870] sm:$0xff]
  %v286 = vld [vmem:[%s0 + $0x878] sm:$0xff]
  %v287 = vld [vmem:[%s0 + $0x880] sm:$0xff]
  %v288 = vld [vmem:[%s0 + $0x888] sm:$0xff]
  %v289 = vld [vmem:[%s0 + $0x890] sm:$0xff]
  %v290 = vld [vmem:[%s0 + $0x898] sm:$0xff]
  %v291 = vld [vmem:[%s0 + $0x8a0] sm:$0xff]
  %v292 = vld [vmem:[%s0 + $0x8a8] sm:$0xff]
  %v293 = vld [vmem:[%s0 + $0x8b0] sm:$0xff]
  %v294 = vld [vmem:[%s0 + $0x8b8] sm:$0xff]
  %v295 = vld [vmem:[%s0 + $0x8c0] sm:$0xff]
  %v296 = vld [vmem:[%s0 + $0x8c8] sm:$0xff]
  %v297 = vld [vmem:[%s0 + $0x8d0] sm:$0xff]
  %v298 = vld [vmem:[%s0 + $0x8d8] sm:$0xff]
  %v299 = vld [vmem:[%s0 + $0x8e0] sm:$0xff]
  %v300 = vld [vmem:[%s0 + $0x8e8] sm:$0xff]
  %v301 = vld [vmem:[%s0 + $0x8f0] sm:$0xff]
  %v302 = vld [vmem:[%s0 + $0x8f8] sm:$0xff]
  %v303 = vld [vmem:[%s0 + $0x900] sm:$0xff]
  %v304 = vld [vmem:[%s0 + $0x908] sm:$0xff]
  %v305 = vld [vmem:[%s0 + $0x910] sm:$0xff]
  %v306 = vld [vmem:[%s0 + $0x918] sm:$0xff]
  %v307 = vld [vmem:[%s0 + $0x920] sm:$0xff]
  %v308 = vld [vmem:[%s0 + $0x928] sm:$0xff]
  %v309 = vld [vmem:[%s0 + $0x930] sm:$0xff]
  %v310 = vld [vmem:[%s0 + $0x938] sm:$0xff]
  %v311 = vld [vmem:[%s0 + $0x940] sm:$0xff]
  %v312 = vld [vmem:[%s0 + $0x948] sm:$0xff]
  %v313 = vld [vmem:[%s0 + $0x950] sm:$0xff]
  %v314 = vld [vmem:[%s0 + $0x958] sm:$0xff]
  %v315 = vld [vmem:[%s0 + $0x960] sm:$0xff]
  %v316 = vld [vmem:[%s0 + $0x968] sm:$0xff]
  %v317 = vld [vmem:[%s0 + $0x970] sm:$0xff]
  %v318 = vld [vmem:[%s0 + $0x978] sm:$0xff]
  %v319 = vld [vmem:[%s0 + $0x980] sm:$0xff]
  %v320 = vld [vmem:[%s0 + $0x988] sm:$0xff]
  %v321 = vld [vmem:[%s0 + $0x990] sm:$0xff]
  %v322 = vld [vmem:[%s0 + $0x998] sm:$0xff]
  %v323 = vld [vmem:[%s0 + $0x9a0] sm:$0xff]
  %v324 = vld [vmem:[%s0 + $0x9a8] sm:$0xff]
  %v325 = vld [vmem:[%s0 + $0x9b0] sm:$0xff]
  %v326 = vld [vmem:[%s0 + $0x9b8] sm:$0xff]
  %v327 = vld [vmem:[%s0 + $0x9c0] sm:$0xff]
  %v328 = vld [vmem:[%s0 + $0x9c8] sm:$0xff]
  %v329 = vld [vmem:[%s0 + $0x9d0] sm:$0xff]
  %v330 = vld [vmem:[%s0 + $0x9d8] sm:$0xff]
  %v331 = vld [vmem:[%s0 + $0x9e0] sm:$0xff]
  %v332 = vld [vmem:[%s0 + $0x9e8] sm:$0xff]
  %v333 = vld [vmem:[%s0 + $0x9f0] sm:$0xff]
  %v334 = vld [vmem:[%s0 + $0x9f8] sm:$0xff]
  %vm335 = vcmask 31744
  %v336 = vsel %vm335, %v15, 0.0
  %v337 = vsel %vm335, %v16, 0.0
  %v338 = vadd.f32 %v336, %v337
  %v339 = vsel %vm335, %v17, 0.0
  %v340 = vadd.f32 %v338, %v339
  %v341 = vsel %vm335, %v18, 0.0
  %v342 = vadd.f32 %v340, %v341
  %v343 = vsel %vm335, %v19, 0.0
  %v344 = vadd.f32 %v342, %v343
  %v345 = vsel %vm335, %v20, 0.0
  %v346 = vadd.f32 %v344, %v345
  %v347 = vsel %vm335, %v21, 0.0
  %v348 = vadd.f32 %v346, %v347
  %v349 = vsel %vm335, %v22, 0.0
  %v350 = vadd.f32 %v348, %v349
  %v351 = vsel %vm335, %v23, 0.0
  %v352 = vadd.f32 %v350, %v351
  %v353 = vsel %vm335, %v24, 0.0
  %v354 = vadd.f32 %v352, %v353
  %v355 = vsel %vm335, %v25, 0.0
  %v356 = vadd.f32 %v354, %v355
  %v357 = vsel %vm335, %v26, 0.0
  %v358 = vadd.f32 %v356, %v357
  %v359 = vsel %vm335, %v27, 0.0
  %v360 = vadd.f32 %v358, %v359
  %v361 = vsel %vm335, %v28, 0.0
  %v362 = vadd.f32 %v360, %v361
  %v363 = vsel %vm335, %v29, 0.0
  %v364 = vadd.f32 %v362, %v363
  %v365 = vsel %vm335, %v30, 0.0
  %v366 = vadd.f32 %v364, %v365
  %v367 = vsel %vm335, %v31, 0.0
  %v368 = vadd.f32 %v366, %v367
  %v369 = vsel %vm335, %v32, 0.0
  %v370 = vadd.f32 %v368, %v369
  %v371 = vsel %vm335, %v33, 0.0
  %v372 = vadd.f32 %v370, %v371
  %v373 = vsel %vm335, %v34, 0.0
  %v374 = vadd.f32 %v372, %v373
  %v375 = vsel %vm335, %v35, 0.0
  %v376 = vadd.f32 %v374, %v375
  %v377 = vsel %vm335, %v36, 0.0
  %v378 = vadd.f32 %v376, %v377
  %v379 = vsel %vm335, %v37, 0.0
  %v380 = vadd.f32 %v378, %v379
  %v381 = vsel %vm335, %v38, 0.0
  %v382 = vadd.f32 %v380, %v381
  %v383 = vsel %vm335, %v39, 0.0
  %v384 = vadd.f32 %v382, %v383
  %v385 = vsel %vm335, %v40, 0.0
  %v386 = vadd.f32 %v384, %v385
  %v387 = vsel %vm335, %v41, 0.0
  %v388 = vadd.f32 %v386, %v387
  %v389 = vsel %vm335, %v42, 0.0
  %v390 = vadd.f32 %v388, %v389
  %v391 = vsel %vm335, %v43, 0.0
  %v392 = vadd.f32 %v390, %v391
  %v393 = vsel %vm335, %v44, 0.0
  %v394 = vadd.f32 %v392, %v393
  %v395 = vsel %vm335, %v45, 0.0
  %v396 = vadd.f32 %v394, %v395
  %v397 = vsel %vm335, %v46, 0.0
  %v398 = vadd.f32 %v396, %v397
  %v399 = vrot.slane %v398, 4
  %v400 = vadd.f32 %v398, %v399
  %v401 = vrot.slane %v400, 2
  %v402 = vadd.f32 %v400, %v401
  %v403 = vrot.slane %v402, 1
  %v404 = vadd.f32 %v402, %v403
  %v405 = vsel %vm335, %v47, 0.0
  %v406 = vsel %vm335, %v48, 0.0
  %v407 = vadd.f32 %v405, %v406
  %v408 = vsel %vm335, %v49, 0.0
  %v409 = vadd.f32 %v407, %v408
  %v410 = vsel %vm335, %v50, 0.0
  %v411 = vadd.f32 %v409, %v410
  %v412 = vsel %vm335, %v51, 0.0
  %v413 = vadd.f32 %v411, %v412
  %v414 = vsel %vm335, %v52, 0.0
  %v415 = vadd.f32 %v413, %v414
  %v416 = vsel %vm335, %v53, 0.0
  %v417 = vadd.f32 %v415, %v416
  %v418 = vsel %vm335, %v54, 0.0
  %v419 = vadd.f32 %v417, %v418
  %v420 = vsel %vm335, %v55, 0.0
  %v421 = vadd.f32 %v419, %v420
  %v422 = vsel %vm335, %v56, 0.0
  %v423 = vadd.f32 %v421, %v422
  %v424 = vsel %vm335, %v57, 0.0
  %v425 = vadd.f32 %v423, %v424
  %v426 = vsel %vm335, %v58, 0.0
  %v427 = vadd.f32 %v425, %v426
  %v428 = vsel %vm335, %v59, 0.0
  %v429 = vadd.f32 %v427, %v428
  %v430 = vsel %vm335, %v60, 0.0
  %v431 = vadd.f32 %v429, %v430
  %v432 = vsel %vm335, %v61, 0.0
  %v433 = vadd.f32 %v431, %v432
  %v434 = vsel %vm335, %v62, 0.0
  %v435 = vadd.f32 %v433, %v434
  %v436 = vsel %vm335, %v63, 0.0
  %v437 = vadd.f32 %v435, %v436
  %v438 = vsel %vm335, %v64, 0.0
  %v439 = vadd.f32 %v437, %v438
  %v440 = vsel %vm335, %v65, 0.0
  %v441 = vadd.f32 %v439, %v440
  %v442 = vsel %vm335, %v66, 0.0
  %v443 = vadd.f32 %v441, %v442
  %v444 = vsel %vm335, %v67, 0.0
  %v445 = vadd.f32 %v443, %v444
  %v446 = vsel %vm335, %v68, 0.0
  %v447 = vadd.f32 %v445, %v446
  %v448 = vsel %vm335, %v69, 0.0
  %v449 = vadd.f32 %v447, %v448
  %v450 = vsel %vm335, %v70, 0.0
  %v451 = vadd.f32 %v449, %v450
  %v452 = vsel %vm335, %v71, 0.0
  %v453 = vadd.f32 %v451, %v452
  %v454 = vsel %vm335, %v72, 0.0
  %v455 = vadd.f32 %v453, %v454
  %v456 = vsel %vm335, %v73, 0.0
  %v457 = vadd.f32 %v455, %v456
  %v458 = vsel %vm335, %v74, 0.0
  %v459 = vadd.f32 %v457, %v458
  %v460 = vsel %vm335, %v75, 0.0
  %v461 = vadd.f32 %v459, %v460
  %v462 = vsel %vm335, %v76, 0.0
  %v463 = vadd.f32 %v461, %v462
  %v464 = vsel %vm335, %v77, 0.0
  %v465 = vadd.f32 %v463, %v464
  %v466 = vsel %vm335, %v78, 0.0
  %v467 = vadd.f32 %v465, %v466
  %v468 = vrot.slane %v467, 4
  %v469 = vadd.f32 %v467, %v468
  %v470 = vrot.slane %v469, 2
  %v471 = vadd.f32 %v469, %v470
  %v472 = vrot.slane %v471, 1
  %v473 = vadd.f32 %v471, %v472
  %v474 = vsel %vm335, %v79, 0.0
  %v475 = vsel %vm335, %v80, 0.0
  %v476 = vadd.f32 %v474, %v475
  %v477 = vsel %vm335, %v81, 0.0
  %v478 = vadd.f32 %v476, %v477
  %v479 = vsel %vm335, %v82, 0.0
  %v480 = vadd.f32 %v478, %v479
  %v481 = vsel %vm335, %v83, 0.0
  %v482 = vadd.f32 %v480, %v481
  %v483 = vsel %vm335, %v84, 0.0
  %v484 = vadd.f32 %v482, %v483
  %v485 = vsel %vm335, %v85, 0.0
  %v486 = vadd.f32 %v484, %v485
  %v487 = vsel %vm335, %v86, 0.0
  %v488 = vadd.f32 %v486, %v487
  %v489 = vsel %vm335, %v87, 0.0
  %v490 = vadd.f32 %v488, %v489
  %v491 = vsel %vm335, %v88, 0.0
  %v492 = vadd.f32 %v490, %v491
  %v493 = vsel %vm335, %v89, 0.0
  %v494 = vadd.f32 %v492, %v493
  %v495 = vsel %vm335, %v90, 0.0
  %v496 = vadd.f32 %v494, %v495
  %v497 = vsel %vm335, %v91, 0.0
  %v498 = vadd.f32 %v496, %v497
  %v499 = vsel %vm335, %v92, 0.0
  %v500 = vadd.f32 %v498, %v499
  %v501 = vsel %vm335, %v93, 0.0
  %v502 = vadd.f32 %v500, %v501
  %v503 = vsel %vm335, %v94, 0.0
  %v504 = vadd.f32 %v502, %v503
  %v505 = vsel %vm335, %v95, 0.0
  %v506 = vadd.f32 %v504, %v505
  %v507 = vsel %vm335, %v96, 0.0
  %v508 = vadd.f32 %v506, %v507
  %v509 = vsel %vm335, %v97, 0.0
  %v510 = vadd.f32 %v508, %v509
  %v511 = vsel %vm335, %v98, 0.0
  %v512 = vadd.f32 %v510, %v511
  %v513 = vsel %vm335, %v99, 0.0
  %v514 = vadd.f32 %v512, %v513
  %v515 = vsel %vm335, %v100, 0.0
  %v516 = vadd.f32 %v514, %v515
  %v517 = vsel %vm335, %v101, 0.0
  %v518 = vadd.f32 %v516, %v517
  %v519 = vsel %vm335, %v102, 0.0
  %v520 = vadd.f32 %v518, %v519
  %v521 = vsel %vm335, %v103, 0.0
  %v522 = vadd.f32 %v520, %v521
  %v523 = vsel %vm335, %v104, 0.0
  %v524 = vadd.f32 %v522, %v523
  %v525 = vsel %vm335, %v105, 0.0
  %v526 = vadd.f32 %v524, %v525
  %v527 = vsel %vm335, %v106, 0.0
  %v528 = vadd.f32 %v526, %v527
  %v529 = vsel %vm335, %v107, 0.0
  %v530 = vadd.f32 %v528, %v529
  %v531 = vsel %vm335, %v108, 0.0
  %v532 = vadd.f32 %v530, %v531
  %v533 = vsel %vm335, %v109, 0.0
  %v534 = vadd.f32 %v532, %v533
  %v535 = vsel %vm335, %v110, 0.0
  %v536 = vadd.f32 %v534, %v535
  %v537 = vrot.slane %v536, 4
  %v538 = vadd.f32 %v536, %v537
  %v539 = vrot.slane %v538, 2
  %v540 = vadd.f32 %v538, %v539
  %v541 = vrot.slane %v540, 1
  %v542 = vadd.f32 %v540, %v541
  %v543 = vsel %vm335, %v111, 0.0
  %v544 = vsel %vm335, %v112, 0.0
  %v545 = vadd.f32 %v543, %v544
  %v546 = vsel %vm335, %v113, 0.0
  %v547 = vadd.f32 %v545, %v546
  %v548 = vsel %vm335, %v114, 0.0
  %v549 = vadd.f32 %v547, %v548
  %v550 = vsel %vm335, %v115, 0.0
  %v551 = vadd.f32 %v549, %v550
  %v552 = vsel %vm335, %v116, 0.0
  %v553 = vadd.f32 %v551, %v552
  %v554 = vsel %vm335, %v117, 0.0
  %v555 = vadd.f32 %v553, %v554
  %v556 = vsel %vm335, %v118, 0.0
  %v557 = vadd.f32 %v555, %v556
  %v558 = vsel %vm335, %v119, 0.0
  %v559 = vadd.f32 %v557, %v558
  %v560 = vsel %vm335, %v120, 0.0
  %v561 = vadd.f32 %v559, %v560
  %v562 = vsel %vm335, %v121, 0.0
  %v563 = vadd.f32 %v561, %v562
  %v564 = vsel %vm335, %v122, 0.0
  %v565 = vadd.f32 %v563, %v564
  %v566 = vsel %vm335, %v123, 0.0
  %v567 = vadd.f32 %v565, %v566
  %v568 = vsel %vm335, %v124, 0.0
  %v569 = vadd.f32 %v567, %v568
  %v570 = vsel %vm335, %v125, 0.0
  %v571 = vadd.f32 %v569, %v570
  %v572 = vsel %vm335, %v126, 0.0
  %v573 = vadd.f32 %v571, %v572
  %v574 = vsel %vm335, %v127, 0.0
  %v575 = vadd.f32 %v573, %v574
  %v576 = vsel %vm335, %v128, 0.0
  %v577 = vadd.f32 %v575, %v576
  %v578 = vsel %vm335, %v129, 0.0
  %v579 = vadd.f32 %v577, %v578
  %v580 = vsel %vm335, %v130, 0.0
  %v581 = vadd.f32 %v579, %v580
  %v582 = vsel %vm335, %v131, 0.0
  %v583 = vadd.f32 %v581, %v582
  %v584 = vsel %vm335, %v132, 0.0
  %v585 = vadd.f32 %v583, %v584
  %v586 = vsel %vm335, %v133, 0.0
  %v587 = vadd.f32 %v585, %v586
  %v588 = vsel %vm335, %v134, 0.0
  %v589 = vadd.f32 %v587, %v588
  %v590 = vsel %vm335, %v135, 0.0
  %v591 = vadd.f32 %v589, %v590
  %v592 = vsel %vm335, %v136, 0.0
  %v593 = vadd.f32 %v591, %v592
  %v594 = vsel %vm335, %v137, 0.0
  %v595 = vadd.f32 %v593, %v594
  %v596 = vsel %vm335, %v138, 0.0
  %v597 = vadd.f32 %v595, %v596
  %v598 = vsel %vm335, %v139, 0.0
  %v599 = vadd.f32 %v597, %v598
  %v600 = vsel %vm335, %v140, 0.0
  %v601 = vadd.f32 %v599, %v600
  %v602 = vsel %vm335, %v141, 0.0
  %v603 = vadd.f32 %v601, %v602
  %v604 = vsel %vm335, %v142, 0.0
  %v605 = vadd.f32 %v603, %v604
  %v606 = vrot.slane %v605, 4
  %v607 = vadd.f32 %v605, %v606
  %v608 = vrot.slane %v607, 2
  %v609 = vadd.f32 %v607, %v608
  %v610 = vrot.slane %v609, 1
  %v611 = vadd.f32 %v609, %v610
  %v612 = vsel %vm335, %v143, 0.0
  %v613 = vsel %vm335, %v144, 0.0
  %v614 = vadd.f32 %v612, %v613
  %v615 = vsel %vm335, %v145, 0.0
  %v616 = vadd.f32 %v614, %v615
  %v617 = vsel %vm335, %v146, 0.0
  %v618 = vadd.f32 %v616, %v617
  %v619 = vsel %vm335, %v147, 0.0
  %v620 = vadd.f32 %v618, %v619
  %v621 = vsel %vm335, %v148, 0.0
  %v622 = vadd.f32 %v620, %v621
  %v623 = vsel %vm335, %v149, 0.0
  %v624 = vadd.f32 %v622, %v623
  %v625 = vsel %vm335, %v150, 0.0
  %v626 = vadd.f32 %v624, %v625
  %v627 = vsel %vm335, %v151, 0.0
  %v628 = vadd.f32 %v626, %v627
  %v629 = vsel %vm335, %v152, 0.0
  %v630 = vadd.f32 %v628, %v629
  %v631 = vsel %vm335, %v153, 0.0
  %v632 = vadd.f32 %v630, %v631
  %v633 = vsel %vm335, %v154, 0.0
  %v634 = vadd.f32 %v632, %v633
  %v635 = vsel %vm335, %v155, 0.0
  %v636 = vadd.f32 %v634, %v635
  %v637 = vsel %vm335, %v156, 0.0
  %v638 = vadd.f32 %v636, %v637
  %v639 = vsel %vm335, %v157, 0.0
  %v640 = vadd.f32 %v638, %v639
  %v641 = vsel %vm335, %v158, 0.0
  %v642 = vadd.f32 %v640, %v641
  %v643 = vsel %vm335, %v159, 0.0
  %v644 = vadd.f32 %v642, %v643
  %v645 = vsel %vm335, %v160, 0.0
  %v646 = vadd.f32 %v644, %v645
  %v647 = vsel %vm335, %v161, 0.0
  %v648 = vadd.f32 %v646, %v647
  %v649 = vsel %vm335, %v162, 0.0
  %v650 = vadd.f32 %v648, %v649
  %v651 = vsel %vm335, %v163, 0.0
  %v652 = vadd.f32 %v650, %v651
  %v653 = vsel %vm335, %v164, 0.0
  %v654 = vadd.f32 %v652, %v653
  %v655 = vsel %vm335, %v165, 0.0
  %v656 = vadd.f32 %v654, %v655
  %v657 = vsel %vm335, %v166, 0.0
  %v658 = vadd.f32 %v656, %v657
  %v659 = vsel %vm335, %v167, 0.0
  %v660 = vadd.f32 %v658, %v659
  %v661 = vsel %vm335, %v168, 0.0
  %v662 = vadd.f32 %v660, %v661
  %v663 = vsel %vm335, %v169, 0.0
  %v664 = vadd.f32 %v662, %v663
  %v665 = vsel %vm335, %v170, 0.0
  %v666 = vadd.f32 %v664, %v665
  %v667 = vsel %vm335, %v171, 0.0
  %v668 = vadd.f32 %v666, %v667
  %v669 = vsel %vm335, %v172, 0.0
  %v670 = vadd.f32 %v668, %v669
  %v671 = vsel %vm335, %v173, 0.0
  %v672 = vadd.f32 %v670, %v671
  %v673 = vsel %vm335, %v174, 0.0
  %v674 = vadd.f32 %v672, %v673
  %v675 = vrot.slane %v674, 4
  %v676 = vadd.f32 %v674, %v675
  %v677 = vrot.slane %v676, 2
  %v678 = vadd.f32 %v676, %v677
  %v679 = vrot.slane %v678, 1
  %v680 = vadd.f32 %v678, %v679
  %v681 = vsel %vm335, %v175, 0.0
  %v682 = vsel %vm335, %v176, 0.0
  %v683 = vadd.f32 %v681, %v682
  %v684 = vsel %vm335, %v177, 0.0
  %v685 = vadd.f32 %v683, %v684
  %v686 = vsel %vm335, %v178, 0.0
  %v687 = vadd.f32 %v685, %v686
  %v688 = vsel %vm335, %v179, 0.0
  %v689 = vadd.f32 %v687, %v688
  %v690 = vsel %vm335, %v180, 0.0
  %v691 = vadd.f32 %v689, %v690
  %v692 = vsel %vm335, %v181, 0.0
  %v693 = vadd.f32 %v691, %v692
  %v694 = vsel %vm335, %v182, 0.0
  %v695 = vadd.f32 %v693, %v694
  %v696 = vsel %vm335, %v183, 0.0
  %v697 = vadd.f32 %v695, %v696
  %v698 = vsel %vm335, %v184, 0.0
  %v699 = vadd.f32 %v697, %v698
  %v700 = vsel %vm335, %v185, 0.0
  %v701 = vadd.f32 %v699, %v700
  %v702 = vsel %vm335, %v186, 0.0
  %v703 = vadd.f32 %v701, %v702
  %v704 = vsel %vm335, %v187, 0.0
  %v705 = vadd.f32 %v703, %v704
  %v706 = vsel %vm335, %v188, 0.0
  %v707 = vadd.f32 %v705, %v706
  %v708 = vsel %vm335, %v189, 0.0
  %v709 = vadd.f32 %v707, %v708
  %v710 = vsel %vm335, %v190, 0.0
  %v711 = vadd.f32 %v709, %v710
  %v712 = vsel %vm335, %v191, 0.0
  %v713 = vadd.f32 %v711, %v712
  %v714 = vsel %vm335, %v192, 0.0
  %v715 = vadd.f32 %v713, %v714
  %v716 = vsel %vm335, %v193, 0.0
  %v717 = vadd.f32 %v715, %v716
  %v718 = vsel %vm335, %v194, 0.0
  %v719 = vadd.f32 %v717, %v718
  %v720 = vsel %vm335, %v195, 0.0
  %v721 = vadd.f32 %v719, %v720
  %v722 = vsel %vm335, %v196, 0.0
  %v723 = vadd.f32 %v721, %v722
  %v724 = vsel %vm335, %v197, 0.0
  %v725 = vadd.f32 %v723, %v724
  %v726 = vsel %vm335, %v198, 0.0
  %v727 = vadd.f32 %v725, %v726
  %v728 = vsel %vm335, %v199, 0.0
  %v729 = vadd.f32 %v727, %v728
  %v730 = vsel %vm335, %v200, 0.0
  %v731 = vadd.f32 %v729, %v730
  %v732 = vsel %vm335, %v201, 0.0
  %v733 = vadd.f32 %v731, %v732
  %v734 = vsel %vm335, %v202, 0.0
  %v735 = vadd.f32 %v733, %v734
  %v736 = vsel %vm335, %v203, 0.0
  %v737 = vadd.f32 %v735, %v736
  %v738 = vsel %vm335, %v204, 0.0
  %v739 = vadd.f32 %v737, %v738
  %v740 = vsel %vm335, %v205, 0.0
  %v741 = vadd.f32 %v739, %v740
  %v742 = vsel %vm335, %v206, 0.0
  %v743 = vadd.f32 %v741, %v742
  %v744 = vrot.slane %v743, 4
  %v745 = vadd.f32 %v743, %v744
  %v746 = vrot.slane %v745, 2
  %v747 = vadd.f32 %v745, %v746
  %v748 = vrot.slane %v747, 1
  %v749 = vadd.f32 %v747, %v748
  %v750 = vsel %vm335, %v207, 0.0
  %v751 = vsel %vm335, %v208, 0.0
  %v752 = vadd.f32 %v750, %v751
  %v753 = vsel %vm335, %v209, 0.0
  %v754 = vadd.f32 %v752, %v753
  %v755 = vsel %vm335, %v210, 0.0
  %v756 = vadd.f32 %v754, %v755
  %v757 = vsel %vm335, %v211, 0.0
  %v758 = vadd.f32 %v756, %v757
  %v759 = vsel %vm335, %v212, 0.0
  %v760 = vadd.f32 %v758, %v759
  %v761 = vsel %vm335, %v213, 0.0
  %v762 = vadd.f32 %v760, %v761
  %v763 = vsel %vm335, %v214, 0.0
  %v764 = vadd.f32 %v762, %v763
  %v765 = vsel %vm335, %v215, 0.0
  %v766 = vadd.f32 %v764, %v765
  %v767 = vsel %vm335, %v216, 0.0
  %v768 = vadd.f32 %v766, %v767
  %v769 = vsel %vm335, %v217, 0.0
  %v770 = vadd.f32 %v768, %v769
  %v771 = vsel %vm335, %v218, 0.0
  %v772 = vadd.f32 %v770, %v771
  %v773 = vsel %vm335, %v219, 0.0
  %v774 = vadd.f32 %v772, %v773
  %v775 = vsel %vm335, %v220, 0.0
  %v776 = vadd.f32 %v774, %v775
  %v777 = vsel %vm335, %v221, 0.0
  %v778 = vadd.f32 %v776, %v777
  %v779 = vsel %vm335, %v222, 0.0
  %v780 = vadd.f32 %v778, %v779
  %v781 = vsel %vm335, %v223, 0.0
  %v782 = vadd.f32 %v780, %v781
  %v783 = vsel %vm335, %v224, 0.0
  %v784 = vadd.f32 %v782, %v783
  %v785 = vsel %vm335, %v225, 0.0
  %v786 = vadd.f32 %v784, %v785
  %v787 = vsel %vm335, %v226, 0.0
  %v788 = vadd.f32 %v786, %v787
  %v789 = vsel %vm335, %v227, 0.0
  %v790 = vadd.f32 %v788, %v789
  %v791 = vsel %vm335, %v228, 0.0
  %v792 = vadd.f32 %v790, %v791
  %v793 = vsel %vm335, %v229, 0.0
  %v794 = vadd.f32 %v792, %v793
  %v795 = vsel %vm335, %v230, 0.0
  %v796 = vadd.f32 %v794, %v795
  %v797 = vsel %vm335, %v231, 0.0
  %v798 = vadd.f32 %v796, %v797
  %v799 = vsel %vm335, %v232, 0.0
  %v800 = vadd.f32 %v798, %v799
  %v801 = vsel %vm335, %v233, 0.0
  %v802 = vadd.f32 %v800, %v801
  %v803 = vsel %vm335, %v234, 0.0
  %v804 = vadd.f32 %v802, %v803
  %v805 = vsel %vm335, %v235, 0.0
  %v806 = vadd.f32 %v804, %v805
  %v807 = vsel %vm335, %v236, 0.0
  %v808 = vadd.f32 %v806, %v807
  %v809 = vsel %vm335, %v237, 0.0
  %v810 = vadd.f32 %v808, %v809
  %v811 = vsel %vm335, %v238, 0.0
  %v812 = vadd.f32 %v810, %v811
  %v813 = vrot.slane %v812, 4
  %v814 = vadd.f32 %v812, %v813
  %v815 = vrot.slane %v814, 2
  %v816 = vadd.f32 %v814, %v815
  %v817 = vrot.slane %v816, 1
  %v818 = vadd.f32 %v816, %v817
  %v819 = vsel %vm335, %v239, 0.0
  %v820 = vsel %vm335, %v240, 0.0
  %v821 = vadd.f32 %v819, %v820
  %v822 = vsel %vm335, %v241, 0.0
  %v823 = vadd.f32 %v821, %v822
  %v824 = vsel %vm335, %v242, 0.0
  %v825 = vadd.f32 %v823, %v824
  %v826 = vsel %vm335, %v243, 0.0
  %v827 = vadd.f32 %v825, %v826
  %v828 = vsel %vm335, %v244, 0.0
  %v829 = vadd.f32 %v827, %v828
  %v830 = vsel %vm335, %v245, 0.0
  %v831 = vadd.f32 %v829, %v830
  %v832 = vsel %vm335, %v246, 0.0
  %v833 = vadd.f32 %v831, %v832
  %v834 = vsel %vm335, %v247, 0.0
  %v835 = vadd.f32 %v833, %v834
  %v836 = vsel %vm335, %v248, 0.0
  %v837 = vadd.f32 %v835, %v836
  %v838 = vsel %vm335, %v249, 0.0
  %v839 = vadd.f32 %v837, %v838
  %v840 = vsel %vm335, %v250, 0.0
  %v841 = vadd.f32 %v839, %v840
  %v842 = vsel %vm335, %v251, 0.0
  %v843 = vadd.f32 %v841, %v842
  %v844 = vsel %vm335, %v252, 0.0
  %v845 = vadd.f32 %v843, %v844
  %v846 = vsel %vm335, %v253, 0.0
  %v847 = vadd.f32 %v845, %v846
  %v848 = vsel %vm335, %v254, 0.0
  %v849 = vadd.f32 %v847, %v848
  %v850 = vsel %vm335, %v255, 0.0
  %v851 = vadd.f32 %v849, %v850
  %v852 = vsel %vm335, %v256, 0.0
  %v853 = vadd.f32 %v851, %v852
  %v854 = vsel %vm335, %v257, 0.0
  %v855 = vadd.f32 %v853, %v854
  %v856 = vsel %vm335, %v258, 0.0
  %v857 = vadd.f32 %v855, %v856
  %v858 = vsel %vm335, %v259, 0.0
  %v859 = vadd.f32 %v857, %v858
  %v860 = vsel %vm335, %v260, 0.0
  %v861 = vadd.f32 %v859, %v860
  %v862 = vsel %vm335, %v261, 0.0
  %v863 = vadd.f32 %v861, %v862
  %v864 = vsel %vm335, %v262, 0.0
  %v865 = vadd.f32 %v863, %v864
  %v866 = vsel %vm335, %v263, 0.0
  %v867 = vadd.f32 %v865, %v866
  %v868 = vsel %vm335, %v264, 0.0
  %v869 = vadd.f32 %v867, %v868
  %v870 = vsel %vm335, %v265, 0.0
  %v871 = vadd.f32 %v869, %v870
  %v872 = vsel %vm335, %v266, 0.0
  %v873 = vadd.f32 %v871, %v872
  %v874 = vsel %vm335, %v267, 0.0
  %v875 = vadd.f32 %v873, %v874
  %v876 = vsel %vm335, %v268, 0.0
  %v877 = vadd.f32 %v875, %v876
  %v878 = vsel %vm335, %v269, 0.0
  %v879 = vadd.f32 %v877, %v878
  %v880 = vsel %vm335, %v270, 0.0
  %v881 = vadd.f32 %v879, %v880
  %v882 = vrot.slane %v881, 4
  %v883 = vadd.f32 %v881, %v882
  %v884 = vrot.slane %v883, 2
  %v885 = vadd.f32 %v883, %v884
  %v886 = vrot.slane %v885, 1
  %v887 = vadd.f32 %v885, %v886
  %v888 = vsel %vm335, %v271, 0.0
  %v889 = vsel %vm335, %v272, 0.0
  %v890 = vadd.f32 %v888, %v889
  %v891 = vsel %vm335, %v273, 0.0
  %v892 = vadd.f32 %v890, %v891
  %v893 = vsel %vm335, %v274, 0.0
  %v894 = vadd.f32 %v892, %v893
  %v895 = vsel %vm335, %v275, 0.0
  %v896 = vadd.f32 %v894, %v895
  %v897 = vsel %vm335, %v276, 0.0
  %v898 = vadd.f32 %v896, %v897
  %v899 = vsel %vm335, %v277, 0.0
  %v900 = vadd.f32 %v898, %v899
  %v901 = vsel %vm335, %v278, 0.0
  %v902 = vadd.f32 %v900, %v901
  %v903 = vsel %vm335, %v279, 0.0
  %v904 = vadd.f32 %v902, %v903
  %v905 = vsel %vm335, %v280, 0.0
  %v906 = vadd.f32 %v904, %v905
  %v907 = vsel %vm335, %v281, 0.0
  %v908 = vadd.f32 %v906, %v907
  %v909 = vsel %vm335, %v282, 0.0
  %v910 = vadd.f32 %v908, %v909
  %v911 = vsel %vm335, %v283, 0.0
  %v912 = vadd.f32 %v910, %v911
  %v913 = vsel %vm335, %v284, 0.0
  %v914 = vadd.f32 %v912, %v913
  %v915 = vsel %vm335, %v285, 0.0
  %v916 = vadd.f32 %v914, %v915
  %v917 = vsel %vm335, %v286, 0.0
  %v918 = vadd.f32 %v916, %v917
  %v919 = vsel %vm335, %v287, 0.0
  %v920 = vadd.f32 %v918, %v919
  %v921 = vsel %vm335, %v288, 0.0
  %v922 = vadd.f32 %v920, %v921
  %v923 = vsel %vm335, %v289, 0.0
  %v924 = vadd.f32 %v922, %v923
  %v925 = vsel %vm335, %v290, 0.0
  %v926 = vadd.f32 %v924, %v925
  %v927 = vsel %vm335, %v291, 0.0
  %v928 = vadd.f32 %v926, %v927
  %v929 = vsel %vm335, %v292, 0.0
  %v930 = vadd.f32 %v928, %v929
  %v931 = vsel %vm335, %v293, 0.0
  %v932 = vadd.f32 %v930, %v931
  %v933 = vsel %vm335, %v294, 0.0
  %v934 = vadd.f32 %v932, %v933
  %v935 = vsel %vm335, %v295, 0.0
  %v936 = vadd.f32 %v934, %v935
  %v937 = vsel %vm335, %v296, 0.0
  %v938 = vadd.f32 %v936, %v937
  %v939 = vsel %vm335, %v297, 0.0
  %v940 = vadd.f32 %v938, %v939
  %v941 = vsel %vm335, %v298, 0.0
  %v942 = vadd.f32 %v940, %v941
  %v943 = vsel %vm335, %v299, 0.0
  %v944 = vadd.f32 %v942, %v943
  %v945 = vsel %vm335, %v300, 0.0
  %v946 = vadd.f32 %v944, %v945
  %v947 = vsel %vm335, %v301, 0.0
  %v948 = vadd.f32 %v946, %v947
  %v949 = vsel %vm335, %v302, 0.0
  %v950 = vadd.f32 %v948, %v949
  %v951 = vrot.slane %v950, 4
  %v952 = vadd.f32 %v950, %v951
  %v953 = vrot.slane %v952, 2
  %v954 = vadd.f32 %v952, %v953
  %v955 = vrot.slane %v954, 1
  %v956 = vadd.f32 %v954, %v955
  %v957 = vsel %vm335, %v303, 0.0
  %v958 = vsel %vm335, %v304, 0.0
  %v959 = vadd.f32 %v957, %v958
  %v960 = vsel %vm335, %v305, 0.0
  %v961 = vadd.f32 %v959, %v960
  %v962 = vsel %vm335, %v306, 0.0
  %v963 = vadd.f32 %v961, %v962
  %v964 = vsel %vm335, %v307, 0.0
  %v965 = vadd.f32 %v963, %v964
  %v966 = vsel %vm335, %v308, 0.0
  %v967 = vadd.f32 %v965, %v966
  %v968 = vsel %vm335, %v309, 0.0
  %v969 = vadd.f32 %v967, %v968
  %v970 = vsel %vm335, %v310, 0.0
  %v971 = vadd.f32 %v969, %v970
  %v972 = vsel %vm335, %v311, 0.0
  %v973 = vadd.f32 %v971, %v972
  %v974 = vsel %vm335, %v312, 0.0
  %v975 = vadd.f32 %v973, %v974
  %v976 = vsel %vm335, %v313, 0.0
  %v977 = vadd.f32 %v975, %v976
  %v978 = vsel %vm335, %v314, 0.0
  %v979 = vadd.f32 %v977, %v978
  %v980 = vsel %vm335, %v315, 0.0
  %v981 = vadd.f32 %v979, %v980
  %v982 = vsel %vm335, %v316, 0.0
  %v983 = vadd.f32 %v981, %v982
  %v984 = vsel %vm335, %v317, 0.0
  %v985 = vadd.f32 %v983, %v984
  %v986 = vsel %vm335, %v318, 0.0
  %v987 = vadd.f32 %v985, %v986
  %v988 = vsel %vm335, %v319, 0.0
  %v989 = vadd.f32 %v987, %v988
  %v990 = vsel %vm335, %v320, 0.0
  %v991 = vadd.f32 %v989, %v990
  %v992 = vsel %vm335, %v321, 0.0
  %v993 = vadd.f32 %v991, %v992
  %v994 = vsel %vm335, %v322, 0.0
  %v995 = vadd.f32 %v993, %v994
  %v996 = vsel %vm335, %v323, 0.0
  %v997 = vadd.f32 %v995, %v996
  %v998 = vsel %vm335, %v324, 0.0
  %v999 = vadd.f32 %v997, %v998
  %v1000 = vsel %vm335, %v325, 0.0
  %v1001 = vadd.f32 %v999, %v1000
  %v1002 = vsel %vm335, %v326, 0.0
  %v1003 = vadd.f32 %v1001, %v1002
  %v1004 = vsel %vm335, %v327, 0.0
  %v1005 = vadd.f32 %v1003, %v1004
  %v1006 = vsel %vm335, %v328, 0.0
  %v1007 = vadd.f32 %v1005, %v1006
  %v1008 = vsel %vm335, %v329, 0.0
  %v1009 = vadd.f32 %v1007, %v1008
  %v1010 = vsel %vm335, %v330, 0.0
  %v1011 = vadd.f32 %v1009, %v1010
  %v1012 = vsel %vm335, %v331, 0.0
  %v1013 = vadd.f32 %v1011, %v1012
  %v1014 = vsel %vm335, %v332, 0.0
  %v1015 = vadd.f32 %v1013, %v1014
  %v1016 = vsel %vm335, %v333, 0.0
  %v1017 = vadd.f32 %v1015, %v1016
  %v1018 = vsel %vm335, %v334, 0.0
  %v1019 = vadd.f32 %v1017, %v1018
  %v1020 = vrot.slane %v1019, 4
  %v1021 = vadd.f32 %v1019, %v1020
  %v1022 = vrot.slane %v1021, 2
  %v1023 = vadd.f32 %v1021, %v1022
  %v1024 = vrot.slane %v1023, 1
  %v1025 = vadd.f32 %v1023, %v1024
  %v1026 = vrcp.pop 256.0
  %v1027 = vmul.f32 %v404, %v1026
  %v1028 = vmul.f32 %v473, %v1026
  %v1029 = vmul.f32 %v542, %v1026
  %v1030 = vmul.f32 %v611, %v1026
  %v1031 = vmul.f32 %v680, %v1026
  %v1032 = vmul.f32 %v749, %v1026
  %v1033 = vmul.f32 %v818, %v1026
  %v1034 = vmul.f32 %v887, %v1026
  %v1035 = vmul.f32 %v956, %v1026
  %v1036 = vmul.f32 %v1025, %v1026
  %v1037 = vpack.c.bf16 %v1027, %v1027
  %v1038 = vpack.c.bf16 %v1028, %v1028
  %v1039 = vpack.c.bf16 %v1029, %v1029
  %v1040 = vpack.c.bf16 %v1030, %v1030
  %v1041 = vpack.c.bf16 %v1031, %v1031
  %v1042 = vpack.c.bf16 %v1032, %v1032
  %v1043 = vpack.c.bf16 %v1033, %v1033
  %v1044 = vpack.c.bf16 %v1034, %v1034
  %v1045 = vpack.c.bf16 %v1035, %v1035
  %v1046 = vpack.c.bf16 %v1036, %v1036
  %v1047 = vld [vmem:[%s1] sm:$0x3]
  %v1048 = vld [vmem:[%s2] sm:$0x1]
  %v1050 = vlaneseq
  %v1051 = vshrl.u32 %v1050, 7
  %v1052 = vsub.s32 0, %v1051
  %v1053 = vrot.slane %v1048, %v1052
  %v1065 = vunpack.c.l.b16 %v1037
  %v1066 = vunpack.c.l.b16 %v1038
  %v1067 = vunpack.c.l.b16 %v1039
  %v1068 = vunpack.c.l.b16 %v1040
  %v1069 = vunpack.c.l.b16 %v1041
  %v1070 = vunpack.c.l.b16 %v1042
  %v1071 = vunpack.c.l.b16 %v1043
  %v1072 = vunpack.c.l.b16 %v1044
  %v1073 = vunpack.c.l.b16 %v1045
  %v1074 = vunpack.c.l.b16 %v1046
  %vm1075 = vcmask 1041409
  %v1076 = vsel %vm1075, %v1066, %v1065
  %vm1077 = vcmask 1042434
  %v1078 = vsel %vm1077, %v1067, %v1076
  %vm1079 = vcmask 1043459
  %v1080 = vsel %vm1079, %v1068, %v1078
  %vm1081 = vcmask 1044484
  %v1082 = vsel %vm1081, %v1069, %v1080
  %vm1083 = vcmask 1045509
  %v1084 = vsel %vm1083, %v1070, %v1082
  %vm1085 = vcmask 1046534
  %v1086 = vsel %vm1085, %v1071, %v1084
  %vm1087 = vcmask 1047559
  %v1088 = vsel %vm1087, %v1072, %v1086
  %v1089 = vsel %vm1075, %v1074, %v1073
  %v1090 = vpack.c.b16 %v1089, %v1088
  %v1092 = vsel %vm335, %v1090, 0
  %vm1094 = vcmask 1041408
  %v1096 = vsel %vm1094, %v1047, 0
  %1098 = vmatprep.subr.bf16.mxu0 0
  %1099 = vmatpush1.bf16.msra.mxu0 %v1096
  %1100 = vmatprep.subr.bf16.mxu0 0
  %1101 = vmatpush1.bf16.msra.mxu0 0
  %1102 = vmatprep.subr.bf16.mxu0 0
  %1103 = vmatpush1.bf16.msra.mxu0 0
  %1104 = vmatprep.subr.bf16.mxu0 0
  %1105 = vmatpush1.bf16.msra.mxu0 0
  %1106 = vmatprep.subr.bf16.mxu0 0
  %1107 = vmatpush1.bf16.msra.mxu0 0
  %1108 = vmatprep.subr.bf16.mxu0 0
  %1109 = vmatpush1.bf16.msra.mxu0 0
  %1110 = vmatprep.subr.bf16.mxu0 0
  %1111 = vmatpush1.bf16.msra.mxu0 0
  %1112 = vmatprep.subr.bf16.mxu0 0
  %1113 = vmatpush1.bf16.msra.mxu0 0
  %1114 = vmatprep.subr.bf16.mxu0 0
  %1115 = vmatpush1.bf16.msra.mxu0 0
  %1116 = vmatprep.subr.bf16.mxu0 0
  %1117 = vmatpush1.bf16.msra.mxu0 0
  %1118 = vmatprep.subr.bf16.mxu0 0
  %1119 = vmatpush1.bf16.msra.mxu0 0
  %1120 = vmatprep.subr.bf16.mxu0 0
  %1121 = vmatpush1.bf16.msra.mxu0 0
  %1122 = vmatprep.subr.bf16.mxu0 0
  %1123 = vmatpush1.bf16.msra.mxu0 0
  %1124 = vmatprep.subr.bf16.mxu0 0
  %1125 = vmatpush1.bf16.msra.mxu0 0
  %1126 = vmatprep.subr.bf16.mxu0 0
  %1127 = vmatpush1.bf16.msra.mxu0 0
  %1128 = vmatprep.subr.bf16.mxu0 0
  %1129 = vmatpush1.bf16.msra.mxu0 0
  %1130 = vmatprep.mubr.bf16.mxu0 0
  %1131 = vmatmul.mubr.bf16.gmra.mrb[0].mxu0 %v1092
  %v1132 = vpop.f32.mrb[0].mxu0
  %v1133 = vadd.f32 %v1053, %v1132
  %v1134 = vpop.f32.mrb[0].mxu0
  %v1135 = vpop.f32.mrb[0].mxu0
  %v1136 = vadd.f32 %v1053, %v1135
  %v1137 = vpop.f32.mrb[0].mxu0
  %1138 = vdwg.mxu0
  %vm1139 = vcmask 261120
  %1140 = vst.msk [vmem:[%s3] sm:$0xff] %vm1139, %v1133
  %vm1141 = vcmask 254976
  %1142 = vst.msk [vmem:[%s3 + $0x8] sm:$0x3] %vm1141, %v1136
  // Predicated region
  $region14: #{glacnet_forward.12} parent=0 // pred_check
    _
  $region15: #{glacnet_forward.12} parent=0 // pred_check_branch
    %1144 = sbr.rel (0) target = $region17
  $region16: #{glacnet_forward.12} parent=0 // pred_region
    _
  $region17: #{glacnet_forward.12} parent=0 // pred_fallthru
    _
  // Predicated region
  $region18: #{glacnet_forward.12} parent=0 // pred_check
    _
  $region19: #{glacnet_forward.12} parent=0 // pred_check_branch
    %1146 = sbr.rel (0) target = $region21
  $region20: #{glacnet_forward.12} parent=0 // pred_region
    _
  $region21: #{glacnet_forward.12} parent=0 // pred_fallthru
    _

// kernel: glacnet_forward.17
$region0: #{glacnet_forward.17}
  #allocation0 [shape = 'u32[]', space=smem, size = 0x4, offset = 0x4, fixed_abs, tag = 'smem constant byte address 0x4 - core index']
  #allocation1 [shape = 'u32[144,128]{1,0:T(1,128)}', space=vmem, size = 0x12000, scoped, tag = 'internal scratch']
  %s0 = inlined_call_operand.vmem [shape: bf16[10,32], index: 0, kind: input, shape index: {}]
  %s1 = inlined_call_operand.vmem [shape: bf16[10,32], index: 1, kind: input, shape index: {}]
  %s2 = inlined_call_operand.vmem [shape: bf16[32,128], index: 2, kind: input, shape index: {}]
  %s3 = inlined_call_operand.vmem [shape: bf16[32,128], index: 3, kind: input, shape index: {}]
  %s4 = inlined_call_operand.vmem [shape: f32[1,128], index: 4, kind: input, shape index: {}]
  %s5 = inlined_call_operand.vmem [shape: f32[10,128], index: 5, kind: output, shape index: {}]
  %s6 = sld [smem:[#allocation0]]
  $region30: #{glacnet_forward.17} parent=0
    _
  %s8 = ssub.s32 1, %s6
  %s9 = scalar_select 0, %s8, %s6
  // Predicated region
  $region2: #{glacnet_forward.17} parent=0 // pred_check
    _
  $region3: #{glacnet_forward.17} parent=0 // pred_check_branch
    %11 = sbr.rel (0) target = $region5
  $region4: #{glacnet_forward.17} parent=0 // pred_region
    _
  $region5: #{glacnet_forward.17} parent=0 // pred_fallthru
    _
  // Predicated region
  $region6: #{glacnet_forward.17} parent=0 // pred_check
    _
  $region7: #{glacnet_forward.17} parent=0 // pred_check_branch
    %13 = sbr.rel (0) target = $region9
  $region8: #{glacnet_forward.17} parent=0 // pred_region
    _
  $region9: #{glacnet_forward.17} parent=0 // pred_fallthru
    _
  // Predicated region
  $region10: #{glacnet_forward.17} parent=0 // pred_check
    _
  $region11: #{glacnet_forward.17} parent=0 // pred_check_branch
    %15 = sbr.rel (0) target = $region13
  $region12: #{glacnet_forward.17} parent=0 // pred_region
    _
  $region13: #{glacnet_forward.17} parent=0 // pred_fallthru
    _
  // Predicated region
  $region14: #{glacnet_forward.17} parent=0 // pred_check
    _
  $region15: #{glacnet_forward.17} parent=0 // pred_check_branch
    %17 = sbr.rel (0) target = $region17
  $region16: #{glacnet_forward.17} parent=0 // pred_region
    _
  $region17: #{glacnet_forward.17} parent=0 // pred_fallthru
    _
  // Predicated region
  $region18: #{glacnet_forward.17} parent=0 // pred_check
    _
  $region19: #{glacnet_forward.17} parent=0 // pred_check_branch
    %19 = sbr.rel (0) target = $region21
  $region20: #{glacnet_forward.17} parent=0 // pred_region
    _
  $region21: #{glacnet_forward.17} parent=0 // pred_fallthru
    _
  %v21 = vld [vmem:[%s0] sm:$0xf]
  %v22 = vld [vmem:[%s0 + $0x4] sm:$0x1]
  %v23 = vld [vmem:[%s2] sm:$0xf]
  %v24 = vld [vmem:[%s2 + $0x4] sm:$0xf]
  %v25 = vld [vmem:[%s2 + $0x8] sm:$0xf]
  %v26 = vld [vmem:[%s2 + $0xc] sm:$0xf]
  %v27 = vld [vmem:[%s1] sm:$0xf]
  %v28 = vld [vmem:[%s1 + $0x4] sm:$0x1]
  %v29 = vld [vmem:[%s3] sm:$0xf]
  %v30 = vld [vmem:[%s3 + $0x4] sm:$0xf]
  %v31 = vld [vmem:[%s3 + $0x8] sm:$0xf]
  %v32 = vld [vmem:[%s3 + $0xc] sm:$0xf]
  %v35 = vunpack.c.l.b16 %v27
  %v36 = vunpack.c.l.b16 %v28
  %v37 = vpack.c.b16 %v36, %v35
  %v42 = vunpack.c.l.b16 %v29
  %v43 = vunpack.c.l.b16 %v30
  %v44 = vunpack.c.l.b16 %v31
  %v45 = vunpack.c.l.b16 %v32
  %v46 = vpack.c.b16 %v43, %v42
  %v47 = vpack.c.b16 %v45, %v44
  %vm50 = vcmask 261120
  %v52 = vsel %vm50, %v37, 0
  %54 = vmatprep.subr.bf16.mxu0 0
  %55 = vmatpush1.bf16.msra.mxu0 %v46
  %56 = vmatprep.subr.bf16.mxu0 0
  %57 = vmatpush1.bf16.msra.mxu0 %v47
  %58 = vmatprep.subr.bf16.mxu0 0
  %59 = vmatpush1.bf16.msra.mxu0 0
  %60 = vmatprep.subr.bf16.mxu0 0
  %61 = vmatpush1.bf16.msra.mxu0 0
  %62 = vmatprep.subr.bf16.mxu0 0
  %63 = vmatpush1.bf16.msra.mxu0 0
  %64 = vmatprep.subr.bf16.mxu0 0
  %65 = vmatpush1.bf16.msra.mxu0 0
  %66 = vmatprep.subr.bf16.mxu0 0
  %67 = vmatpush1.bf16.msra.mxu0 0
  %68 = vmatprep.subr.bf16.mxu0 0
  %69 = vmatpush1.bf16.msra.mxu0 0
  %70 = vmatprep.subr.bf16.mxu0 0
  %71 = vmatpush1.bf16.msra.mxu0 0
  %72 = vmatprep.subr.bf16.mxu0 0
  %73 = vmatpush1.bf16.msra.mxu0 0
  %74 = vmatprep.subr.bf16.mxu0 0
  %75 = vmatpush1.bf16.msra.mxu0 0
  %76 = vmatprep.subr.bf16.mxu0 0
  %77 = vmatpush1.bf16.msra.mxu0 0
  %78 = vmatprep.subr.bf16.mxu0 0
  %79 = vmatpush1.bf16.msra.mxu0 0
  %80 = vmatprep.subr.bf16.mxu0 0
  %81 = vmatpush1.bf16.msra.mxu0 0
  %82 = vmatprep.subr.bf16.mxu0 0
  %83 = vmatpush1.bf16.msra.mxu0 0
  %84 = vmatprep.subr.bf16.mxu0 0
  %85 = vmatpush1.bf16.msra.mxu0 0
  %86 = vmatprep.mubr.bf16.mxu0 0
  %87 = vmatmul.mubr.bf16.gmra.mrb[0].mxu0 %v52
  %v88 = vpop.f32.mrb[0].mxu0
  %v89 = vadd.f32 0.0, %v88
  %v90 = vpop.f32.mrb[0].mxu0
  %v91 = vpop.f32.mrb[0].mxu0
  %v92 = vadd.f32 0.0, %v91
  %v93 = vpop.f32.mrb[0].mxu0
  %94 = vdwg.mxu0
  %v97 = vunpack.c.l.b16 %v21
  %v98 = vunpack.c.l.b16 %v22
  %v99 = vpack.c.b16 %v98, %v97
  %v104 = vunpack.c.l.b16 %v23
  %v105 = vunpack.c.l.b16 %v24
  %v106 = vunpack.c.l.b16 %v25
  %v107 = vunpack.c.l.b16 %v26
  %v108 = vpack.c.b16 %v105, %v104
  %v109 = vpack.c.b16 %v107, %v106
  %v113 = vsel %vm50, %v99, 0
  %115 = vmatprep.subr.bf16.mxu0 0
  %116 = vmatpush1.bf16.msra.mxu0 %v108
  %117 = vmatprep.subr.bf16.mxu0 0
  %118 = vmatpush1.bf16.msra.mxu0 %v109
  %119 = vmatprep.subr.bf16.mxu0 0
  %120 = vmatpush1.bf16.msra.mxu0 0
  %121 = vmatprep.subr.bf16.mxu0 0
  %122 = vmatpush1.bf16.msra.mxu0 0
  %123 = vmatprep.subr.bf16.mxu0 0
  %124 = vmatpush1.bf16.msra.mxu0 0
  %125 = vmatprep.subr.bf16.mxu0 0
  %126 = vmatpush1.bf16.msra.mxu0 0
  %127 = vmatprep.subr.bf16.mxu0 0
  %128 = vmatpush1.bf16.msra.mxu0 0
  %129 = vmatprep.subr.bf16.mxu0 0
  %130 = vmatpush1.bf16.msra.mxu0 0
  %131 = vmatprep.subr.bf16.mxu0 0
  %132 = vmatpush1.bf16.msra.mxu0 0
  %133 = vmatprep.subr.bf16.mxu0 0
  %134 = vmatpush1.bf16.msra.mxu0 0
  %135 = vmatprep.subr.bf16.mxu0 0
  %136 = vmatpush1.bf16.msra.mxu0 0
  %137 = vmatprep.subr.bf16.mxu0 0
  %138 = vmatpush1.bf16.msra.mxu0 0
  %139 = vmatprep.subr.bf16.mxu0 0
  %140 = vmatpush1.bf16.msra.mxu0 0
  %141 = vmatprep.subr.bf16.mxu0 0
  %142 = vmatpush1.bf16.msra.mxu0 0
  %143 = vmatprep.subr.bf16.mxu0 0
  %144 = vmatpush1.bf16.msra.mxu0 0
  %145 = vmatprep.subr.bf16.mxu0 0
  %146 = vmatpush1.bf16.msra.mxu0 0
  %147 = vmatprep.mubr.bf16.mxu0 0
  %148 = vmatmul.mubr.bf16.gmra.mrb[0].mxu0 %v113
  %v149 = vpop.f32.mrb[0].mxu0
  %v150 = vadd.f32 %v89, %v149
  %v151 = vpop.f32.mrb[0].mxu0
  %v152 = vpop.f32.mrb[0].mxu0
  %v153 = vadd.f32 %v92, %v152
  %v154 = vpop.f32.mrb[0].mxu0
  %155 = vdwg.mxu0
  %v156 = vld [vmem:[%s4] sm:$0x1]
  %v158 = vlaneseq
  %v159 = vshrl.u32 %v158, 7
  %v160 = vsub.s32 0, %v159
  %v161 = vrot.slane %v156, %v160
  %v163 = vadd.f32 %v150, %v161
  %v164 = vadd.f32 %v153, %v161
  %165 = vst [vmem:[%s5] sm:$0xff] %v163
  %166 = vst [vmem:[%s5 + $0x8] sm:$0x3] %v164
  // Predicated region
  $region22: #{glacnet_forward.17} parent=0 // pred_check
    _
  $region23: #{glacnet_forward.17} parent=0 // pred_check_branch
    %168 = sbr.rel (0) target = $region25
  $region24: #{glacnet_forward.17} parent=0 // pred_region
    _
  $region25: #{glacnet_forward.17} parent=0 // pred_fallthru
    _
  // Predicated region
  $region26: #{glacnet_forward.17} parent=0 // pred_check
    _
  $region27: #{glacnet_forward.17} parent=0 // pred_check_branch
    %170 = sbr.rel (0) target = $region29
  $region28: #{glacnet_forward.17} parent=0 // pred_region
    _
  $region29: #{glacnet_forward.17} parent=0 // pred_fallthru
    _

// kernel: glacnet_forward.15
$region0: #{glacnet_forward.15}
  #allocation0 [shape = 'u32[]', space=smem, size = 0x4, offset = 0x4, fixed_abs, tag = 'smem constant byte address 0x4 - core index']
  #allocation1 [shape = 'u32[144,128]{1,0:T(1,128)}', space=vmem, size = 0x12000, scoped, tag = 'internal scratch']
  #allocation2 [shape = 'f32[2,32]{1,0:T(2,128)}', space=vmem, size = 0x400, scoped, tag = 'scratch operand']
  #allocation3 [shape = 'f32[2,32]{1,0:T(2,128)}', space=vmem, size = 0x400, scoped, tag = 'scratch operand']
  #allocation4 [shape = 'f32[2,32]{1,0:T(2,128)}', space=vmem, size = 0x400, scoped, tag = 'scratch operand']
  #allocation5 [shape = 'f32[2,32]{1,0:T(2,128)}', space=vmem, size = 0x400, scoped, tag = 'scratch operand']
  %s0 = inlined_call_operand.vmem [shape: f32[5,2,128], index: 0, kind: input, shape index: {}]
  %s1 = inlined_call_operand.vmem [shape: f32[5,2,128], index: 1, kind: input, shape index: {}]
  %s2 = inlined_call_operand.vmem [shape: bf16[32,128], index: 2, kind: input, shape index: {}]
  %s3 = inlined_call_operand.vmem [shape: bf16[32,128], index: 3, kind: input, shape index: {}]
  %s4 = inlined_call_operand.vmem [shape: bf16[5,2,32], index: 4, kind: output, shape index: {0}]
  %s5 = inlined_call_operand.vmem [shape: bf16[5,2,32], index: 5, kind: output, shape index: {1}]
  %6 = xla_tuple %s4, %s5
  %s7 = sld [smem:[#allocation0]]
  $region34: #{glacnet_forward.15} parent=0
    _
  %s9 = ssub.s32 1, %s7
  %s10 = scalar_select 0, %s9, %s7
  // Predicated region
  $region2: #{glacnet_forward.15} parent=0 // pred_check
    _
  $region3: #{glacnet_forward.15} parent=0 // pred_check_branch
    %12 = sbr.rel (0) target = $region5
  $region4: #{glacnet_forward.15} parent=0 // pred_region
    _
  $region5: #{glacnet_forward.15} parent=0 // pred_fallthru
    _
  // Predicated region
  $region6: #{glacnet_forward.15} parent=0 // pred_check
    _
  $region7: #{glacnet_forward.15} parent=0 // pred_check_branch
    %14 = sbr.rel (0) target = $region9
  $region8: #{glacnet_forward.15} parent=0 // pred_region
    _
  $region9: #{glacnet_forward.15} parent=0 // pred_fallthru
    _
  // Predicated region
  $region10: #{glacnet_forward.15} parent=0 // pred_check
    _
  $region11: #{glacnet_forward.15} parent=0 // pred_check_branch
    %16 = sbr.rel (0) target = $region13
  $region12: #{glacnet_forward.15} parent=0 // pred_region
    _
  $region13: #{glacnet_forward.15} parent=0 // pred_fallthru
    _
  // Predicated region
  $region14: #{glacnet_forward.15} parent=0 // pred_check
    _
  $region15: #{glacnet_forward.15} parent=0 // pred_check_branch
    %18 = sbr.rel (0) target = $region17
  $region16: #{glacnet_forward.15} parent=0 // pred_region
    _
  $region17: #{glacnet_forward.15} parent=0 // pred_fallthru
    _
  %vm20 = vcmask 254976
  %21 = vst.msk [vmem:[#allocation2] sm:$0x3] %vm20, 0.0
  %22 = vst.msk [vmem:[#allocation3] sm:$0x3] %vm20, 0.0
  %23 = vst.msk [vmem:[#allocation4] sm:$0x3] %vm20, 0.0
  %24 = vst.msk [vmem:[#allocation5] sm:$0x3] %vm20, 0.0
  %v25 = vld [vmem:[%s0] sm:$0x3]
  %v26 = vld [vmem:[#allocation2] sm:$0x3]
  %v27 = vpack.c.bf16 %v26, %v26
  %v28 = vld [vmem:[%s2] sm:$0xf]
  %v29 = vld [vmem:[%s2 + $0x4] sm:$0xf]
  %v30 = vld [vmem:[%s2 + $0x8] sm:$0xf]
  %v31 = vld [vmem:[%s2 + $0xc] sm:$0xf]
  %v36 = vunpack.c.l.b16 %v28
  %v37 = vunpack.c.l.b16 %v29
  %v38 = vunpack.c.l.b16 %v30
  %v39 = vunpack.c.l.b16 %v31
  %v40 = vpack.c.b16 %v37, %v36
  %v41 = vpack.c.b16 %v39, %v38
  %vm44 = vcmask 261120
  %v46 = vsel %vm44, %v27, 0
  %48 = vmatprep.subr.bf16.mxu0 0
  %49 = vmatpush1.bf16.msra.mxu0 %v40
  %50 = vmatprep.subr.bf16.mxu0 0
  %51 = vmatpush1.bf16.msra.mxu0 %v41
  %52 = vmatprep.subr.bf16.mxu0 0
  %53 = vmatpush1.bf16.msra.mxu0 0
  %54 = vmatprep.subr.bf16.mxu0 0
  %55 = vmatpush1.bf16.msra.mxu0 0
  %56 = vmatprep.subr.bf16.mxu0 0
  %57 = vmatpush1.bf16.msra.mxu0 0
  %58 = vmatprep.subr.bf16.mxu0 0
  %59 = vmatpush1.bf16.msra.mxu0 0
  %60 = vmatprep.subr.bf16.mxu0 0
  %61 = vmatpush1.bf16.msra.mxu0 0
  %62 = vmatprep.subr.bf16.mxu0 0
  %63 = vmatpush1.bf16.msra.mxu0 0
  %64 = vmatprep.subr.bf16.mxu0 0
  %65 = vmatpush1.bf16.msra.mxu0 0
  %66 = vmatprep.subr.bf16.mxu0 0
  %67 = vmatpush1.bf16.msra.mxu0 0
  %68 = vmatprep.subr.bf16.mxu0 0
  %69 = vmatpush1.bf16.msra.mxu0 0
  %70 = vmatprep.subr.bf16.mxu0 0
  %71 = vmatpush1.bf16.msra.mxu0 0
  %72 = vmatprep.subr.bf16.mxu0 0
  %73 = vmatpush1.bf16.msra.mxu0 0
  %74 = vmatprep.subr.bf16.mxu0 0
  %75 = vmatpush1.bf16.msra.mxu0 0
  %76 = vmatprep.subr.bf16.mxu0 0
  %77 = vmatpush1.bf16.msra.mxu0 0
  %78 = vmatprep.subr.bf16.mxu0 0
  %79 = vmatpush1.bf16.msra.mxu0 0
  %80 = vmatprep.mubr.bf16.mxu0 0
  %81 = vmatmul.mubr.bf16.gmra.mrb[0].mxu0 %v46
  %v82 = vpop.f32.mrb[0].mxu0
  %v83 = vadd.f32 0.0, %v82
  %v84 = vpop.f32.mrb[0].mxu0
  %v85 = vpop.f32.mrb[0].mxu0
  %v86 = vpop.f32.mrb[0].mxu0
  %87 = vdwg.mxu0
  %v88 = vadd.f32 %v25, %v83
  %v89 = vld [vmem:[#allocation3] sm:$0x3]
  %v90 = vxor.u32 %v88, 2147483648
  %v91 = vmul.f32 %v90, 1.442695
  %v92 = vpow.pop %v91
  %v93 = vadd.f32 %v92, 1.0
  %v94 = vrcp.pop %v93
  %v95 = vmul.f32 1.0, %v94
  %v96 = vtanh.pop %v88
  %98 = vrot.lane.b32.xlu0 %v89, 32
  %v99 = vpop.permute.xlu0 %98
  %v101 = vmul.f32 %v95, %v99
  %103 = vrot.lane.b32.xlu0 %v96, 64
  %v104 = vpop.permute.xlu0 %103
  %v106 = vmul.f32 %v95, %v104
  %108 = vrot.lane.b32.xlu0 %v106, 32
  %v109 = vpop.permute.xlu0 %108
  %v111 = vadd.f32 %v101, %v109
  %v112 = vtanh.pop %v111
  %114 = vrot.lane.b32.xlu0 %v112, 64
  %v115 = vpop.permute.xlu0 %114
  %v117 = vmul.f32 %v95, %v115
  %119 = vrot.lane.b32.xlu0 %v117, 32
  %v120 = vpop.permute.xlu0 %119
  %122 = vst.msk [vmem:[#allocation2] sm:$0x3] %vm20, %v120
  %124 = vrot.lane.b32.xlu0 %v111, 96
  %v125 = vpop.permute.xlu0 %124
  %127 = vst.msk [vmem:[#allocation3] sm:$0x3] %vm20, %v125
  %v128 = vpack.c.bf16 %v117, %v117
  %v131 = vunpack.c.l.s4 1966171168
  %v132 = vunpack.c.0.s8 %v131
  %v133 = vlaneseq
  %v134 = vshrl.u32 %v133, 7
  %v135 = vsub.s32 %v132, %v134
  %v136 = vrot.slane %v128, %v135
  %v138 = vunpack.c.l.s4 1966171168
  %v139 = vunpack.c.0.s8 %v138
  %v140 = vlaneseq
  %v141 = vshrl.u32 %v140, 7
  %v142 = vsub.s32 %v139, %v141
  %v143 = vrot.slane %v136, %v142
  %144 = vrot.lane.b32.xlu0 %v143, 32
  %v145 = vpop.permute.xlu0 %144
  %vm147 = vcmask 253952
  %148 = vst.msk [vmem:[%s4] sm:$0x1] %vm147, %v145
  %s149 = scalar_lea.vmem %s1, 8
  %v150 = vld [vmem:[%s149] sm:$0x3]
  %v151 = vld [vmem:[#allocation4] sm:$0x3]
  %v152 = vpack.c.bf16 %v151, %v151
  %v153 = vld [vmem:[%s3] sm:$0xf]
  %v154 = vld [vmem:[%s3 + $0x4] sm:$0xf]
  %v155 = vld [vmem:[%s3 + $0x8] sm:$0xf]
  %v156 = vld [vmem:[%s3 + $0xc] sm:$0xf]
  %v161 = vunpack.c.l.b16 %v153
  %v162 = vunpack.c.l.b16 %v154
  %v163 = vunpack.c.l.b16 %v155
  %v164 = vunpack.c.l.b16 %v156
  %v165 = vpack.c.b16 %v162, %v161
  %v166 = vpack.c.b16 %v164, %v163
  %v170 = vsel %vm44, %v152, 0
  %172 = vmatprep.subr.bf16.mxu0 0
  %173 = vmatpush1.bf16.msra.mxu0 %v165
  %174 = vmatprep.subr.bf16.mxu0 0
  %175 = vmatpush1.bf16.msra.mxu0 %v166
  %176 = vmatprep.subr.bf16.mxu0 0
  %177 = vmatpush1.bf16.msra.mxu0 0
  %178 = vmatprep.subr.bf16.mxu0 0
  %179 = vmatpush1.bf16.msra.mxu0 0
  %180 = vmatprep.subr.bf16.mxu0 0
  %181 = vmatpush1.bf16.msra.mxu0 0
  %182 = vmatprep.subr.bf16.mxu0 0
  %183 = vmatpush1.bf16.msra.mxu0 0
  %184 = vmatprep.subr.bf16.mxu0 0
  %185 = vmatpush1.bf16.msra.mxu0 0
  %186 = vmatprep.subr.bf16.mxu0 0
  %187 = vmatpush1.bf16.msra.mxu0 0
  %188 = vmatprep.subr.bf16.mxu0 0
  %189 = vmatpush1.bf16.msra.mxu0 0
  %190 = vmatprep.subr.bf16.mxu0 0
  %191 = vmatpush1.bf16.msra.mxu0 0
  %192 = vmatprep.subr.bf16.mxu0 0
  %193 = vmatpush1.bf16.msra.mxu0 0
  %194 = vmatprep.subr.bf16.mxu0 0
  %195 = vmatpush1.bf16.msra.mxu0 0
  %196 = vmatprep.subr.bf16.mxu0 0
  %197 = vmatpush1.bf16.msra.mxu0 0
  %198 = vmatprep.subr.bf16.mxu0 0
  %199 = vmatpush1.bf16.msra.mxu0 0
  %200 = vmatprep.subr.bf16.mxu0 0
  %201 = vmatpush1.bf16.msra.mxu0 0
  %202 = vmatprep.subr.bf16.mxu0 0
  %203 = vmatpush1.bf16.msra.mxu0 0
  %204 = vmatprep.mubr.bf16.mxu0 0
  %205 = vmatmul.mubr.bf16.gmra.mrb[0].mxu0 %v170
  %v206 = vpop.f32.mrb[0].mxu0
  %v207 = vadd.f32 0.0, %v206
  %v208 = vpop.f32.mrb[0].mxu0
  %v209 = vpop.f32.mrb[0].mxu0
  %v210 = vpop.f32.mrb[0].mxu0
  %211 = vdwg.mxu0
  %v212 = vadd.f32 %v150, %v207
  %v213 = vld [vmem:[#allocation5] sm:$0x3]
  %v214 = vxor.u32 %v212, 2147483648
  %v215 = vmul.f32 %v214, 1.442695
  %v216 = vpow.pop %v215
  %v217 = vadd.f32 %v216, 1.0
  %v218 = vrcp.pop %v217
  %v219 = vmul.f32 1.0, %v218
  %v220 = vtanh.pop %v212
  %222 = vrot.lane.b32.xlu0 %v213, 32
  %v223 = vpop.permute.xlu0 %222
  %v225 = vmul.f32 %v219, %v223
  %227 = vrot.lane.b32.xlu0 %v220, 64
  %v228 = vpop.permute.xlu0 %227
  %v230 = vmul.f32 %v219, %v228
  %232 = vrot.lane.b32.xlu0 %v230, 32
  %v233 = vpop.permute.xlu0 %232
  %v235 = vadd.f32 %v225, %v233
  %v236 = vtanh.pop %v235
  %238 = vrot.lane.b32.xlu0 %v236, 64
  %v239 = vpop.permute.xlu0 %238
  %v241 = vmul.f32 %v219, %v239
  %243 = vrot.lane.b32.xlu0 %v241, 32
  %v244 = vpop.permute.xlu0 %243
  %246 = vst.msk [vmem:[#allocation4] sm:$0x3] %vm20, %v244
  %248 = vrot.lane.b32.xlu0 %v235, 96
  %v249 = vpop.permute.xlu0 %248
  %251 = vst.msk [vmem:[#allocation5] sm:$0x3] %vm20, %v249
  %v252 = vpack.c.bf16 %v241, %v241
  %v255 = vunpack.c.l.s4 1966171168
  %v256 = vunpack.c.0.s8 %v255
  %v257 = vlaneseq
  %v258 = vshrl.u32 %v257, 7
  %v259 = vsub.s32 %v256, %v258
  %v260 = vrot.slane %v252, %v259
  %v262 = vunpack.c.l.s4 1966171168
  %v263 = vunpack.c.0.s8 %v262
  %v264 = vlaneseq
  %v265 = vshrl.u32 %v264, 7
  %v266 = vsub.s32 %v263, %v265
  %v267 = vrot.slane %v260, %v266
  %268 = vrot.lane.b32.xlu0 %v267, 32
  %v269 = vpop.permute.xlu0 %268
  %s271 = scalar_lea.vmem %s5, 4
  %272 = vst.msk [vmem:[%s271] sm:$0x1] %vm147, %v269
  %s273 = scalar_lea.vmem %s0, 2
  %v274 = vld [vmem:[%s273] sm:$0x3]
  %v275 = vld [vmem:[#allocation2] sm:$0x3]
  %v276 = vpack.c.bf16 %v275, %v275
  %v277 = vld [vmem:[%s2] sm:$0xf]
  %v278 = vld [vmem:[%s2 + $0x4] sm:$0xf]
  %v279 = vld [vmem:[%s2 + $0x8] sm:$0xf]
  %v280 = vld [vmem:[%s2 + $0xc] sm:$0xf]
  %v285 = vunpack.c.l.b16 %v277
  %v286 = vunpack.c.l.b16 %v278
  %v287 = vunpack.c.l.b16 %v279
  %v288 = vunpack.c.l.b16 %v280
  %v289 = vpack.c.b16 %v286, %v285
  %v290 = vpack.c.b16 %v288, %v287
  %v294 = vsel %vm44, %v276, 0
  %296 = vmatprep.subr.bf16.mxu0 0
  %297 = vmatpush1.bf16.msra.mxu0 %v289
  %298 = vmatprep.subr.bf16.mxu0 0
  %299 = vmatpush1.bf16.msra.mxu0 %v290
  %300 = vmatprep.subr.bf16.mxu0 0
  %301 = vmatpush1.bf16.msra.mxu0 0
  %302 = vmatprep.subr.bf16.mxu0 0
  %303 = vmatpush1.bf16.msra.mxu0 0
  %304 = vmatprep.subr.bf16.mxu0 0
  %305 = vmatpush1.bf16.msra.mxu0 0
  %306 = vmatprep.subr.bf16.mxu0 0
  %307 = vmatpush1.bf16.msra.mxu0 0
  %308 = vmatprep.subr.bf16.mxu0 0
  %309 = vmatpush1.bf16.msra.mxu0 0
  %310 = vmatprep.subr.bf16.mxu0 0
  %311 = vmatpush1.bf16.msra.mxu0 0
  %312 = vmatprep.subr.bf16.mxu0 0
  %313 = vmatpush1.bf16.msra.mxu0 0
  %314 = vmatprep.subr.bf16.mxu0 0
  %315 = vmatpush1.bf16.msra.mxu0 0
  %316 = vmatprep.subr.bf16.mxu0 0
  %317 = vmatpush1.bf16.msra.mxu0 0
  %318 = vmatprep.subr.bf16.mxu0 0
  %319 = vmatpush1.bf16.msra.mxu0 0
  %320 = vmatprep.subr.bf16.mxu0 0
  %321 = vmatpush1.bf16.msra.mxu0 0
  %322 = vmatprep.subr.bf16.mxu0 0
  %323 = vmatpush1.bf16.msra.mxu0 0
  %324 = vmatprep.subr.bf16.mxu0 0
  %325 = vmatpush1.bf16.msra.mxu0 0
  %326 = vmatprep.subr.bf16.mxu0 0
  %327 = vmatpush1.bf16.msra.mxu0 0
  %328 = vmatprep.mubr.bf16.mxu0 0
  %329 = vmatmul.mubr.bf16.gmra.mrb[0].mxu0 %v294
  %v330 = vpop.f32.mrb[0].mxu0
  %v331 = vadd.f32 0.0, %v330
  %v332 = vpop.f32.mrb[0].mxu0
  %v333 = vpop.f32.mrb[0].mxu0
  %v334 = vpop.f32.mrb[0].mxu0
  %335 = vdwg.mxu0
  %v336 = vadd.f32 %v274, %v331
  %v337 = vld [vmem:[#allocation3] sm:$0x3]
  %v338 = vxor.u32 %v336, 2147483648
  %v339 = vmul.f32 %v338, 1.442695
  %v340 = vpow.pop %v339
  %v341 = vadd.f32 %v340, 1.0
  %v342 = vrcp.pop %v341
  %v343 = vmul.f32 1.0, %v342
  %v344 = vtanh.pop %v336
  %346 = vrot.lane.b32.xlu0 %v337, 32
  %v347 = vpop.permute.xlu0 %346
  %v349 = vmul.f32 %v343, %v347
  %351 = vrot.lane.b32.xlu0 %v344, 64
  %v352 = vpop.permute.xlu0 %351
  %v354 = vmul.f32 %v343, %v352
  %356 = vrot.lane.b32.xlu0 %v354, 32
  %v357 = vpop.permute.xlu0 %356
  %v359 = vadd.f32 %v349, %v357
  %v360 = vtanh.pop %v359
  %362 = vrot.lane.b32.xlu0 %v360, 64
  %v363 = vpop.permute.xlu0 %362
  %v365 = vmul.f32 %v343, %v363
  %367 = vrot.lane.b32.xlu0 %v365, 32
  %v368 = vpop.permute.xlu0 %367
  %370 = vst.msk [vmem:[#allocation2] sm:$0x3] %vm20, %v368
  %372 = vrot.lane.b32.xlu0 %v359, 96
  %v373 = vpop.permute.xlu0 %372
  %375 = vst.msk [vmem:[#allocation3] sm:$0x3] %vm20, %v373
  %v376 = vpack.c.bf16 %v365, %v365
  %v379 = vunpack.c.l.s4 1966171168
  %v380 = vunpack.c.0.s8 %v379
  %v381 = vlaneseq
  %v382 = vshrl.u32 %v381, 7
  %v383 = vsub.s32 %v380, %v382
  %v384 = vrot.slane %v376, %v383
  %v386 = vunpack.c.l.s4 1966171168
  %v387 = vunpack.c.0.s8 %v386
  %v388 = vlaneseq
  %v389 = vshrl.u32 %v388, 7
  %v390 = vsub.s32 %v387, %v389
  %v391 = vrot.slane %v384, %v390
  %392 = vrot.lane.b32.xlu0 %v391, 32
  %v393 = vpop.permute.xlu0 %392
  %s395 = scalar_lea.vmem %s4, 1
  %396 = vst.msk [vmem:[%s395] sm:$0x1] %vm147, %v393
  %s397 = scalar_lea.vmem %s1, 6
  %v398 = vld [vmem:[%s397] sm:$0x3]
  %v399 = vld [vmem:[#allocation4] sm:$0x3]
  %v400 = vpack.c.bf16 %v399, %v399
  %v401 = vld [vmem:[%s3] sm:$0xf]
  %v402 = vld [vmem:[%s3 + $0x4] sm:$0xf]
  %v403 = vld [vmem:[%s3 + $0x8] sm:$0xf]
  %v404 = vld [vmem:[%s3 + $0xc] sm:$0xf]
  %v409 = vunpack.c.l.b16 %v401
  %v410 = vunpack.c.l.b16 %v402
  %v411 = vunpack.c.l.b16 %v403
  %v412 = vunpack.c.l.b16 %v404
  %v413 = vpack.c.b16 %v410, %v409
  %v414 = vpack.c.b16 %v412, %v411
  %v418 = vsel %vm44, %v400, 0
  %420 = vmatprep.subr.bf16.mxu0 0
  %421 = vmatpush1.bf16.msra.mxu0 %v413
  %422 = vmatprep.subr.bf16.mxu0 0
  %423 = vmatpush1.bf16.msra.mxu0 %v414
  %424 = vmatprep.subr.bf16.mxu0 0
  %425 = vmatpush1.bf16.msra.mxu0 0
  %426 = vmatprep.subr.bf16.mxu0 0
  %427 = vmatpush1.bf16.msra.mxu0 0
  %428 = vmatprep.subr.bf16.mxu0 0
  %429 = vmatpush1.bf16.msra.mxu0 0
  %430 = vmatprep.subr.bf16.mxu0 0
  %431 = vmatpush1.bf16.msra.mxu0 0
  %432 = vmatprep.subr.bf16.mxu0 0
  %433 = vmatpush1.bf16.msra.mxu0 0
  %434 = vmatprep.subr.bf16.mxu0 0
  %435 = vmatpush1.bf16.msra.mxu0 0
  %436 = vmatprep.subr.bf16.mxu0 0
  %437 = vmatpush1.bf16.msra.mxu0 0
  %438 = vmatprep.subr.bf16.mxu0 0
  %439 = vmatpush1.bf16.msra.mxu0 0
  %440 = vmatprep.subr.bf16.mxu0 0
  %441 = vmatpush1.bf16.msra.mxu0 0
  %442 = vmatprep.subr.bf16.mxu0 0
  %443 = vmatpush1.bf16.msra.mxu0 0
  %444 = vmatprep.subr.bf16.mxu0 0
  %445 = vmatpush1.bf16.msra.mxu0 0
  %446 = vmatprep.subr.bf16.mxu0 0
  %447 = vmatpush1.bf16.msra.mxu0 0
  %448 = vmatprep.subr.bf16.mxu0 0
  %449 = vmatpush1.bf16.msra.mxu0 0
  %450 = vmatprep.subr.bf16.mxu0 0
  %451 = vmatpush1.bf16.msra.mxu0 0
  %452 = vmatprep.mubr.bf16.mxu0 0
  %453 = vmatmul.mubr.bf16.gmra.mrb[0].mxu0 %v418
  %v454 = vpop.f32.mrb[0].mxu0
  %v455 = vadd.f32 0.0, %v454
  %v456 = vpop.f32.mrb[0].mxu0
  %v457 = vpop.f32.mrb[0].mxu0
  %v458 = vpop.f32.mrb[0].mxu0
  %459 = vdwg.mxu0
  %v460 = vadd.f32 %v398, %v455
  %v461 = vld [vmem:[#allocation5] sm:$0x3]
  %v462 = vxor.u32 %v460, 2147483648
  %v463 = vmul.f32 %v462, 1.442695
  %v464 = vpow.pop %v463
  %v465 = vadd.f32 %v464, 1.0
  %v466 = vrcp.pop %v465
  %v467 = vmul.f32 1.0, %v466
  %v468 = vtanh.pop %v460
  %470 = vrot.lane.b32.xlu0 %v461, 32
  %v471 = vpop.permute.xlu0 %470
  %v473 = vmul.f32 %v467, %v471
  %475 = vrot.lane.b32.xlu0 %v468, 64
  %v476 = vpop.permute.xlu0 %475
  %v478 = vmul.f32 %v467, %v476
  %480 = vrot.lane.b32.xlu0 %v478, 32
  %v481 = vpop.permute.xlu0 %480
  %v483 = vadd.f32 %v473, %v481
  %v484 = vtanh.pop %v483
  %486 = vrot.lane.b32.xlu0 %v484, 64
  %v487 = vpop.permute.xlu0 %486
  %v489 = vmul.f32 %v467, %v487
  %491 = vrot.lane.b32.xlu0 %v489, 32
  %v492 = vpop.permute.xlu0 %491
  %494 = vst.msk [vmem:[#allocation4] sm:$0x3] %vm20, %v492
  %496 = vrot.lane.b32.xlu0 %v483, 96
  %v497 = vpop.permute.xlu0 %496
  %499 = vst.msk [vmem:[#allocation5] sm:$0x3] %vm20, %v497
  %v500 = vpack.c.bf16 %v489, %v489
  %v503 = vunpack.c.l.s4 1966171168
  %v504 = vunpack.c.0.s8 %v503
  %v505 = vlaneseq
  %v506 = vshrl.u32 %v505, 7
  %v507 = vsub.s32 %v504, %v506
  %v508 = vrot.slane %v500, %v507
  %v510 = vunpack.c.l.s4 1966171168
  %v511 = vunpack.c.0.s8 %v510
  %v512 = vlaneseq
  %v513 = vshrl.u32 %v512, 7
  %v514 = vsub.s32 %v511, %v513
  %v515 = vrot.slane %v508, %v514
  %516 = vrot.lane.b32.xlu0 %v515, 32
  %v517 = vpop.permute.xlu0 %516
  %s519 = scalar_lea.vmem %s5, 3
  %520 = vst.msk [vmem:[%s519] sm:$0x1] %vm147, %v517
  %s521 = scalar_lea.vmem %s0, 4
  %v522 = vld [vmem:[%s521] sm:$0x3]
  %v523 = vld [vmem:[#allocation2] sm:$0x3]
  %v524 = vpack.c.bf16 %v523, %v523
  %v525 = vld [vmem:[%s2] sm:$0xf]
  %v526 = vld [vmem:[%s2 + $0x4] sm:$0xf]
  %v527 = vld [vmem:[%s2 + $0x8] sm:$0xf]
  %v528 = vld [vmem:[%s2 + $0xc] sm:$0xf]
  %v533 = vunpack.c.l.b16 %v525
  %v534 = vunpack.c.l.b16 %v526
  %v535 = vunpack.c.l.b16 %v527
  %v536 = vunpack.c.l.b16 %v528
  %v537 = vpack.c.b16 %v534, %v533
  %v538 = vpack.c.b16 %v536, %v535
  %v542 = vsel %vm44, %v524, 0
  %544 = vmatprep.subr.bf16.mxu0 0
  %545 = vmatpush1.bf16.msra.mxu0 %v537
  %546 = vmatprep.subr.bf16.mxu0 0
  %547 = vmatpush1.bf16.msra.mxu0 %v538
  %548 = vmatprep.subr.bf16.mxu0 0
  %549 = vmatpush1.bf16.msra.mxu0 0
  %550 = vmatprep.subr.bf16.mxu0 0
  %551 = vmatpush1.bf16.msra.mxu0 0
  %552 = vmatprep.subr.bf16.mxu0 0
  %553 = vmatpush1.bf16.msra.mxu0 0
  %554 = vmatprep.subr.bf16.mxu0 0
  %555 = vmatpush1.bf16.msra.mxu0 0
  %556 = vmatprep.subr.bf16.mxu0 0
  %557 = vmatpush1.bf16.msra.mxu0 0
  %558 = vmatprep.subr.bf16.mxu0 0
  %559 = vmatpush1.bf16.msra.mxu0 0
  %560 = vmatprep.subr.bf16.mxu0 0
  %561 = vmatpush1.bf16.msra.mxu0 0
  %562 = vmatprep.subr.bf16.mxu0 0
  %563 = vmatpush1.bf16.msra.mxu0 0
  %564 = vmatprep.subr.bf16.mxu0 0
  %565 = vmatpush1.bf16.msra.mxu0 0
  %566 = vmatprep.subr.bf16.mxu0 0
  %567 = vmatpush1.bf16.msra.mxu0 0
  %568 = vmatprep.subr.bf16.mxu0 0
  %569 = vmatpush1.bf16.msra.mxu0 0
  %570 = vmatprep.subr.bf16.mxu0 0
  %571 = vmatpush1.bf16.msra.mxu0 0
  %572 = vmatprep.subr.bf16.mxu0 0
  %573 = vmatpush1.bf16.msra.mxu0 0
  %574 = vmatprep.subr.bf16.mxu0 0
  %575 = vmatpush1.bf16.msra.mxu0 0
  %576 = vmatprep.mubr.bf16.mxu0 0
  %577 = vmatmul.mubr.bf16.gmra.mrb[0].mxu0 %v542
  %v578 = vpop.f32.mrb[0].mxu0
  %v579 = vadd.f32 0.0, %v578
  %v580 = vpop.f32.mrb[0].mxu0
  %v581 = vpop.f32.mrb[0].mxu0
  %v582 = vpop.f32.mrb[0].mxu0
  %583 = vdwg.mxu0
  %v584 = vadd.f32 %v522, %v579
  %v585 = vld [vmem:[#allocation3] sm:$0x3]
  %v586 = vxor.u32 %v584, 2147483648
  %v587 = vmul.f32 %v586, 1.442695
  %v588 = vpow.pop %v587
  %v589 = vadd.f32 %v588, 1.0
  %v590 = vrcp.pop %v589
  %v591 = vmul.f32 1.0, %v590
  %v592 = vtanh.pop %v584
  %594 = vrot.lane.b32.xlu0 %v585, 32
  %v595 = vpop.permute.xlu0 %594
  %v597 = vmul.f32 %v591, %v595
  %599 = vrot.lane.b32.xlu0 %v592, 64
  %v600 = vpop.permute.xlu0 %599
  %v602 = vmul.f32 %v591, %v600
  %604 = vrot.lane.b32.xlu0 %v602, 32
  %v605 = vpop.permute.xlu0 %604
  %v607 = vadd.f32 %v597, %v605
  %v608 = vtanh.pop %v607
  %610 = vrot.lane.b32.xlu0 %v608, 64
  %v611 = vpop.permute.xlu0 %610
  %v613 = vmul.f32 %v591, %v611
  %615 = vrot.lane.b32.xlu0 %v613, 32
  %v616 = vpop.permute.xlu0 %615
  %618 = vst.msk [vmem:[#allocation2] sm:$0x3] %vm20, %v616
  %620 = vrot.lane.b32.xlu0 %v607, 96
  %v621 = vpop.permute.xlu0 %620
  %623 = vst.msk [vmem:[#allocation3] sm:$0x3] %vm20, %v621
  %v624 = vpack.c.bf16 %v613, %v613
  %v627 = vunpack.c.l.s4 1966171168
  %v628 = vunpack.c.0.s8 %v627
  %v629 = vlaneseq
  %v630 = vshrl.u32 %v629, 7
  %v631 = vsub.s32 %v628, %v630
  %v632 = vrot.slane %v624, %v631
  %v634 = vunpack.c.l.s4 1966171168
  %v635 = vunpack.c.0.s8 %v634
  %v636 = vlaneseq
  %v637 = vshrl.u32 %v636, 7
  %v638 = vsub.s32 %v635, %v637
  %v639 = vrot.slane %v632, %v638
  %640 = vrot.lane.b32.xlu0 %v639, 32
  %v641 = vpop.permute.xlu0 %640
  %s643 = scalar_lea.vmem %s4, 2
  %644 = vst.msk [vmem:[%s643] sm:$0x1] %vm147, %v641
  %s645 = scalar_lea.vmem %s1, 4
  %v646 = vld [vmem:[%s645] sm:$0x3]
  %v647 = vld [vmem:[#allocation4] sm:$0x3]
  %v648 = vpack.c.bf16 %v647, %v647
  %v649 = vld [vmem:[%s3] sm:$0xf]
  %v650 = vld [vmem:[%s3 + $0x4] sm:$0xf]
  %v651 = vld [vmem:[%s3 + $0x8] sm:$0xf]
  %v652 = vld [vmem:[%s3 + $0xc] sm:$0xf]
  %v657 = vunpack.c.l.b16 %v649
  %v658 = vunpack.c.l.b16 %v650
  %v659 = vunpack.c.l.b16 %v651
  %v660 = vunpack.c.l.b16 %v652
  %v661 = vpack.c.b16 %v658, %v657
  %v662 = vpack.c.b16 %v660, %v659
  %v666 = vsel %vm44, %v648, 0
  %668 = vmatprep.subr.bf16.mxu0 0
  %669 = vmatpush1.bf16.msra.mxu0 %v661
  %670 = vmatprep.subr.bf16.mxu0 0
  %671 = vmatpush1.bf16.msra.mxu0 %v662
  %672 = vmatprep.subr.bf16.mxu0 0
  %673 = vmatpush1.bf16.msra.mxu0 0
  %674 = vmatprep.subr.bf16.mxu0 0
  %675 = vmatpush1.bf16.msra.mxu0 0
  %676 = vmatprep.subr.bf16.mxu0 0
  %677 = vmatpush1.bf16.msra.mxu0 0
  %678 = vmatprep.subr.bf16.mxu0 0
  %679 = vmatpush1.bf16.msra.mxu0 0
  %680 = vmatprep.subr.bf16.mxu0 0
  %681 = vmatpush1.bf16.msra.mxu0 0
  %682 = vmatprep.subr.bf16.mxu0 0
  %683 = vmatpush1.bf16.msra.mxu0 0
  %684 = vmatprep.subr.bf16.mxu0 0
  %685 = vmatpush1.bf16.msra.mxu0 0
  %686 = vmatprep.subr.bf16.mxu0 0
  %687 = vmatpush1.bf16.msra.mxu0 0
  %688 = vmatprep.subr.bf16.mxu0 0
  %689 = vmatpush1.bf16.msra.mxu0 0
  %690 = vmatprep.subr.bf16.mxu0 0
  %691 = vmatpush1.bf16.msra.mxu0 0
  %692 = vmatprep.subr.bf16.mxu0 0
  %693 = vmatpush1.bf16.msra.mxu0 0
  %694 = vmatprep.subr.bf16.mxu0 0
  %695 = vmatpush1.bf16.msra.mxu0 0
  %696 = vmatprep.subr.bf16.mxu0 0
  %697 = vmatpush1.bf16.msra.mxu0 0
  %698 = vmatprep.subr.bf16.mxu0 0
  %699 = vmatpush1.bf16.msra.mxu0 0
  %700 = vmatprep.mubr.bf16.mxu0 0
  %701 = vmatmul.mubr.bf16.gmra.mrb[0].mxu0 %v666
  %v702 = vpop.f32.mrb[0].mxu0
  %v703 = vadd.f32 0.0, %v702
  %v704 = vpop.f32.mrb[0].mxu0
  %v705 = vpop.f32.mrb[0].mxu0
  %v706 = vpop.f32.mrb[0].mxu0
  %707 = vdwg.mxu0
  %v708 = vadd.f32 %v646, %v703
  %v709 = vld [vmem:[#allocation5] sm:$0x3]
  %v710 = vxor.u32 %v708, 2147483648
  %v711 = vmul.f32 %v710, 1.442695
  %v712 = vpow.pop %v711
  %v713 = vadd.f32 %v712, 1.0
  %v714 = vrcp.pop %v713
  %v715 = vmul.f32 1.0, %v714
  %v716 = vtanh.pop %v708
  %718 = vrot.lane.b32.xlu0 %v709, 32
  %v719 = vpop.permute.xlu0 %718
  %v721 = vmul.f32 %v715, %v719
  %723 = vrot.lane.b32.xlu0 %v716, 64
  %v724 = vpop.permute.xlu0 %723
  %v726 = vmul.f32 %v715, %v724
  %728 = vrot.lane.b32.xlu0 %v726, 32
  %v729 = vpop.permute.xlu0 %728
  %v731 = vadd.f32 %v721, %v729
  %v732 = vtanh.pop %v731
  %734 = vrot.lane.b32.xlu0 %v732, 64
  %v735 = vpop.permute.xlu0 %734
  %v737 = vmul.f32 %v715, %v735
  %739 = vrot.lane.b32.xlu0 %v737, 32
  %v740 = vpop.permute.xlu0 %739
  %742 = vst.msk [vmem:[#allocation4] sm:$0x3] %vm20, %v740
  %744 = vrot.lane.b32.xlu0 %v731, 96
  %v745 = vpop.permute.xlu0 %744
  %747 = vst.msk [vmem:[#allocation5] sm:$0x3] %vm20, %v745
  %v748 = vpack.c.bf16 %v737, %v737
  %v751 = vunpack.c.l.s4 1966171168
  %v752 = vunpack.c.0.s8 %v751
  %v753 = vlaneseq
  %v754 = vshrl.u32 %v753, 7
  %v755 = vsub.s32 %v752, %v754
  %v756 = vrot.slane %v748, %v755
  %v758 = vunpack.c.l.s4 1966171168
  %v759 = vunpack.c.0.s8 %v758
  %v760 = vlaneseq
  %v761 = vshrl.u32 %v760, 7
  %v762 = vsub.s32 %v759, %v761
  %v763 = vrot.slane %v756, %v762
  %764 = vrot.lane.b32.xlu0 %v763, 32
  %v765 = vpop.permute.xlu0 %764
  %s767 = scalar_lea.vmem %s5, 2
  %768 = vst.msk [vmem:[%s767] sm:$0x1] %vm147, %v765
  %s769 = scalar_lea.vmem %s0, 6
  %v770 = vld [vmem:[%s769] sm:$0x3]
  %v771 = vld [vmem:[#allocation2] sm:$0x3]
  %v772 = vpack.c.bf16 %v771, %v771
  %v773 = vld [vmem:[%s2] sm:$0xf]
  %v774 = vld [vmem:[%s2 + $0x4] sm:$0xf]
  %v775 = vld [vmem:[%s2 + $0x8] sm:$0xf]
  %v776 = vld [vmem:[%s2 + $0xc] sm:$0xf]
  %v781 = vunpack.c.l.b16 %v773
  %v782 = vunpack.c.l.b16 %v774
  %v783 = vunpack.c.l.b16 %v775
  %v784 = vunpack.c.l.b16 %v776
  %v785 = vpack.c.b16 %v782, %v781
  %v786 = vpack.c.b16 %v784, %v783
  %v790 = vsel %vm44, %v772, 0
  %792 = vmatprep.subr.bf16.mxu0 0
  %793 = vmatpush1.bf16.msra.mxu0 %v785
  %794 = vmatprep.subr.bf16.mxu0 0
  %795 = vmatpush1.bf16.msra.mxu0 %v786
  %796 = vmatprep.subr.bf16.mxu0 0
  %797 = vmatpush1.bf16.msra.mxu0 0
  %798 = vmatprep.subr.bf16.mxu0 0
  %799 = vmatpush1.bf16.msra.mxu0 0
  %800 = vmatprep.subr.bf16.mxu0 0
  %801 = vmatpush1.bf16.msra.mxu0 0
  %802 = vmatprep.subr.bf16.mxu0 0
  %803 = vmatpush1.bf16.msra.mxu0 0
  %804 = vmatprep.subr.bf16.mxu0 0
  %805 = vmatpush1.bf16.msra.mxu0 0
  %806 = vmatprep.subr.bf16.mxu0 0
  %807 = vmatpush1.bf16.msra.mxu0 0
  %808 = vmatprep.subr.bf16.mxu0 0
  %809 = vmatpush1.bf16.msra.mxu0 0
  %810 = vmatprep.subr.bf16.mxu0 0
  %811 = vmatpush1.bf16.msra.mxu0 0
  %812 = vmatprep.subr.bf16.mxu0 0
  %813 = vmatpush1.bf16.msra.mxu0 0
  %814 = vmatprep.subr.bf16.mxu0 0
  %815 = vmatpush1.bf16.msra.mxu0 0
  %816 = vmatprep.subr.bf16.mxu0 0
  %817 = vmatpush1.bf16.msra.mxu0 0
  %818 = vmatprep.subr.bf16.mxu0 0
  %819 = vmatpush1.bf16.msra.mxu0 0
  %820 = vmatprep.subr.bf16.mxu0 0
  %821 = vmatpush1.bf16.msra.mxu0 0
  %822 = vmatprep.subr.bf16.mxu0 0
  %823 = vmatpush1.bf16.msra.mxu0 0
  %824 = vmatprep.mubr.bf16.mxu0 0
  %825 = vmatmul.mubr.bf16.gmra.mrb[0].mxu0 %v790
  %v826 = vpop.f32.mrb[0].mxu0
  %v827 = vadd.f32 0.0, %v826
  %v828 = vpop.f32.mrb[0].mxu0
  %v829 = vpop.f32.mrb[0].mxu0
  %v830 = vpop.f32.mrb[0].mxu0
  %831 = vdwg.mxu0
  %v832 = vadd.f32 %v770, %v827
  %v833 = vld [vmem:[#allocation3] sm:$0x3]
  %v834 = vxor.u32 %v832, 2147483648
  %v835 = vmul.f32 %v834, 1.442695
  %v836 = vpow.pop %v835
  %v837 = vadd.f32 %v836, 1.0
  %v838 = vrcp.pop %v837
  %v839 = vmul.f32 1.0, %v838
  %v840 = vtanh.pop %v832
  %842 = vrot.lane.b32.xlu0 %v833, 32
  %v843 = vpop.permute.xlu0 %842
  %v845 = vmul.f32 %v839, %v843
  %847 = vrot.lane.b32.xlu0 %v840, 64
  %v848 = vpop.permute.xlu0 %847
  %v850 = vmul.f32 %v839, %v848
  %852 = vrot.lane.b32.xlu0 %v850, 32
  %v853 = vpop.permute.xlu0 %852
  %v855 = vadd.f32 %v845, %v853
  %v856 = vtanh.pop %v855
  %858 = vrot.lane.b32.xlu0 %v856, 64
  %v859 = vpop.permute.xlu0 %858
  %v861 = vmul.f32 %v839, %v859
  %863 = vrot.lane.b32.xlu0 %v861, 32
  %v864 = vpop.permute.xlu0 %863
  %866 = vst.msk [vmem:[#allocation2] sm:$0x3] %vm20, %v864
  %868 = vrot.lane.b32.xlu0 %v855, 96
  %v869 = vpop.permute.xlu0 %868
  %871 = vst.msk [vmem:[#allocation3] sm:$0x3] %vm20, %v869
  %v872 = vpack.c.bf16 %v861, %v861
  %v875 = vunpack.c.l.s4 1966171168
  %v876 = vunpack.c.0.s8 %v875
  %v877 = vlaneseq
  %v878 = vshrl.u32 %v877, 7
  %v879 = vsub.s32 %v876, %v878
  %v880 = vrot.slane %v872, %v879
  %v882 = vunpack.c.l.s4 1966171168
  %v883 = vunpack.c.0.s8 %v882
  %v884 = vlaneseq
  %v885 = vshrl.u32 %v884, 7
  %v886 = vsub.s32 %v883, %v885
  %v887 = vrot.slane %v880, %v886
  %888 = vrot.lane.b32.xlu0 %v887, 32
  %v889 = vpop.permute.xlu0 %888
  %s891 = scalar_lea.vmem %s4, 3
  %892 = vst.msk [vmem:[%s891] sm:$0x1] %vm147, %v889
  %s893 = scalar_lea.vmem %s1, 2
  %v894 = vld [vmem:[%s893] sm:$0x3]
  %v895 = vld [vmem:[#allocation4] sm:$0x3]
  %v896 = vpack.c.bf16 %v895, %v895
  %v897 = vld [vmem:[%s3] sm:$0xf]
  %v898 = vld [vmem:[%s3 + $0x4] sm:$0xf]
  %v899 = vld [vmem:[%s3 + $0x8] sm:$0xf]
  %v900 = vld [vmem:[%s3 + $0xc] sm:$0xf]
  %v905 = vunpack.c.l.b16 %v897
  %v906 = vunpack.c.l.b16 %v898
  %v907 = vunpack.c.l.b16 %v899
  %v908 = vunpack.c.l.b16 %v900
  %v909 = vpack.c.b16 %v906, %v905
  %v910 = vpack.c.b16 %v908, %v907
  %v914 = vsel %vm44, %v896, 0
  %916 = vmatprep.subr.bf16.mxu0 0
  %917 = vmatpush1.bf16.msra.mxu0 %v909
  %918 = vmatprep.subr.bf16.mxu0 0
  %919 = vmatpush1.bf16.msra.mxu0 %v910
  %920 = vmatprep.subr.bf16.mxu0 0
  %921 = vmatpush1.bf16.msra.mxu0 0
  %922 = vmatprep.subr.bf16.mxu0 0
  %923 = vmatpush1.bf16.msra.mxu0 0
  %924 = vmatprep.subr.bf16.mxu0 0
  %925 = vmatpush1.bf16.msra.mxu0 0
  %926 = vmatprep.subr.bf16.mxu0 0
  %927 = vmatpush1.bf16.msra.mxu0 0
  %928 = vmatprep.subr.bf16.mxu0 0
  %929 = vmatpush1.bf16.msra.mxu0 0
  %930 = vmatprep.subr.bf16.mxu0 0
  %931 = vmatpush1.bf16.msra.mxu0 0
  %932 = vmatprep.subr.bf16.mxu0 0
  %933 = vmatpush1.bf16.msra.mxu0 0
  %934 = vmatprep.subr.bf16.mxu0 0
  %935 = vmatpush1.bf16.msra.mxu0 0
  %936 = vmatprep.subr.bf16.mxu0 0
  %937 = vmatpush1.bf16.msra.mxu0 0
  %938 = vmatprep.subr.bf16.mxu0 0
  %939 = vmatpush1.bf16.msra.mxu0 0
  %940 = vmatprep.subr.bf16.mxu0 0
  %941 = vmatpush1.bf16.msra.mxu0 0
  %942 = vmatprep.subr.bf16.mxu0 0
  %943 = vmatpush1.bf16.msra.mxu0 0
  %944 = vmatprep.subr.bf16.mxu0 0
  %945 = vmatpush1.bf16.msra.mxu0 0
  %946 = vmatprep.subr.bf16.mxu0 0
  %947 = vmatpush1.bf16.msra.mxu0 0
  %948 = vmatprep.mubr.bf16.mxu0 0
  %949 = vmatmul.mubr.bf16.gmra.mrb[0].mxu0 %v914
  %v950 = vpop.f32.mrb[0].mxu0
  %v951 = vadd.f32 0.0, %v950
  %v952 = vpop.f32.mrb[0].mxu0
  %v953 = vpop.f32.mrb[0].mxu0
  %v954 = vpop.f32.mrb[0].mxu0
  %955 = vdwg.mxu0
  %v956 = vadd.f32 %v894, %v951
  %v957 = vld [vmem:[#allocation5] sm:$0x3]
  %v958 = vxor.u32 %v956, 2147483648
  %v959 = vmul.f32 %v958, 1.442695
  %v960 = vpow.pop %v959
  %v961 = vadd.f32 %v960, 1.0
  %v962 = vrcp.pop %v961
  %v963 = vmul.f32 1.0, %v962
  %v964 = vtanh.pop %v956
  %966 = vrot.lane.b32.xlu0 %v957, 32
  %v967 = vpop.permute.xlu0 %966
  %v969 = vmul.f32 %v963, %v967
  %971 = vrot.lane.b32.xlu0 %v964, 64
  %v972 = vpop.permute.xlu0 %971
  %v974 = vmul.f32 %v963, %v972
  %976 = vrot.lane.b32.xlu0 %v974, 32
  %v977 = vpop.permute.xlu0 %976
  %v979 = vadd.f32 %v969, %v977
  %v980 = vtanh.pop %v979
  %982 = vrot.lane.b32.xlu0 %v980, 64
  %v983 = vpop.permute.xlu0 %982
  %v985 = vmul.f32 %v963, %v983
  %987 = vrot.lane.b32.xlu0 %v985, 32
  %v988 = vpop.permute.xlu0 %987
  %990 = vst.msk [vmem:[#allocation4] sm:$0x3] %vm20, %v988
  %992 = vrot.lane.b32.xlu0 %v979, 96
  %v993 = vpop.permute.xlu0 %992
  %995 = vst.msk [vmem:[#allocation5] sm:$0x3] %vm20, %v993
  %v996 = vpack.c.bf16 %v985, %v985
  %v999 = vunpack.c.l.s4 1966171168
  %v1000 = vunpack.c.0.s8 %v999
  %v1001 = vlaneseq
  %v1002 = vshrl.u32 %v1001, 7
  %v1003 = vsub.s32 %v1000, %v1002
  %v1004 = vrot.slane %v996, %v1003
  %v1006 = vunpack.c.l.s4 1966171168
  %v1007 = vunpack.c.0.s8 %v1006
  %v1008 = vlaneseq
  %v1009 = vshrl.u32 %v1008, 7
  %v1010 = vsub.s32 %v1007, %v1009
  %v1011 = vrot.slane %v1004, %v1010
  %1012 = vrot.lane.b32.xlu0 %v1011, 32
  %v1013 = vpop.permute.xlu0 %1012
  %s1015 = scalar_lea.vmem %s5, 1
  %1016 = vst.msk [vmem:[%s1015] sm:$0x1] %vm147, %v1013
  %s1017 = scalar_lea.vmem %s0, 8
  %v1018 = vld [vmem:[%s1017] sm:$0x3]
  %v1019 = vld [vmem:[#allocation2] sm:$0x3]
  %v1020 = vpack.c.bf16 %v1019, %v1019
  %v1021 = vld [vmem:[%s2] sm:$0xf]
  %v1022 = vld [vmem:[%s2 + $0x4] sm:$0xf]
  %v1023 = vld [vmem:[%s2 + $0x8] sm:$0xf]
  %v1024 = vld [vmem:[%s2 + $0xc] sm:$0xf]
  %v1029 = vunpack.c.l.b16 %v1021
  %v1030 = vunpack.c.l.b16 %v1022
  %v1031 = vunpack.c.l.b16 %v1023
  %v1032 = vunpack.c.l.b16 %v1024
  %v1033 = vpack.c.b16 %v1030, %v1029
  %v1034 = vpack.c.b16 %v1032, %v1031
  %v1038 = vsel %vm44, %v1020, 0
  %1040 = vmatprep.subr.bf16.mxu0 0
  %1041 = vmatpush1.bf16.msra.mxu0 %v1033
  %1042 = vmatprep.subr.bf16.mxu0 0
  %1043 = vmatpush1.bf16.msra.mxu0 %v1034
  %1044 = vmatprep.subr.bf16.mxu0 0
  %1045 = vmatpush1.bf16.msra.mxu0 0
  %1046 = vmatprep.subr.bf16.mxu0 0
  %1047 = vmatpush1.bf16.msra.mxu0 0
  %1048 = vmatprep.subr.bf16.mxu0 0
  %1049 = vmatpush1.bf16.msra.mxu0 0
  %1050 = vmatprep.subr.bf16.mxu0 0
  %1051 = vmatpush1.bf16.msra.mxu0 0
  %1052 = vmatprep.subr.bf16.mxu0 0
  %1053 = vmatpush1.bf16.msra.mxu0 0
  %1054 = vmatprep.subr.bf16.mxu0 0
  %1055 = vmatpush1.bf16.msra.mxu0 0
  %1056 = vmatprep.subr.bf16.mxu0 0
  %1057 = vmatpush1.bf16.msra.mxu0 0
  %1058 = vmatprep.subr.bf16.mxu0 0
  %1059 = vmatpush1.bf16.msra.mxu0 0
  %1060 = vmatprep.subr.bf16.mxu0 0
  %1061 = vmatpush1.bf16.msra.mxu0 0
  %1062 = vmatprep.subr.bf16.mxu0 0
  %1063 = vmatpush1.bf16.msra.mxu0 0
  %1064 = vmatprep.subr.bf16.mxu0 0
  %1065 = vmatpush1.bf16.msra.mxu0 0
  %1066 = vmatprep.subr.bf16.mxu0 0
  %1067 = vmatpush1.bf16.msra.mxu0 0
  %1068 = vmatprep.subr.bf16.mxu0 0
  %1069 = vmatpush1.bf16.msra.mxu0 0
  %1070 = vmatprep.subr.bf16.mxu0 0
  %1071 = vmatpush1.bf16.msra.mxu0 0
  %1072 = vmatprep.mubr.bf16.mxu0 0
  %1073 = vmatmul.mubr.bf16.gmra.mrb[0].mxu0 %v1038
  %v1074 = vpop.f32.mrb[0].mxu0
  %v1075 = vadd.f32 0.0, %v1074
  %v1076 = vpop.f32.mrb[0].mxu0
  %v1077 = vpop.f32.mrb[0].mxu0
  %v1078 = vpop.f32.mrb[0].mxu0
  %1079 = vdwg.mxu0
  %v1080 = vadd.f32 %v1018, %v1075
  %v1081 = vld [vmem:[#allocation3] sm:$0x3]
  %v1082 = vxor.u32 %v1080, 2147483648
  %v1083 = vmul.f32 %v1082, 1.442695
  %v1084 = vpow.pop %v1083
  %v1085 = vadd.f32 %v1084, 1.0
  %v1086 = vrcp.pop %v1085
  %v1087 = vmul.f32 1.0, %v1086
  %v1088 = vtanh.pop %v1080
  %1090 = vrot.lane.b32.xlu0 %v1081, 32
  %v1091 = vpop.permute.xlu0 %1090
  %v1093 = vmul.f32 %v1087, %v1091
  %1095 = vrot.lane.b32.xlu0 %v1088, 64
  %v1096 = vpop.permute.xlu0 %1095
  %v1098 = vmul.f32 %v1087, %v1096
  %1100 = vrot.lane.b32.xlu0 %v1098, 32
  %v1101 = vpop.permute.xlu0 %1100
  %v1103 = vadd.f32 %v1093, %v1101
  %v1104 = vtanh.pop %v1103
  %1106 = vrot.lane.b32.xlu0 %v1104, 64
  %v1107 = vpop.permute.xlu0 %1106
  %v1109 = vmul.f32 %v1087, %v1107
  %1111 = vrot.lane.b32.xlu0 %v1109, 32
  %v1112 = vpop.permute.xlu0 %1111
  %1114 = vst.msk [vmem:[#allocation2] sm:$0x3] %vm20, %v1112
  %1116 = vrot.lane.b32.xlu0 %v1103, 96
  %v1117 = vpop.permute.xlu0 %1116
  %1119 = vst.msk [vmem:[#allocation3] sm:$0x3] %vm20, %v1117
  %v1120 = vpack.c.bf16 %v1109, %v1109
  %v1123 = vunpack.c.l.s4 1966171168
  %v1124 = vunpack.c.0.s8 %v1123
  %v1125 = vlaneseq
  %v1126 = vshrl.u32 %v1125, 7
  %v1127 = vsub.s32 %v1124, %v1126
  %v1128 = vrot.slane %v1120, %v1127
  %v1130 = vunpack.c.l.s4 1966171168
  %v1131 = vunpack.c.0.s8 %v1130
  %v1132 = vlaneseq
  %v1133 = vshrl.u32 %v1132, 7
  %v1134 = vsub.s32 %v1131, %v1133
  %v1135 = vrot.slane %v1128, %v1134
  %1136 = vrot.lane.b32.xlu0 %v1135, 32
  %v1137 = vpop.permute.xlu0 %1136
  %s1139 = scalar_lea.vmem %s4, 4
  %1140 = vst.msk [vmem:[%s1139] sm:$0x1] %vm147, %v1137
  %v1141 = vld [vmem:[%s1] sm:$0x3]
  %v1142 = vld [vmem:[#allocation4] sm:$0x3]
  %v1143 = vpack.c.bf16 %v1142, %v1142
  %v1144 = vld [vmem:[%s3] sm:$0xf]
  %v1145 = vld [vmem:[%s3 + $0x4] sm:$0xf]
  %v1146 = vld [vmem:[%s3 + $0x8] sm:$0xf]
  %v1147 = vld [vmem:[%s3 + $0xc] sm:$0xf]
  %v1152 = vunpack.c.l.b16 %v1144
  %v1153 = vunpack.c.l.b16 %v1145
  %v1154 = vunpack.c.l.b16 %v1146
  %v1155 = vunpack.c.l.b16 %v1147
  %v1156 = vpack.c.b16 %v1153, %v1152
  %v1157 = vpack.c.b16 %v1155, %v1154
  %v1161 = vsel %vm44, %v1143, 0
  %1163 = vmatprep.subr.bf16.mxu0 0
  %1164 = vmatpush1.bf16.msra.mxu0 %v1156
  %1165 = vmatprep.subr.bf16.mxu0 0
  %1166 = vmatpush1.bf16.msra.mxu0 %v1157
  %1167 = vmatprep.subr.bf16.mxu0 0
  %1168 = vmatpush1.bf16.msra.mxu0 0
  %1169 = vmatprep.subr.bf16.mxu0 0
  %1170 = vmatpush1.bf16.msra.mxu0 0
  %1171 = vmatprep.subr.bf16.mxu0 0
  %1172 = vmatpush1.bf16.msra.mxu0 0
  %1173 = vmatprep.subr.bf16.mxu0 0
  %1174 = vmatpush1.bf16.msra.mxu0 0
  %1175 = vmatprep.subr.bf16.mxu0 0
  %1176 = vmatpush1.bf16.msra.mxu0 0
  %1177 = vmatprep.subr.bf16.mxu0 0
  %1178 = vmatpush1.bf16.msra.mxu0 0
  %1179 = vmatprep.subr.bf16.mxu0 0
  %1180 = vmatpush1.bf16.msra.mxu0 0
  %1181 = vmatprep.subr.bf16.mxu0 0
  %1182 = vmatpush1.bf16.msra.mxu0 0
  %1183 = vmatprep.subr.bf16.mxu0 0
  %1184 = vmatpush1.bf16.msra.mxu0 0
  %1185 = vmatprep.subr.bf16.mxu0 0
  %1186 = vmatpush1.bf16.msra.mxu0 0
  %1187 = vmatprep.subr.bf16.mxu0 0
  %1188 = vmatpush1.bf16.msra.mxu0 0
  %1189 = vmatprep.subr.bf16.mxu0 0
  %1190 = vmatpush1.bf16.msra.mxu0 0
  %1191 = vmatprep.subr.bf16.mxu0 0
  %1192 = vmatpush1.bf16.msra.mxu0 0
  %1193 = vmatprep.subr.bf16.mxu0 0
  %1194 = vmatpush1.bf16.msra.mxu0 0
  %1195 = vmatprep.mubr.bf16.mxu0 0
  %1196 = vmatmul.mubr.bf16.gmra.mrb[0].mxu0 %v1161
  %v1197 = vpop.f32.mrb[0].mxu0
  %v1198 = vadd.f32 0.0, %v1197
  %v1199 = vpop.f32.mrb[0].mxu0
  %v1200 = vpop.f32.mrb[0].mxu0
  %v1201 = vpop.f32.mrb[0].mxu0
  %1202 = vdwg.mxu0
  %v1203 = vadd.f32 %v1141, %v1198
  %v1204 = vld [vmem:[#allocation5] sm:$0x3]
  %v1205 = vxor.u32 %v1203, 2147483648
  %v1206 = vmul.f32 %v1205, 1.442695
  %v1207 = vpow.pop %v1206
  %v1208 = vadd.f32 %v1207, 1.0
  %v1209 = vrcp.pop %v1208
  %v1210 = vmul.f32 1.0, %v1209
  %v1211 = vtanh.pop %v1203
  %1213 = vrot.lane.b32.xlu0 %v1204, 32
  %v1214 = vpop.permute.xlu0 %1213
  %v1216 = vmul.f32 %v1210, %v1214
  %1218 = vrot.lane.b32.xlu0 %v1211, 64
  %v1219 = vpop.permute.xlu0 %1218
  %v1221 = vmul.f32 %v1210, %v1219
  %1223 = vrot.lane.b32.xlu0 %v1221, 32
  %v1224 = vpop.permute.xlu0 %1223
  %v1226 = vadd.f32 %v1216, %v1224
  %v1227 = vtanh.pop %v1226
  %1229 = vrot.lane.b32.xlu0 %v1227, 64
  %v1230 = vpop.permute.xlu0 %1229
  %v1232 = vmul.f32 %v1210, %v1230
  %1234 = vrot.lane.b32.xlu0 %v1232, 32
  %v1235 = vpop.permute.xlu0 %1234
  %1237 = vst.msk [vmem:[#allocation4] sm:$0x3] %vm20, %v1235
  %1239 = vrot.lane.b32.xlu0 %v1226, 96
  %v1240 = vpop.permute.xlu0 %1239
  %1242 = vst.msk [vmem:[#allocation5] sm:$0x3] %vm20, %v1240
  %v1243 = vpack.c.bf16 %v1232, %v1232
  %v1246 = vunpack.c.l.s4 1966171168
  %v1247 = vunpack.c.0.s8 %v1246
  %v1248 = vlaneseq
  %v1249 = vshrl.u32 %v1248, 7
  %v1250 = vsub.s32 %v1247, %v1249
  %v1251 = vrot.slane %v1243, %v1250
  %v1253 = vunpack.c.l.s4 1966171168
  %v1254 = vunpack.c.0.s8 %v1253
  %v1255 = vlaneseq
  %v1256 = vshrl.u32 %v1255, 7
  %v1257 = vsub.s32 %v1254, %v1256
  %v1258 = vrot.slane %v1251, %v1257
  %1259 = vrot.lane.b32.xlu0 %v1258, 32
  %v1260 = vpop.permute.xlu0 %1259
  %1262 = vst.msk [vmem:[%s5] sm:$0x1] %vm147, %v1260
  // Predicated region
  $region18: #{glacnet_forward.15} parent=0 // pred_check
    _
  $region19: #{glacnet_forward.15} parent=0 // pred_check_branch
    %1264 = sbr.rel (0) target = $region21
  $region20: #{glacnet_forward.15} parent=0 // pred_region
    _
  $region21: #{glacnet_forward.15} parent=0 // pred_fallthru
    _
  // Predicated region
  $region22: #{glacnet_forward.15} parent=0 // pred_check
    _
  $region23: #{glacnet_forward.15} parent=0 // pred_check_branch
    %1266 = sbr.rel (0) target = $region25
  $region24: #{glacnet_forward.15} parent=0 // pred_region
    _
  $region25: #{glacnet_forward.15} parent=0 // pred_fallthru
    _
  // Predicated region
  $region26: #{glacnet_forward.15} parent=0 // pred_check
    _
  $region27: #{glacnet_forward.15} parent=0 // pred_check_branch
    %1268 = sbr.rel (0) target = $region29
  $region28: #{glacnet_forward.15} parent=0 // pred_region
    _
  $region29: #{glacnet_forward.15} parent=0 // pred_fallthru
    _
  // Predicated region
  $region30: #{glacnet_forward.15} parent=0 // pred_check
    _
  $region31: #{glacnet_forward.15} parent=0 // pred_check_branch
    %1270 = sbr.rel (0) target = $region33
  $region32: #{glacnet_forward.15} parent=0 // pred_region
    _
  $region33: #{glacnet_forward.15} parent=0 // pred_fallthru
    _

// kernel: glacnet_forward.21
$region0: #{glacnet_forward.21}
  #allocation0 [shape = 'u32[]', space=smem, size = 0x4, offset = 0x4, fixed_abs, tag = 'smem constant byte address 0x4 - core index']
  #allocation1 [shape = 'u32[144,128]{1,0:T(1,128)}', space=vmem, size = 0x12000, scoped, tag = 'internal scratch']
  %s0 = inlined_call_operand.vmem [shape: f32[8,32], index: 0, kind: input, shape index: {}]
  %s1 = inlined_call_operand.vmem [shape: bf16[32,128], index: 1, kind: input, shape index: {}]
  %s2 = inlined_call_operand.vmem [shape: f32[1,128], index: 2, kind: input, shape index: {}]
  %s3 = inlined_call_operand.vmem [shape: f32[8,128], index: 3, kind: output, shape index: {}]
  %s4 = sld [smem:[#allocation0]]
  $region22: #{glacnet_forward.21} parent=0
    _
  %s6 = ssub.s32 1, %s4
  %s7 = scalar_select 0, %s6, %s4
  // Predicated region
  $region2: #{glacnet_forward.21} parent=0 // pred_check
    _
  $region3: #{glacnet_forward.21} parent=0 // pred_check_branch
    %9 = sbr.rel (0) target = $region5
  $region4: #{glacnet_forward.21} parent=0 // pred_region
    _
  $region5: #{glacnet_forward.21} parent=0 // pred_fallthru
    _
  // Predicated region
  $region6: #{glacnet_forward.21} parent=0 // pred_check
    _
  $region7: #{glacnet_forward.21} parent=0 // pred_check_branch
    %11 = sbr.rel (0) target = $region9
  $region8: #{glacnet_forward.21} parent=0 // pred_region
    _
  $region9: #{glacnet_forward.21} parent=0 // pred_fallthru
    _
  // Predicated region
  $region10: #{glacnet_forward.21} parent=0 // pred_check
    _
  $region11: #{glacnet_forward.21} parent=0 // pred_check_branch
    %13 = sbr.rel (0) target = $region13
  $region12: #{glacnet_forward.21} parent=0 // pred_region
    _
  $region13: #{glacnet_forward.21} parent=0 // pred_fallthru
    _
  %v15 = vld [vmem:[%s0] sm:$0xff]
  %v16 = vpack.c.bf16 %v15, %v15
  %v17 = vld [vmem:[%s1] sm:$0xf]
  %v18 = vld [vmem:[%s1 + $0x4] sm:$0xf]
  %v19 = vld [vmem:[%s1 + $0x8] sm:$0xf]
  %v20 = vld [vmem:[%s1 + $0xc] sm:$0xf]
  %v21 = vld [vmem:[%s2] sm:$0x1]
  %v23 = vlaneseq
  %v24 = vshrl.u32 %v23, 7
  %v25 = vsub.s32 0, %v24
  %v26 = vrot.slane %v21, %v25
  %v32 = vunpack.c.l.b16 %v17
  %v33 = vunpack.c.l.b16 %v18
  %v34 = vunpack.c.l.b16 %v19
  %v35 = vunpack.c.l.b16 %v20
  %v36 = vpack.c.b16 %v33, %v32
  %v37 = vpack.c.b16 %v35, %v34
  %vm40 = vcmask 261120
  %v42 = vsel %vm40, %v16, 0
  %44 = vmatprep.subr.bf16.mxu0 0
  %45 = vmatpush1.bf16.msra.mxu0 %v36
  %46 = vmatprep.subr.bf16.mxu0 0
  %47 = vmatpush1.bf16.msra.mxu0 %v37
  %48 = vmatprep.subr.bf16.mxu0 0
  %49 = vmatpush1.bf16.msra.mxu0 0
  %50 = vmatprep.subr.bf16.mxu0 0
  %51 = vmatpush1.bf16.msra.mxu0 0
  %52 = vmatprep.subr.bf16.mxu0 0
  %53 = vmatpush1.bf16.msra.mxu0 0
  %54 = vmatprep.subr.bf16.mxu0 0
  %55 = vmatpush1.bf16.msra.mxu0 0
  %56 = vmatprep.subr.bf16.mxu0 0
  %57 = vmatpush1.bf16.msra.mxu0 0
  %58 = vmatprep.subr.bf16.mxu0 0
  %59 = vmatpush1.bf16.msra.mxu0 0
  %60 = vmatprep.subr.bf16.mxu0 0
  %61 = vmatpush1.bf16.msra.mxu0 0
  %62 = vmatprep.subr.bf16.mxu0 0
  %63 = vmatpush1.bf16.msra.mxu0 0
  %64 = vmatprep.subr.bf16.mxu0 0
  %65 = vmatpush1.bf16.msra.mxu0 0
  %66 = vmatprep.subr.bf16.mxu0 0
  %67 = vmatpush1.bf16.msra.mxu0 0
  %68 = vmatprep.subr.bf16.mxu0 0
  %69 = vmatpush1.bf16.msra.mxu0 0
  %70 = vmatprep.subr.bf16.mxu0 0
  %71 = vmatpush1.bf16.msra.mxu0 0
  %72 = vmatprep.subr.bf16.mxu0 0
  %73 = vmatpush1.bf16.msra.mxu0 0
  %74 = vmatprep.subr.bf16.mxu0 0
  %75 = vmatpush1.bf16.msra.mxu0 0
  %76 = vmatprep.mubr.bf16.mxu0 0
  %77 = vmatmul.mubr.bf16.gmra.mrb[0].mxu0 %v42
  %v78 = vpop.f32.mrb[0].mxu0
  %v79 = vadd.f32 %v26, %v78
  %v80 = vpop.f32.mrb[0].mxu0
  %v81 = vpop.f32.mrb[0].mxu0
  %v82 = vpop.f32.mrb[0].mxu0
  %83 = vdwg.mxu0
  %84 = vst [vmem:[%s3] sm:$0xff] %v79
  // Predicated region
  $region14: #{glacnet_forward.21} parent=0 // pred_check
    _
  $region15: #{glacnet_forward.21} parent=0 // pred_check_branch
    %86 = sbr.rel (0) target = $region17
  $region16: #{glacnet_forward.21} parent=0 // pred_region
    _
  $region17: #{glacnet_forward.21} parent=0 // pred_fallthru
    _
  // Predicated region
  $region18: #{glacnet_forward.21} parent=0 // pred_check
    _
  $region19: #{glacnet_forward.21} parent=0 // pred_check_branch
    %88 = sbr.rel (0) target = $region21
  $region20: #{glacnet_forward.21} parent=0 // pred_region
    _
  $region21: #{glacnet_forward.21} parent=0 // pred_fallthru
    _

// kernel: glacnet_forward.19
$region0: #{glacnet_forward.19}
  #allocation0 [shape = 'u32[]', space=smem, size = 0x4, offset = 0x4, fixed_abs, tag = 'smem constant byte address 0x4 - core index']
  #allocation1 [shape = 'u32[144,128]{1,0:T(1,128)}', space=vmem, size = 0x12000, scoped, tag = 'internal scratch']
  %s0 = inlined_call_operand.vmem [shape: bf16[10,32], index: 0, kind: input, shape index: {}]
  %s1 = inlined_call_operand.vmem [shape: bf16[10,32], index: 1, kind: input, shape index: {}]
  %s2 = inlined_call_operand.vmem [shape: f32[10,32], index: 2, kind: input, shape index: {}]
  %s3 = inlined_call_operand.vmem [shape: bf16[32,32], index: 3, kind: input, shape index: {}]
  %s4 = inlined_call_operand.vmem [shape: bf16[32,32], index: 4, kind: input, shape index: {}]
  %s5 = inlined_call_operand.vmem [shape: bf16[32,32], index: 5, kind: input, shape index: {}]
  %s6 = inlined_call_operand.vmem [shape: f32[1,32], index: 6, kind: input, shape index: {}]
  %s7 = inlined_call_operand.vmem [shape: f32[10,32], index: 7, kind: output, shape index: {}]
  %s8 = sld [smem:[#allocation0]]
  $region38: #{glacnet_forward.19} parent=0
    _
  %s10 = ssub.s32 1, %s8
  %s11 = scalar_select 0, %s10, %s8
  // Predicated region
  $region2: #{glacnet_forward.19} parent=0 // pred_check
    _
  $region3: #{glacnet_forward.19} parent=0 // pred_check_branch
    %13 = sbr.rel (0) target = $region5
  $region4: #{glacnet_forward.19} parent=0 // pred_region
    _
  $region5: #{glacnet_forward.19} parent=0 // pred_fallthru
    _
  // Predicated region
  $region6: #{glacnet_forward.19} parent=0 // pred_check
    _
  $region7: #{glacnet_forward.19} parent=0 // pred_check_branch
    %15 = sbr.rel (0) target = $region9
  $region8: #{glacnet_forward.19} parent=0 // pred_region
    _
  $region9: #{glacnet_forward.19} parent=0 // pred_fallthru
    _
  // Predicated region
  $region10: #{glacnet_forward.19} parent=0 // pred_check
    _
  $region11: #{glacnet_forward.19} parent=0 // pred_check_branch
    %17 = sbr.rel (0) target = $region13
  $region12: #{glacnet_forward.19} parent=0 // pred_region
    _
  $region13: #{glacnet_forward.19} parent=0 // pred_fallthru
    _
  // Predicated region
  $region14: #{glacnet_forward.19} parent=0 // pred_check
    _
  $region15: #{glacnet_forward.19} parent=0 // pred_check_branch
    %19 = sbr.rel (0) target = $region17
  $region16: #{glacnet_forward.19} parent=0 // pred_region
    _
  $region17: #{glacnet_forward.19} parent=0 // pred_fallthru
    _
  // Predicated region
  $region18: #{glacnet_forward.19} parent=0 // pred_check
    _
  $region19: #{glacnet_forward.19} parent=0 // pred_check_branch
    %21 = sbr.rel (0) target = $region21
  $region20: #{glacnet_forward.19} parent=0 // pred_region
    _
  $region21: #{glacnet_forward.19} parent=0 // pred_fallthru
    _
  // Predicated region
  $region22: #{glacnet_forward.19} parent=0 // pred_check
    _
  $region23: #{glacnet_forward.19} parent=0 // pred_check_branch
    %23 = sbr.rel (0) target = $region25
  $region24: #{glacnet_forward.19} parent=0 // pred_region
    _
  $region25: #{glacnet_forward.19} parent=0 // pred_fallthru
    _
  // Predicated region
  $region26: #{glacnet_forward.19} parent=0 // pred_check
    _
  $region27: #{glacnet_forward.19} parent=0 // pred_check_branch
    %25 = sbr.rel (0) target = $region29
  $region28: #{glacnet_forward.19} parent=0 // pred_region
    _
  $region29: #{glacnet_forward.19} parent=0 // pred_fallthru
    _
  %v27 = vld [vmem:[%s0] sm:$0xf]
  %v28 = vld [vmem:[%s0 + $0x4] sm:$0x1]
  %v29 = vld [vmem:[%s3] sm:$0xf]
  %v30 = vld [vmem:[%s3 + $0x4] sm:$0xf]
  %v31 = vld [vmem:[%s3 + $0x8] sm:$0xf]
  %v32 = vld [vmem:[%s3 + $0xc] sm:$0xf]
  %v33 = vld [vmem:[%s1] sm:$0xf]
  %v34 = vld [vmem:[%s1 + $0x4] sm:$0x1]
  %v35 = vld [vmem:[%s4] sm:$0xf]
  %v36 = vld [vmem:[%s4 + $0x4] sm:$0xf]
  %v37 = vld [vmem:[%s4 + $0x8] sm:$0xf]
  %v38 = vld [vmem:[%s4 + $0xc] sm:$0xf]
  %v41 = vunpack.c.l.b16 %v33
  %v42 = vunpack.c.l.b16 %v34
  %v43 = vpack.c.b16 %v42, %v41
  %v48 = vunpack.c.l.b16 %v35
  %v49 = vunpack.c.l.b16 %v36
  %v50 = vunpack.c.l.b16 %v37
  %v51 = vunpack.c.l.b16 %v38
  %v52 = vpack.c.b16 %v49, %v48
  %v53 = vpack.c.b16 %v51, %v50
  %vm56 = vcmask 261120
  %v58 = vsel %vm56, %v43, 0
  %60 = vmatprep.subr.bf16.mxu0 0
  %61 = vmatpush1.bf16.msra.mxu0 %v52
  %62 = vmatprep.subr.bf16.mxu0 0
  %63 = vmatpush1.bf16.msra.mxu0 %v53
  %64 = vmatprep.subr.bf16.mxu0 0
  %65 = vmatpush1.bf16.msra.mxu0 0
  %66 = vmatprep.subr.bf16.mxu0 0
  %67 = vmatpush1.bf16.msra.mxu0 0
  %68 = vmatprep.subr.bf16.mxu0 0
  %69 = vmatpush1.bf16.msra.mxu0 0
  %70 = vmatprep.subr.bf16.mxu0 0
  %71 = vmatpush1.bf16.msra.mxu0 0
  %72 = vmatprep.subr.bf16.mxu0 0
  %73 = vmatpush1.bf16.msra.mxu0 0
  %74 = vmatprep.subr.bf16.mxu0 0
  %75 = vmatpush1.bf16.msra.mxu0 0
  %76 = vmatprep.subr.bf16.mxu0 0
  %77 = vmatpush1.bf16.msra.mxu0 0
  %78 = vmatprep.subr.bf16.mxu0 0
  %79 = vmatpush1.bf16.msra.mxu0 0
  %80 = vmatprep.subr.bf16.mxu0 0
  %81 = vmatpush1.bf16.msra.mxu0 0
  %82 = vmatprep.subr.bf16.mxu0 0
  %83 = vmatpush1.bf16.msra.mxu0 0
  %84 = vmatprep.subr.bf16.mxu0 0
  %85 = vmatpush1.bf16.msra.mxu0 0
  %86 = vmatprep.subr.bf16.mxu0 0
  %87 = vmatpush1.bf16.msra.mxu0 0
  %88 = vmatprep.subr.bf16.mxu0 0
  %89 = vmatpush1.bf16.msra.mxu0 0
  %90 = vmatprep.subr.bf16.mxu0 0
  %91 = vmatpush1.bf16.msra.mxu0 0
  %92 = vmatprep.mubr.bf16.mxu0 0
  %93 = vmatmul.mubr.bf16.gmra.mrb[0].mxu0 %v58
  %v94 = vpop.f32.mrb[0].mxu0
  %v95 = vadd.f32 0.0, %v94
  %v96 = vpop.f32.mrb[0].mxu0
  %v97 = vpop.f32.mrb[0].mxu0
  %v98 = vadd.f32 0.0, %v97
  %v99 = vpop.f32.mrb[0].mxu0
  %100 = vdwg.mxu0
  %v103 = vunpack.c.l.b16 %v27
  %v104 = vunpack.c.l.b16 %v28
  %v105 = vpack.c.b16 %v104, %v103
  %v110 = vunpack.c.l.b16 %v29
  %v111 = vunpack.c.l.b16 %v30
  %v112 = vunpack.c.l.b16 %v31
  %v113 = vunpack.c.l.b16 %v32
  %v114 = vpack.c.b16 %v111, %v110
  %v115 = vpack.c.b16 %v113, %v112
  %v119 = vsel %vm56, %v105, 0
  %121 = vmatprep.subr.bf16.mxu0 0
  %122 = vmatpush1.bf16.msra.mxu0 %v114
  %123 = vmatprep.subr.bf16.mxu0 0
  %124 = vmatpush1.bf16.msra.mxu0 %v115
  %125 = vmatprep.subr.bf16.mxu0 0
  %126 = vmatpush1.bf16.msra.mxu0 0
  %127 = vmatprep.subr.bf16.mxu0 0
  %128 = vmatpush1.bf16.msra.mxu0 0
  %129 = vmatprep.subr.bf16.mxu0 0
  %130 = vmatpush1.bf16.msra.mxu0 0
  %131 = vmatprep.subr.bf16.mxu0 0
  %132 = vmatpush1.bf16.msra.mxu0 0
  %133 = vmatprep.subr.bf16.mxu0 0
  %134 = vmatpush1.bf16.msra.mxu0 0
  %135 = vmatprep.subr.bf16.mxu0 0
  %136 = vmatpush1.bf16.msra.mxu0 0
  %137 = vmatprep.subr.bf16.mxu0 0
  %138 = vmatpush1.bf16.msra.mxu0 0
  %139 = vmatprep.subr.bf16.mxu0 0
  %140 = vmatpush1.bf16.msra.mxu0 0
  %141 = vmatprep.subr.bf16.mxu0 0
  %142 = vmatpush1.bf16.msra.mxu0 0
  %143 = vmatprep.subr.bf16.mxu0 0
  %144 = vmatpush1.bf16.msra.mxu0 0
  %145 = vmatprep.subr.bf16.mxu0 0
  %146 = vmatpush1.bf16.msra.mxu0 0
  %147 = vmatprep.subr.bf16.mxu0 0
  %148 = vmatpush1.bf16.msra.mxu0 0
  %149 = vmatprep.subr.bf16.mxu0 0
  %150 = vmatpush1.bf16.msra.mxu0 0
  %151 = vmatprep.subr.bf16.mxu0 0
  %152 = vmatpush1.bf16.msra.mxu0 0
  %153 = vmatprep.mubr.bf16.mxu0 0
  %154 = vmatmul.mubr.bf16.gmra.mrb[0].mxu0 %v119
  %v155 = vpop.f32.mrb[0].mxu0
  %v156 = vadd.f32 %v95, %v155
  %v157 = vpop.f32.mrb[0].mxu0
  %v158 = vpop.f32.mrb[0].mxu0
  %v159 = vadd.f32 %v98, %v158
  %v160 = vpop.f32.mrb[0].mxu0
  %161 = vdwg.mxu0
  %v162 = vld [vmem:[%s2] sm:$0xff]
  %v163 = vld [vmem:[%s2 + $0x8] sm:$0x3]
  %v164 = vpack.c.bf16 %v163, %v162
  %v165 = vld [vmem:[%s5] sm:$0xf]
  %v166 = vld [vmem:[%s5 + $0x4] sm:$0xf]
  %v167 = vld [vmem:[%s5 + $0x8] sm:$0xf]
  %v168 = vld [vmem:[%s5 + $0xc] sm:$0xf]
  %v173 = vunpack.c.l.b16 %v165
  %v174 = vunpack.c.l.b16 %v166
  %v175 = vunpack.c.l.b16 %v167
  %v176 = vunpack.c.l.b16 %v168
  %v177 = vpack.c.b16 %v174, %v173
  %v178 = vpack.c.b16 %v176, %v175
  %v182 = vsel %vm56, %v164, 0
  %184 = vmatprep.subr.bf16.mxu0 0
  %185 = vmatpush1.bf16.msra.mxu0 %v177
  %186 = vmatprep.subr.bf16.mxu0 0
  %187 = vmatpush1.bf16.msra.mxu0 %v178
  %188 = vmatprep.subr.bf16.mxu0 0
  %189 = vmatpush1.bf16.msra.mxu0 0
  %190 = vmatprep.subr.bf16.mxu0 0
  %191 = vmatpush1.bf16.msra.mxu0 0
  %192 = vmatprep.subr.bf16.mxu0 0
  %193 = vmatpush1.bf16.msra.mxu0 0
  %194 = vmatprep.subr.bf16.mxu0 0
  %195 = vmatpush1.bf16.msra.mxu0 0
  %196 = vmatprep.subr.bf16.mxu0 0
  %197 = vmatpush1.bf16.msra.mxu0 0
  %198 = vmatprep.subr.bf16.mxu0 0
  %199 = vmatpush1.bf16.msra.mxu0 0
  %200 = vmatprep.subr.bf16.mxu0 0
  %201 = vmatpush1.bf16.msra.mxu0 0
  %202 = vmatprep.subr.bf16.mxu0 0
  %203 = vmatpush1.bf16.msra.mxu0 0
  %204 = vmatprep.subr.bf16.mxu0 0
  %205 = vmatpush1.bf16.msra.mxu0 0
  %206 = vmatprep.subr.bf16.mxu0 0
  %207 = vmatpush1.bf16.msra.mxu0 0
  %208 = vmatprep.subr.bf16.mxu0 0
  %209 = vmatpush1.bf16.msra.mxu0 0
  %210 = vmatprep.subr.bf16.mxu0 0
  %211 = vmatpush1.bf16.msra.mxu0 0
  %212 = vmatprep.subr.bf16.mxu0 0
  %213 = vmatpush1.bf16.msra.mxu0 0
  %214 = vmatprep.subr.bf16.mxu0 0
  %215 = vmatpush1.bf16.msra.mxu0 0
  %216 = vmatprep.mubr.bf16.mxu0 0
  %217 = vmatmul.mubr.bf16.gmra.mrb[0].mxu0 %v182
  %v218 = vpop.f32.mrb[0].mxu0
  %v219 = vadd.f32 0.0, %v218
  %v220 = vpop.f32.mrb[0].mxu0
  %v221 = vpop.f32.mrb[0].mxu0
  %v222 = vadd.f32 0.0, %v221
  %v223 = vpop.f32.mrb[0].mxu0
  %224 = vdwg.mxu0
  %v225 = vadd.f32 %v156, %v219
  %v226 = vadd.f32 %v159, %v222
  %v227 = vld [vmem:[%s6] sm:$0x1]
  %v229 = vlaneseq
  %v230 = vshrl.u32 %v229, 7
  %v231 = vsub.s32 0, %v230
  %v232 = vrot.slane %v227, %v231
  %v234 = vadd.f32 %v225, %v232
  %v235 = vadd.f32 %v226, %v232
  %236 = vst.msk [vmem:[%s7] sm:$0xff] %vm56, %v234
  %vm237 = vcmask 254976
  %238 = vst.msk [vmem:[%s7 + $0x8] sm:$0x3] %vm237, %v235
  // Predicated region
  $region30: #{glacnet_forward.19} parent=0 // pred_check
    _
  $region31: #{glacnet_forward.19} parent=0 // pred_check_branch
    %240 = sbr.rel (0) target = $region33
  $region32: #{glacnet_forward.19} parent=0 // pred_region
    _
  $region33: #{glacnet_forward.19} parent=0 // pred_fallthru
    _
  // Predicated region
  $region34: #{glacnet_forward.19} parent=0 // pred_check
    _
  $region35: #{glacnet_forward.19} parent=0 // pred_check_branch
    %242 = sbr.rel (0) target = $region37
  $region36: #{glacnet_forward.19} parent=0 // pred_region
    _
  $region37: #{glacnet_forward.19} parent=0 // pred_fallthru
    _

// kernel: squeeze.1
$region0: #{squeeze.1}
  %s0 = inlined_call_operand.vmem [shape: f32[64], index: 0, kind: input, shape index: {}]
  %s1 = inlined_call_operand.vmem [shape: f32[2,4,8], index: 1, kind: output, shape index: {}]
  $region1: #{squeeze.1} parent=0
    #allocation0 [shape = 'u8[8192]{0}', space=vmem, size = 0x2000, scoped, tag = 'scoped mem for output reshape']
    #allocation1 [shape = 'u8[4096]{0}', space=vmem, size = 0x1000, scoped, tag = 'scoped mem for input reshape']
    %s3 = sshllo.u32 0, 1
    %v4 = vld [vmem:[%s0] sm:%s3]
    %5 = vst [vmem:[#allocation1] sm:%s3] %v4
    %v6 = vld [vmem:[#allocation1] sm:$0x1]
    %vm7 = vcmask 64512
    %8 = vst.msk [vmem:[#allocation0] sm:$0x1] %vm7, %v6
    %v9 = vld [vmem:[#allocation1] sm:$0x1]
    %10 = vrot.lane.b32.xlu0 %v9, 120
    %v11 = vpop.permute.xlu0 %10
    %vm12 = vcmask 64512
    %s13 = scalar_lea.vmem [#allocation0], 1
    %14 = vst.msk [vmem:[%s13] sm:$0x1] %vm12, %v11
    %v15 = vld [vmem:[#allocation1] sm:$0x1]
    %16 = vrot.lane.b32.xlu0 %v15, 112
    %v17 = vpop.permute.xlu0 %16
    %vm18 = vcmask 64512
    %s19 = scalar_lea.vmem [#allocation0], 2
    %20 = vst.msk [vmem:[%s19] sm:$0x1] %vm18, %v17
    %v21 = vld [vmem:[#allocation1] sm:$0x1]
    %22 = vrot.lane.b32.xlu0 %v21, 104
    %v23 = vpop.permute.xlu0 %22
    %vm24 = vcmask 64512
    %s25 = scalar_lea.vmem [#allocation0], 3
    %26 = vst.msk [vmem:[%s25] sm:$0x1] %vm24, %v23
    %v27 = vld [vmem:[#allocation1] sm:$0x1]
    %28 = vrot.lane.b32.xlu0 %v27, 96
    %v29 = vpop.permute.xlu0 %28
    %vm30 = vcmask 64512
    %s31 = scalar_lea.vmem [#allocation0], 8
    %32 = vst.msk [vmem:[%s31] sm:$0x1] %vm30, %v29
    %v33 = vld [vmem:[#allocation1] sm:$0x1]
    %34 = vrot.lane.b32.xlu0 %v33, 88
    %v35 = vpop.permute.xlu0 %34
    %vm36 = vcmask 64512
    %s37 = scalar_lea.vmem [#allocation0], 9
    %38 = vst.msk [vmem:[%s37] sm:$0x1] %vm36, %v35
    %v39 = vld [vmem:[#allocation1] sm:$0x1]
    %40 = vrot.lane.b32.xlu0 %v39, 80
    %v41 = vpop.permute.xlu0 %40
    %vm42 = vcmask 64512
    %s43 = scalar_lea.vmem [#allocation0], 10
    %44 = vst.msk [vmem:[%s43] sm:$0x1] %vm42, %v41
    %v45 = vld [vmem:[#allocation1] sm:$0x1]
    %46 = vrot.lane.b32.xlu0 %v45, 72
    %v47 = vpop.permute.xlu0 %46
    %vm48 = vcmask 64512
    %s49 = scalar_lea.vmem [#allocation0], 11
    %50 = vst.msk [vmem:[%s49] sm:$0x1] %vm48, %v47
    %s52 = sshllo.u32 0, 4
    %v54 = vld [vmem:[#allocation0] sm:%s52]
    %s55 = sshllo.u32 0, 4
    %56 = vst [vmem:[%s1] sm:%s55] %v54
    %s57 = scalar_lea.vmem [#allocation0], 8
    %v58 = vld [vmem:[%s57] sm:%s52]
    %s59 = sshllo.u32 0, 4
    %s60 = scalar_lea.vmem %s1, 4
    %61 = vst [vmem:[%s60] sm:%s59] %v58

// kernel: glacnet_forward.20
$region0: #{glacnet_forward.20}
  #allocation0 [shape = 'u32[]', space=smem, size = 0x4, offset = 0x4, fixed_abs, tag = 'smem constant byte address 0x4 - core index']
  #allocation1 [shape = 'u32[144,128]{1,0:T(1,128)}', space=vmem, size = 0x12000, scoped, tag = 'internal scratch']
  %s0 = inlined_call_operand.vmem [shape: f32[64,32], index: 0, kind: input, shape index: {}]
  %s1 = inlined_call_operand.vmem [shape: bf16[32,128], index: 1, kind: input, shape index: {}]
  %s2 = inlined_call_operand.vmem [shape: f32[1,128], index: 2, kind: input, shape index: {}]
  %s3 = inlined_call_operand.vmem [shape: f32[64,128], index: 3, kind: output, shape index: {}]
  %s4 = sld [smem:[#allocation0]]
  $region22: #{glacnet_forward.20} parent=0
    _
  %s6 = ssub.s32 1, %s4
  %s7 = scalar_select 0, %s6, %s4
  // Predicated region
  $region2: #{glacnet_forward.20} parent=0 // pred_check
    _
  $region3: #{glacnet_forward.20} parent=0 // pred_check_branch
    %9 = sbr.rel (0) target = $region5
  $region4: #{glacnet_forward.20} parent=0 // pred_region
    _
  $region5: #{glacnet_forward.20} parent=0 // pred_fallthru
    _
  // Predicated region
  $region6: #{glacnet_forward.20} parent=0 // pred_check
    _
  $region7: #{glacnet_forward.20} parent=0 // pred_check_branch
    %11 = sbr.rel (0) target = $region9
  $region8: #{glacnet_forward.20} parent=0 // pred_region
    _
  $region9: #{glacnet_forward.20} parent=0 // pred_fallthru
    _
  // Predicated region
  $region10: #{glacnet_forward.20} parent=0 // pred_check
    _
  $region11: #{glacnet_forward.20} parent=0 // pred_check_branch
    %13 = sbr.rel (0) target = $region13
  $region12: #{glacnet_forward.20} parent=0 // pred_region
    _
  $region13: #{glacnet_forward.20} parent=0 // pred_fallthru
    _
  %v15 = vld [vmem:[%s0] sm:$0xff]
  %v16 = vld [vmem:[%s0 + $0x8] sm:$0xff]
  %v17 = vld [vmem:[%s0 + $0x10] sm:$0xff]
  %v18 = vld [vmem:[%s0 + $0x18] sm:$0xff]
  %v19 = vld [vmem:[%s0 + $0x20] sm:$0xff]
  %v20 = vld [vmem:[%s0 + $0x28] sm:$0xff]
  %v21 = vld [vmem:[%s0 + $0x30] sm:$0xff]
  %v22 = vld [vmem:[%s0 + $0x38] sm:$0xff]
  %v23 = vpack.c.bf16 %v16, %v15
  %v24 = vpack.c.bf16 %v18, %v17
  %v25 = vpack.c.bf16 %v20, %v19
  %v26 = vpack.c.bf16 %v22, %v21
  %v27 = vld [vmem:[%s1] sm:$0xf]
  %v28 = vld [vmem:[%s1 + $0x4] sm:$0xf]
  %v29 = vld [vmem:[%s1 + $0x8] sm:$0xf]
  %v30 = vld [vmem:[%s1 + $0xc] sm:$0xf]
  %v31 = vld [vmem:[%s2] sm:$0x1]
  %v33 = vlaneseq
  %v34 = vshrl.u32 %v33, 7
  %v35 = vsub.s32 0, %v34
  %v36 = vrot.slane %v31, %v35
  %v42 = vunpack.c.l.b16 %v27
  %v43 = vunpack.c.l.b16 %v28
  %v44 = vunpack.c.l.b16 %v29
  %v45 = vunpack.c.l.b16 %v30
  %v46 = vpack.c.b16 %v43, %v42
  %v47 = vpack.c.b16 %v45, %v44
  %vm50 = vcmask 261120
  %v52 = vsel %vm50, %v23, 0
  %v55 = vsel %vm50, %v24, 0
  %v58 = vsel %vm50, %v25, 0
  %v61 = vsel %vm50, %v26, 0
  %63 = vmatprep.subr.bf16.mxu0 0
  %64 = vmatpush1.bf16.msra.mxu0 %v46
  %65 = vmatprep.subr.bf16.mxu0 0
  %66 = vmatpush1.bf16.msra.mxu0 %v47
  %67 = vmatprep.subr.bf16.mxu0 0
  %68 = vmatpush1.bf16.msra.mxu0 0
  %69 = vmatprep.subr.bf16.mxu0 0
  %70 = vmatpush1.bf16.msra.mxu0 0
  %71 = vmatprep.subr.bf16.mxu0 0
  %72 = vmatpush1.bf16.msra.mxu0 0
  %73 = vmatprep.subr.bf16.mxu0 0
  %74 = vmatpush1.bf16.msra.mxu0 0
  %75 = vmatprep.subr.bf16.mxu0 0
  %76 = vmatpush1.bf16.msra.mxu0 0
  %77 = vmatprep.subr.bf16.mxu0 0
  %78 = vmatpush1.bf16.msra.mxu0 0
  %79 = vmatprep.subr.bf16.mxu0 0
  %80 = vmatpush1.bf16.msra.mxu0 0
  %81 = vmatprep.subr.bf16.mxu0 0
  %82 = vmatpush1.bf16.msra.mxu0 0
  %83 = vmatprep.subr.bf16.mxu0 0
  %84 = vmatpush1.bf16.msra.mxu0 0
  %85 = vmatprep.subr.bf16.mxu0 0
  %86 = vmatpush1.bf16.msra.mxu0 0
  %87 = vmatprep.subr.bf16.mxu0 0
  %88 = vmatpush1.bf16.msra.mxu0 0
  %89 = vmatprep.subr.bf16.mxu0 0
  %90 = vmatpush1.bf16.msra.mxu0 0
  %91 = vmatprep.subr.bf16.mxu0 0
  %92 = vmatpush1.bf16.msra.mxu0 0
  %93 = vmatprep.subr.bf16.mxu0 0
  %94 = vmatpush1.bf16.msra.mxu0 0
  %95 = vmatprep.mubr.bf16.mxu0 0
  %96 = vmatmul.mubr.bf16.gmra.mrb[0].mxu0 %v52
  %v97 = vpop.f32.mrb[0].mxu0
  %v98 = vadd.f32 %v36, %v97
  %v99 = vpop.f32.mrb[0].mxu0
  %v100 = vpop.f32.mrb[0].mxu0
  %v101 = vadd.f32 %v36, %v100
  %v102 = vpop.f32.mrb[0].mxu0
  %103 = vmatprep.mubr.bf16.mxu0 0
  %104 = vmatmul.mubr.bf16.gmra.mrb[0].mxu0 %v55
  %v105 = vpop.f32.mrb[0].mxu0
  %v106 = vadd.f32 %v36, %v105
  %v107 = vpop.f32.mrb[0].mxu0
  %v108 = vpop.f32.mrb[0].mxu0
  %v109 = vadd.f32 %v36, %v108
  %v110 = vpop.f32.mrb[0].mxu0
  %111 = vmatprep.mubr.bf16.mxu0 0
  %112 = vmatmul.mubr.bf16.gmra.mrb[0].mxu0 %v58
  %v113 = vpop.f32.mrb[0].mxu0
  %v114 = vadd.f32 %v36, %v113
  %v115 = vpop.f32.mrb[0].mxu0
  %v116 = vpop.f32.mrb[0].mxu0
  %v117 = vadd.f32 %v36, %v116
  %v118 = vpop.f32.mrb[0].mxu0
  %119 = vmatprep.mubr.bf16.mxu0 0
  %120 = vmatmul.mubr.bf16.gmra.mrb[0].mxu0 %v61
  %v121 = vpop.f32.mrb[0].mxu0
  %v122 = vadd.f32 %v36, %v121
  %v123 = vpop.f32.mrb[0].mxu0
  %v124 = vpop.f32.mrb[0].mxu0
  %v125 = vadd.f32 %v36, %v124
  %v126 = vpop.f32.mrb[0].mxu0
  %127 = vdwg.mxu0
  %128 = vst [vmem:[%s3] sm:$0xff] %v98
  %129 = vst [vmem:[%s3 + $0x8] sm:$0xff] %v101
  %130 = vst [vmem:[%s3 + $0x10] sm:$0xff] %v106
  %131 = vst [vmem:[%s3 + $0x18] sm:$0xff] %v109
  %132 = vst [vmem:[%s3 + $0x20] sm:$0xff] %v114
  %133 = vst [vmem:[%s3 + $0x28] sm:$0xff] %v117
  %134 = vst [vmem:[%s3 + $0x30] sm:$0xff] %v122
  %135 = vst [vmem:[%s3 + $0x38] sm:$0xff] %v125
  // Predicated region
  $region14: #{glacnet_forward.20} parent=0 // pred_check
    _
  $region15: #{glacnet_forward.20} parent=0 // pred_check_branch
    %137 = sbr.rel (0) target = $region17
  $region16: #{glacnet_forward.20} parent=0 // pred_region
    _
  $region17: #{glacnet_forward.20} parent=0 // pred_fallthru
    _
  // Predicated region
  $region18: #{glacnet_forward.20} parent=0 // pred_check
    _
  $region19: #{glacnet_forward.20} parent=0 // pred_check_branch
    %139 = sbr.rel (0) target = $region21
  $region20: #{glacnet_forward.20} parent=0 // pred_region
    _
  $region21: #{glacnet_forward.20} parent=0 // pred_fallthru
    _

// kernel: glacnet_forward.23
$region0: #{glacnet_forward.23}
  #allocation0 [shape = 'u32[]', space=smem, size = 0x4, offset = 0x4, fixed_abs, tag = 'smem constant byte address 0x4 - core index']
  #allocation1 [shape = 'u32[144,128]{1,0:T(1,128)}', space=vmem, size = 0x12000, scoped, tag = 'internal scratch']
  #allocation2 [shape = 'f32[64,1]{1,0:T(8,128)}', space=vmem, size = 0x8000, scoped, tag = 'scratch operand']
  #allocation3 [shape = 'f32[64,1]{1,0:T(8,128)}', space=vmem, size = 0x8000, scoped, tag = 'scratch operand']
  #allocation4 [shape = 'f32[64,1]{1,0:T(8,128)}', space=vmem, size = 0x8000, scoped, tag = 'scratch operand']
  %s0 = inlined_call_operand.vmem [shape: bf16[64,32], index: 0, kind: input, shape index: {}]
  %s1 = inlined_call_operand.vmem [shape: bf16[32,64], index: 1, kind: input, shape index: {}]
  %s2 = inlined_call_operand.vmem [shape: f32[1,64], index: 2, kind: input, shape index: {}]
  %s3 = inlined_call_operand.vmem [shape: s32[64,1], index: 3, kind: input, shape index: {}]
  %s4 = inlined_call_operand.hbm [shape: bf16[64,64], index: 4, kind: output, shape index: {0}]
  %s5 = inlined_call_operand.vmem [shape: f32[64,1], index: 5, kind: output, shape index: {1}]
  %6 = xla_tuple %s4, %s5
  %s7 = sld [smem:[#allocation0]]
  $region42: #{glacnet_forward.23} parent=0
    _
  %s9 = ssub.s32 1, %s7
  %s10 = scalar_select 0, %s9, %s7
  $region1: #{glacnet_forward.23} parent=0
    #allocation5 [shape = 'u8[16384]{0}', space=vmem, size = 0x4000, scoped, tag = 'output window, operand 0, single buffered']
    #allocation6 [shape = 's32[1]{0}', space=sflag, size = 0x4, scoped, tag = 'scoped memory for glacnet_forward.23']
    %11 = vsyncpa [#allocation6], 0
    // Predicated region
    $region2: #{glacnet_forward.23} parent=1 // pred_check
      _
    $region3: #{glacnet_forward.23} parent=1 // pred_check_branch
      %13 = sbr.rel (0) target = $region5
    $region4: #{glacnet_forward.23} parent=1 // pred_region
      _
    $region5: #{glacnet_forward.23} parent=1 // pred_fallthru
      _
    // Predicated region
    $region6: #{glacnet_forward.23} parent=1 // pred_check
      _
    $region7: #{glacnet_forward.23} parent=1 // pred_check_branch
      %15 = sbr.rel (0) target = $region9
    $region8: #{glacnet_forward.23} parent=1 // pred_region
      _
    $region9: #{glacnet_forward.23} parent=1 // pred_fallthru
      _
    // Predicated region
    $region10: #{glacnet_forward.23} parent=1 // pred_check
      _
    $region11: #{glacnet_forward.23} parent=1 // pred_check_branch
      %17 = sbr.rel (0) target = $region13
    $region12: #{glacnet_forward.23} parent=1 // pred_region
      _
    $region13: #{glacnet_forward.23} parent=1 // pred_fallthru
      _
    // Predicated region
    $region14: #{glacnet_forward.23} parent=1 // pred_check
      _
    $region15: #{glacnet_forward.23} parent=1 // pred_check_branch
      %19 = sbr.rel (0) target = $region17
    $region16: #{glacnet_forward.23} parent=1 // pred_region
      _
    $region17: #{glacnet_forward.23} parent=1 // pred_fallthru
      _
    %v21 = vld [vmem:[%s0] sm:$0xf]
    %v22 = vld [vmem:[%s0 + $0x4] sm:$0xf]
    %v23 = vld [vmem:[%s0 + $0x8] sm:$0xf]
    %v24 = vld [vmem:[%s0 + $0xc] sm:$0xf]
    %v25 = vld [vmem:[%s0 + $0x10] sm:$0xf]
    %v26 = vld [vmem:[%s0 + $0x14] sm:$0xf]
    %v27 = vld [vmem:[%s0 + $0x18] sm:$0xf]
    %v28 = vld [vmem:[%s0 + $0x1c] sm:$0xf]
    %v29 = vld [vmem:[%s1] sm:$0xf]
    %v30 = vld [vmem:[%s1 + $0x4] sm:$0xf]
    %v31 = vld [vmem:[%s1 + $0x8] sm:$0xf]
    %v32 = vld [vmem:[%s1 + $0xc] sm:$0xf]
    %v33 = vld [vmem:[%s2] sm:$0x1]
    %v35 = vlaneseq
    %v36 = vshrl.u32 %v35, 7
    %v37 = vsub.s32 0, %v36
    %v38 = vrot.slane %v33, %v37
    %v48 = vunpack.c.l.b16 %v21
    %v49 = vunpack.c.l.b16 %v22
    %v50 = vunpack.c.l.b16 %v23
    %v51 = vunpack.c.l.b16 %v24
    %v52 = vunpack.c.l.b16 %v25
    %v53 = vunpack.c.l.b16 %v26
    %v54 = vunpack.c.l.b16 %v27
    %v55 = vunpack.c.l.b16 %v28
    %v56 = vpack.c.b16 %v49, %v48
    %v57 = vpack.c.b16 %v51, %v50
    %v58 = vpack.c.b16 %v53, %v52
    %v59 = vpack.c.b16 %v55, %v54
    %v64 = vunpack.c.l.b16 %v29
    %v65 = vunpack.c.l.b16 %v30
    %v66 = vunpack.c.l.b16 %v31
    %v67 = vunpack.c.l.b16 %v32
    %v68 = vpack.c.b16 %v65, %v64
    %v69 = vpack.c.b16 %v67, %v66
    %vm72 = vcmask 261120
    %v74 = vsel %vm72, %v56, 0
    %v77 = vsel %vm72, %v57, 0
    %v80 = vsel %vm72, %v58, 0
    %v83 = vsel %vm72, %v59, 0
    %85 = vmatprep.subr.bf16.mxu0 0
    %86 = vmatpush1.bf16.msra.mxu0 %v68
    %87 = vmatprep.subr.bf16.mxu0 0
    %88 = vmatpush1.bf16.msra.mxu0 %v69
    %89 = vmatprep.subr.bf16.mxu0 0
    %90 = vmatpush1.bf16.msra.mxu0 0
    %91 = vmatprep.subr.bf16.mxu0 0
    %92 = vmatpush1.bf16.msra.mxu0 0
    %93 = vmatprep.subr.bf16.mxu0 0
    %94 = vmatpush1.bf16.msra.mxu0 0
    %95 = vmatprep.subr.bf16.mxu0 0
    %96 = vmatpush1.bf16.msra.mxu0 0
    %97 = vmatprep.subr.bf16.mxu0 0
    %98 = vmatpush1.bf16.msra.mxu0 0
    %99 = vmatprep.subr.bf16.mxu0 0
    %100 = vmatpush1.bf16.msra.mxu0 0
    %101 = vmatprep.subr.bf16.mxu0 0
    %102 = vmatpush1.bf16.msra.mxu0 0
    %103 = vmatprep.subr.bf16.mxu0 0
    %104 = vmatpush1.bf16.msra.mxu0 0
    %105 = vmatprep.subr.bf16.mxu0 0
    %106 = vmatpush1.bf16.msra.mxu0 0
    %107 = vmatprep.subr.bf16.mxu0 0
    %108 = vmatpush1.bf16.msra.mxu0 0
    %109 = vmatprep.subr.bf16.mxu0 0
    %110 = vmatpush1.bf16.msra.mxu0 0
    %111 = vmatprep.subr.bf16.mxu0 0
    %112 = vmatpush1.bf16.msra.mxu0 0
    %113 = vmatprep.subr.bf16.mxu0 0
    %114 = vmatpush1.bf16.msra.mxu0 0
    %115 = vmatprep.subr.bf16.mxu0 0
    %116 = vmatpush1.bf16.msra.mxu0 0
    %117 = vmatprep.mubr.bf16.mxu0 0
    %118 = vmatmul.mubr.bf16.gmra.mrb[0].mxu0 %v74
    %v119 = vpop.f32.mrb[0].mxu0
    %v120 = vadd.f32 %v38, %v119
    %v121 = vpop.f32.mrb[0].mxu0
    %v122 = vpop.f32.mrb[0].mxu0
    %v123 = vadd.f32 %v38, %v122
    %v124 = vpop.f32.mrb[0].mxu0
    %125 = vmatprep.mubr.bf16.mxu0 0
    %126 = vmatmul.mubr.bf16.gmra.mrb[0].mxu0 %v77
    %v127 = vpop.f32.mrb[0].mxu0
    %v128 = vadd.f32 %v38, %v127
    %v129 = vpop.f32.mrb[0].mxu0
    %v130 = vpop.f32.mrb[0].mxu0
    %v131 = vadd.f32 %v38, %v130
    %v132 = vpop.f32.mrb[0].mxu0
    %133 = vmatprep.mubr.bf16.mxu0 0
    %134 = vmatmul.mubr.bf16.gmra.mrb[0].mxu0 %v80
    %v135 = vpop.f32.mrb[0].mxu0
    %v136 = vadd.f32 %v38, %v135
    %v137 = vpop.f32.mrb[0].mxu0
    %v138 = vpop.f32.mrb[0].mxu0
    %v139 = vadd.f32 %v38, %v138
    %v140 = vpop.f32.mrb[0].mxu0
    %141 = vmatprep.mubr.bf16.mxu0 0
    %142 = vmatmul.mubr.bf16.gmra.mrb[0].mxu0 %v83
    %v143 = vpop.f32.mrb[0].mxu0
    %v144 = vadd.f32 %v38, %v143
    %v145 = vpop.f32.mrb[0].mxu0
    %v146 = vpop.f32.mrb[0].mxu0
    %v147 = vadd.f32 %v38, %v146
    %v148 = vpop.f32.mrb[0].mxu0
    %149 = vdwg.mxu0
    %v150 = vpack.c.bf16 %v123, %v120
    %v151 = vpack.c.bf16 %v131, %v128
    %v152 = vpack.c.bf16 %v139, %v136
    %v153 = vpack.c.bf16 %v147, %v144
    %v158 = vunpack.c.l.b16 %v150
    %v159 = vunpack.c.h.b16 %v150
    %v160 = vunpack.c.l.b16 %v151
    %v161 = vunpack.c.h.b16 %v151
    %v162 = vunpack.c.l.b16 %v152
    %v163 = vunpack.c.h.b16 %v152
    %v164 = vunpack.c.l.b16 %v153
    %v165 = vunpack.c.h.b16 %v153
    %v166 = vpack.c.b16 %v158, %v158
    %v167 = vpack.c.b16 %v159, %v159
    %v168 = vpack.c.b16 %v160, %v160
    %v169 = vpack.c.b16 %v161, %v161
    %v170 = vpack.c.b16 %v162, %v162
    %v171 = vpack.c.b16 %v163, %v163
    %v172 = vpack.c.b16 %v164, %v164
    %v173 = vpack.c.b16 %v165, %v165
    %vm182 = vcmask 519168
    %183 = vst.msk [vmem:[#allocation5] sm:$0xf] %vm182, %v166
    %184 = vst.msk [vmem:[#allocation5 + $0x4] sm:$0xf] %vm182, %v167
    %185 = vst.msk [vmem:[#allocation5 + $0x8] sm:$0xf] %vm182, %v168
    %186 = vst.msk [vmem:[#allocation5 + $0xc] sm:$0xf] %vm182, %v169
    %187 = vst.msk [vmem:[#allocation5 + $0x10] sm:$0xf] %vm182, %v170
    %188 = vst.msk [vmem:[#allocation5 + $0x14] sm:$0xf] %vm182, %v171
    %189 = vst.msk [vmem:[#allocation5 + $0x18] sm:$0xf] %vm182, %v172
    %190 = vst.msk [vmem:[#allocation5 + $0x1c] sm:$0xf] %vm182, %v173
    %p191 = scmp.eq.s32.totalorder 0, 0
    // Predicated region
    $region18: #{glacnet_forward.23} parent=1 // pred_check
      %p192 = pneg %p191
    $region19: #{glacnet_forward.23} parent=1 // pred_check_branch
      %194 = sbr.rel (%p192) target = $region21
    $region20: #{glacnet_forward.23} parent=1 // pred_region
      %vm195 = vcmask 7168
      %196 = vst.msk [vmem:[#allocation2] sm:$0xff] %vm195, -inf
      %197 = vst.msk [vmem:[#allocation2 + $0x8] sm:$0xff] %vm195, -inf
      %198 = vst.msk [vmem:[#allocation2 + $0x10] sm:$0xff] %vm195, -inf
      %199 = vst.msk [vmem:[#allocation2 + $0x18] sm:$0xff] %vm195, -inf
      %200 = vst.msk [vmem:[#allocation2 + $0x20] sm:$0xff] %vm195, -inf
      %201 = vst.msk [vmem:[#allocation2 + $0x28] sm:$0xff] %vm195, -inf
      %202 = vst.msk [vmem:[#allocation2 + $0x30] sm:$0xff] %vm195, -inf
      %203 = vst.msk [vmem:[#allocation2 + $0x38] sm:$0xff] %vm195, -inf
      %204 = vst.msk [vmem:[#allocation3] sm:$0xff] %vm195, 0.0
      %205 = vst.msk [vmem:[#allocation3 + $0x8] sm:$0xff] %vm195, 0.0
      %206 = vst.msk [vmem:[#allocation3 + $0x10] sm:$0xff] %vm195, 0.0
      %207 = vst.msk [vmem:[#allocation3 + $0x18] sm:$0xff] %vm195, 0.0
      %208 = vst.msk [vmem:[#allocation3 + $0x20] sm:$0xff] %vm195, 0.0
      %209 = vst.msk [vmem:[#allocation3 + $0x28] sm:$0xff] %vm195, 0.0
      %210 = vst.msk [vmem:[#allocation3 + $0x30] sm:$0xff] %vm195, 0.0
      %211 = vst.msk [vmem:[#allocation3 + $0x38] sm:$0xff] %vm195, 0.0
      %212 = vst.msk [vmem:[#allocation4] sm:$0xff] %vm195, 0.0
      %213 = vst.msk [vmem:[#allocation4 + $0x8] sm:$0xff] %vm195, 0.0
      %214 = vst.msk [vmem:[#allocation4 + $0x10] sm:$0xff] %vm195, 0.0
      %215 = vst.msk [vmem:[#allocation4 + $0x18] sm:$0xff] %vm195, 0.0
      %216 = vst.msk [vmem:[#allocation4 + $0x20] sm:$0xff] %vm195, 0.0
      %217 = vst.msk [vmem:[#allocation4 + $0x28] sm:$0xff] %vm195, 0.0
      %218 = vst.msk [vmem:[#allocation4 + $0x30] sm:$0xff] %vm195, 0.0
      %219 = vst.msk [vmem:[#allocation4 + $0x38] sm:$0xff] %vm195, 0.0
    $region21: #{glacnet_forward.23} parent=1 // pred_fallthru
      _
    %s220 = smul.u32 0, 64
    %v221 = vlaneseq
    %v222 = vand.u32 %v221, 127
    %v223 = vstv %s220
    %v224 = vadd.s32 %v223, %v222
    %v225 = vld [vmem:[%s3] sm:$0xff]
    %v226 = vld [vmem:[%s3 + $0x8] sm:$0xff]
    %v227 = vld [vmem:[%s3 + $0x10] sm:$0xff]
    %v228 = vld [vmem:[%s3 + $0x18] sm:$0xff]
    %v229 = vld [vmem:[%s3 + $0x20] sm:$0xff]
    %v230 = vld [vmem:[%s3 + $0x28] sm:$0xff]
    %v231 = vld [vmem:[%s3 + $0x30] sm:$0xff]
    %v232 = vld [vmem:[%s3 + $0x38] sm:$0xff]
    %233 = vset.pattern.permute.xlu0 0
    %234 = vperm.xlu0 %233, %v225
    %v235 = vpop.permute.xlu0 %234
    %236 = vset.pattern.permute.xlu0 0
    %237 = vperm.xlu0 %236, %v226
    %v238 = vpop.permute.xlu0 %237
    %239 = vset.pattern.permute.xlu0 0
    %240 = vperm.xlu0 %239, %v227
    %v241 = vpop.permute.xlu0 %240
    %242 = vset.pattern.permute.xlu0 0
    %243 = vperm.xlu0 %242, %v228
    %v244 = vpop.permute.xlu0 %243
    %245 = vset.pattern.permute.xlu0 0
    %246 = vperm.xlu0 %245, %v229
    %v247 = vpop.permute.xlu0 %246
    %248 = vset.pattern.permute.xlu0 0
    %249 = vperm.xlu0 %248, %v230
    %v250 = vpop.permute.xlu0 %249
    %251 = vset.pattern.permute.xlu0 0
    %252 = vperm.xlu0 %251, %v231
    %v253 = vpop.permute.xlu0 %252
    %254 = vset.pattern.permute.xlu0 0
    %255 = vperm.xlu0 %254, %v232
    %v256 = vpop.permute.xlu0 %255
    %vm257 = vcmp.eq.s32.totalorder %v224, %v235
    %vm258 = vcmp.eq.s32.totalorder %v224, %v238
    %vm259 = vcmp.eq.s32.totalorder %v224, %v241
    %vm260 = vcmp.eq.s32.totalorder %v224, %v244
    %vm261 = vcmp.eq.s32.totalorder %v224, %v247
    %vm262 = vcmp.eq.s32.totalorder %v224, %v250
    %vm263 = vcmp.eq.s32.totalorder %v224, %v253
    %vm264 = vcmp.eq.s32.totalorder %v224, %v256
    %v265 = vld [vmem:[#allocation4] sm:$0xff]
    %v266 = vld [vmem:[#allocation4 + $0x8] sm:$0xff]
    %v267 = vld [vmem:[#allocation4 + $0x10] sm:$0xff]
    %v268 = vld [vmem:[#allocation4 + $0x18] sm:$0xff]
    %v269 = vld [vmem:[#allocation4 + $0x20] sm:$0xff]
    %v270 = vld [vmem:[#allocation4 + $0x28] sm:$0xff]
    %v271 = vld [vmem:[#allocation4 + $0x30] sm:$0xff]
    %v272 = vld [vmem:[#allocation4 + $0x38] sm:$0xff]
    %v273 = vsel %vm257, %v120, 0.0
    %v274 = vsel %vm258, %v123, 0.0
    %v275 = vsel %vm259, %v128, 0.0
    %v276 = vsel %vm260, %v131, 0.0
    %v277 = vsel %vm261, %v136, 0.0
    %v278 = vsel %vm262, %v139, 0.0
    %v279 = vsel %vm263, %v144, 0.0
    %v280 = vsel %vm264, %v147, 0.0
    %vm281 = vcmask 523264
    %v282 = vsel %vm281, %v273, 0.0
    %283 = vadd.xlane.f32.xlu0 %v282
    %v284 = vpop.xlane.xlu0 %283
    %v285 = vsel %vm281, %v274, 0.0
    %286 = vadd.xlane.f32.xlu0 %v285
    %v287 = vpop.xlane.xlu0 %286
    %v288 = vsel %vm281, %v275, 0.0
    %289 = vadd.xlane.f32.xlu0 %v288
    %v290 = vpop.xlane.xlu0 %289
    %v291 = vsel %vm281, %v276, 0.0
    %292 = vadd.xlane.f32.xlu0 %v291
    %v293 = vpop.xlane.xlu0 %292
    %v294 = vsel %vm281, %v277, 0.0
    %295 = vadd.xlane.f32.xlu0 %v294
    %v296 = vpop.xlane.xlu0 %295
    %v297 = vsel %vm281, %v278, 0.0
    %298 = vadd.xlane.f32.xlu0 %v297
    %v299 = vpop.xlane.xlu0 %298
    %v300 = vsel %vm281, %v279, 0.0
    %301 = vadd.xlane.f32.xlu0 %v300
    %v302 = vpop.xlane.xlu0 %301
    %v303 = vsel %vm281, %v280, 0.0
    %304 = vadd.xlane.f32.xlu0 %v303
    %v305 = vpop.xlane.xlu0 %304
    %v306 = vadd.f32 %v265, %v284
    %v307 = vadd.f32 %v266, %v287
    %v308 = vadd.f32 %v267, %v290
    %v309 = vadd.f32 %v268, %v293
    %v310 = vadd.f32 %v269, %v296
    %v311 = vadd.f32 %v270, %v299
    %v312 = vadd.f32 %v271, %v302
    %v313 = vadd.f32 %v272, %v305
    %vm314 = vcmask 7168
    %315 = vst.msk [vmem:[#allocation4] sm:$0xff] %vm314, %v306
    %316 = vst.msk [vmem:[#allocation4 + $0x8] sm:$0xff] %vm314, %v307
    %317 = vst.msk [vmem:[#allocation4 + $0x10] sm:$0xff] %vm314, %v308
    %318 = vst.msk [vmem:[#allocation4 + $0x18] sm:$0xff] %vm314, %v309
    %319 = vst.msk [vmem:[#allocation4 + $0x20] sm:$0xff] %vm314, %v310
    %320 = vst.msk [vmem:[#allocation4 + $0x28] sm:$0xff] %vm314, %v311
    %321 = vst.msk [vmem:[#allocation4 + $0x30] sm:$0xff] %vm314, %v312
    %322 = vst.msk [vmem:[#allocation4 + $0x38] sm:$0xff] %vm314, %v313
    %v323 = vld [vmem:[#allocation2] sm:$0xff]
    %v324 = vld [vmem:[#allocation2 + $0x8] sm:$0xff]
    %v325 = vld [vmem:[#allocation2 + $0x10] sm:$0xff]
    %v326 = vld [vmem:[#allocation2 + $0x18] sm:$0xff]
    %v327 = vld [vmem:[#allocation2 + $0x20] sm:$0xff]
    %v328 = vld [vmem:[#allocation2 + $0x28] sm:$0xff]
    %v329 = vld [vmem:[#allocation2 + $0x30] sm:$0xff]
    %v330 = vld [vmem:[#allocation2 + $0x38] sm:$0xff]
    %v331 = vsel %vm281, %v120, -inf
    %332 = vmax.xlane.f32.xlu0 %v331
    %v333 = vpop.xlane.xlu0 %332
    %v334 = vsel %vm281, %v123, -inf
    %335 = vmax.xlane.f32.xlu0 %v334
    %v336 = vpop.xlane.xlu0 %335
    %v337 = vsel %vm281, %v128, -inf
    %338 = vmax.xlane.f32.xlu0 %v337
    %v339 = vpop.xlane.xlu0 %338
    %v340 = vsel %vm281, %v131, -inf
    %341 = vmax.xlane.f32.xlu0 %v340
    %v342 = vpop.xlane.xlu0 %341
    %v343 = vsel %vm281, %v136, -inf
    %344 = vmax.xlane.f32.xlu0 %v343
    %v345 = vpop.xlane.xlu0 %344
    %v346 = vsel %vm281, %v139, -inf
    %347 = vmax.xlane.f32.xlu0 %v346
    %v348 = vpop.xlane.xlu0 %347
    %v349 = vsel %vm281, %v144, -inf
    %350 = vmax.xlane.f32.xlu0 %v349
    %v351 = vpop.xlane.xlu0 %350
    %v352 = vsel %vm281, %v147, -inf
    %353 = vmax.xlane.f32.xlu0 %v352
    %v354 = vpop.xlane.xlu0 %353
    %v355 = vmax.f32 %v323, %v333
    %v356 = vmax.f32 %v324, %v336
    %v357 = vmax.f32 %v325, %v339
    %v358 = vmax.f32 %v326, %v342
    %v359 = vmax.f32 %v327, %v345
    %v360 = vmax.f32 %v328, %v348
    %v361 = vmax.f32 %v329, %v351
    %v362 = vmax.f32 %v330, %v354
    %v363 = vld [vmem:[#allocation3] sm:$0xff]
    %v364 = vld [vmem:[#allocation3 + $0x8] sm:$0xff]
    %v365 = vld [vmem:[#allocation3 + $0x10] sm:$0xff]
    %v366 = vld [vmem:[#allocation3 + $0x18] sm:$0xff]
    %v367 = vld [vmem:[#allocation3 + $0x20] sm:$0xff]
    %v368 = vld [vmem:[#allocation3 + $0x28] sm:$0xff]
    %v369 = vld [vmem:[#allocation3 + $0x30] sm:$0xff]
    %v370 = vld [vmem:[#allocation3 + $0x38] sm:$0xff]
    %v371 = vsub.f32 %v323, %v355
    %v372 = vsub.f32 %v324, %v356
    %v373 = vsub.f32 %v325, %v357
    %v374 = vsub.f32 %v326, %v358
    %v375 = vsub.f32 %v327, %v359
    %v376 = vsub.f32 %v328, %v360
    %v377 = vsub.f32 %v329, %v361
    %v378 = vsub.f32 %v330, %v362
    %v379 = vmul.f32 %v371, 1.442695
    %v380 = vpow.pop %v379
    %v381 = vmul.f32 %v372, 1.442695
    %v382 = vpow.pop %v381
    %v383 = vmul.f32 %v373, 1.442695
    %v384 = vpow.pop %v383
    %v385 = vmul.f32 %v374, 1.442695
    %v386 = vpow.pop %v385
    %v387 = vmul.f32 %v375, 1.442695
    %v388 = vpow.pop %v387
    %v389 = vmul.f32 %v376, 1.442695
    %v390 = vpow.pop %v389
    %v391 = vmul.f32 %v377, 1.442695
    %v392 = vpow.pop %v391
    %v393 = vmul.f32 %v378, 1.442695
    %v394 = vpow.pop %v393
    %v395 = vmul.f32 %v363, %v380
    %v396 = vmul.f32 %v364, %v382
    %v397 = vmul.f32 %v365, %v384
    %v398 = vmul.f32 %v366, %v386
    %v399 = vmul.f32 %v367, %v388
    %v400 = vmul.f32 %v368, %v390
    %v401 = vmul.f32 %v369, %v392
    %v402 = vmul.f32 %v370, %v394
    %404 = vset.pattern.permute.xlu0 0
    %405 = vperm.xlu0 %404, %v355
    %v406 = vpop.permute.xlu0 %405
    %409 = vset.pattern.permute.xlu0 0
    %410 = vperm.xlu0 %409, %v356
    %v411 = vpop.permute.xlu0 %410
    %414 = vset.pattern.permute.xlu0 0
    %415 = vperm.xlu0 %414, %v357
    %v416 = vpop.permute.xlu0 %415
    %419 = vset.pattern.permute.xlu0 0
    %420 = vperm.xlu0 %419, %v358
    %v421 = vpop.permute.xlu0 %420
    %424 = vset.pattern.permute.xlu0 0
    %425 = vperm.xlu0 %424, %v359
    %v426 = vpop.permute.xlu0 %425
    %429 = vset.pattern.permute.xlu0 0
    %430 = vperm.xlu0 %429, %v360
    %v431 = vpop.permute.xlu0 %430
    %434 = vset.pattern.permute.xlu0 0
    %435 = vperm.xlu0 %434, %v361
    %v436 = vpop.permute.xlu0 %435
    %439 = vset.pattern.permute.xlu0 0
    %440 = vperm.xlu0 %439, %v362
    %v441 = vpop.permute.xlu0 %440
    %v443 = vsub.f32 %v120, %v406
    %v444 = vsub.f32 %v123, %v411
    %v445 = vsub.f32 %v128, %v416
    %v446 = vsub.f32 %v131, %v421
    %v447 = vsub.f32 %v136, %v426
    %v448 = vsub.f32 %v139, %v431
    %v449 = vsub.f32 %v144, %v436
    %v450 = vsub.f32 %v147, %v441
    %v451 = vmul.f32 %v443, 1.442695
    %v452 = vpow.pop %v451
    %v453 = vmul.f32 %v444, 1.442695
    %v454 = vpow.pop %v453
    %v455 = vmul.f32 %v445, 1.442695
    %v456 = vpow.pop %v455
    %v457 = vmul.f32 %v446, 1.442695
    %v458 = vpow.pop %v457
    %v459 = vmul.f32 %v447, 1.442695
    %v460 = vpow.pop %v459
    %v461 = vmul.f32 %v448, 1.442695
    %v462 = vpow.pop %v461
    %v463 = vmul.f32 %v449, 1.442695
    %v464 = vpow.pop %v463
    %v465 = vmul.f32 %v450, 1.442695
    %v466 = vpow.pop %v465
    %v467 = vsel %vm281, %v452, 0.0
    %468 = vadd.xlane.f32.xlu0 %v467
    %v469 = vpop.xlane.xlu0 %468
    %v470 = vsel %vm281, %v454, 0.0
    %471 = vadd.xlane.f32.xlu0 %v470
    %v472 = vpop.xlane.xlu0 %471
    %v473 = vsel %vm281, %v456, 0.0
    %474 = vadd.xlane.f32.xlu0 %v473
    %v475 = vpop.xlane.xlu0 %474
    %v476 = vsel %vm281, %v458, 0.0
    %477 = vadd.xlane.f32.xlu0 %v476
    %v478 = vpop.xlane.xlu0 %477
    %v479 = vsel %vm281, %v460, 0.0
    %480 = vadd.xlane.f32.xlu0 %v479
    %v481 = vpop.xlane.xlu0 %480
    %v482 = vsel %vm281, %v462, 0.0
    %483 = vadd.xlane.f32.xlu0 %v482
    %v484 = vpop.xlane.xlu0 %483
    %v485 = vsel %vm281, %v464, 0.0
    %486 = vadd.xlane.f32.xlu0 %v485
    %v487 = vpop.xlane.xlu0 %486
    %v488 = vsel %vm281, %v466, 0.0
    %489 = vadd.xlane.f32.xlu0 %v488
    %v490 = vpop.xlane.xlu0 %489
    %v491 = vadd.f32 %v395, %v469
    %v492 = vadd.f32 %v396, %v472
    %v493 = vadd.f32 %v397, %v475
    %v494 = vadd.f32 %v398, %v478
    %v495 = vadd.f32 %v399, %v481
    %v496 = vadd.f32 %v400, %v484
    %v497 = vadd.f32 %v401, %v487
    %v498 = vadd.f32 %v402, %v490
    %499 = vst.msk [vmem:[#allocation3] sm:$0xff] %vm314, %v491
    %500 = vst.msk [vmem:[#allocation3 + $0x8] sm:$0xff] %vm314, %v492
    %501 = vst.msk [vmem:[#allocation3 + $0x10] sm:$0xff] %vm314, %v493
    %502 = vst.msk [vmem:[#allocation3 + $0x18] sm:$0xff] %vm314, %v494
    %503 = vst.msk [vmem:[#allocation3 + $0x20] sm:$0xff] %vm314, %v495
    %504 = vst.msk [vmem:[#allocation3 + $0x28] sm:$0xff] %vm314, %v496
    %505 = vst.msk [vmem:[#allocation3 + $0x30] sm:$0xff] %vm314, %v497
    %506 = vst.msk [vmem:[#allocation3 + $0x38] sm:$0xff] %vm314, %v498
    %507 = vst.msk [vmem:[#allocation2] sm:$0xff] %vm314, %v355
    %508 = vst.msk [vmem:[#allocation2 + $0x8] sm:$0xff] %vm314, %v356
    %509 = vst.msk [vmem:[#allocation2 + $0x10] sm:$0xff] %vm314, %v357
    %510 = vst.msk [vmem:[#allocation2 + $0x18] sm:$0xff] %vm314, %v358
    %511 = vst.msk [vmem:[#allocation2 + $0x20] sm:$0xff] %vm314, %v359
    %512 = vst.msk [vmem:[#allocation2 + $0x28] sm:$0xff] %vm314, %v360
    %513 = vst.msk [vmem:[#allocation2 + $0x30] sm:$0xff] %vm314, %v361
    %514 = vst.msk [vmem:[#allocation2 + $0x38] sm:$0xff] %vm314, %v362
    // Predicated region
    $region22: #{glacnet_forward.23} parent=1 // pred_check
      %p515 = pneg %p191
    $region23: #{glacnet_forward.23} parent=1 // pred_check_branch
      %517 = sbr.rel (%p515) target = $region25
    $region24: #{glacnet_forward.23} parent=1 // pred_region
      %v518 = vld [vmem:[#allocation2] sm:$0xff]
      %v519 = vld [vmem:[#allocation2 + $0x8] sm:$0xff]
      %v520 = vld [vmem:[#allocation2 + $0x10] sm:$0xff]
      %v521 = vld [vmem:[#allocation2 + $0x18] sm:$0xff]
      %v522 = vld [vmem:[#allocation2 + $0x20] sm:$0xff]
      %v523 = vld [vmem:[#allocation2 + $0x28] sm:$0xff]
      %v524 = vld [vmem:[#allocation2 + $0x30] sm:$0xff]
      %v525 = vld [vmem:[#allocation2 + $0x38] sm:$0xff]
      %v526 = vld [vmem:[#allocation3] sm:$0xff]
      %v527 = vld [vmem:[#allocation3 + $0x8] sm:$0xff]
      %v528 = vld [vmem:[#allocation3 + $0x10] sm:$0xff]
      %v529 = vld [vmem:[#allocation3 + $0x18] sm:$0xff]
      %v530 = vld [vmem:[#allocation3 + $0x20] sm:$0xff]
      %v531 = vld [vmem:[#allocation3 + $0x28] sm:$0xff]
      %v532 = vld [vmem:[#allocation3 + $0x30] sm:$0xff]
      %v533 = vld [vmem:[#allocation3 + $0x38] sm:$0xff]
      %v534 = vlog2.pop %v526
      %v535 = vmul.f32 %v534, 0.6931472
      %v536 = vlog2.pop %v527
      %v537 = vmul.f32 %v536, 0.6931472
      %v538 = vlog2.pop %v528
      %v539 = vmul.f32 %v538, 0.6931472
      %v540 = vlog2.pop %v529
      %v541 = vmul.f32 %v540, 0.6931472
      %v542 = vlog2.pop %v530
      %v543 = vmul.f32 %v542, 0.6931472
      %v544 = vlog2.pop %v531
      %v545 = vmul.f32 %v544, 0.6931472
      %v546 = vlog2.pop %v532
      %v547 = vmul.f32 %v546, 0.6931472
      %v548 = vlog2.pop %v533
      %v549 = vmul.f32 %v548, 0.6931472
      %v550 = vadd.f32 %v518, %v535
      %v551 = vadd.f32 %v519, %v537
      %v552 = vadd.f32 %v520, %v539
      %v553 = vadd.f32 %v521, %v541
      %v554 = vadd.f32 %v522, %v543
      %v555 = vadd.f32 %v523, %v545
      %v556 = vadd.f32 %v524, %v547
      %v557 = vadd.f32 %v525, %v549
      %v558 = vld [vmem:[#allocation4] sm:$0xff]
      %v559 = vld [vmem:[#allocation4 + $0x8] sm:$0xff]
      %v560 = vld [vmem:[#allocation4 + $0x10] sm:$0xff]
      %v561 = vld [vmem:[#allocation4 + $0x18] sm:$0xff]
      %v562 = vld [vmem:[#allocation4 + $0x20] sm:$0xff]
      %v563 = vld [vmem:[#allocation4 + $0x28] sm:$0xff]
      %v564 = vld [vmem:[#allocation4 + $0x30] sm:$0xff]
      %v565 = vld [vmem:[#allocation4 + $0x38] sm:$0xff]
      %v566 = vsub.f32 %v550, %v558
      %v567 = vsub.f32 %v551, %v559
      %v568 = vsub.f32 %v552, %v560
      %v569 = vsub.f32 %v553, %v561
      %v570 = vsub.f32 %v554, %v562
      %v571 = vsub.f32 %v555, %v563
      %v572 = vsub.f32 %v556, %v564
      %v573 = vsub.f32 %v557, %v565
      %574 = vst.msk [vmem:[%s5] sm:$0xff] %vm314, %v566
      %575 = vst.msk [vmem:[%s5 + $0x8] sm:$0xff] %vm314, %v567
      %576 = vst.msk [vmem:[%s5 + $0x10] sm:$0xff] %vm314, %v568
      %577 = vst.msk [vmem:[%s5 + $0x18] sm:$0xff] %vm314, %v569
      %578 = vst.msk [vmem:[%s5 + $0x20] sm:$0xff] %vm314, %v570
      %579 = vst.msk [vmem:[%s5 + $0x28] sm:$0xff] %vm314, %v571
      %580 = vst.msk [vmem:[%s5 + $0x30] sm:$0xff] %vm314, %v572
      %581 = vst.msk [vmem:[%s5 + $0x38] sm:$0xff] %vm314, %v573
    $region25: #{glacnet_forward.23} parent=1 // pred_fallthru
      _
    // Predicated region
    $region26: #{glacnet_forward.23} parent=1 // pred_check
      _
    $region27: #{glacnet_forward.23} parent=1 // pred_check_branch
      %583 = sbr.rel (0) target = $region29
    $region28: #{glacnet_forward.23} parent=1 // pred_region
      %s585 = ssub.s32 512, 512
      %586 = vsyncadd [#allocation6], %s585
      %s587 = sshll.u32 [#allocation5], 4
      %s588 = int_to_ptr.vmem [resolvable:$true] %s587
      %593 = dma.vmem_to_hbm [thread:$0]  %s588, 512, %s4, [#allocation6], 64, 64, 4
    $region29: #{glacnet_forward.23} parent=1 // pred_fallthru
      _
    // Predicated region
    $region30: #{glacnet_forward.23} parent=1 // pred_check
      _
    $region31: #{glacnet_forward.23} parent=1 // pred_check_branch
      %595 = sbr.rel (0) target = $region33
    $region32: #{glacnet_forward.23} parent=1 // pred_region
      _
    $region33: #{glacnet_forward.23} parent=1 // pred_fallthru
      _
    // Predicated region
    $region34: #{glacnet_forward.23} parent=1 // pred_check
      _
    $region35: #{glacnet_forward.23} parent=1 // pred_check_branch
      %597 = sbr.rel (0) target = $region37
    $region36: #{glacnet_forward.23} parent=1 // pred_region
      %598 = dma.done [#allocation6], 512
    $region37: #{glacnet_forward.23} parent=1 // pred_fallthru
      _
    // Predicated region
    $region38: #{glacnet_forward.23} parent=1 // pred_check
      _
    $region39: #{glacnet_forward.23} parent=1 // pred_check_branch
      %600 = sbr.rel (0) target = $region41
    $region40: #{glacnet_forward.23} parent=1 // pred_region
      _
    $region41: #{glacnet_forward.23} parent=1 // pred_fallthru
      _
    %601 = vsyncpa [#allocation6], 1

// kernel: glacnet_forward.22
$region0: #{glacnet_forward.22}
  #allocation0 [shape = 'u32[]', space=smem, size = 0x4, offset = 0x4, fixed_abs, tag = 'smem constant byte address 0x4 - core index']
  #allocation1 [shape = 'u32[144,128]{1,0:T(1,128)}', space=vmem, size = 0x12000, scoped, tag = 'internal scratch']
  #allocation2 [shape = 'f32[8,32]{1,0:T(8,128)}', space=vmem, size = 0x1000, scoped, tag = 'scratch operand']
  #allocation3 [shape = 'f32[8,32]{1,0:T(8,128)}', space=vmem, size = 0x1000, scoped, tag = 'scratch operand']
  #allocation4 [shape = 'bf16[8,8,32]{2,1,0:T(8,128)(2,1)}', space=vmem, size = 0x4000, scoped, tag = 'scratch operand']
  %s0 = inlined_call_operand.vmem [shape: f32[8,8,128], index: 0, kind: input, shape index: {}]
  %s1 = inlined_call_operand.vmem [shape: f32[8,128], index: 1, kind: input, shape index: {}]
  %s2 = inlined_call_operand.vmem [shape: bf16[32,128], index: 2, kind: input, shape index: {}]
  %s3 = inlined_call_operand.vmem [shape: bf16[32,128], index: 3, kind: input, shape index: {}]
  %s4 = inlined_call_operand.vmem [shape: f32[1,128], index: 4, kind: input, shape index: {}]
  %s5 = inlined_call_operand.vmem [shape: bf16[32,128], index: 5, kind: input, shape index: {}]
  %s6 = inlined_call_operand.vmem [shape: bf16[8,8,32], index: 6, kind: output, shape index: {}]
  %s7 = sld [smem:[#allocation0]]
  $region34: #{glacnet_forward.22} parent=0
    _
  %s9 = ssub.s32 1, %s7
  %s10 = scalar_select 0, %s9, %s7
  // Predicated region
  $region2: #{glacnet_forward.22} parent=0 // pred_check
    _
  $region3: #{glacnet_forward.22} parent=0 // pred_check_branch
    %12 = sbr.rel (0) target = $region5
  $region4: #{glacnet_forward.22} parent=0 // pred_region
    _
  $region5: #{glacnet_forward.22} parent=0 // pred_fallthru
    _
  // Predicated region
  $region6: #{glacnet_forward.22} parent=0 // pred_check
    _
  $region7: #{glacnet_forward.22} parent=0 // pred_check_branch
    %14 = sbr.rel (0) target = $region9
  $region8: #{glacnet_forward.22} parent=0 // pred_region
    _
  $region9: #{glacnet_forward.22} parent=0 // pred_fallthru
    _
  // Predicated region
  $region10: #{glacnet_forward.22} parent=0 // pred_check
    _
  $region11: #{glacnet_forward.22} parent=0 // pred_check_branch
    %16 = sbr.rel (0) target = $region13
  $region12: #{glacnet_forward.22} parent=0 // pred_region
    _
  $region13: #{glacnet_forward.22} parent=0 // pred_fallthru
    _
  // Predicated region
  $region14: #{glacnet_forward.22} parent=0 // pred_check
    _
  $region15: #{glacnet_forward.22} parent=0 // pred_check_branch
    %18 = sbr.rel (0) target = $region17
  $region16: #{glacnet_forward.22} parent=0 // pred_region
    _
  $region17: #{glacnet_forward.22} parent=0 // pred_fallthru
    _
  // Predicated region
  $region18: #{glacnet_forward.22} parent=0 // pred_check
    _
  $region19: #{glacnet_forward.22} parent=0 // pred_check_branch
    %20 = sbr.rel (0) target = $region21
  $region20: #{glacnet_forward.22} parent=0 // pred_region
    _
  $region21: #{glacnet_forward.22} parent=0 // pred_fallthru
    _
  // Predicated region
  $region22: #{glacnet_forward.22} parent=0 // pred_check
    _
  $region23: #{glacnet_forward.22} parent=0 // pred_check_branch
    %22 = sbr.rel (0) target = $region25
  $region24: #{glacnet_forward.22} parent=0 // pred_region
    _
  $region25: #{glacnet_forward.22} parent=0 // pred_fallthru
    _
  %vm24 = vcmask 261120
  %25 = vst.msk [vmem:[#allocation2] sm:$0xff] %vm24, 0.0
  %26 = vst.msk [vmem:[#allocation3] sm:$0xff] %vm24, 0.0
  %v27 = vld [vmem:[%s0] sm:$0xff]
  %v28 = vld [vmem:[%s1] sm:$0xff]
  %v29 = vadd.f32 %v27, %v28
  %v30 = vld [vmem:[#allocation2] sm:$0xff]
  %v31 = vpack.c.bf16 %v30, %v30
  %v32 = vld [vmem:[%s2] sm:$0xf]
  %v33 = vld [vmem:[%s2 + $0x4] sm:$0xf]
  %v34 = vld [vmem:[%s2 + $0x8] sm:$0xf]
  %v35 = vld [vmem:[%s2 + $0xc] sm:$0xf]
  %v40 = vunpack.c.l.b16 %v32
  %v41 = vunpack.c.l.b16 %v33
  %v42 = vunpack.c.l.b16 %v34
  %v43 = vunpack.c.l.b16 %v35
  %v44 = vpack.c.b16 %v41, %v40
  %v45 = vpack.c.b16 %v43, %v42
  %v49 = vsel %vm24, %v31, 0
  %51 = vmatprep.subr.bf16.mxu0 0
  %52 = vmatpush1.bf16.msra.mxu0 %v44
  %53 = vmatprep.subr.bf16.mxu0 0
  %54 = vmatpush1.bf16.msra.mxu0 %v45
  %55 = vmatprep.subr.bf16.mxu0 0
  %56 = vmatpush1.bf16.msra.mxu0 0
  %57 = vmatprep.subr.bf16.mxu0 0
  %58 = vmatpush1.bf16.msra.mxu0 0
  %59 = vmatprep.subr.bf16.mxu0 0
  %60 = vmatpush1.bf16.msra.mxu0 0
  %61 = vmatprep.subr.bf16.mxu0 0
  %62 = vmatpush1.bf16.msra.mxu0 0
  %63 = vmatprep.subr.bf16.mxu0 0
  %64 = vmatpush1.bf16.msra.mxu0 0
  %65 = vmatprep.subr.bf16.mxu0 0
  %66 = vmatpush1.bf16.msra.mxu0 0
  %67 = vmatprep.subr.bf16.mxu0 0
  %68 = vmatpush1.bf16.msra.mxu0 0
  %69 = vmatprep.subr.bf16.mxu0 0
  %70 = vmatpush1.bf16.msra.mxu0 0
  %71 = vmatprep.subr.bf16.mxu0 0
  %72 = vmatpush1.bf16.msra.mxu0 0
  %73 = vmatprep.subr.bf16.mxu0 0
  %74 = vmatpush1.bf16.msra.mxu0 0
  %75 = vmatprep.subr.bf16.mxu0 0
  %76 = vmatpush1.bf16.msra.mxu0 0
  %77 = vmatprep.subr.bf16.mxu0 0
  %78 = vmatpush1.bf16.msra.mxu0 0
  %79 = vmatprep.subr.bf16.mxu0 0
  %80 = vmatpush1.bf16.msra.mxu0 0
  %81 = vmatprep.subr.bf16.mxu0 0
  %82 = vmatpush1.bf16.msra.mxu0 0
  %83 = vmatprep.mubr.bf16.mxu0 0
  %84 = vmatmul.mubr.bf16.gmra.mrb[0].mxu0 %v49
  %v85 = vpop.f32.mrb[0].mxu0
  %v86 = vadd.f32 0.0, %v85
  %v87 = vpop.f32.mrb[0].mxu0
  %v88 = vpop.f32.mrb[0].mxu0
  %v89 = vpop.f32.mrb[0].mxu0
  %90 = vdwg.mxu0
  %v91 = vadd.f32 %v29, %v86
  %v92 = vld [vmem:[#allocation3] sm:$0xff]
  %v93 = vxor.u32 %v91, 2147483648
  %v94 = vmul.f32 %v93, 1.442695
  %v95 = vpow.pop %v94
  %v96 = vadd.f32 %v95, 1.0
  %v97 = vrcp.pop %v96
  %v98 = vmul.f32 1.0, %v97
  %v99 = vtanh.pop %v91
  %101 = vrot.lane.b32.xlu0 %v92, 32
  %v102 = vpop.permute.xlu0 %101
  %v104 = vmul.f32 %v98, %v102
  %106 = vrot.lane.b32.xlu0 %v99, 64
  %v107 = vpop.permute.xlu0 %106
  %v109 = vmul.f32 %v98, %v107
  %111 = vrot.lane.b32.xlu0 %v109, 32
  %v112 = vpop.permute.xlu0 %111
  %v114 = vadd.f32 %v104, %v112
  %v115 = vtanh.pop %v114
  %117 = vrot.lane.b32.xlu0 %v115, 64
  %v118 = vpop.permute.xlu0 %117
  %v120 = vmul.f32 %v98, %v118
  %122 = vrot.lane.b32.xlu0 %v120, 32
  %v123 = vpop.permute.xlu0 %122
  %125 = vst.msk [vmem:[#allocation2] sm:$0xff] %vm24, %v123
  %127 = vrot.lane.b32.xlu0 %v114, 96
  %v128 = vpop.permute.xlu0 %127
  %130 = vst.msk [vmem:[#allocation3] sm:$0xff] %vm24, %v128
  %v131 = vpack.c.bf16 %v120, %v120
  %v133 = vunpack.c.l.b16 %v131
  %v134 = vpack.c.b16 %v133, %v133
  %135 = vrot.lane.b32.xlu0 %v134, 32
  %v136 = vpop.permute.xlu0 %135
  %vm138 = vcmask 257024
  %139 = vst.msk [vmem:[#allocation4] sm:$0xf] %vm138, %v136
  %s140 = scalar_lea.vmem %s0, 8
  %v141 = vld [vmem:[%s140] sm:$0xff]
  %v142 = vld [vmem:[%s1] sm:$0xff]
  %v143 = vadd.f32 %v141, %v142
  %v144 = vld [vmem:[#allocation2] sm:$0xff]
  %v145 = vpack.c.bf16 %v144, %v144
  %v146 = vld [vmem:[%s2] sm:$0xf]
  %v147 = vld [vmem:[%s2 + $0x4] sm:$0xf]
  %v148 = vld [vmem:[%s2 + $0x8] sm:$0xf]
  %v149 = vld [vmem:[%s2 + $0xc] sm:$0xf]
  %v154 = vunpack.c.l.b16 %v146
  %v155 = vunpack.c.l.b16 %v147
  %v156 = vunpack.c.l.b16 %v148
  %v157 = vunpack.c.l.b16 %v149
  %v158 = vpack.c.b16 %v155, %v154
  %v159 = vpack.c.b16 %v157, %v156
  %v163 = vsel %vm24, %v145, 0
  %165 = vmatprep.subr.bf16.mxu0 0
  %166 = vmatpush1.bf16.msra.mxu0 %v158
  %167 = vmatprep.subr.bf16.mxu0 0
  %168 = vmatpush1.bf16.msra.mxu0 %v159
  %169 = vmatprep.subr.bf16.mxu0 0
  %170 = vmatpush1.bf16.msra.mxu0 0
  %171 = vmatprep.subr.bf16.mxu0 0
  %172 = vmatpush1.bf16.msra.mxu0 0
  %173 = vmatprep.subr.bf16.mxu0 0
  %174 = vmatpush1.bf16.msra.mxu0 0
  %175 = vmatprep.subr.bf16.mxu0 0
  %176 = vmatpush1.bf16.msra.mxu0 0
  %177 = vmatprep.subr.bf16.mxu0 0
  %178 = vmatpush1.bf16.msra.mxu0 0
  %179 = vmatprep.subr.bf16.mxu0 0
  %180 = vmatpush1.bf16.msra.mxu0 0
  %181 = vmatprep.subr.bf16.mxu0 0
  %182 = vmatpush1.bf16.msra.mxu0 0
  %183 = vmatprep.subr.bf16.mxu0 0
  %184 = vmatpush1.bf16.msra.mxu0 0
  %185 = vmatprep.subr.bf16.mxu0 0
  %186 = vmatpush1.bf16.msra.mxu0 0
  %187 = vmatprep.subr.bf16.mxu0 0
  %188 = vmatpush1.bf16.msra.mxu0 0
  %189 = vmatprep.subr.bf16.mxu0 0
  %190 = vmatpush1.bf16.msra.mxu0 0
  %191 = vmatprep.subr.bf16.mxu0 0
  %192 = vmatpush1.bf16.msra.mxu0 0
  %193 = vmatprep.subr.bf16.mxu0 0
  %194 = vmatpush1.bf16.msra.mxu0 0
  %195 = vmatprep.subr.bf16.mxu0 0
  %196 = vmatpush1.bf16.msra.mxu0 0
  %197 = vmatprep.mubr.bf16.mxu0 0
  %198 = vmatmul.mubr.bf16.gmra.mrb[0].mxu0 %v163
  %v199 = vpop.f32.mrb[0].mxu0
  %v200 = vadd.f32 0.0, %v199
  %v201 = vpop.f32.mrb[0].mxu0
  %v202 = vpop.f32.mrb[0].mxu0
  %v203 = vpop.f32.mrb[0].mxu0
  %204 = vdwg.mxu0
  %v205 = vadd.f32 %v143, %v200
  %v206 = vld [vmem:[#allocation3] sm:$0xff]
  %v207 = vxor.u32 %v205, 2147483648
  %v208 = vmul.f32 %v207, 1.442695
  %v209 = vpow.pop %v208
  %v210 = vadd.f32 %v209, 1.0
  %v211 = vrcp.pop %v210
  %v212 = vmul.f32 1.0, %v211
  %v213 = vtanh.pop %v205
  %215 = vrot.lane.b32.xlu0 %v206, 32
  %v216 = vpop.permute.xlu0 %215
  %v218 = vmul.f32 %v212, %v216
  %220 = vrot.lane.b32.xlu0 %v213, 64
  %v221 = vpop.permute.xlu0 %220
  %v223 = vmul.f32 %v212, %v221
  %225 = vrot.lane.b32.xlu0 %v223, 32
  %v226 = vpop.permute.xlu0 %225
  %v228 = vadd.f32 %v218, %v226
  %v229 = vtanh.pop %v228
  %231 = vrot.lane.b32.xlu0 %v229, 64
  %v232 = vpop.permute.xlu0 %231
  %v234 = vmul.f32 %v212, %v232
  %236 = vrot.lane.b32.xlu0 %v234, 32
  %v237 = vpop.permute.xlu0 %236
  %239 = vst.msk [vmem:[#allocation2] sm:$0xff] %vm24, %v237
  %241 = vrot.lane.b32.xlu0 %v228, 96
  %v242 = vpop.permute.xlu0 %241
  %244 = vst.msk [vmem:[#allocation3] sm:$0xff] %vm24, %v242
  %v245 = vpack.c.bf16 %v234, %v234
  %v247 = vunpack.c.l.b16 %v245
  %v248 = vpack.c.b16 %v247, %v247
  %249 = vrot.lane.b32.xlu0 %v248, 32
  %v250 = vpop.permute.xlu0 %249
  %s252 = scalar_lea.vmem [#allocation4], 4
  %253 = vst.msk [vmem:[%s252] sm:$0xf] %vm138, %v250
  %s254 = scalar_lea.vmem %s0, 16
  %v255 = vld [vmem:[%s254] sm:$0xff]
  %v256 = vld [vmem:[%s1] sm:$0xff]
  %v257 = vadd.f32 %v255, %v256
  %v258 = vld [vmem:[#allocation2] sm:$0xff]
  %v259 = vpack.c.bf16 %v258, %v258
  %v260 = vld [vmem:[%s2] sm:$0xf]
  %v261 = vld [vmem:[%s2 + $0x4] sm:$0xf]
  %v262 = vld [vmem:[%s2 + $0x8] sm:$0xf]
  %v263 = vld [vmem:[%s2 + $0xc] sm:$0xf]
  %v268 = vunpack.c.l.b16 %v260
  %v269 = vunpack.c.l.b16 %v261
  %v270 = vunpack.c.l.b16 %v262
  %v271 = vunpack.c.l.b16 %v263
  %v272 = vpack.c.b16 %v269, %v268
  %v273 = vpack.c.b16 %v271, %v270
  %v277 = vsel %vm24, %v259, 0
  %279 = vmatprep.subr.bf16.mxu0 0
  %280 = vmatpush1.bf16.msra.mxu0 %v272
  %281 = vmatprep.subr.bf16.mxu0 0
  %282 = vmatpush1.bf16.msra.mxu0 %v273
  %283 = vmatprep.subr.bf16.mxu0 0
  %284 = vmatpush1.bf16.msra.mxu0 0
  %285 = vmatprep.subr.bf16.mxu0 0
  %286 = vmatpush1.bf16.msra.mxu0 0
  %287 = vmatprep.subr.bf16.mxu0 0
  %288 = vmatpush1.bf16.msra.mxu0 0
  %289 = vmatprep.subr.bf16.mxu0 0
  %290 = vmatpush1.bf16.msra.mxu0 0
  %291 = vmatprep.subr.bf16.mxu0 0
  %292 = vmatpush1.bf16.msra.mxu0 0
  %293 = vmatprep.subr.bf16.mxu0 0
  %294 = vmatpush1.bf16.msra.mxu0 0
  %295 = vmatprep.subr.bf16.mxu0 0
  %296 = vmatpush1.bf16.msra.mxu0 0
  %297 = vmatprep.subr.bf16.mxu0 0
  %298 = vmatpush1.bf16.msra.mxu0 0
  %299 = vmatprep.subr.bf16.mxu0 0
  %300 = vmatpush1.bf16.msra.mxu0 0
  %301 = vmatprep.subr.bf16.mxu0 0
  %302 = vmatpush1.bf16.msra.mxu0 0
  %303 = vmatprep.subr.bf16.mxu0 0
  %304 = vmatpush1.bf16.msra.mxu0 0
  %305 = vmatprep.subr.bf16.mxu0 0
  %306 = vmatpush1.bf16.msra.mxu0 0
  %307 = vmatprep.subr.bf16.mxu0 0
  %308 = vmatpush1.bf16.msra.mxu0 0
  %309 = vmatprep.subr.bf16.mxu0 0
  %310 = vmatpush1.bf16.msra.mxu0 0
  %311 = vmatprep.mubr.bf16.mxu0 0
  %312 = vmatmul.mubr.bf16.gmra.mrb[0].mxu0 %v277
  %v313 = vpop.f32.mrb[0].mxu0
  %v314 = vadd.f32 0.0, %v313
  %v315 = vpop.f32.mrb[0].mxu0
  %v316 = vpop.f32.mrb[0].mxu0
  %v317 = vpop.f32.mrb[0].mxu0
  %318 = vdwg.mxu0
  %v319 = vadd.f32 %v257, %v314
  %v320 = vld [vmem:[#allocation3] sm:$0xff]
  %v321 = vxor.u32 %v319, 2147483648
  %v322 = vmul.f32 %v321, 1.442695
  %v323 = vpow.pop %v322
  %v324 = vadd.f32 %v323, 1.0
  %v325 = vrcp.pop %v324
  %v326 = vmul.f32 1.0, %v325
  %v327 = vtanh.pop %v319
  %329 = vrot.lane.b32.xlu0 %v320, 32
  %v330 = vpop.permute.xlu0 %329
  %v332 = vmul.f32 %v326, %v330
  %334 = vrot.lane.b32.xlu0 %v327, 64
  %v335 = vpop.permute.xlu0 %334
  %v337 = vmul.f32 %v326, %v335
  %339 = vrot.lane.b32.xlu0 %v337, 32
  %v340 = vpop.permute.xlu0 %339
  %v342 = vadd.f32 %v332, %v340
  %v343 = vtanh.pop %v342
  %345 = vrot.lane.b32.xlu0 %v343, 64
  %v346 = vpop.permute.xlu0 %345
  %v348 = vmul.f32 %v326, %v346
  %350 = vrot.lane.b32.xlu0 %v348, 32
  %v351 = vpop.permute.xlu0 %350
  %353 = vst.msk [vmem:[#allocation2] sm:$0xff] %vm24, %v351
  %355 = vrot.lane.b32.xlu0 %v342, 96
  %v356 = vpop.permute.xlu0 %355
  %358 = vst.msk [vmem:[#allocation3] sm:$0xff] %vm24, %v356
  %v359 = vpack.c.bf16 %v348, %v348
  %v361 = vunpack.c.l.b16 %v359
  %v362 = vpack.c.b16 %v361, %v361
  %363 = vrot.lane.b32.xlu0 %v362, 32
  %v364 = vpop.permute.xlu0 %363
  %s366 = scalar_lea.vmem [#allocation4], 8
  %367 = vst.msk [vmem:[%s366] sm:$0xf] %vm138, %v364
  %s368 = scalar_lea.vmem %s0, 24
  %v369 = vld [vmem:[%s368] sm:$0xff]
  %v370 = vld [vmem:[%s1] sm:$0xff]
  %v371 = vadd.f32 %v369, %v370
  %v372 = vld [vmem:[#allocation2] sm:$0xff]
  %v373 = vpack.c.bf16 %v372, %v372
  %v374 = vld [vmem:[%s2] sm:$0xf]
  %v375 = vld [vmem:[%s2 + $0x4] sm:$0xf]
  %v376 = vld [vmem:[%s2 + $0x8] sm:$0xf]
  %v377 = vld [vmem:[%s2 + $0xc] sm:$0xf]
  %v382 = vunpack.c.l.b16 %v374
  %v383 = vunpack.c.l.b16 %v375
  %v384 = vunpack.c.l.b16 %v376
  %v385 = vunpack.c.l.b16 %v377
  %v386 = vpack.c.b16 %v383, %v382
  %v387 = vpack.c.b16 %v385, %v384
  %v391 = vsel %vm24, %v373, 0
  %393 = vmatprep.subr.bf16.mxu0 0
  %394 = vmatpush1.bf16.msra.mxu0 %v386
  %395 = vmatprep.subr.bf16.mxu0 0
  %396 = vmatpush1.bf16.msra.mxu0 %v387
  %397 = vmatprep.subr.bf16.mxu0 0
  %398 = vmatpush1.bf16.msra.mxu0 0
  %399 = vmatprep.subr.bf16.mxu0 0
  %400 = vmatpush1.bf16.msra.mxu0 0
  %401 = vmatprep.subr.bf16.mxu0 0
  %402 = vmatpush1.bf16.msra.mxu0 0
  %403 = vmatprep.subr.bf16.mxu0 0
  %404 = vmatpush1.bf16.msra.mxu0 0
  %405 = vmatprep.subr.bf16.mxu0 0
  %406 = vmatpush1.bf16.msra.mxu0 0
  %407 = vmatprep.subr.bf16.mxu0 0
  %408 = vmatpush1.bf16.msra.mxu0 0
  %409 = vmatprep.subr.bf16.mxu0 0
  %410 = vmatpush1.bf16.msra.mxu0 0
  %411 = vmatprep.subr.bf16.mxu0 0
  %412 = vmatpush1.bf16.msra.mxu0 0
  %413 = vmatprep.subr.bf16.mxu0 0
  %414 = vmatpush1.bf16.msra.mxu0 0
  %415 = vmatprep.subr.bf16.mxu0 0
  %416 = vmatpush1.bf16.msra.mxu0 0
  %417 = vmatprep.subr.bf16.mxu0 0
  %418 = vmatpush1.bf16.msra.mxu0 0
  %419 = vmatprep.subr.bf16.mxu0 0
  %420 = vmatpush1.bf16.msra.mxu0 0
  %421 = vmatprep.subr.bf16.mxu0 0
  %422 = vmatpush1.bf16.msra.mxu0 0
  %423 = vmatprep.subr.bf16.mxu0 0
  %424 = vmatpush1.bf16.msra.mxu0 0
  %425 = vmatprep.mubr.bf16.mxu0 0
  %426 = vmatmul.mubr.bf16.gmra.mrb[0].mxu0 %v391
  %v427 = vpop.f32.mrb[0].mxu0
  %v428 = vadd.f32 0.0, %v427
  %v429 = vpop.f32.mrb[0].mxu0
  %v430 = vpop.f32.mrb[0].mxu0
  %v431 = vpop.f32.mrb[0].mxu0
  %432 = vdwg.mxu0
  %v433 = vadd.f32 %v371, %v428
  %v434 = vld [vmem:[#allocation3] sm:$0xff]
  %v435 = vxor.u32 %v433, 2147483648
  %v436 = vmul.f32 %v435, 1.442695
  %v437 = vpow.pop %v436
  %v438 = vadd.f32 %v437, 1.0
  %v439 = vrcp.pop %v438
  %v440 = vmul.f32 1.0, %v439
  %v441 = vtanh.pop %v433
  %443 = vrot.lane.b32.xlu0 %v434, 32
  %v444 = vpop.permute.xlu0 %443
  %v446 = vmul.f32 %v440, %v444
  %448 = vrot.lane.b32.xlu0 %v441, 64
  %v449 = vpop.permute.xlu0 %448
  %v451 = vmul.f32 %v440, %v449
  %453 = vrot.lane.b32.xlu0 %v451, 32
  %v454 = vpop.permute.xlu0 %453
  %v456 = vadd.f32 %v446, %v454
  %v457 = vtanh.pop %v456
  %459 = vrot.lane.b32.xlu0 %v457, 64
  %v460 = vpop.permute.xlu0 %459
  %v462 = vmul.f32 %v440, %v460
  %464 = vrot.lane.b32.xlu0 %v462, 32
  %v465 = vpop.permute.xlu0 %464
  %467 = vst.msk [vmem:[#allocation2] sm:$0xff] %vm24, %v465
  %469 = vrot.lane.b32.xlu0 %v456, 96
  %v470 = vpop.permute.xlu0 %469
  %472 = vst.msk [vmem:[#allocation3] sm:$0xff] %vm24, %v470
  %v473 = vpack.c.bf16 %v462, %v462
  %v475 = vunpack.c.l.b16 %v473
  %v476 = vpack.c.b16 %v475, %v475
  %477 = vrot.lane.b32.xlu0 %v476, 32
  %v478 = vpop.permute.xlu0 %477
  %s480 = scalar_lea.vmem [#allocation4], 12
  %481 = vst.msk [vmem:[%s480] sm:$0xf] %vm138, %v478
  %s482 = scalar_lea.vmem %s0, 32
  %v483 = vld [vmem:[%s482] sm:$0xff]
  %v484 = vld [vmem:[%s1] sm:$0xff]
  %v485 = vadd.f32 %v483, %v484
  %v486 = vld [vmem:[#allocation2] sm:$0xff]
  %v487 = vpack.c.bf16 %v486, %v486
  %v488 = vld [vmem:[%s2] sm:$0xf]
  %v489 = vld [vmem:[%s2 + $0x4] sm:$0xf]
  %v490 = vld [vmem:[%s2 + $0x8] sm:$0xf]
  %v491 = vld [vmem:[%s2 + $0xc] sm:$0xf]
  %v496 = vunpack.c.l.b16 %v488
  %v497 = vunpack.c.l.b16 %v489
  %v498 = vunpack.c.l.b16 %v490
  %v499 = vunpack.c.l.b16 %v491
  %v500 = vpack.c.b16 %v497, %v496
  %v501 = vpack.c.b16 %v499, %v498
  %v505 = vsel %vm24, %v487, 0
  %507 = vmatprep.subr.bf16.mxu0 0
  %508 = vmatpush1.bf16.msra.mxu0 %v500
  %509 = vmatprep.subr.bf16.mxu0 0
  %510 = vmatpush1.bf16.msra.mxu0 %v501
  %511 = vmatprep.subr.bf16.mxu0 0
  %512 = vmatpush1.bf16.msra.mxu0 0
  %513 = vmatprep.subr.bf16.mxu0 0
  %514 = vmatpush1.bf16.msra.mxu0 0
  %515 = vmatprep.subr.bf16.mxu0 0
  %516 = vmatpush1.bf16.msra.mxu0 0
  %517 = vmatprep.subr.bf16.mxu0 0
  %518 = vmatpush1.bf16.msra.mxu0 0
  %519 = vmatprep.subr.bf16.mxu0 0
  %520 = vmatpush1.bf16.msra.mxu0 0
  %521 = vmatprep.subr.bf16.mxu0 0
  %522 = vmatpush1.bf16.msra.mxu0 0
  %523 = vmatprep.subr.bf16.mxu0 0
  %524 = vmatpush1.bf16.msra.mxu0 0
  %525 = vmatprep.subr.bf16.mxu0 0
  %526 = vmatpush1.bf16.msra.mxu0 0
  %527 = vmatprep.subr.bf16.mxu0 0
  %528 = vmatpush1.bf16.msra.mxu0 0
  %529 = vmatprep.subr.bf16.mxu0 0
  %530 = vmatpush1.bf16.msra.mxu0 0
  %531 = vmatprep.subr.bf16.mxu0 0
  %532 = vmatpush1.bf16.msra.mxu0 0
  %533 = vmatprep.subr.bf16.mxu0 0
  %534 = vmatpush1.bf16.msra.mxu0 0
  %535 = vmatprep.subr.bf16.mxu0 0
  %536 = vmatpush1.bf16.msra.mxu0 0
  %537 = vmatprep.subr.bf16.mxu0 0
  %538 = vmatpush1.bf16.msra.mxu0 0
  %539 = vmatprep.mubr.bf16.mxu0 0
  %540 = vmatmul.mubr.bf16.gmra.mrb[0].mxu0 %v505
  %v541 = vpop.f32.mrb[0].mxu0
  %v542 = vadd.f32 0.0, %v541
  %v543 = vpop.f32.mrb[0].mxu0
  %v544 = vpop.f32.mrb[0].mxu0
  %v545 = vpop.f32.mrb[0].mxu0
  %546 = vdwg.mxu0
  %v547 = vadd.f32 %v485, %v542
  %v548 = vld [vmem:[#allocation3] sm:$0xff]
  %v549 = vxor.u32 %v547, 2147483648
  %v550 = vmul.f32 %v549, 1.442695
  %v551 = vpow.pop %v550
  %v552 = vadd.f32 %v551, 1.0
  %v553 = vrcp.pop %v552
  %v554 = vmul.f32 1.0, %v553
  %v555 = vtanh.pop %v547
  %557 = vrot.lane.b32.xlu0 %v548, 32
  %v558 = vpop.permute.xlu0 %557
  %v560 = vmul.f32 %v554, %v558
  %562 = vrot.lane.b32.xlu0 %v555, 64
  %v563 = vpop.permute.xlu0 %562
  %v565 = vmul.f32 %v554, %v563
  %567 = vrot.lane.b32.xlu0 %v565, 32
  %v568 = vpop.permute.xlu0 %567
  %v570 = vadd.f32 %v560, %v568
  %v571 = vtanh.pop %v570
  %573 = vrot.lane.b32.xlu0 %v571, 64
  %v574 = vpop.permute.xlu0 %573
  %v576 = vmul.f32 %v554, %v574
  %578 = vrot.lane.b32.xlu0 %v576, 32
  %v579 = vpop.permute.xlu0 %578
  %581 = vst.msk [vmem:[#allocation2] sm:$0xff] %vm24, %v579
  %583 = vrot.lane.b32.xlu0 %v570, 96
  %v584 = vpop.permute.xlu0 %583
  %586 = vst.msk [vmem:[#allocation3] sm:$0xff] %vm24, %v584
  %v587 = vpack.c.bf16 %v576, %v576
  %v589 = vunpack.c.l.b16 %v587
  %v590 = vpack.c.b16 %v589, %v589
  %591 = vrot.lane.b32.xlu0 %v590, 32
  %v592 = vpop.permute.xlu0 %591
  %s594 = scalar_lea.vmem [#allocation4], 16
  %595 = vst.msk [vmem:[%s594] sm:$0xf] %vm138, %v592
  %s596 = scalar_lea.vmem %s0, 40
  %v597 = vld [vmem:[%s596] sm:$0xff]
  %v598 = vld [vmem:[%s1] sm:$0xff]
  %v599 = vadd.f32 %v597, %v598
  %v600 = vld [vmem:[#allocation2] sm:$0xff]
  %v601 = vpack.c.bf16 %v600, %v600
  %v602 = vld [vmem:[%s2] sm:$0xf]
  %v603 = vld [vmem:[%s2 + $0x4] sm:$0xf]
  %v604 = vld [vmem:[%s2 + $0x8] sm:$0xf]
  %v605 = vld [vmem:[%s2 + $0xc] sm:$0xf]
  %v610 = vunpack.c.l.b16 %v602
  %v611 = vunpack.c.l.b16 %v603
  %v612 = vunpack.c.l.b16 %v604
  %v613 = vunpack.c.l.b16 %v605
  %v614 = vpack.c.b16 %v611, %v610
  %v615 = vpack.c.b16 %v613, %v612
  %v619 = vsel %vm24, %v601, 0
  %621 = vmatprep.subr.bf16.mxu0 0
  %622 = vmatpush1.bf16.msra.mxu0 %v614
  %623 = vmatprep.subr.bf16.mxu0 0
  %624 = vmatpush1.bf16.msra.mxu0 %v615
  %625 = vmatprep.subr.bf16.mxu0 0
  %626 = vmatpush1.bf16.msra.mxu0 0
  %627 = vmatprep.subr.bf16.mxu0 0
  %628 = vmatpush1.bf16.msra.mxu0 0
  %629 = vmatprep.subr.bf16.mxu0 0
  %630 = vmatpush1.bf16.msra.mxu0 0
  %631 = vmatprep.subr.bf16.mxu0 0
  %632 = vmatpush1.bf16.msra.mxu0 0
  %633 = vmatprep.subr.bf16.mxu0 0
  %634 = vmatpush1.bf16.msra.mxu0 0
  %635 = vmatprep.subr.bf16.mxu0 0
  %636 = vmatpush1.bf16.msra.mxu0 0
  %637 = vmatprep.subr.bf16.mxu0 0
  %638 = vmatpush1.bf16.msra.mxu0 0
  %639 = vmatprep.subr.bf16.mxu0 0
  %640 = vmatpush1.bf16.msra.mxu0 0
  %641 = vmatprep.subr.bf16.mxu0 0
  %642 = vmatpush1.bf16.msra.mxu0 0
  %643 = vmatprep.subr.bf16.mxu0 0
  %644 = vmatpush1.bf16.msra.mxu0 0
  %645 = vmatprep.subr.bf16.mxu0 0
  %646 = vmatpush1.bf16.msra.mxu0 0
  %647 = vmatprep.subr.bf16.mxu0 0
  %648 = vmatpush1.bf16.msra.mxu0 0
  %649 = vmatprep.subr.bf16.mxu0 0
  %650 = vmatpush1.bf16.msra.mxu0 0
  %651 = vmatprep.subr.bf16.mxu0 0
  %652 = vmatpush1.bf16.msra.mxu0 0
  %653 = vmatprep.mubr.bf16.mxu0 0
  %654 = vmatmul.mubr.bf16.gmra.mrb[0].mxu0 %v619
  %v655 = vpop.f32.mrb[0].mxu0
  %v656 = vadd.f32 0.0, %v655
  %v657 = vpop.f32.mrb[0].mxu0
  %v658 = vpop.f32.mrb[0].mxu0
  %v659 = vpop.f32.mrb[0].mxu0
  %660 = vdwg.mxu0
  %v661 = vadd.f32 %v599, %v656
  %v662 = vld [vmem:[#allocation3] sm:$0xff]
  %v663 = vxor.u32 %v661, 2147483648
  %v664 = vmul.f32 %v663, 1.442695
  %v665 = vpow.pop %v664
  %v666 = vadd.f32 %v665, 1.0
  %v667 = vrcp.pop %v666
  %v668 = vmul.f32 1.0, %v667
  %v669 = vtanh.pop %v661
  %671 = vrot.lane.b32.xlu0 %v662, 32
  %v672 = vpop.permute.xlu0 %671
  %v674 = vmul.f32 %v668, %v672
  %676 = vrot.lane.b32.xlu0 %v669, 64
  %v677 = vpop.permute.xlu0 %676
  %v679 = vmul.f32 %v668, %v677
  %681 = vrot.lane.b32.xlu0 %v679, 32
  %v682 = vpop.permute.xlu0 %681
  %v684 = vadd.f32 %v674, %v682
  %v685 = vtanh.pop %v684
  %687 = vrot.lane.b32.xlu0 %v685, 64
  %v688 = vpop.permute.xlu0 %687
  %v690 = vmul.f32 %v668, %v688
  %692 = vrot.lane.b32.xlu0 %v690, 32
  %v693 = vpop.permute.xlu0 %692
  %695 = vst.msk [vmem:[#allocation2] sm:$0xff] %vm24, %v693
  %697 = vrot.lane.b32.xlu0 %v684, 96
  %v698 = vpop.permute.xlu0 %697
  %700 = vst.msk [vmem:[#allocation3] sm:$0xff] %vm24, %v698
  %v701 = vpack.c.bf16 %v690, %v690
  %v703 = vunpack.c.l.b16 %v701
  %v704 = vpack.c.b16 %v703, %v703
  %705 = vrot.lane.b32.xlu0 %v704, 32
  %v706 = vpop.permute.xlu0 %705
  %s708 = scalar_lea.vmem [#allocation4], 20
  %709 = vst.msk [vmem:[%s708] sm:$0xf] %vm138, %v706
  %s710 = scalar_lea.vmem %s0, 48
  %v711 = vld [vmem:[%s710] sm:$0xff]
  %v712 = vld [vmem:[%s1] sm:$0xff]
  %v713 = vadd.f32 %v711, %v712
  %v714 = vld [vmem:[#allocation2] sm:$0xff]
  %v715 = vpack.c.bf16 %v714, %v714
  %v716 = vld [vmem:[%s2] sm:$0xf]
  %v717 = vld [vmem:[%s2 + $0x4] sm:$0xf]
  %v718 = vld [vmem:[%s2 + $0x8] sm:$0xf]
  %v719 = vld [vmem:[%s2 + $0xc] sm:$0xf]
  %v724 = vunpack.c.l.b16 %v716
  %v725 = vunpack.c.l.b16 %v717
  %v726 = vunpack.c.l.b16 %v718
  %v727 = vunpack.c.l.b16 %v719
  %v728 = vpack.c.b16 %v725, %v724
  %v729 = vpack.c.b16 %v727, %v726
  %v733 = vsel %vm24, %v715, 0
  %735 = vmatprep.subr.bf16.mxu0 0
  %736 = vmatpush1.bf16.msra.mxu0 %v728
  %737 = vmatprep.subr.bf16.mxu0 0
  %738 = vmatpush1.bf16.msra.mxu0 %v729
  %739 = vmatprep.subr.bf16.mxu0 0
  %740 = vmatpush1.bf16.msra.mxu0 0
  %741 = vmatprep.subr.bf16.mxu0 0
  %742 = vmatpush1.bf16.msra.mxu0 0
  %743 = vmatprep.subr.bf16.mxu0 0
  %744 = vmatpush1.bf16.msra.mxu0 0
  %745 = vmatprep.subr.bf16.mxu0 0
  %746 = vmatpush1.bf16.msra.mxu0 0
  %747 = vmatprep.subr.bf16.mxu0 0
  %748 = vmatpush1.bf16.msra.mxu0 0
  %749 = vmatprep.subr.bf16.mxu0 0
  %750 = vmatpush1.bf16.msra.mxu0 0
  %751 = vmatprep.subr.bf16.mxu0 0
  %752 = vmatpush1.bf16.msra.mxu0 0
  %753 = vmatprep.subr.bf16.mxu0 0
  %754 = vmatpush1.bf16.msra.mxu0 0
  %755 = vmatprep.subr.bf16.mxu0 0
  %756 = vmatpush1.bf16.msra.mxu0 0
  %757 = vmatprep.subr.bf16.mxu0 0
  %758 = vmatpush1.bf16.msra.mxu0 0
  %759 = vmatprep.subr.bf16.mxu0 0
  %760 = vmatpush1.bf16.msra.mxu0 0
  %761 = vmatprep.subr.bf16.mxu0 0
  %762 = vmatpush1.bf16.msra.mxu0 0
  %763 = vmatprep.subr.bf16.mxu0 0
  %764 = vmatpush1.bf16.msra.mxu0 0
  %765 = vmatprep.subr.bf16.mxu0 0
  %766 = vmatpush1.bf16.msra.mxu0 0
  %767 = vmatprep.mubr.bf16.mxu0 0
  %768 = vmatmul.mubr.bf16.gmra.mrb[0].mxu0 %v733
  %v769 = vpop.f32.mrb[0].mxu0
  %v770 = vadd.f32 0.0, %v769
  %v771 = vpop.f32.mrb[0].mxu0
  %v772 = vpop.f32.mrb[0].mxu0
  %v773 = vpop.f32.mrb[0].mxu0
  %774 = vdwg.mxu0
  %v775 = vadd.f32 %v713, %v770
  %v776 = vld [vmem:[#allocation3] sm:$0xff]
  %v777 = vxor.u32 %v775, 2147483648
  %v778 = vmul.f32 %v777, 1.442695
  %v779 = vpow.pop %v778
  %v780 = vadd.f32 %v779, 1.0
  %v781 = vrcp.pop %v780
  %v782 = vmul.f32 1.0, %v781
  %v783 = vtanh.pop %v775
  %785 = vrot.lane.b32.xlu0 %v776, 32
  %v786 = vpop.permute.xlu0 %785
  %v788 = vmul.f32 %v782, %v786
  %790 = vrot.lane.b32.xlu0 %v783, 64
  %v791 = vpop.permute.xlu0 %790
  %v793 = vmul.f32 %v782, %v791
  %795 = vrot.lane.b32.xlu0 %v793, 32
  %v796 = vpop.permute.xlu0 %795
  %v798 = vadd.f32 %v788, %v796
  %v799 = vtanh.pop %v798
  %801 = vrot.lane.b32.xlu0 %v799, 64
  %v802 = vpop.permute.xlu0 %801
  %v804 = vmul.f32 %v782, %v802
  %806 = vrot.lane.b32.xlu0 %v804, 32
  %v807 = vpop.permute.xlu0 %806
  %809 = vst.msk [vmem:[#allocation2] sm:$0xff] %vm24, %v807
  %811 = vrot.lane.b32.xlu0 %v798, 96
  %v812 = vpop.permute.xlu0 %811
  %814 = vst.msk [vmem:[#allocation3] sm:$0xff] %vm24, %v812
  %v815 = vpack.c.bf16 %v804, %v804
  %v817 = vunpack.c.l.b16 %v815
  %v818 = vpack.c.b16 %v817, %v817
  %819 = vrot.lane.b32.xlu0 %v818, 32
  %v820 = vpop.permute.xlu0 %819
  %s822 = scalar_lea.vmem [#allocation4], 24
  %823 = vst.msk [vmem:[%s822] sm:$0xf] %vm138, %v820
  %s824 = scalar_lea.vmem %s0, 56
  %v825 = vld [vmem:[%s824] sm:$0xff]
  %v826 = vld [vmem:[%s1] sm:$0xff]
  %v827 = vadd.f32 %v825, %v826
  %v828 = vld [vmem:[#allocation2] sm:$0xff]
  %v829 = vpack.c.bf16 %v828, %v828
  %v830 = vld [vmem:[%s2] sm:$0xf]
  %v831 = vld [vmem:[%s2 + $0x4] sm:$0xf]
  %v832 = vld [vmem:[%s2 + $0x8] sm:$0xf]
  %v833 = vld [vmem:[%s2 + $0xc] sm:$0xf]
  %v838 = vunpack.c.l.b16 %v830
  %v839 = vunpack.c.l.b16 %v831
  %v840 = vunpack.c.l.b16 %v832
  %v841 = vunpack.c.l.b16 %v833
  %v842 = vpack.c.b16 %v839, %v838
  %v843 = vpack.c.b16 %v841, %v840
  %v847 = vsel %vm24, %v829, 0
  %849 = vmatprep.subr.bf16.mxu0 0
  %850 = vmatpush1.bf16.msra.mxu0 %v842
  %851 = vmatprep.subr.bf16.mxu0 0
  %852 = vmatpush1.bf16.msra.mxu0 %v843
  %853 = vmatprep.subr.bf16.mxu0 0
  %854 = vmatpush1.bf16.msra.mxu0 0
  %855 = vmatprep.subr.bf16.mxu0 0
  %856 = vmatpush1.bf16.msra.mxu0 0
  %857 = vmatprep.subr.bf16.mxu0 0
  %858 = vmatpush1.bf16.msra.mxu0 0
  %859 = vmatprep.subr.bf16.mxu0 0
  %860 = vmatpush1.bf16.msra.mxu0 0
  %861 = vmatprep.subr.bf16.mxu0 0
  %862 = vmatpush1.bf16.msra.mxu0 0
  %863 = vmatprep.subr.bf16.mxu0 0
  %864 = vmatpush1.bf16.msra.mxu0 0
  %865 = vmatprep.subr.bf16.mxu0 0
  %866 = vmatpush1.bf16.msra.mxu0 0
  %867 = vmatprep.subr.bf16.mxu0 0
  %868 = vmatpush1.bf16.msra.mxu0 0
  %869 = vmatprep.subr.bf16.mxu0 0
  %870 = vmatpush1.bf16.msra.mxu0 0
  %871 = vmatprep.subr.bf16.mxu0 0
  %872 = vmatpush1.bf16.msra.mxu0 0
  %873 = vmatprep.subr.bf16.mxu0 0
  %874 = vmatpush1.bf16.msra.mxu0 0
  %875 = vmatprep.subr.bf16.mxu0 0
  %876 = vmatpush1.bf16.msra.mxu0 0
  %877 = vmatprep.subr.bf16.mxu0 0
  %878 = vmatpush1.bf16.msra.mxu0 0
  %879 = vmatprep.subr.bf16.mxu0 0
  %880 = vmatpush1.bf16.msra.mxu0 0
  %881 = vmatprep.mubr.bf16.mxu0 0
  %882 = vmatmul.mubr.bf16.gmra.mrb[0].mxu0 %v847
  %v883 = vpop.f32.mrb[0].mxu0
  %v884 = vadd.f32 0.0, %v883
  %v885 = vpop.f32.mrb[0].mxu0
  %v886 = vpop.f32.mrb[0].mxu0
  %v887 = vpop.f32.mrb[0].mxu0
  %888 = vdwg.mxu0
  %v889 = vadd.f32 %v827, %v884
  %v890 = vld [vmem:[#allocation3] sm:$0xff]
  %v891 = vxor.u32 %v889, 2147483648
  %v892 = vmul.f32 %v891, 1.442695
  %v893 = vpow.pop %v892
  %v894 = vadd.f32 %v893, 1.0
  %v895 = vrcp.pop %v894
  %v896 = vmul.f32 1.0, %v895
  %v897 = vtanh.pop %v889
  %899 = vrot.lane.b32.xlu0 %v890, 32
  %v900 = vpop.permute.xlu0 %899
  %v902 = vmul.f32 %v896, %v900
  %904 = vrot.lane.b32.xlu0 %v897, 64
  %v905 = vpop.permute.xlu0 %904
  %v907 = vmul.f32 %v896, %v905
  %909 = vrot.lane.b32.xlu0 %v907, 32
  %v910 = vpop.permute.xlu0 %909
  %v912 = vadd.f32 %v902, %v910
  %v913 = vtanh.pop %v912
  %915 = vrot.lane.b32.xlu0 %v913, 64
  %v916 = vpop.permute.xlu0 %915
  %v918 = vmul.f32 %v896, %v916
  %920 = vrot.lane.b32.xlu0 %v918, 32
  %v921 = vpop.permute.xlu0 %920
  %923 = vst.msk [vmem:[#allocation2] sm:$0xff] %vm24, %v921
  %925 = vrot.lane.b32.xlu0 %v912, 96
  %v926 = vpop.permute.xlu0 %925
  %928 = vst.msk [vmem:[#allocation3] sm:$0xff] %vm24, %v926
  %v929 = vpack.c.bf16 %v918, %v918
  %v931 = vunpack.c.l.b16 %v929
  %v932 = vpack.c.b16 %v931, %v931
  %933 = vrot.lane.b32.xlu0 %v932, 32
  %v934 = vpop.permute.xlu0 %933
  %s936 = scalar_lea.vmem [#allocation4], 28
  %937 = vst.msk [vmem:[%s936] sm:$0xf] %vm138, %v934
  %938 = vst.msk [vmem:[#allocation2] sm:$0xff] %vm24, 0.0
  %939 = vst.msk [vmem:[#allocation3] sm:$0xff] %vm24, 0.0
  %v940 = vld [vmem:[#allocation4] sm:$0xf]
  %v941 = vld [vmem:[%s3] sm:$0xf]
  %v942 = vld [vmem:[%s3 + $0x4] sm:$0xf]
  %v943 = vld [vmem:[%s3 + $0x8] sm:$0xf]
  %v944 = vld [vmem:[%s3 + $0xc] sm:$0xf]
  %v945 = vld [vmem:[%s4] sm:$0x1]
  %v947 = vlaneseq
  %v948 = vshrl.u32 %v947, 7
  %v949 = vsub.s32 0, %v948
  %v950 = vrot.slane %v945, %v949
  %v956 = vunpack.c.l.b16 %v941
  %v957 = vunpack.c.l.b16 %v942
  %v958 = vunpack.c.l.b16 %v943
  %v959 = vunpack.c.l.b16 %v944
  %v960 = vpack.c.b16 %v957, %v956
  %v961 = vpack.c.b16 %v959, %v958
  %v965 = vsel %vm24, %v940, 0
  %967 = vmatprep.subr.bf16.mxu0 0
  %968 = vmatpush1.bf16.msra.mxu0 %v960
  %969 = vmatprep.subr.bf16.mxu0 0
  %970 = vmatpush1.bf16.msra.mxu0 %v961
  %971 = vmatprep.subr.bf16.mxu0 0
  %972 = vmatpush1.bf16.msra.mxu0 0
  %973 = vmatprep.subr.bf16.mxu0 0
  %974 = vmatpush1.bf16.msra.mxu0 0
  %975 = vmatprep.subr.bf16.mxu0 0
  %976 = vmatpush1.bf16.msra.mxu0 0
  %977 = vmatprep.subr.bf16.mxu0 0
  %978 = vmatpush1.bf16.msra.mxu0 0
  %979 = vmatprep.subr.bf16.mxu0 0
  %980 = vmatpush1.bf16.msra.mxu0 0
  %981 = vmatprep.subr.bf16.mxu0 0
  %982 = vmatpush1.bf16.msra.mxu0 0
  %983 = vmatprep.subr.bf16.mxu0 0
  %984 = vmatpush1.bf16.msra.mxu0 0
  %985 = vmatprep.subr.bf16.mxu0 0
  %986 = vmatpush1.bf16.msra.mxu0 0
  %987 = vmatprep.subr.bf16.mxu0 0
  %988 = vmatpush1.bf16.msra.mxu0 0
  %989 = vmatprep.subr.bf16.mxu0 0
  %990 = vmatpush1.bf16.msra.mxu0 0
  %991 = vmatprep.subr.bf16.mxu0 0
  %992 = vmatpush1.bf16.msra.mxu0 0
  %993 = vmatprep.subr.bf16.mxu0 0
  %994 = vmatpush1.bf16.msra.mxu0 0
  %995 = vmatprep.subr.bf16.mxu0 0
  %996 = vmatpush1.bf16.msra.mxu0 0
  %997 = vmatprep.subr.bf16.mxu0 0
  %998 = vmatpush1.bf16.msra.mxu0 0
  %999 = vmatprep.mubr.bf16.mxu0 0
  %1000 = vmatmul.mubr.bf16.gmra.mrb[0].mxu0 %v965
  %v1001 = vpop.f32.mrb[0].mxu0
  %v1002 = vadd.f32 %v950, %v1001
  %v1003 = vpop.f32.mrb[0].mxu0
  %v1004 = vpop.f32.mrb[0].mxu0
  %v1005 = vpop.f32.mrb[0].mxu0
  %1006 = vdwg.mxu0
  %v1007 = vld [vmem:[#allocation2] sm:$0xff]
  %v1008 = vpack.c.bf16 %v1007, %v1007
  %v1009 = vld [vmem:[%s5] sm:$0xf]
  %v1010 = vld [vmem:[%s5 + $0x4] sm:$0xf]
  %v1011 = vld [vmem:[%s5 + $0x8] sm:$0xf]
  %v1012 = vld [vmem:[%s5 + $0xc] sm:$0xf]
  %v1017 = vunpack.c.l.b16 %v1009
  %v1018 = vunpack.c.l.b16 %v1010
  %v1019 = vunpack.c.l.b16 %v1011
  %v1020 = vunpack.c.l.b16 %v1012
  %v1021 = vpack.c.b16 %v1018, %v1017
  %v1022 = vpack.c.b16 %v1020, %v1019
  %v1026 = vsel %vm24, %v1008, 0
  %1028 = vmatprep.subr.bf16.mxu0 0
  %1029 = vmatpush1.bf16.msra.mxu0 %v1021
  %1030 = vmatprep.subr.bf16.mxu0 0
  %1031 = vmatpush1.bf16.msra.mxu0 %v1022
  %1032 = vmatprep.subr.bf16.mxu0 0
  %1033 = vmatpush1.bf16.msra.mxu0 0
  %1034 = vmatprep.subr.bf16.mxu0 0
  %1035 = vmatpush1.bf16.msra.mxu0 0
  %1036 = vmatprep.subr.bf16.mxu0 0
  %1037 = vmatpush1.bf16.msra.mxu0 0
  %1038 = vmatprep.subr.bf16.mxu0 0
  %1039 = vmatpush1.bf16.msra.mxu0 0
  %1040 = vmatprep.subr.bf16.mxu0 0
  %1041 = vmatpush1.bf16.msra.mxu0 0
  %1042 = vmatprep.subr.bf16.mxu0 0
  %1043 = vmatpush1.bf16.msra.mxu0 0
  %1044 = vmatprep.subr.bf16.mxu0 0
  %1045 = vmatpush1.bf16.msra.mxu0 0
  %1046 = vmatprep.subr.bf16.mxu0 0
  %1047 = vmatpush1.bf16.msra.mxu0 0
  %1048 = vmatprep.subr.bf16.mxu0 0
  %1049 = vmatpush1.bf16.msra.mxu0 0
  %1050 = vmatprep.subr.bf16.mxu0 0
  %1051 = vmatpush1.bf16.msra.mxu0 0
  %1052 = vmatprep.subr.bf16.mxu0 0
  %1053 = vmatpush1.bf16.msra.mxu0 0
  %1054 = vmatprep.subr.bf16.mxu0 0
  %1055 = vmatpush1.bf16.msra.mxu0 0
  %1056 = vmatprep.subr.bf16.mxu0 0
  %1057 = vmatpush1.bf16.msra.mxu0 0
  %1058 = vmatprep.subr.bf16.mxu0 0
  %1059 = vmatpush1.bf16.msra.mxu0 0
  %1060 = vmatprep.mubr.bf16.mxu0 0
  %1061 = vmatmul.mubr.bf16.gmra.mrb[0].mxu0 %v1026
  %v1062 = vpop.f32.mrb[0].mxu0
  %v1063 = vadd.f32 0.0, %v1062
  %v1064 = vpop.f32.mrb[0].mxu0
  %v1065 = vpop.f32.mrb[0].mxu0
  %v1066 = vpop.f32.mrb[0].mxu0
  %1067 = vdwg.mxu0
  %v1068 = vadd.f32 %v1002, %v1063
  %v1069 = vld [vmem:[#allocation3] sm:$0xff]
  %v1070 = vxor.u32 %v1068, 2147483648
  %v1071 = vmul.f32 %v1070, 1.442695
  %v1072 = vpow.pop %v1071
  %v1073 = vadd.f32 %v1072, 1.0
  %v1074 = vrcp.pop %v1073
  %v1075 = vmul.f32 1.0, %v1074
  %v1076 = vtanh.pop %v1068
  %1078 = vrot.lane.b32.xlu0 %v1069, 32
  %v1079 = vpop.permute.xlu0 %1078
  %v1081 = vmul.f32 %v1075, %v1079
  %1083 = vrot.lane.b32.xlu0 %v1076, 64
  %v1084 = vpop.permute.xlu0 %1083
  %v1086 = vmul.f32 %v1075, %v1084
  %1088 = vrot.lane.b32.xlu0 %v1086, 32
  %v1089 = vpop.permute.xlu0 %1088
  %v1091 = vadd.f32 %v1081, %v1089
  %v1092 = vtanh.pop %v1091
  %1094 = vrot.lane.b32.xlu0 %v1092, 64
  %v1095 = vpop.permute.xlu0 %1094
  %v1097 = vmul.f32 %v1075, %v1095
  %1099 = vrot.lane.b32.xlu0 %v1097, 32
  %v1100 = vpop.permute.xlu0 %1099
  %1102 = vst.msk [vmem:[#allocation2] sm:$0xff] %vm24, %v1100
  %1104 = vrot.lane.b32.xlu0 %v1091, 96
  %v1105 = vpop.permute.xlu0 %1104
  %1107 = vst.msk [vmem:[#allocation3] sm:$0xff] %vm24, %v1105
  %v1108 = vpack.c.bf16 %v1097, %v1097
  %v1110 = vunpack.c.l.b16 %v1108
  %v1111 = vpack.c.b16 %v1110, %v1110
  %1112 = vrot.lane.b32.xlu0 %v1111, 32
  %v1113 = vpop.permute.xlu0 %1112
  %1115 = vst.msk [vmem:[%s6] sm:$0xf] %vm138, %v1113
  %v1116 = vld [vmem:[%s252] sm:$0xf]
  %v1117 = vld [vmem:[%s3] sm:$0xf]
  %v1118 = vld [vmem:[%s3 + $0x4] sm:$0xf]
  %v1119 = vld [vmem:[%s3 + $0x8] sm:$0xf]
  %v1120 = vld [vmem:[%s3 + $0xc] sm:$0xf]
  %v1121 = vld [vmem:[%s4] sm:$0x1]
  %v1123 = vlaneseq
  %v1124 = vshrl.u32 %v1123, 7
  %v1125 = vsub.s32 0, %v1124
  %v1126 = vrot.slane %v1121, %v1125
  %v1132 = vunpack.c.l.b16 %v1117
  %v1133 = vunpack.c.l.b16 %v1118
  %v1134 = vunpack.c.l.b16 %v1119
  %v1135 = vunpack.c.l.b16 %v1120
  %v1136 = vpack.c.b16 %v1133, %v1132
  %v1137 = vpack.c.b16 %v1135, %v1134
  %v1141 = vsel %vm24, %v1116, 0
  %1143 = vmatprep.subr.bf16.mxu0 0
  %1144 = vmatpush1.bf16.msra.mxu0 %v1136
  %1145 = vmatprep.subr.bf16.mxu0 0
  %1146 = vmatpush1.bf16.msra.mxu0 %v1137
  %1147 = vmatprep.subr.bf16.mxu0 0
  %1148 = vmatpush1.bf16.msra.mxu0 0
  %1149 = vmatprep.subr.bf16.mxu0 0
  %1150 = vmatpush1.bf16.msra.mxu0 0
  %1151 = vmatprep.subr.bf16.mxu0 0
  %1152 = vmatpush1.bf16.msra.mxu0 0
  %1153 = vmatprep.subr.bf16.mxu0 0
  %1154 = vmatpush1.bf16.msra.mxu0 0
  %1155 = vmatprep.subr.bf16.mxu0 0
  %1156 = vmatpush1.bf16.msra.mxu0 0
  %1157 = vmatprep.subr.bf16.mxu0 0
  %1158 = vmatpush1.bf16.msra.mxu0 0
  %1159 = vmatprep.subr.bf16.mxu0 0
  %1160 = vmatpush1.bf16.msra.mxu0 0
  %1161 = vmatprep.subr.bf16.mxu0 0
  %1162 = vmatpush1.bf16.msra.mxu0 0
  %1163 = vmatprep.subr.bf16.mxu0 0
  %1164 = vmatpush1.bf16.msra.mxu0 0
  %1165 = vmatprep.subr.bf16.mxu0 0
  %1166 = vmatpush1.bf16.msra.mxu0 0
  %1167 = vmatprep.subr.bf16.mxu0 0
  %1168 = vmatpush1.bf16.msra.mxu0 0
  %1169 = vmatprep.subr.bf16.mxu0 0
  %1170 = vmatpush1.bf16.msra.mxu0 0
  %1171 = vmatprep.subr.bf16.mxu0 0
  %1172 = vmatpush1.bf16.msra.mxu0 0
  %1173 = vmatprep.subr.bf16.mxu0 0
  %1174 = vmatpush1.bf16.msra.mxu0 0
  %1175 = vmatprep.mubr.bf16.mxu0 0
  %1176 = vmatmul.mubr.bf16.gmra.mrb[0].mxu0 %v1141
  %v1177 = vpop.f32.mrb[0].mxu0
  %v1178 = vadd.f32 %v1126, %v1177
  %v1179 = vpop.f32.mrb[0].mxu0
  %v1180 = vpop.f32.mrb[0].mxu0
  %v1181 = vpop.f32.mrb[0].mxu0
  %1182 = vdwg.mxu0
  %v1183 = vld [vmem:[#allocation2] sm:$0xff]
  %v1184 = vpack.c.bf16 %v1183, %v1183
  %v1185 = vld [vmem:[%s5] sm:$0xf]
  %v1186 = vld [vmem:[%s5 + $0x4] sm:$0xf]
  %v1187 = vld [vmem:[%s5 + $0x8] sm:$0xf]
  %v1188 = vld [vmem:[%s5 + $0xc] sm:$0xf]
  %v1193 = vunpack.c.l.b16 %v1185
  %v1194 = vunpack.c.l.b16 %v1186
  %v1195 = vunpack.c.l.b16 %v1187
  %v1196 = vunpack.c.l.b16 %v1188
  %v1197 = vpack.c.b16 %v1194, %v1193
  %v1198 = vpack.c.b16 %v1196, %v1195
  %v1202 = vsel %vm24, %v1184, 0
  %1204 = vmatprep.subr.bf16.mxu0 0
  %1205 = vmatpush1.bf16.msra.mxu0 %v1197
  %1206 = vmatprep.subr.bf16.mxu0 0
  %1207 = vmatpush1.bf16.msra.mxu0 %v1198
  %1208 = vmatprep.subr.bf16.mxu0 0
  %1209 = vmatpush1.bf16.msra.mxu0 0
  %1210 = vmatprep.subr.bf16.mxu0 0
  %1211 = vmatpush1.bf16.msra.mxu0 0
  %1212 = vmatprep.subr.bf16.mxu0 0
  %1213 = vmatpush1.bf16.msra.mxu0 0
  %1214 = vmatprep.subr.bf16.mxu0 0
  %1215 = vmatpush1.bf16.msra.mxu0 0
  %1216 = vmatprep.subr.bf16.mxu0 0
  %1217 = vmatpush1.bf16.msra.mxu0 0
  %1218 = vmatprep.subr.bf16.mxu0 0
  %1219 = vmatpush1.bf16.msra.mxu0 0
  %1220 = vmatprep.subr.bf16.mxu0 0
  %1221 = vmatpush1.bf16.msra.mxu0 0
  %1222 = vmatprep.subr.bf16.mxu0 0
  %1223 = vmatpush1.bf16.msra.mxu0 0
  %1224 = vmatprep.subr.bf16.mxu0 0
  %1225 = vmatpush1.bf16.msra.mxu0 0
  %1226 = vmatprep.subr.bf16.mxu0 0
  %1227 = vmatpush1.bf16.msra.mxu0 0
  %1228 = vmatprep.subr.bf16.mxu0 0
  %1229 = vmatpush1.bf16.msra.mxu0 0
  %1230 = vmatprep.subr.bf16.mxu0 0
  %1231 = vmatpush1.bf16.msra.mxu0 0
  %1232 = vmatprep.subr.bf16.mxu0 0
  %1233 = vmatpush1.bf16.msra.mxu0 0
  %1234 = vmatprep.subr.bf16.mxu0 0
  %1235 = vmatpush1.bf16.msra.mxu0 0
  %1236 = vmatprep.mubr.bf16.mxu0 0
  %1237 = vmatmul.mubr.bf16.gmra.mrb[0].mxu0 %v1202
  %v1238 = vpop.f32.mrb[0].mxu0
  %v1239 = vadd.f32 0.0, %v1238
  %v1240 = vpop.f32.mrb[0].mxu0
  %v1241 = vpop.f32.mrb[0].mxu0
  %v1242 = vpop.f32.mrb[0].mxu0
  %1243 = vdwg.mxu0
  %v1244 = vadd.f32 %v1178, %v1239
  %v1245 = vld [vmem:[#allocation3] sm:$0xff]
  %v1246 = vxor.u32 %v1244, 2147483648
  %v1247 = vmul.f32 %v1246, 1.442695
  %v1248 = vpow.pop %v1247
  %v1249 = vadd.f32 %v1248, 1.0
  %v1250 = vrcp.pop %v1249
  %v1251 = vmul.f32 1.0, %v1250
  %v1252 = vtanh.pop %v1244
  %1254 = vrot.lane.b32.xlu0 %v1245, 32
  %v1255 = vpop.permute.xlu0 %1254
  %v1257 = vmul.f32 %v1251, %v1255
  %1259 = vrot.lane.b32.xlu0 %v1252, 64
  %v1260 = vpop.permute.xlu0 %1259
  %v1262 = vmul.f32 %v1251, %v1260
  %1264 = vrot.lane.b32.xlu0 %v1262, 32
  %v1265 = vpop.permute.xlu0 %1264
  %v1267 = vadd.f32 %v1257, %v1265
  %v1268 = vtanh.pop %v1267
  %1270 = vrot.lane.b32.xlu0 %v1268, 64
  %v1271 = vpop.permute.xlu0 %1270
  %v1273 = vmul.f32 %v1251, %v1271
  %1275 = vrot.lane.b32.xlu0 %v1273, 32
  %v1276 = vpop.permute.xlu0 %1275
  %1278 = vst.msk [vmem:[#allocation2] sm:$0xff] %vm24, %v1276
  %1280 = vrot.lane.b32.xlu0 %v1267, 96
  %v1281 = vpop.permute.xlu0 %1280
  %1283 = vst.msk [vmem:[#allocation3] sm:$0xff] %vm24, %v1281
  %v1284 = vpack.c.bf16 %v1273, %v1273
  %v1286 = vunpack.c.l.b16 %v1284
  %v1287 = vpack.c.b16 %v1286, %v1286
  %1288 = vrot.lane.b32.xlu0 %v1287, 32
  %v1289 = vpop.permute.xlu0 %1288
  %s1291 = scalar_lea.vmem %s6, 4
  %1292 = vst.msk [vmem:[%s1291] sm:$0xf] %vm138, %v1289
  %v1293 = vld [vmem:[%s366] sm:$0xf]
  %v1294 = vld [vmem:[%s3] sm:$0xf]
  %v1295 = vld [vmem:[%s3 + $0x4] sm:$0xf]
  %v1296 = vld [vmem:[%s3 + $0x8] sm:$0xf]
  %v1297 = vld [vmem:[%s3 + $0xc] sm:$0xf]
  %v1298 = vld [vmem:[%s4] sm:$0x1]
  %v1300 = vlaneseq
  %v1301 = vshrl.u32 %v1300, 7
  %v1302 = vsub.s32 0, %v1301
  %v1303 = vrot.slane %v1298, %v1302
  %v1309 = vunpack.c.l.b16 %v1294
  %v1310 = vunpack.c.l.b16 %v1295
  %v1311 = vunpack.c.l.b16 %v1296
  %v1312 = vunpack.c.l.b16 %v1297
  %v1313 = vpack.c.b16 %v1310, %v1309
  %v1314 = vpack.c.b16 %v1312, %v1311
  %v1318 = vsel %vm24, %v1293, 0
  %1320 = vmatprep.subr.bf16.mxu0 0
  %1321 = vmatpush1.bf16.msra.mxu0 %v1313
  %1322 = vmatprep.subr.bf16.mxu0 0
  %1323 = vmatpush1.bf16.msra.mxu0 %v1314
  %1324 = vmatprep.subr.bf16.mxu0 0
  %1325 = vmatpush1.bf16.msra.mxu0 0
  %1326 = vmatprep.subr.bf16.mxu0 0
  %1327 = vmatpush1.bf16.msra.mxu0 0
  %1328 = vmatprep.subr.bf16.mxu0 0
  %1329 = vmatpush1.bf16.msra.mxu0 0
  %1330 = vmatprep.subr.bf16.mxu0 0
  %1331 = vmatpush1.bf16.msra.mxu0 0
  %1332 = vmatprep.subr.bf16.mxu0 0
  %1333 = vmatpush1.bf16.msra.mxu0 0
  %1334 = vmatprep.subr.bf16.mxu0 0
  %1335 = vmatpush1.bf16.msra.mxu0 0
  %1336 = vmatprep.subr.bf16.mxu0 0
  %1337 = vmatpush1.bf16.msra.mxu0 0
  %1338 = vmatprep.subr.bf16.mxu0 0
  %1339 = vmatpush1.bf16.msra.mxu0 0
  %1340 = vmatprep.subr.bf16.mxu0 0
  %1341 = vmatpush1.bf16.msra.mxu0 0
  %1342 = vmatprep.subr.bf16.mxu0 0
  %1343 = vmatpush1.bf16.msra.mxu0 0
  %1344 = vmatprep.subr.bf16.mxu0 0
  %1345 = vmatpush1.bf16.msra.mxu0 0
  %1346 = vmatprep.subr.bf16.mxu0 0
  %1347 = vmatpush1.bf16.msra.mxu0 0
  %1348 = vmatprep.subr.bf16.mxu0 0
  %1349 = vmatpush1.bf16.msra.mxu0 0
  %1350 = vmatprep.subr.bf16.mxu0 0
  %1351 = vmatpush1.bf16.msra.mxu0 0
  %1352 = vmatprep.mubr.bf16.mxu0 0
  %1353 = vmatmul.mubr.bf16.gmra.mrb[0].mxu0 %v1318
  %v1354 = vpop.f32.mrb[0].mxu0
  %v1355 = vadd.f32 %v1303, %v1354
  %v1356 = vpop.f32.mrb[0].mxu0
  %v1357 = vpop.f32.mrb[0].mxu0
  %v1358 = vpop.f32.mrb[0].mxu0
  %1359 = vdwg.mxu0
  %v1360 = vld [vmem:[#allocation2] sm:$0xff]
  %v1361 = vpack.c.bf16 %v1360, %v1360
  %v1362 = vld [vmem:[%s5] sm:$0xf]
  %v1363 = vld [vmem:[%s5 + $0x4] sm:$0xf]
  %v1364 = vld [vmem:[%s5 + $0x8] sm:$0xf]
  %v1365 = vld [vmem:[%s5 + $0xc] sm:$0xf]
  %v1370 = vunpack.c.l.b16 %v1362
  %v1371 = vunpack.c.l.b16 %v1363
  %v1372 = vunpack.c.l.b16 %v1364
  %v1373 = vunpack.c.l.b16 %v1365
  %v1374 = vpack.c.b16 %v1371, %v1370
  %v1375 = vpack.c.b16 %v1373, %v1372
  %v1379 = vsel %vm24, %v1361, 0
  %1381 = vmatprep.subr.bf16.mxu0 0
  %1382 = vmatpush1.bf16.msra.mxu0 %v1374
  %1383 = vmatprep.subr.bf16.mxu0 0
  %1384 = vmatpush1.bf16.msra.mxu0 %v1375
  %1385 = vmatprep.subr.bf16.mxu0 0
  %1386 = vmatpush1.bf16.msra.mxu0 0
  %1387 = vmatprep.subr.bf16.mxu0 0
  %1388 = vmatpush1.bf16.msra.mxu0 0
  %1389 = vmatprep.subr.bf16.mxu0 0
  %1390 = vmatpush1.bf16.msra.mxu0 0
  %1391 = vmatprep.subr.bf16.mxu0 0
  %1392 = vmatpush1.bf16.msra.mxu0 0
  %1393 = vmatprep.subr.bf16.mxu0 0
  %1394 = vmatpush1.bf16.msra.mxu0 0
  %1395 = vmatprep.subr.bf16.mxu0 0
  %1396 = vmatpush1.bf16.msra.mxu0 0
  %1397 = vmatprep.subr.bf16.mxu0 0
  %1398 = vmatpush1.bf16.msra.mxu0 0
  %1399 = vmatprep.subr.bf16.mxu0 0
  %1400 = vmatpush1.bf16.msra.mxu0 0
  %1401 = vmatprep.subr.bf16.mxu0 0
  %1402 = vmatpush1.bf16.msra.mxu0 0
  %1403 = vmatprep.subr.bf16.mxu0 0
  %1404 = vmatpush1.bf16.msra.mxu0 0
  %1405 = vmatprep.subr.bf16.mxu0 0
  %1406 = vmatpush1.bf16.msra.mxu0 0
  %1407 = vmatprep.subr.bf16.mxu0 0
  %1408 = vmatpush1.bf16.msra.mxu0 0
  %1409 = vmatprep.subr.bf16.mxu0 0
  %1410 = vmatpush1.bf16.msra.mxu0 0
  %1411 = vmatprep.subr.bf16.mxu0 0
  %1412 = vmatpush1.bf16.msra.mxu0 0
  %1413 = vmatprep.mubr.bf16.mxu0 0
  %1414 = vmatmul.mubr.bf16.gmra.mrb[0].mxu0 %v1379
  %v1415 = vpop.f32.mrb[0].mxu0
  %v1416 = vadd.f32 0.0, %v1415
  %v1417 = vpop.f32.mrb[0].mxu0
  %v1418 = vpop.f32.mrb[0].mxu0
  %v1419 = vpop.f32.mrb[0].mxu0
  %1420 = vdwg.mxu0
  %v1421 = vadd.f32 %v1355, %v1416
  %v1422 = vld [vmem:[#allocation3] sm:$0xff]
  %v1423 = vxor.u32 %v1421, 2147483648
  %v1424 = vmul.f32 %v1423, 1.442695
  %v1425 = vpow.pop %v1424
  %v1426 = vadd.f32 %v1425, 1.0
  %v1427 = vrcp.pop %v1426
  %v1428 = vmul.f32 1.0, %v1427
  %v1429 = vtanh.pop %v1421
  %1431 = vrot.lane.b32.xlu0 %v1422, 32
  %v1432 = vpop.permute.xlu0 %1431
  %v1434 = vmul.f32 %v1428, %v1432
  %1436 = vrot.lane.b32.xlu0 %v1429, 64
  %v1437 = vpop.permute.xlu0 %1436
  %v1439 = vmul.f32 %v1428, %v1437
  %1441 = vrot.lane.b32.xlu0 %v1439, 32
  %v1442 = vpop.permute.xlu0 %1441
  %v1444 = vadd.f32 %v1434, %v1442
  %v1445 = vtanh.pop %v1444
  %1447 = vrot.lane.b32.xlu0 %v1445, 64
  %v1448 = vpop.permute.xlu0 %1447
  %v1450 = vmul.f32 %v1428, %v1448
  %1452 = vrot.lane.b32.xlu0 %v1450, 32
  %v1453 = vpop.permute.xlu0 %1452
  %1455 = vst.msk [vmem:[#allocation2] sm:$0xff] %vm24, %v1453
  %1457 = vrot.lane.b32.xlu0 %v1444, 96
  %v1458 = vpop.permute.xlu0 %1457
  %1460 = vst.msk [vmem:[#allocation3] sm:$0xff] %vm24, %v1458
  %v1461 = vpack.c.bf16 %v1450, %v1450
  %v1463 = vunpack.c.l.b16 %v1461
  %v1464 = vpack.c.b16 %v1463, %v1463
  %1465 = vrot.lane.b32.xlu0 %v1464, 32
  %v1466 = vpop.permute.xlu0 %1465
  %s1468 = scalar_lea.vmem %s6, 8
  %1469 = vst.msk [vmem:[%s1468] sm:$0xf] %vm138, %v1466
  %v1470 = vld [vmem:[%s480] sm:$0xf]
  %v1471 = vld [vmem:[%s3] sm:$0xf]
  %v1472 = vld [vmem:[%s3 + $0x4] sm:$0xf]
  %v1473 = vld [vmem:[%s3 + $0x8] sm:$0xf]
  %v1474 = vld [vmem:[%s3 + $0xc] sm:$0xf]
  %v1475 = vld [vmem:[%s4] sm:$0x1]
  %v1477 = vlaneseq
  %v1478 = vshrl.u32 %v1477, 7
  %v1479 = vsub.s32 0, %v1478
  %v1480 = vrot.slane %v1475, %v1479
  %v1486 = vunpack.c.l.b16 %v1471
  %v1487 = vunpack.c.l.b16 %v1472
  %v1488 = vunpack.c.l.b16 %v1473
  %v1489 = vunpack.c.l.b16 %v1474
  %v1490 = vpack.c.b16 %v1487, %v1486
  %v1491 = vpack.c.b16 %v1489, %v1488
  %v1495 = vsel %vm24, %v1470, 0
  %1497 = vmatprep.subr.bf16.mxu0 0
  %1498 = vmatpush1.bf16.msra.mxu0 %v1490
  %1499 = vmatprep.subr.bf16.mxu0 0
  %1500 = vmatpush1.bf16.msra.mxu0 %v1491
  %1501 = vmatprep.subr.bf16.mxu0 0
  %1502 = vmatpush1.bf16.msra.mxu0 0
  %1503 = vmatprep.subr.bf16.mxu0 0
  %1504 = vmatpush1.bf16.msra.mxu0 0
  %1505 = vmatprep.subr.bf16.mxu0 0
  %1506 = vmatpush1.bf16.msra.mxu0 0
  %1507 = vmatprep.subr.bf16.mxu0 0
  %1508 = vmatpush1.bf16.msra.mxu0 0
  %1509 = vmatprep.subr.bf16.mxu0 0
  %1510 = vmatpush1.bf16.msra.mxu0 0
  %1511 = vmatprep.subr.bf16.mxu0 0
  %1512 = vmatpush1.bf16.msra.mxu0 0
  %1513 = vmatprep.subr.bf16.mxu0 0
  %1514 = vmatpush1.bf16.msra.mxu0 0
  %1515 = vmatprep.subr.bf16.mxu0 0
  %1516 = vmatpush1.bf16.msra.mxu0 0
  %1517 = vmatprep.subr.bf16.mxu0 0
  %1518 = vmatpush1.bf16.msra.mxu0 0
  %1519 = vmatprep.subr.bf16.mxu0 0
  %1520 = vmatpush1.bf16.msra.mxu0 0
  %1521 = vmatprep.subr.bf16.mxu0 0
  %1522 = vmatpush1.bf16.msra.mxu0 0
  %1523 = vmatprep.subr.bf16.mxu0 0
  %1524 = vmatpush1.bf16.msra.mxu0 0
  %1525 = vmatprep.subr.bf16.mxu0 0
  %1526 = vmatpush1.bf16.msra.mxu0 0
  %1527 = vmatprep.subr.bf16.mxu0 0
  %1528 = vmatpush1.bf16.msra.mxu0 0
  %1529 = vmatprep.mubr.bf16.mxu0 0
  %1530 = vmatmul.mubr.bf16.gmra.mrb[0].mxu0 %v1495
  %v1531 = vpop.f32.mrb[0].mxu0
  %v1532 = vadd.f32 %v1480, %v1531
  %v1533 = vpop.f32.mrb[0].mxu0
  %v1534 = vpop.f32.mrb[0].mxu0
  %v1535 = vpop.f32.mrb[0].mxu0
  %1536 = vdwg.mxu0
  %v1537 = vld [vmem:[#allocation2] sm:$0xff]
  %v1538 = vpack.c.bf16 %v1537, %v1537
  %v1539 = vld [vmem:[%s5] sm:$0xf]
  %v1540 = vld [vmem:[%s5 + $0x4] sm:$0xf]
  %v1541 = vld [vmem:[%s5 + $0x8] sm:$0xf]
  %v1542 = vld [vmem:[%s5 + $0xc] sm:$0xf]
  %v1547 = vunpack.c.l.b16 %v1539
  %v1548 = vunpack.c.l.b16 %v1540
  %v1549 = vunpack.c.l.b16 %v1541
  %v1550 = vunpack.c.l.b16 %v1542
  %v1551 = vpack.c.b16 %v1548, %v1547
  %v1552 = vpack.c.b16 %v1550, %v1549
  %v1556 = vsel %vm24, %v1538, 0
  %1558 = vmatprep.subr.bf16.mxu0 0
  %1559 = vmatpush1.bf16.msra.mxu0 %v1551
  %1560 = vmatprep.subr.bf16.mxu0 0
  %1561 = vmatpush1.bf16.msra.mxu0 %v1552
  %1562 = vmatprep.subr.bf16.mxu0 0
  %1563 = vmatpush1.bf16.msra.mxu0 0
  %1564 = vmatprep.subr.bf16.mxu0 0
  %1565 = vmatpush1.bf16.msra.mxu0 0
  %1566 = vmatprep.subr.bf16.mxu0 0
  %1567 = vmatpush1.bf16.msra.mxu0 0
  %1568 = vmatprep.subr.bf16.mxu0 0
  %1569 = vmatpush1.bf16.msra.mxu0 0
  %1570 = vmatprep.subr.bf16.mxu0 0
  %1571 = vmatpush1.bf16.msra.mxu0 0
  %1572 = vmatprep.subr.bf16.mxu0 0
  %1573 = vmatpush1.bf16.msra.mxu0 0
  %1574 = vmatprep.subr.bf16.mxu0 0
  %1575 = vmatpush1.bf16.msra.mxu0 0
  %1576 = vmatprep.subr.bf16.mxu0 0
  %1577 = vmatpush1.bf16.msra.mxu0 0
  %1578 = vmatprep.subr.bf16.mxu0 0
  %1579 = vmatpush1.bf16.msra.mxu0 0
  %1580 = vmatprep.subr.bf16.mxu0 0
  %1581 = vmatpush1.bf16.msra.mxu0 0
  %1582 = vmatprep.subr.bf16.mxu0 0
  %1583 = vmatpush1.bf16.msra.mxu0 0
  %1584 = vmatprep.subr.bf16.mxu0 0
  %1585 = vmatpush1.bf16.msra.mxu0 0
  %1586 = vmatprep.subr.bf16.mxu0 0
  %1587 = vmatpush1.bf16.msra.mxu0 0
  %1588 = vmatprep.subr.bf16.mxu0 0
  %1589 = vmatpush1.bf16.msra.mxu0 0
  %1590 = vmatprep.mubr.bf16.mxu0 0
  %1591 = vmatmul.mubr.bf16.gmra.mrb[0].mxu0 %v1556
  %v1592 = vpop.f32.mrb[0].mxu0
  %v1593 = vadd.f32 0.0, %v1592
  %v1594 = vpop.f32.mrb[0].mxu0
  %v1595 = vpop.f32.mrb[0].mxu0
  %v1596 = vpop.f32.mrb[0].mxu0
  %1597 = vdwg.mxu0
  %v1598 = vadd.f32 %v1532, %v1593
  %v1599 = vld [vmem:[#allocation3] sm:$0xff]
  %v1600 = vxor.u32 %v1598, 2147483648
  %v1601 = vmul.f32 %v1600, 1.442695
  %v1602 = vpow.pop %v1601
  %v1603 = vadd.f32 %v1602, 1.0
  %v1604 = vrcp.pop %v1603
  %v1605 = vmul.f32 1.0, %v1604
  %v1606 = vtanh.pop %v1598
  %1608 = vrot.lane.b32.xlu0 %v1599, 32
  %v1609 = vpop.permute.xlu0 %1608
  %v1611 = vmul.f32 %v1605, %v1609
  %1613 = vrot.lane.b32.xlu0 %v1606, 64
  %v1614 = vpop.permute.xlu0 %1613
  %v1616 = vmul.f32 %v1605, %v1614
  %1618 = vrot.lane.b32.xlu0 %v1616, 32
  %v1619 = vpop.permute.xlu0 %1618
  %v1621 = vadd.f32 %v1611, %v1619
  %v1622 = vtanh.pop %v1621
  %1624 = vrot.lane.b32.xlu0 %v1622, 64
  %v1625 = vpop.permute.xlu0 %1624
  %v1627 = vmul.f32 %v1605, %v1625
  %1629 = vrot.lane.b32.xlu0 %v1627, 32
  %v1630 = vpop.permute.xlu0 %1629
  %1632 = vst.msk [vmem:[#allocation2] sm:$0xff] %vm24, %v1630
  %1634 = vrot.lane.b32.xlu0 %v1621, 96
  %v1635 = vpop.permute.xlu0 %1634
  %1637 = vst.msk [vmem:[#allocation3] sm:$0xff] %vm24, %v1635
  %v1638 = vpack.c.bf16 %v1627, %v1627
  %v1640 = vunpack.c.l.b16 %v1638
  %v1641 = vpack.c.b16 %v1640, %v1640
  %1642 = vrot.lane.b32.xlu0 %v1641, 32
  %v1643 = vpop.permute.xlu0 %1642
  %s1645 = scalar_lea.vmem %s6, 12
  %1646 = vst.msk [vmem:[%s1645] sm:$0xf] %vm138, %v1643
  %v1647 = vld [vmem:[%s594] sm:$0xf]
  %v1648 = vld [vmem:[%s3] sm:$0xf]
  %v1649 = vld [vmem:[%s3 + $0x4] sm:$0xf]
  %v1650 = vld [vmem:[%s3 + $0x8] sm:$0xf]
  %v1651 = vld [vmem:[%s3 + $0xc] sm:$0xf]
  %v1652 = vld [vmem:[%s4] sm:$0x1]
  %v1654 = vlaneseq
  %v1655 = vshrl.u32 %v1654, 7
  %v1656 = vsub.s32 0, %v1655
  %v1657 = vrot.slane %v1652, %v1656
  %v1663 = vunpack.c.l.b16 %v1648
  %v1664 = vunpack.c.l.b16 %v1649
  %v1665 = vunpack.c.l.b16 %v1650
  %v1666 = vunpack.c.l.b16 %v1651
  %v1667 = vpack.c.b16 %v1664, %v1663
  %v1668 = vpack.c.b16 %v1666, %v1665
  %v1672 = vsel %vm24, %v1647, 0
  %1674 = vmatprep.subr.bf16.mxu0 0
  %1675 = vmatpush1.bf16.msra.mxu0 %v1667
  %1676 = vmatprep.subr.bf16.mxu0 0
  %1677 = vmatpush1.bf16.msra.mxu0 %v1668
  %1678 = vmatprep.subr.bf16.mxu0 0
  %1679 = vmatpush1.bf16.msra.mxu0 0
  %1680 = vmatprep.subr.bf16.mxu0 0
  %1681 = vmatpush1.bf16.msra.mxu0 0
  %1682 = vmatprep.subr.bf16.mxu0 0
  %1683 = vmatpush1.bf16.msra.mxu0 0
  %1684 = vmatprep.subr.bf16.mxu0 0
  %1685 = vmatpush1.bf16.msra.mxu0 0
  %1686 = vmatprep.subr.bf16.mxu0 0
  %1687 = vmatpush1.bf16.msra.mxu0 0
  %1688 = vmatprep.subr.bf16.mxu0 0
  %1689 = vmatpush1.bf16.msra.mxu0 0
  %1690 = vmatprep.subr.bf16.mxu0 0
  %1691 = vmatpush1.bf16.msra.mxu0 0
  %1692 = vmatprep.subr.bf16.mxu0 0
  %1693 = vmatpush1.bf16.msra.mxu0 0
  %1694 = vmatprep.subr.bf16.mxu0 0
  %1695 = vmatpush1.bf16.msra.mxu0 0
  %1696 = vmatprep.subr.bf16.mxu0 0
  %1697 = vmatpush1.bf16.msra.mxu0 0
  %1698 = vmatprep.subr.bf16.mxu0 0
  %1699 = vmatpush1.bf16.msra.mxu0 0
  %1700 = vmatprep.subr.bf16.mxu0 0
  %1701 = vmatpush1.bf16.msra.mxu0 0
  %1702 = vmatprep.subr.bf16.mxu0 0
  %1703 = vmatpush1.bf16.msra.mxu0 0
  %1704 = vmatprep.subr.bf16.mxu0 0
  %1705 = vmatpush1.bf16.msra.mxu0 0
  %1706 = vmatprep.mubr.bf16.mxu0 0
  %1707 = vmatmul.mubr.bf16.gmra.mrb[0].mxu0 %v1672
  %v1708 = vpop.f32.mrb[0].mxu0
  %v1709 = vadd.f32 %v1657, %v1708
  %v1710 = vpop.f32.mrb[0].mxu0
  %v1711 = vpop.f32.mrb[0].mxu0
  %v1712 = vpop.f32.mrb[0].mxu0
  %1713 = vdwg.mxu0
  %v1714 = vld [vmem:[#allocation2] sm:$0xff]
  %v1715 = vpack.c.bf16 %v1714, %v1714
  %v1716 = vld [vmem:[%s5] sm:$0xf]
  %v1717 = vld [vmem:[%s5 + $0x4] sm:$0xf]
  %v1718 = vld [vmem:[%s5 + $0x8] sm:$0xf]
  %v1719 = vld [vmem:[%s5 + $0xc] sm:$0xf]
  %v1724 = vunpack.c.l.b16 %v1716
  %v1725 = vunpack.c.l.b16 %v1717
  %v1726 = vunpack.c.l.b16 %v1718
  %v1727 = vunpack.c.l.b16 %v1719
  %v1728 = vpack.c.b16 %v1725, %v1724
  %v1729 = vpack.c.b16 %v1727, %v1726
  %v1733 = vsel %vm24, %v1715, 0
  %1735 = vmatprep.subr.bf16.mxu0 0
  %1736 = vmatpush1.bf16.msra.mxu0 %v1728
  %1737 = vmatprep.subr.bf16.mxu0 0
  %1738 = vmatpush1.bf16.msra.mxu0 %v1729
  %1739 = vmatprep.subr.bf16.mxu0 0
  %1740 = vmatpush1.bf16.msra.mxu0 0
  %1741 = vmatprep.subr.bf16.mxu0 0
  %1742 = vmatpush1.bf16.msra.mxu0 0
  %1743 = vmatprep.subr.bf16.mxu0 0
  %1744 = vmatpush1.bf16.msra.mxu0 0
  %1745 = vmatprep.subr.bf16.mxu0 0
  %1746 = vmatpush1.bf16.msra.mxu0 0
  %1747 = vmatprep.subr.bf16.mxu0 0
  %1748 = vmatpush1.bf16.msra.mxu0 0
  %1749 = vmatprep.subr.bf16.mxu0 0
  %1750 = vmatpush1.bf16.msra.mxu0 0
  %1751 = vmatprep.subr.bf16.mxu0 0
  %1752 = vmatpush1.bf16.msra.mxu0 0
  %1753 = vmatprep.subr.bf16.mxu0 0
  %1754 = vmatpush1.bf16.msra.mxu0 0
  %1755 = vmatprep.subr.bf16.mxu0 0
  %1756 = vmatpush1.bf16.msra.mxu0 0
  %1757 = vmatprep.subr.bf16.mxu0 0
  %1758 = vmatpush1.bf16.msra.mxu0 0
  %1759 = vmatprep.subr.bf16.mxu0 0
  %1760 = vmatpush1.bf16.msra.mxu0 0
  %1761 = vmatprep.subr.bf16.mxu0 0
  %1762 = vmatpush1.bf16.msra.mxu0 0
  %1763 = vmatprep.subr.bf16.mxu0 0
  %1764 = vmatpush1.bf16.msra.mxu0 0
  %1765 = vmatprep.subr.bf16.mxu0 0
  %1766 = vmatpush1.bf16.msra.mxu0 0
  %1767 = vmatprep.mubr.bf16.mxu0 0
  %1768 = vmatmul.mubr.bf16.gmra.mrb[0].mxu0 %v1733
  %v1769 = vpop.f32.mrb[0].mxu0
  %v1770 = vadd.f32 0.0, %v1769
  %v1771 = vpop.f32.mrb[0].mxu0
  %v1772 = vpop.f32.mrb[0].mxu0
  %v1773 = vpop.f32.mrb[0].mxu0
  %1774 = vdwg.mxu0
  %v1775 = vadd.f32 %v1709, %v1770
  %v1776 = vld [vmem:[#allocation3] sm:$0xff]
  %v1777 = vxor.u32 %v1775, 2147483648
  %v1778 = vmul.f32 %v1777, 1.442695
  %v1779 = vpow.pop %v1778
  %v1780 = vadd.f32 %v1779, 1.0
  %v1781 = vrcp.pop %v1780
  %v1782 = vmul.f32 1.0, %v1781
  %v1783 = vtanh.pop %v1775
  %1785 = vrot.lane.b32.xlu0 %v1776, 32
  %v1786 = vpop.permute.xlu0 %1785
  %v1788 = vmul.f32 %v1782, %v1786
  %1790 = vrot.lane.b32.xlu0 %v1783, 64
  %v1791 = vpop.permute.xlu0 %1790
  %v1793 = vmul.f32 %v1782, %v1791
  %1795 = vrot.lane.b32.xlu0 %v1793, 32
  %v1796 = vpop.permute.xlu0 %1795
  %v1798 = vadd.f32 %v1788, %v1796
  %v1799 = vtanh.pop %v1798
  %1801 = vrot.lane.b32.xlu0 %v1799, 64
  %v1802 = vpop.permute.xlu0 %1801
  %v1804 = vmul.f32 %v1782, %v1802
  %1806 = vrot.lane.b32.xlu0 %v1804, 32
  %v1807 = vpop.permute.xlu0 %1806
  %1809 = vst.msk [vmem:[#allocation2] sm:$0xff] %vm24, %v1807
  %1811 = vrot.lane.b32.xlu0 %v1798, 96
  %v1812 = vpop.permute.xlu0 %1811
  %1814 = vst.msk [vmem:[#allocation3] sm:$0xff] %vm24, %v1812
  %v1815 = vpack.c.bf16 %v1804, %v1804
  %v1817 = vunpack.c.l.b16 %v1815
  %v1818 = vpack.c.b16 %v1817, %v1817
  %1819 = vrot.lane.b32.xlu0 %v1818, 32
  %v1820 = vpop.permute.xlu0 %1819
  %s1822 = scalar_lea.vmem %s6, 16
  %1823 = vst.msk [vmem:[%s1822] sm:$0xf] %vm138, %v1820
  %v1824 = vld [vmem:[%s708] sm:$0xf]
  %v1825 = vld [vmem:[%s3] sm:$0xf]
  %v1826 = vld [vmem:[%s3 + $0x4] sm:$0xf]
  %v1827 = vld [vmem:[%s3 + $0x8] sm:$0xf]
  %v1828 = vld [vmem:[%s3 + $0xc] sm:$0xf]
  %v1829 = vld [vmem:[%s4] sm:$0x1]
  %v1831 = vlaneseq
  %v1832 = vshrl.u32 %v1831, 7
  %v1833 = vsub.s32 0, %v1832
  %v1834 = vrot.slane %v1829, %v1833
  %v1840 = vunpack.c.l.b16 %v1825
  %v1841 = vunpack.c.l.b16 %v1826
  %v1842 = vunpack.c.l.b16 %v1827
  %v1843 = vunpack.c.l.b16 %v1828
  %v1844 = vpack.c.b16 %v1841, %v1840
  %v1845 = vpack.c.b16 %v1843, %v1842
  %v1849 = vsel %vm24, %v1824, 0
  %1851 = vmatprep.subr.bf16.mxu0 0
  %1852 = vmatpush1.bf16.msra.mxu0 %v1844
  %1853 = vmatprep.subr.bf16.mxu0 0
  %1854 = vmatpush1.bf16.msra.mxu0 %v1845
  %1855 = vmatprep.subr.bf16.mxu0 0
  %1856 = vmatpush1.bf16.msra.mxu0 0
  %1857 = vmatprep.subr.bf16.mxu0 0
  %1858 = vmatpush1.bf16.msra.mxu0 0
  %1859 = vmatprep.subr.bf16.mxu0 0
  %1860 = vmatpush1.bf16.msra.mxu0 0
  %1861 = vmatprep.subr.bf16.mxu0 0
  %1862 = vmatpush1.bf16.msra.mxu0 0
  %1863 = vmatprep.subr.bf16.mxu0 0
  %1864 = vmatpush1.bf16.msra.mxu0 0
  %1865 = vmatprep.subr.bf16.mxu0 0
  %1866 = vmatpush1.bf16.msra.mxu0 0
  %1867 = vmatprep.subr.bf16.mxu0 0
  %1868 = vmatpush1.bf16.msra.mxu0 0
  %1869 = vmatprep.subr.bf16.mxu0 0
  %1870 = vmatpush1.bf16.msra.mxu0 0
  %1871 = vmatprep.subr.bf16.mxu0 0
  %1872 = vmatpush1.bf16.msra.mxu0 0
  %1873 = vmatprep.subr.bf16.mxu0 0
  %1874 = vmatpush1.bf16.msra.mxu0 0
  %1875 = vmatprep.subr.bf16.mxu0 0
  %1876 = vmatpush1.bf16.msra.mxu0 0
  %1877 = vmatprep.subr.bf16.mxu0 0
  %1878 = vmatpush1.bf16.msra.mxu0 0
  %1879 = vmatprep.subr.bf16.mxu0 0
  %1880 = vmatpush1.bf16.msra.mxu0 0
  %1881 = vmatprep.subr.bf16.mxu0 0
  %1882 = vmatpush1.bf16.msra.mxu0 0
  %1883 = vmatprep.mubr.bf16.mxu0 0
  %1884 = vmatmul.mubr.bf16.gmra.mrb[0].mxu0 %v1849
  %v1885 = vpop.f32.mrb[0].mxu0
  %v1886 = vadd.f32 %v1834, %v1885
  %v1887 = vpop.f32.mrb[0].mxu0
  %v1888 = vpop.f32.mrb[0].mxu0
  %v1889 = vpop.f32.mrb[0].mxu0
  %1890 = vdwg.mxu0
  %v1891 = vld [vmem:[#allocation2] sm:$0xff]
  %v1892 = vpack.c.bf16 %v1891, %v1891
  %v1893 = vld [vmem:[%s5] sm:$0xf]
  %v1894 = vld [vmem:[%s5 + $0x4] sm:$0xf]
  %v1895 = vld [vmem:[%s5 + $0x8] sm:$0xf]
  %v1896 = vld [vmem:[%s5 + $0xc] sm:$0xf]
  %v1901 = vunpack.c.l.b16 %v1893
  %v1902 = vunpack.c.l.b16 %v1894
  %v1903 = vunpack.c.l.b16 %v1895
  %v1904 = vunpack.c.l.b16 %v1896
  %v1905 = vpack.c.b16 %v1902, %v1901
  %v1906 = vpack.c.b16 %v1904, %v1903
  %v1910 = vsel %vm24, %v1892, 0
  %1912 = vmatprep.subr.bf16.mxu0 0
  %1913 = vmatpush1.bf16.msra.mxu0 %v1905
  %1914 = vmatprep.subr.bf16.mxu0 0
  %1915 = vmatpush1.bf16.msra.mxu0 %v1906
  %1916 = vmatprep.subr.bf16.mxu0 0
  %1917 = vmatpush1.bf16.msra.mxu0 0
  %1918 = vmatprep.subr.bf16.mxu0 0
  %1919 = vmatpush1.bf16.msra.mxu0 0
  %1920 = vmatprep.subr.bf16.mxu0 0
  %1921 = vmatpush1.bf16.msra.mxu0 0
  %1922 = vmatprep.subr.bf16.mxu0 0
  %1923 = vmatpush1.bf16.msra.mxu0 0
  %1924 = vmatprep.subr.bf16.mxu0 0
  %1925 = vmatpush1.bf16.msra.mxu0 0
  %1926 = vmatprep.subr.bf16.mxu0 0
  %1927 = vmatpush1.bf16.msra.mxu0 0
  %1928 = vmatprep.subr.bf16.mxu0 0
  %1929 = vmatpush1.bf16.msra.mxu0 0
  %1930 = vmatprep.subr.bf16.mxu0 0
  %1931 = vmatpush1.bf16.msra.mxu0 0
  %1932 = vmatprep.subr.bf16.mxu0 0
  %1933 = vmatpush1.bf16.msra.mxu0 0
  %1934 = vmatprep.subr.bf16.mxu0 0
  %1935 = vmatpush1.bf16.msra.mxu0 0
  %1936 = vmatprep.subr.bf16.mxu0 0
  %1937 = vmatpush1.bf16.msra.mxu0 0
  %1938 = vmatprep.subr.bf16.mxu0 0
  %1939 = vmatpush1.bf16.msra.mxu0 0
  %1940 = vmatprep.subr.bf16.mxu0 0
  %1941 = vmatpush1.bf16.msra.mxu0 0
  %1942 = vmatprep.subr.bf16.mxu0 0
  %1943 = vmatpush1.bf16.msra.mxu0 0
  %1944 = vmatprep.mubr.bf16.mxu0 0
  %1945 = vmatmul.mubr.bf16.gmra.mrb[0].mxu0 %v1910
  %v1946 = vpop.f32.mrb[0].mxu0
  %v1947 = vadd.f32 0.0, %v1946
  %v1948 = vpop.f32.mrb[0].mxu0
  %v1949 = vpop.f32.mrb[0].mxu0
  %v1950 = vpop.f32.mrb[0].mxu0
  %1951 = vdwg.mxu0
  %v1952 = vadd.f32 %v1886, %v1947
  %v1953 = vld [vmem:[#allocation3] sm:$0xff]
  %v1954 = vxor.u32 %v1952, 2147483648
  %v1955 = vmul.f32 %v1954, 1.442695
  %v1956 = vpow.pop %v1955
  %v1957 = vadd.f32 %v1956, 1.0
  %v1958 = vrcp.pop %v1957
  %v1959 = vmul.f32 1.0, %v1958
  %v1960 = vtanh.pop %v1952
  %1962 = vrot.lane.b32.xlu0 %v1953, 32
  %v1963 = vpop.permute.xlu0 %1962
  %v1965 = vmul.f32 %v1959, %v1963
  %1967 = vrot.lane.b32.xlu0 %v1960, 64
  %v1968 = vpop.permute.xlu0 %1967
  %v1970 = vmul.f32 %v1959, %v1968
  %1972 = vrot.lane.b32.xlu0 %v1970, 32
  %v1973 = vpop.permute.xlu0 %1972
  %v1975 = vadd.f32 %v1965, %v1973
  %v1976 = vtanh.pop %v1975
  %1978 = vrot.lane.b32.xlu0 %v1976, 64
  %v1979 = vpop.permute.xlu0 %1978
  %v1981 = vmul.f32 %v1959, %v1979
  %1983 = vrot.lane.b32.xlu0 %v1981, 32
  %v1984 = vpop.permute.xlu0 %1983
  %1986 = vst.msk [vmem:[#allocation2] sm:$0xff] %vm24, %v1984
  %1988 = vrot.lane.b32.xlu0 %v1975, 96
  %v1989 = vpop.permute.xlu0 %1988
  %1991 = vst.msk [vmem:[#allocation3] sm:$0xff] %vm24, %v1989
  %v1992 = vpack.c.bf16 %v1981, %v1981
  %v1994 = vunpack.c.l.b16 %v1992
  %v1995 = vpack.c.b16 %v1994, %v1994
  %1996 = vrot.lane.b32.xlu0 %v1995, 32
  %v1997 = vpop.permute.xlu0 %1996
  %s1999 = scalar_lea.vmem %s6, 20
  %2000 = vst.msk [vmem:[%s1999] sm:$0xf] %vm138, %v1997
  %v2001 = vld [vmem:[%s822] sm:$0xf]
  %v2002 = vld [vmem:[%s3] sm:$0xf]
  %v2003 = vld [vmem:[%s3 + $0x4] sm:$0xf]
  %v2004 = vld [vmem:[%s3 + $0x8] sm:$0xf]
  %v2005 = vld [vmem:[%s3 + $0xc] sm:$0xf]
  %v2006 = vld [vmem:[%s4] sm:$0x1]
  %v2008 = vlaneseq
  %v2009 = vshrl.u32 %v2008, 7
  %v2010 = vsub.s32 0, %v2009
  %v2011 = vrot.slane %v2006, %v2010
  %v2017 = vunpack.c.l.b16 %v2002
  %v2018 = vunpack.c.l.b16 %v2003
  %v2019 = vunpack.c.l.b16 %v2004
  %v2020 = vunpack.c.l.b16 %v2005
  %v2021 = vpack.c.b16 %v2018, %v2017
  %v2022 = vpack.c.b16 %v2020, %v2019
  %v2026 = vsel %vm24, %v2001, 0
  %2028 = vmatprep.subr.bf16.mxu0 0
  %2029 = vmatpush1.bf16.msra.mxu0 %v2021
  %2030 = vmatprep.subr.bf16.mxu0 0
  %2031 = vmatpush1.bf16.msra.mxu0 %v2022
  %2032 = vmatprep.subr.bf16.mxu0 0
  %2033 = vmatpush1.bf16.msra.mxu0 0
  %2034 = vmatprep.subr.bf16.mxu0 0
  %2035 = vmatpush1.bf16.msra.mxu0 0
  %2036 = vmatprep.subr.bf16.mxu0 0
  %2037 = vmatpush1.bf16.msra.mxu0 0
  %2038 = vmatprep.subr.bf16.mxu0 0
  %2039 = vmatpush1.bf16.msra.mxu0 0
  %2040 = vmatprep.subr.bf16.mxu0 0
  %2041 = vmatpush1.bf16.msra.mxu0 0
  %2042 = vmatprep.subr.bf16.mxu0 0
  %2043 = vmatpush1.bf16.msra.mxu0 0
  %2044 = vmatprep.subr.bf16.mxu0 0
  %2045 = vmatpush1.bf16.msra.mxu0 0
  %2046 = vmatprep.subr.bf16.mxu0 0
  %2047 = vmatpush1.bf16.msra.mxu0 0
  %2048 = vmatprep.subr.bf16.mxu0 0
  %2049 = vmatpush1.bf16.msra.mxu0 0
  %2050 = vmatprep.subr.bf16.mxu0 0
  %2051 = vmatpush1.bf16.msra.mxu0 0
  %2052 = vmatprep.subr.bf16.mxu0 0
  %2053 = vmatpush1.bf16.msra.mxu0 0
  %2054 = vmatprep.subr.bf16.mxu0 0
  %2055 = vmatpush1.bf16.msra.mxu0 0
  %2056 = vmatprep.subr.bf16.mxu0 0
  %2057 = vmatpush1.bf16.msra.mxu0 0
  %2058 = vmatprep.subr.bf16.mxu0 0
  %2059 = vmatpush1.bf16.msra.mxu0 0
  %2060 = vmatprep.mubr.bf16.mxu0 0
  %2061 = vmatmul.mubr.bf16.gmra.mrb[0].mxu0 %v2026
  %v2062 = vpop.f32.mrb[0].mxu0
  %v2063 = vadd.f32 %v2011, %v2062
  %v2064 = vpop.f32.mrb[0].mxu0
  %v2065 = vpop.f32.mrb[0].mxu0
  %v2066 = vpop.f32.mrb[0].mxu0
  %2067 = vdwg.mxu0
  %v2068 = vld [vmem:[#allocation2] sm:$0xff]
  %v2069 = vpack.c.bf16 %v2068, %v2068
  %v2070 = vld [vmem:[%s5] sm:$0xf]
  %v2071 = vld [vmem:[%s5 + $0x4] sm:$0xf]
  %v2072 = vld [vmem:[%s5 + $0x8] sm:$0xf]
  %v2073 = vld [vmem:[%s5 + $0xc] sm:$0xf]
  %v2078 = vunpack.c.l.b16 %v2070
  %v2079 = vunpack.c.l.b16 %v2071
  %v2080 = vunpack.c.l.b16 %v2072
  %v2081 = vunpack.c.l.b16 %v2073
  %v2082 = vpack.c.b16 %v2079, %v2078
  %v2083 = vpack.c.b16 %v2081, %v2080
  %v2087 = vsel %vm24, %v2069, 0
  %2089 = vmatprep.subr.bf16.mxu0 0
  %2090 = vmatpush1.bf16.msra.mxu0 %v2082
  %2091 = vmatprep.subr.bf16.mxu0 0
  %2092 = vmatpush1.bf16.msra.mxu0 %v2083
  %2093 = vmatprep.subr.bf16.mxu0 0
  %2094 = vmatpush1.bf16.msra.mxu0 0
  %2095 = vmatprep.subr.bf16.mxu0 0
  %2096 = vmatpush1.bf16.msra.mxu0 0
  %2097 = vmatprep.subr.bf16.mxu0 0
  %2098 = vmatpush1.bf16.msra.mxu0 0
  %2099 = vmatprep.subr.bf16.mxu0 0
  %2100 = vmatpush1.bf16.msra.mxu0 0
  %2101 = vmatprep.subr.bf16.mxu0 0
  %2102 = vmatpush1.bf16.msra.mxu0 0
  %2103 = vmatprep.subr.bf16.mxu0 0
  %2104 = vmatpush1.bf16.msra.mxu0 0
  %2105 = vmatprep.subr.bf16.mxu0 0
  %2106 = vmatpush1.bf16.msra.mxu0 0
  %2107 = vmatprep.subr.bf16.mxu0 0
  %2108 = vmatpush1.bf16.msra.mxu0 0
  %2109 = vmatprep.subr.bf16.mxu0 0
  %2110 = vmatpush1.bf16.msra.mxu0 0
  %2111 = vmatprep.subr.bf16.mxu0 0
  %2112 = vmatpush1.bf16.msra.mxu0 0
  %2113 = vmatprep.subr.bf16.mxu0 0
  %2114 = vmatpush1.bf16.msra.mxu0 0
  %2115 = vmatprep.subr.bf16.mxu0 0
  %2116 = vmatpush1.bf16.msra.mxu0 0
  %2117 = vmatprep.subr.bf16.mxu0 0
  %2118 = vmatpush1.bf16.msra.mxu0 0
  %2119 = vmatprep.subr.bf16.mxu0 0
  %2120 = vmatpush1.bf16.msra.mxu0 0
  %2121 = vmatprep.mubr.bf16.mxu0 0
  %2122 = vmatmul.mubr.bf16.gmra.mrb[0].mxu0 %v2087
  %v2123 = vpop.f32.mrb[0].mxu0
  %v2124 = vadd.f32 0.0, %v2123
  %v2125 = vpop.f32.mrb[0].mxu0
  %v2126 = vpop.f32.mrb[0].mxu0
  %v2127 = vpop.f32.mrb[0].mxu0
  %2128 = vdwg.mxu0
  %v2129 = vadd.f32 %v2063, %v2124
  %v2130 = vld [vmem:[#allocation3] sm:$0xff]
  %v2131 = vxor.u32 %v2129, 2147483648
  %v2132 = vmul.f32 %v2131, 1.442695
  %v2133 = vpow.pop %v2132
  %v2134 = vadd.f32 %v2133, 1.0
  %v2135 = vrcp.pop %v2134
  %v2136 = vmul.f32 1.0, %v2135
  %v2137 = vtanh.pop %v2129
  %2139 = vrot.lane.b32.xlu0 %v2130, 32
  %v2140 = vpop.permute.xlu0 %2139
  %v2142 = vmul.f32 %v2136, %v2140
  %2144 = vrot.lane.b32.xlu0 %v2137, 64
  %v2145 = vpop.permute.xlu0 %2144
  %v2147 = vmul.f32 %v2136, %v2145
  %2149 = vrot.lane.b32.xlu0 %v2147, 32
  %v2150 = vpop.permute.xlu0 %2149
  %v2152 = vadd.f32 %v2142, %v2150
  %v2153 = vtanh.pop %v2152
  %2155 = vrot.lane.b32.xlu0 %v2153, 64
  %v2156 = vpop.permute.xlu0 %2155
  %v2158 = vmul.f32 %v2136, %v2156
  %2160 = vrot.lane.b32.xlu0 %v2158, 32
  %v2161 = vpop.permute.xlu0 %2160
  %2163 = vst.msk [vmem:[#allocation2] sm:$0xff] %vm24, %v2161
  %2165 = vrot.lane.b32.xlu0 %v2152, 96
  %v2166 = vpop.permute.xlu0 %2165
  %2168 = vst.msk [vmem:[#allocation3] sm:$0xff] %vm24, %v2166
  %v2169 = vpack.c.bf16 %v2158, %v2158
  %v2171 = vunpack.c.l.b16 %v2169
  %v2172 = vpack.c.b16 %v2171, %v2171
  %2173 = vrot.lane.b32.xlu0 %v2172, 32
  %v2174 = vpop.permute.xlu0 %2173
  %s2176 = scalar_lea.vmem %s6, 24
  %2177 = vst.msk [vmem:[%s2176] sm:$0xf] %vm138, %v2174
  %v2178 = vld [vmem:[%s936] sm:$0xf]
  %v2179 = vld [vmem:[%s3] sm:$0xf]
  %v2180 = vld [vmem:[%s3 + $0x4] sm:$0xf]
  %v2181 = vld [vmem:[%s3 + $0x8] sm:$0xf]
  %v2182 = vld [vmem:[%s3 + $0xc] sm:$0xf]
  %v2183 = vld [vmem:[%s4] sm:$0x1]
  %v2185 = vlaneseq
  %v2186 = vshrl.u32 %v2185, 7
  %v2187 = vsub.s32 0, %v2186
  %v2188 = vrot.slane %v2183, %v2187
  %v2194 = vunpack.c.l.b16 %v2179
  %v2195 = vunpack.c.l.b16 %v2180
  %v2196 = vunpack.c.l.b16 %v2181
  %v2197 = vunpack.c.l.b16 %v2182
  %v2198 = vpack.c.b16 %v2195, %v2194
  %v2199 = vpack.c.b16 %v2197, %v2196
  %v2203 = vsel %vm24, %v2178, 0
  %2205 = vmatprep.subr.bf16.mxu0 0
  %2206 = vmatpush1.bf16.msra.mxu0 %v2198
  %2207 = vmatprep.subr.bf16.mxu0 0
  %2208 = vmatpush1.bf16.msra.mxu0 %v2199
  %2209 = vmatprep.subr.bf16.mxu0 0
  %2210 = vmatpush1.bf16.msra.mxu0 0
  %2211 = vmatprep.subr.bf16.mxu0 0
  %2212 = vmatpush1.bf16.msra.mxu0 0
  %2213 = vmatprep.subr.bf16.mxu0 0
  %2214 = vmatpush1.bf16.msra.mxu0 0
  %2215 = vmatprep.subr.bf16.mxu0 0
  %2216 = vmatpush1.bf16.msra.mxu0 0
  %2217 = vmatprep.subr.bf16.mxu0 0
  %2218 = vmatpush1.bf16.msra.mxu0 0
  %2219 = vmatprep.subr.bf16.mxu0 0
  %2220 = vmatpush1.bf16.msra.mxu0 0
  %2221 = vmatprep.subr.bf16.mxu0 0
  %2222 = vmatpush1.bf16.msra.mxu0 0
  %2223 = vmatprep.subr.bf16.mxu0 0
  %2224 = vmatpush1.bf16.msra.mxu0 0
  %2225 = vmatprep.subr.bf16.mxu0 0
  %2226 = vmatpush1.bf16.msra.mxu0 0
  %2227 = vmatprep.subr.bf16.mxu0 0
  %2228 = vmatpush1.bf16.msra.mxu0 0
  %2229 = vmatprep.subr.bf16.mxu0 0
  %2230 = vmatpush1.bf16.msra.mxu0 0
  %2231 = vmatprep.subr.bf16.mxu0 0
  %2232 = vmatpush1.bf16.msra.mxu0 0
  %2233 = vmatprep.subr.bf16.mxu0 0
  %2234 = vmatpush1.bf16.msra.mxu0 0
  %2235 = vmatprep.subr.bf16.mxu0 0
  %2236 = vmatpush1.bf16.msra.mxu0 0
  %2237 = vmatprep.mubr.bf16.mxu0 0
  %2238 = vmatmul.mubr.bf16.gmra.mrb[0].mxu0 %v2203
  %v2239 = vpop.f32.mrb[0].mxu0
  %v2240 = vadd.f32 %v2188, %v2239
  %v2241 = vpop.f32.mrb[0].mxu0
  %v2242 = vpop.f32.mrb[0].mxu0
  %v2243 = vpop.f32.mrb[0].mxu0
  %2244 = vdwg.mxu0
  %v2245 = vld [vmem:[#allocation2] sm:$0xff]
  %v2246 = vpack.c.bf16 %v2245, %v2245
  %v2247 = vld [vmem:[%s5] sm:$0xf]
  %v2248 = vld [vmem:[%s5 + $0x4] sm:$0xf]
  %v2249 = vld [vmem:[%s5 + $0x8] sm:$0xf]
  %v2250 = vld [vmem:[%s5 + $0xc] sm:$0xf]
  %v2255 = vunpack.c.l.b16 %v2247
  %v2256 = vunpack.c.l.b16 %v2248
  %v2257 = vunpack.c.l.b16 %v2249
  %v2258 = vunpack.c.l.b16 %v2250
  %v2259 = vpack.c.b16 %v2256, %v2255
  %v2260 = vpack.c.b16 %v2258, %v2257
  %v2264 = vsel %vm24, %v2246, 0
  %2266 = vmatprep.subr.bf16.mxu0 0
  %2267 = vmatpush1.bf16.msra.mxu0 %v2259
  %2268 = vmatprep.subr.bf16.mxu0 0
  %2269 = vmatpush1.bf16.msra.mxu0 %v2260
  %2270 = vmatprep.subr.bf16.mxu0 0
  %2271 = vmatpush1.bf16.msra.mxu0 0
  %2272 = vmatprep.subr.bf16.mxu0 0
  %2273 = vmatpush1.bf16.msra.mxu0 0
  %2274 = vmatprep.subr.bf16.mxu0 0
  %2275 = vmatpush1.bf16.msra.mxu0 0
  %2276 = vmatprep.subr.bf16.mxu0 0
  %2277 = vmatpush1.bf16.msra.mxu0 0
  %2278 = vmatprep.subr.bf16.mxu0 0
  %2279 = vmatpush1.bf16.msra.mxu0 0
  %2280 = vmatprep.subr.bf16.mxu0 0
  %2281 = vmatpush1.bf16.msra.mxu0 0
  %2282 = vmatprep.subr.bf16.mxu0 0
  %2283 = vmatpush1.bf16.msra.mxu0 0
  %2284 = vmatprep.subr.bf16.mxu0 0
  %2285 = vmatpush1.bf16.msra.mxu0 0
  %2286 = vmatprep.subr.bf16.mxu0 0
  %2287 = vmatpush1.bf16.msra.mxu0 0
  %2288 = vmatprep.subr.bf16.mxu0 0
  %2289 = vmatpush1.bf16.msra.mxu0 0
  %2290 = vmatprep.subr.bf16.mxu0 0
  %2291 = vmatpush1.bf16.msra.mxu0 0
  %2292 = vmatprep.subr.bf16.mxu0 0
  %2293 = vmatpush1.bf16.msra.mxu0 0
  %2294 = vmatprep.subr.bf16.mxu0 0
  %2295 = vmatpush1.bf16.msra.mxu0 0
  %2296 = vmatprep.subr.bf16.mxu0 0
  %2297 = vmatpush1.bf16.msra.mxu0 0
  %2298 = vmatprep.mubr.bf16.mxu0 0
  %2299 = vmatmul.mubr.bf16.gmra.mrb[0].mxu0 %v2264
  %v2300 = vpop.f32.mrb[0].mxu0
  %v2301 = vadd.f32 0.0, %v2300
  %v2302 = vpop.f32.mrb[0].mxu0
  %v2303 = vpop.f32.mrb[0].mxu0
  %v2304 = vpop.f32.mrb[0].mxu0
  %2305 = vdwg.mxu0
  %v2306 = vadd.f32 %v2240, %v2301
  %v2307 = vld [vmem:[#allocation3] sm:$0xff]
  %v2308 = vxor.u32 %v2306, 2147483648
  %v2309 = vmul.f32 %v2308, 1.442695
  %v2310 = vpow.pop %v2309
  %v2311 = vadd.f32 %v2310, 1.0
  %v2312 = vrcp.pop %v2311
  %v2313 = vmul.f32 1.0, %v2312
  %v2314 = vtanh.pop %v2306
  %2316 = vrot.lane.b32.xlu0 %v2307, 32
  %v2317 = vpop.permute.xlu0 %2316
  %v2319 = vmul.f32 %v2313, %v2317
  %2321 = vrot.lane.b32.xlu0 %v2314, 64
  %v2322 = vpop.permute.xlu0 %2321
  %v2324 = vmul.f32 %v2313, %v2322
  %2326 = vrot.lane.b32.xlu0 %v2324, 32
  %v2327 = vpop.permute.xlu0 %2326
  %v2329 = vadd.f32 %v2319, %v2327
  %v2330 = vtanh.pop %v2329
  %2332 = vrot.lane.b32.xlu0 %v2330, 64
  %v2333 = vpop.permute.xlu0 %2332
  %v2335 = vmul.f32 %v2313, %v2333
  %2337 = vrot.lane.b32.xlu0 %v2335, 32
  %v2338 = vpop.permute.xlu0 %2337
  %2340 = vst.msk [vmem:[#allocation2] sm:$0xff] %vm24, %v2338
  %2342 = vrot.lane.b32.xlu0 %v2329, 96
  %v2343 = vpop.permute.xlu0 %2342
  %2345 = vst.msk [vmem:[#allocation3] sm:$0xff] %vm24, %v2343
  %v2346 = vpack.c.bf16 %v2335, %v2335
  %v2348 = vunpack.c.l.b16 %v2346
  %v2349 = vpack.c.b16 %v2348, %v2348
  %2350 = vrot.lane.b32.xlu0 %v2349, 32
  %v2351 = vpop.permute.xlu0 %2350
  %s2353 = scalar_lea.vmem %s6, 28
  %2354 = vst.msk [vmem:[%s2353] sm:$0xf] %vm138, %v2351
  // Predicated region
  $region26: #{glacnet_forward.22} parent=0 // pred_check
    _
  $region27: #{glacnet_forward.22} parent=0 // pred_check_branch
    %2356 = sbr.rel (0) target = $region29
  $region28: #{glacnet_forward.22} parent=0 // pred_region
    _
  $region29: #{glacnet_forward.22} parent=0 // pred_fallthru
    _
  // Predicated region
  $region30: #{glacnet_forward.22} parent=0 // pred_check
    _
  $region31: #{glacnet_forward.22} parent=0 // pred_check_branch
    %2358 = sbr.rel (0) target = $region33
  $region32: #{glacnet_forward.22} parent=0 // pred_region
    _
  $region33: #{glacnet_forward.22} parent=0 // pred_fallthru
    _

</llo_original>
